<compile_context>
chip_gen: v5e
topology: v5e:2x2
jax: 0.10.0
libtpu: 0.0.40
codegen_flags: <defaults>
</compile_context>

<pallas_src>
import functools

import jax
import jax.numpy as jnp
from jax.experimental import pallas as pl
from jax.experimental.pallas import tpu as pltpu

BN_EPS = 1e-5
LANE = 128                              # channel padding target (lane-dense stores)
VMEM_LIMIT_BYTES = 64 * 1024 * 1024     # explicit scoped-VMEM budget (fits v7x)
DW_ROW_CHUNK = 8                        # in-kernel row chunk for depthwise taps


def _silu(x):
    return x * jax.nn.sigmoid(x)


def _round_up(n, m):
    return ((n + m - 1) // m) * m


def _pad_last(a, target):
    pad = target - a.shape[-1]
    if pad == 0:
        return a
    widths = [(0, 0)] * (a.ndim - 1) + [(0, pad)]
    return jnp.pad(a, widths)


def _pad_2d(a, rows, cols):
    pr, pc = rows - a.shape[0], cols - a.shape[1]
    if pr == 0 and pc == 0:
        return a
    return jnp.pad(a, ((0, pr), (0, pc)))


def _compiler_params(grid_rank):
    return pltpu.CompilerParams(
        dimension_semantics=("parallel",) * grid_rank,
        vmem_limit_bytes=VMEM_LIMIT_BYTES)


def _choose_tile_m(M, row_bytes, max_tile_m=1024, vmem_budget_bytes=16 << 20):
    """M tile for the pointwise kernels: a multiple of 128 (lane-dense MXU passes and
    unmasked stores) that preferably divides M exactly (no ragged tail, no HBM pad),
    capped by a conservative per-block budget (blocks are double-buffered)."""
    cap = min(M, max_tile_m, max(128, vmem_budget_bytes // (2 * max(1, row_bytes))))
    align = 128 if (M % 128 == 0 and cap >= 128) else 8
    cap = max(align, (cap // align) * align)
    t = cap
    while t > align and M % t != 0:
        t -= align
    if M % t != 0:
        t = cap            # ragged tail: Pallas masks OOB rows of the last block
    return t


# ---------------------------------------------------------------------------
# 1x1 conv (M-tiled matmul) + folded BatchNorm + optional SiLU
# ---------------------------------------------------------------------------
def _pw_kernel(x_ref, w_ref, s_ref, b_ref, o_ref, *, act):
    y = jnp.dot(x_ref[...], w_ref[...], preferred_element_type=jnp.float32)
    y = y * s_ref[...] + b_ref[...]                  # folded BN (eval mode), f32
    if act:
        y = _silu(y)
    o_ref[...] = y.astype(o_ref.dtype)


def pointwise_conv_bn(x_nhwc, w, scale, bias, act=True):
    B, H, W, Cin = x_nhwc.shape
    Cout = w.shape[1]
    M = B * H * W
    dt = x_nhwc.dtype
    x2d = x_nhwc.reshape(M, Cin)
    tm = _choose_tile_m(M, jnp.dtype(dt).itemsize * (Cin + Cout))
    out = pl.pallas_call(
        functools.partial(_pw_kernel, act=act),
        out_shape=jax.ShapeDtypeStruct((M, Cout), dt),
        grid=(pl.cdiv(M, tm),),
        in_specs=[
            pl.BlockSpec((tm, Cin), lambda i: (i, 0)),      # streamed activations
            pl.BlockSpec((Cin, Cout), lambda i: (0, 0)),    # grid-invariant -> resident
            pl.BlockSpec((1, Cout), lambda i: (0, 0)),
            pl.BlockSpec((1, Cout), lambda i: (0, 0)),
        ],
        out_specs=pl.BlockSpec((tm, Cout), lambda i: (i, 0)),
        compiler_params=_compiler_params(1),
    )(x2d, w.astype(dt), scale.reshape(1, Cout).astype(jnp.float32),
      bias.reshape(1, Cout).astype(jnp.float32))
    return out.reshape(B, H, W, Cout)


# ---------------------------------------------------------------------------
# Depthwise kxk 'same' conv + folded BN + optional SiLU (one image per grid step)
# ---------------------------------------------------------------------------
def _dw_body(x_ref, w_ref, s_ref, b_ref, o_ref, xp_ref, *, k, act, row_chunk):
    p = k // 2
    _, H, W, C = x_ref.shape
    # Zero ONLY the halo border; the interior is fully overwritten by the copy below.
    zrow = jnp.zeros((p, W + 2 * p, C), xp_ref.dtype)
    zcol = jnp.zeros((H, p, C), xp_ref.dtype)
    xp_ref[0:p, :, :] = zrow
    xp_ref[p + H:, :, :] = zrow
    xp_ref[p:p + H, 0:p, :] = zcol
    xp_ref[p:p + H, p + W:, :] = zcol
    xp_ref[p:p + H, p:p + W, :] = x_ref[0].astype(xp_ref.dtype)

    w = w_ref[...].astype(jnp.float32)                      # all taps, VMEM resident
    s = s_ref[0].astype(jnp.float32).reshape(1, 1, C)       # broadcast hoisted
    b = b_ref[0].astype(jnp.float32).reshape(1, 1, C)

    for r0 in range(0, H, row_chunk):                       # static, unrolled
        th = min(row_chunk, H - r0)
        acc = jnp.zeros((th, W, C), jnp.float32)
        for dx in range(k):
            # one sublane-shifted strip per (chunk, dx), reused across all dy taps
            strip = xp_ref[r0:r0 + th + 2 * p, dx:dx + W, :].astype(jnp.float32)
            for dy in range(k):
                acc = acc + strip[dy:dy + th] * w[dy * k + dx].reshape(1, 1, C)
        y = acc * s + b
        if act:
            y = _silu(y)
        o_ref[0, r0:r0 + th, :, :] = y.astype(o_ref.dtype)


def _dw_pair_kernel(xa_ref, xb_ref, wa_ref, sa_ref, ba_ref, wb_ref, sb_ref, bb_ref,
                    oa_ref, ob_ref, xpa_ref, xpb_ref, *,
                    ka, kb, act_a, act_b, row_chunk):
    _dw_body(xa_ref, wa_ref, sa_ref, ba_ref, oa_ref, xpa_ref,
             k=ka, act=act_a, row_chunk=row_chunk)
    _dw_body(xb_ref, wb_ref, sb_ref, bb_ref, ob_ref, xpb_ref,
             k=kb, act=act_b, row_chunk=row_chunk)


def depthwise_pair_conv_bn(xa, wa, sa, ba, ka, act_a,
                           xb, wb, sb, bb, kb, act_b, row_chunk=DW_ROW_CHUNK):
    """Two independent depthwise convs (fused multi-kernel branch + shortcut DWConv)
    sharing one pallas_call so their DMAs overlap and launch overhead is paid once."""
    B, H, W, Ca = xa.shape
    Cb = xb.shape[-1]
    pa, pb = ka // 2, kb // 2

    def img_spec(C):
        return pl.BlockSpec((1, H, W, C), lambda bi: (bi, 0, 0, 0))

    def cspec(shape):
        return pl.BlockSpec(shape, lambda bi: (0, 0))

    out_a, out_b = pl.pallas_call(
        functools.partial(_dw_pair_kernel, ka=ka, kb=kb, act_a=act_a, act_b=act_b,
                          row_chunk=row_chunk),
        out_shape=(jax.ShapeDtypeStruct(xa.shape, xa.dtype),
                   jax.ShapeDtypeStruct(xb.shape, xb.dtype)),
        grid=(B,),
        in_specs=[
            img_spec(Ca), img_spec(Cb),
            cspec((ka * ka, Ca)), cspec((1, Ca)), cspec((1, Ca)),
            cspec((kb * kb, Cb)), cspec((1, Cb)), cspec((1, Cb)),
        ],
        out_specs=(img_spec(Ca), img_spec(Cb)),
        scratch_shapes=[pltpu.VMEM((H + 2 * pa, W + 2 * pa, Ca), jnp.float32),
                        pltpu.VMEM((H + 2 * pb, W + 2 * pb, Cb), jnp.float32)],
        compiler_params=_compiler_params(1),
    )(xa, xb,
      wa.astype(jnp.float32), sa.reshape(1, Ca).astype(jnp.float32),
      ba.reshape(1, Ca).astype(jnp.float32),
      wb.astype(jnp.float32), sb.reshape(1, Cb).astype(jnp.float32),
      bb.reshape(1, Cb).astype(jnp.float32))
    return out_a, out_b


# ---------------------------------------------------------------------------
# Fused head: out = SiLU(BN(cat([x1,x2]) @ W)) + BN_sc(dsc @ W_sc)
# ---------------------------------------------------------------------------
def _head_kernel(x1_ref, x2_ref, d_ref, wa_ref, wb_ref, wsc_ref,
                 s1_ref, b1_ref, ss_ref, bs_ref, o_ref):
    y = jnp.dot(x1_ref[...], wa_ref[...], preferred_element_type=jnp.float32)
    y = y + jnp.dot(x2_ref[...], wb_ref[...], preferred_element_type=jnp.float32)
    y = _silu(y * s1_ref[...] + b1_ref[...])
    sc = jnp.dot(d_ref[...], wsc_ref[...], preferred_element_type=jnp.float32)
    y = y + sc * ss_ref[...] + bs_ref[...]
    o_ref[...] = y.astype(o_ref.dtype)


def fused_head(x1, x2, dsc, wa, wb, wsc, s1, b1, ssc, bsc, out_dtype):
    B, H, W, Cm = x1.shape
    c1p = dsc.shape[-1]
    c2p = wa.shape[1]
    M = B * H * W
    dt = x1.dtype
    row_bytes = (jnp.dtype(dt).itemsize * (2 * Cm + c1p)
                 + jnp.dtype(out_dtype).itemsize * c2p)
    tm = _choose_tile_m(M, row_bytes)

    def act_spec(c):
        return pl.BlockSpec((tm, c), lambda i: (i, 0))

    def const_spec(shape):
        return pl.BlockSpec(shape, lambda i: (0, 0))

    out = pl.pallas_call(
        _head_kernel,
        out_shape=jax.ShapeDtypeStruct((M, c2p), out_dtype),
        grid=(pl.cdiv(M, tm),),
        in_specs=[
            act_spec(Cm), act_spec(Cm), act_spec(c1p),
            const_spec((Cm, c2p)), const_spec((Cm, c2p)), const_spec((c1p, c2p)),
            const_spec((1, c2p)), const_spec((1, c2p)),
            const_spec((1, c2p)), const_spec((1, c2p)),
        ],
        out_specs=pl.BlockSpec((tm, c2p), lambda i: (i, 0)),
        compiler_params=_compiler_params(1),
    )(x1.reshape(M, Cm), x2.reshape(M, Cm), dsc.reshape(M, c1p),
      wa.astype(dt), wb.astype(dt), wsc.astype(dt),
      s1.reshape(1, c2p).astype(jnp.float32), b1.reshape(1, c2p).astype(jnp.float32),
      ssc.reshape(1, c2p).astype(jnp.float32), bsc.reshape(1, c2p).astype(jnp.float32))
    return out.reshape(B, H, W, c2p)


# ---------------------------------------------------------------------------
# kxk 'same' depthwise == zero-embedded kmax x kmax 'same' depthwise
# ---------------------------------------------------------------------------
def _embed_kernel(w, k, kmax):
    if k == kmax:
        return w
    off = (kmax - k) // 2
    C = w.shape[1]
    wk = jnp.zeros((kmax * kmax, C), w.dtype)
    for dy in range(k):
        for dx in range(k):
            wk = wk.at[(dy + off) * kmax + (dx + off)].set(w[dy * k + dx])
    return wk


# ---------------------------------------------------------------------------
# Deterministic synthetic parameters (BatchNorm eval mode, default init)
# ---------------------------------------------------------------------------
def init_msgr_params(key, c1, c2, kernels=(3, 5)):
    min_ch = c2 // 2
    ch_sub = min_ch // len(kernels)
    keys = jax.random.split(key, 4 + len(kernels))

    def bn_fold(c):
        gamma = jnp.ones((c,), jnp.float32)
        beta = jnp.zeros((c,), jnp.float32)
        mean = jnp.zeros((c,), jnp.float32)
        var = jnp.ones((c,), jnp.float32)
        s = gamma / jnp.sqrt(var + BN_EPS)
        b = beta - mean * s
        return s, b

    p = {}
    p["cv1_w"] = 0.1 * jax.random.normal(keys[0], (c1, min_ch), jnp.float32)
    p["cv1_s"], p["cv1_b"] = bn_fold(min_ch)
    for i, ks in enumerate(kernels):
        p[f"dw{i}_w"] = 0.1 * jax.random.normal(keys[1 + i], (ks * ks, ch_sub), jnp.float32)
        p[f"dw{i}_s"], p[f"dw{i}_b"] = bn_fold(ch_sub)
    n0 = 1 + len(kernels)
    p["c1x1_w"] = 0.1 * jax.random.normal(keys[n0], (c2, c2), jnp.float32)
    p["c1x1_s"], p["c1x1_b"] = bn_fold(c2)
    p["sc_dw_w"] = 0.1 * jax.random.normal(keys[n0 + 1], (3 * 3, c1), jnp.float32)
    p["sc_dw_s"], p["sc_dw_b"] = bn_fold(c1)
    p["sc_pw_w"] = 0.1 * jax.random.normal(keys[n0 + 2], (c1, c2), jnp.float32)
    p["sc_pw_s"], p["sc_pw_b"] = bn_fold(c2)
    return p


# ---------------------------------------------------------------------------
# MSGRConv forward (s == 1), NCHW in / NCHW out like the PyTorch module
# ---------------------------------------------------------------------------
def msgr_conv_forward(x_nchw, params, kernels=(3, 5), compute_dtype=jnp.bfloat16,
                      lane=LANE):
    out_dtype = x_nchw.dtype
    c1 = x_nchw.shape[1]
    min_ch = params["cv1_w"].shape[1]
    c2 = params["c1x1_w"].shape[1]
    g = len(kernels)

    c1p = _round_up(c1, lane)
    mcp = _round_up(min_ch, lane)
    c2p = _round_up(c2, lane)

    # NCHW -> NHWC, zero-pad channels once, cast to streaming dtype. Padded channels
    # (zero weights / zero bias) propagate as exact zeros through every stage.
    x = jnp.transpose(x_nchw, (0, 2, 3, 1))
    x = _pad_last(x, c1p).astype(compute_dtype)

    # 1) x1 = cv1(x)
    x1 = pointwise_conv_bn(
        x, _pad_2d(params["cv1_w"], c1p, mcp),
        _pad_last(params["cv1_s"], mcp), _pad_last(params["cv1_b"], mcp), act=True)

    # 2) both grouped depthwise branches (small kernels zero-embedded into the kmax
    #    footprint) on x1, and the shortcut DWConv 3x3 (no act) on x — one call.
    kmax = max(kernels)
    w_f = jnp.concatenate(
        [_embed_kernel(params[f"dw{i}_w"], kernels[i], kmax) for i in range(g)], axis=1)
    s_f = jnp.concatenate([params[f"dw{i}_s"] for i in range(g)])
    b_f = jnp.concatenate([params[f"dw{i}_b"] for i in range(g)])
    x2, dsc = depthwise_pair_conv_bn(
        x1, _pad_2d(w_f, kmax * kmax, mcp), _pad_last(s_f, mcp), _pad_last(b_f, mcp),
        kmax, True,
        x, _pad_2d(params["sc_dw_w"], 9, c1p), _pad_last(params["sc_dw_s"], c1p),
        _pad_last(params["sc_dw_b"], c1p), 3, False)

    # 3) head: conv1x1(cat([x1, x2])) + BN + SiLU + shortcut 1x1 (BN) + residual add.
    wa = _pad_2d(params["c1x1_w"][:min_ch, :], mcp, c2p)   # rows for x1 channels
    wb = _pad_2d(params["c1x1_w"][min_ch:, :], mcp, c2p)   # rows for x2 channels
    wsc = _pad_2d(params["sc_pw_w"], c1p, c2p)
    out = fused_head(x1, x2, dsc, wa, wb, wsc,
                     _pad_last(params["c1x1_s"], c2p), _pad_last(params["c1x1_b"], c2p),
                     _pad_last(params["sc_pw_s"], c2p), _pad_last(params["sc_pw_b"], c2p),
                     out_dtype)

    # strip channel padding once, NHWC -> NCHW
    return jnp.transpose(out[..., :c2], (0, 3, 1, 2))


# ---------------------------------------------------------------------------
# Pure-JAX (unfused, f32) reference mirroring the PyTorch module structure.
# ---------------------------------------------------------------------------
def msgr_conv_reference(x_nchw, params, kernels=(3, 5)):
    hi = jax.lax.Precision.HIGHEST
    x = jnp.transpose(x_nchw, (0, 2, 3, 1))

    def pw(x, w, s, b, act):
        y = jnp.einsum("bhwc,cd->bhwd", x, w, precision=hi) * s + b
        return _silu(y) if act else y

    def dw(x, w, s, b, k, act):
        B, H, W, C = x.shape
        p = k // 2
        xp = jnp.pad(x, ((0, 0), (p, p), (p, p), (0, 0)))
        acc = jnp.zeros((B, H, W, C), jnp.float32)
        for dy in range(k):
            for dx in range(k):
                acc = acc + xp[:, dy:dy + H, dx:dx + W, :] * w[dy * k + dx].reshape(1, 1, 1, C)
        y = acc * s + b
        return _silu(y) if act else y

    x1 = pw(x, params["cv1_w"], params["cv1_s"], params["cv1_b"], True)
    min_ch = x1.shape[-1]
    ch_sub = min_ch // len(kernels)
    branches = []
    for i, ks in enumerate(kernels):
        xi = x1[..., i * ch_sub:(i + 1) * ch_sub]
        branches.append(dw(xi, params[f"dw{i}_w"], params[f"dw{i}_s"], params[f"dw{i}_b"], ks, True))
    x2 = jnp.concatenate(branches, axis=-1)
    out = jnp.concatenate([x1, x2], axis=-1)
    sc = dw(x, params["sc_dw_w"], params["sc_dw_s"], params["sc_dw_b"], 3, False)
    sc = pw(sc, params["sc_pw_w"], params["sc_pw_s"], params["sc_pw_b"], False)
    out = pw(out, params["c1x1_w"], params["c1x1_s"], params["c1x1_b"], True) + sc
    return jnp.transpose(out, (0, 3, 1, 2))


if __name__ == "__main__":
    B, c1, c2, H, W = 2, 4, 8, 16, 16
    kernels = (3, 5)
    key = jax.random.PRNGKey(0)
    kx, kp = jax.random.split(key)
    x = jax.random.normal(kx, (B, c1, H, W), jnp.float32)   # PyTorch-style NCHW input
    params = init_msgr_params(kp, c1, c2, kernels)

    ref = jax.block_until_ready(msgr_conv_reference(x, params, kernels))

    # f32 streaming path: tight semantic check against the unfused reference.
    fwd32 = jax.jit(lambda x_: msgr_conv_forward(x_, params, kernels,
                                                 compute_dtype=jnp.float32))
    out32 = jax.block_until_ready(fwd32(x))
    assert out32.shape == (B, c2, H, W), out32.shape
    assert bool(jnp.all(jnp.isfinite(out32)))
    err32 = float(jnp.max(jnp.abs(out32 - ref)))
    assert err32 < 2e-3, f"f32 max |out - ref| = {err32}"

    # bf16 streaming path (recommended on v6e/v7x): looser tolerance for the casts.
    fwd16 = jax.jit(lambda x_: msgr_conv_forward(x_, params, kernels,
                                                 compute_dtype=jnp.bfloat16))
    out16 = jax.block_until_ready(fwd16(x))
    assert out16.shape == (B, c2, H, W), out16.shape
    assert bool(jnp.all(jnp.isfinite(out16)))
    err16 = float(jnp.max(jnp.abs(out16 - ref)))
    assert err16 < 1e-1, f"bf16 max |out - ref| = {err16}"

    print("KERNEL_OK")
</pallas_src>

<mosaic_0001>
module attributes {stable_mosaic.version = 11 : i64} {
  func.func @_pw_kernel(%arg0: i32, %arg1: memref<512x128xf32, #tpu.memory_space<vmem>>, %arg2: memref<128x128xf32, #tpu.memory_space<vmem>>, %arg3: memref<1x128xf32, #tpu.memory_space<vmem>>, %arg4: memref<1x128xf32, #tpu.memory_space<vmem>>, %arg5: memref<512x128xf32, #tpu.memory_space<vmem>>) attributes {dimension_semantics = [#tpu.dimension_semantics<parallel>], iteration_bounds = array<i64: 1>, scalar_prefetch = 0 : i64, scratch_operands = 0 : i64, tpu.core_type = #tpu.core_type<tc>, window_params = [{transform_indices = @transform_0, window_bounds = array<i64: 512, 128>}, {pipeline_mode = #tpu.pipeline_mode<synchronous>, transform_indices = @transform_1, window_bounds = array<i64: 128, 128>}, {pipeline_mode = #tpu.pipeline_mode<synchronous>, transform_indices = @transform_2, window_bounds = array<i64: 1, 128>}, {pipeline_mode = #tpu.pipeline_mode<synchronous>, transform_indices = @transform_3, window_bounds = array<i64: 1, 128>}, {transform_indices = @transform_4, window_bounds = array<i64: 512, 128>}]} {
    %c0 = arith.constant 0 : index
    %c0_0 = arith.constant 0 : index
    %0 = vector.load %arg1[%c0, %c0_0] : memref<512x128xf32, #tpu.memory_space<vmem>>, vector<512x128xf32>
    %c0_1 = arith.constant 0 : index
    %c0_2 = arith.constant 0 : index
    %1 = vector.load %arg2[%c0_1, %c0_2] : memref<128x128xf32, #tpu.memory_space<vmem>>, vector<128x128xf32>
    %cst = arith.constant dense<0.000000e+00> : vector<512x128xf32>
    %2 = tpu.matmul %0, %1, %cst {dimension_numbers = #tpu.dot_dimension_numbers<[1], [0], [0], [1], [0, 0, 1, 1], [], []>} : vector<512x128xf32>, vector<128x128xf32>, vector<512x128xf32> -> vector<512x128xf32>
    %c0_3 = arith.constant 0 : index
    %c0_4 = arith.constant 0 : index
    %3 = vector.load %arg3[%c0_3, %c0_4] : memref<1x128xf32, #tpu.memory_space<vmem>>, vector<1x128xf32>
    %4 = vector.broadcast %3 : vector<1x128xf32> to vector<512x128xf32>
    %5 = arith.mulf %2, %4 : vector<512x128xf32>
    %c0_5 = arith.constant 0 : index
    %c0_6 = arith.constant 0 : index
    %6 = vector.load %arg4[%c0_5, %c0_6] : memref<1x128xf32, #tpu.memory_space<vmem>>, vector<1x128xf32>
    %7 = vector.broadcast %6 : vector<1x128xf32> to vector<512x128xf32>
    %8 = arith.addf %5, %7 : vector<512x128xf32>
    %9 = arith.negf %8 : vector<512x128xf32>
    %10 = math.exp %9 : vector<512x128xf32>
    %cst_7 = arith.constant 1.000000e+00 : f32
    %11 = vector.broadcast %cst_7 : f32 to vector<512x128xf32>
    %12 = arith.addf %11, %10 : vector<512x128xf32>
    %13 = arith.divf %11, %12 : vector<512x128xf32>
    %14 = arith.mulf %8, %13 : vector<512x128xf32>
    %c0_8 = arith.constant 0 : index
    %c0_9 = arith.constant 0 : index
    %15 = vector.load %arg5[%c0_8, %c0_9] : memref<512x128xf32, #tpu.memory_space<vmem>>, vector<512x128xf32>
    tpu.vector_store %arg5[%c0_8, %c0_9], %14 {strides = array<i32>} : memref<512x128xf32, #tpu.memory_space<vmem>>, vector<512x128xf32>,
    return
  }
  func.func @transform_0(%arg0: i32) -> (i32, i32) {
    %c0_i32 = arith.constant 0 : i32
    %c0_i32_0 = arith.constant 0 : i32
    return %arg0, %c0_i32 : i32, i32
  }
  func.func @transform_1(%arg0: i32) -> (i32, i32) {
    %c0_i32 = arith.constant 0 : i32
    %c0_i32_0 = arith.constant 0 : i32
    %c0_i32_1 = arith.constant 0 : i32
    return %c0_i32, %c0_i32_0 : i32, i32
  }
  func.func @transform_2(%arg0: i32) -> (i32, i32) {
    %c0_i32 = arith.constant 0 : i32
    %c0_i32_0 = arith.constant 0 : i32
    %c0_i32_1 = arith.constant 0 : i32
    return %c0_i32, %c0_i32_0 : i32, i32
  }
  func.func @transform_3(%arg0: i32) -> (i32, i32) {
    %c0_i32 = arith.constant 0 : i32
    %c0_i32_0 = arith.constant 0 : i32
    %c0_i32_1 = arith.constant 0 : i32
    return %c0_i32, %c0_i32_0 : i32, i32
  }
  func.func @transform_4(%arg0: i32) -> (i32, i32) {
    %c0_i32 = arith.constant 0 : i32
    %c0_i32_0 = arith.constant 0 : i32
    return %arg0, %c0_i32 : i32, i32
  }
}

module attributes {stable_mosaic.version = 11 : i64} {
  func.func @_dw_pair_kernel(%arg0: i32, %arg1: memref<1x16x16x128xf32, #tpu.memory_space<vmem>>, %arg2: memref<1x16x16x128xf32, #tpu.memory_space<vmem>>, %arg3: memref<25x128xf32, #tpu.memory_space<vmem>>, %arg4: memref<1x128xf32, #tpu.memory_space<vmem>>, %arg5: memref<1x128xf32, #tpu.memory_space<vmem>>, %arg6: memref<9x128xf32, #tpu.memory_space<vmem>>, %arg7: memref<1x128xf32, #tpu.memory_space<vmem>>, %arg8: memref<1x128xf32, #tpu.memory_space<vmem>>, %arg9: memref<1x16x16x128xf32, #tpu.memory_space<vmem>>, %arg10: memref<1x16x16x128xf32, #tpu.memory_space<vmem>>, %arg11: memref<20x20x128xf32, #tpu.memory_space<vmem>>, %arg12: memref<18x18x128xf32, #tpu.memory_space<vmem>>) attributes {dimension_semantics = [#tpu.dimension_semantics<parallel>], iteration_bounds = array<i64: 2>, scalar_prefetch = 0 : i64, scratch_operands = 2 : i64, tpu.core_type = #tpu.core_type<tc>, window_params = [{transform_indices = @transform_0, window_bounds = array<i64: 1, 16, 16, 128>}, {transform_indices = @transform_1, window_bounds = array<i64: 1, 16, 16, 128>}, {pipeline_mode = #tpu.pipeline_mode<synchronous>, transform_indices = @transform_2, window_bounds = array<i64: 25, 128>}, {pipeline_mode = #tpu.pipeline_mode<synchronous>, transform_indices = @transform_3, window_bounds = array<i64: 1, 128>}, {pipeline_mode = #tpu.pipeline_mode<synchronous>, transform_indices = @transform_4, window_bounds = array<i64: 1, 128>}, {pipeline_mode = #tpu.pipeline_mode<synchronous>, transform_indices = @transform_5, window_bounds = array<i64: 9, 128>}, {pipeline_mode = #tpu.pipeline_mode<synchronous>, transform_indices = @transform_6, window_bounds = array<i64: 1, 128>}, {pipeline_mode = #tpu.pipeline_mode<synchronous>, transform_indices = @transform_7, window_bounds = array<i64: 1, 128>}, {transform_indices = @transform_8, window_bounds = array<i64: 1, 16, 16, 128>}, {transform_indices = @transform_9, window_bounds = array<i64: 1, 16, 16, 128>}]} {
    %cst = arith.constant 0.000000e+00 : f32
    %0 = vector.broadcast %cst : f32 to vector<2x20x128xf32>
    %cst_0 = arith.constant 0.000000e+00 : f32
    %1 = vector.broadcast %cst_0 : f32 to vector<16x2x128xf32>
    %c0 = arith.constant 0 : index
    %c0_1 = arith.constant 0 : index
    %c0_2 = arith.constant 0 : index
    %2 = vector.load %arg11[%c0, %c0_1, %c0_2] : memref<20x20x128xf32, #tpu.memory_space<vmem>>, vector<2x20x128xf32>
    tpu.vector_store %arg11[%c0, %c0_1, %c0_2], %0 {strides = array<i32>} : memref<20x20x128xf32, #tpu.memory_space<vmem>>, vector<2x20x128xf32>,
    %c18 = arith.constant 18 : index
    %c0_3 = arith.constant 0 : index
    %c0_4 = arith.constant 0 : index
    %3 = vector.load %arg11[%c18, %c0_3, %c0_4] : memref<20x20x128xf32, #tpu.memory_space<vmem>>, vector<2x20x128xf32>
    tpu.vector_store %arg11[%c18, %c0_3, %c0_4], %0 {strides = array<i32>} : memref<20x20x128xf32, #tpu.memory_space<vmem>>, vector<2x20x128xf32>,
    %c2 = arith.constant 2 : index
    %c0_5 = arith.constant 0 : index
    %c0_6 = arith.constant 0 : index
    %4 = vector.load %arg11[%c2, %c0_5, %c0_6] : memref<20x20x128xf32, #tpu.memory_space<vmem>>, vector<16x2x128xf32>
    tpu.vector_store %arg11[%c2, %c0_5, %c0_6], %1 {strides = array<i32>} : memref<20x20x128xf32, #tpu.memory_space<vmem>>, vector<16x2x128xf32>,
    %c2_7 = arith.constant 2 : index
    %c18_8 = arith.constant 18 : index
    %c0_9 = arith.constant 0 : index
    %5 = vector.load %arg11[%c2_7, %c18_8, %c0_9] : memref<20x20x128xf32, #tpu.memory_space<vmem>>, vector<16x2x128xf32>
    tpu.vector_store %arg11[%c2_7, %c18_8, %c0_9], %1 {strides = array<i32>} : memref<20x20x128xf32, #tpu.memory_space<vmem>>, vector<16x2x128xf32>,
    %c0_10 = arith.constant 0 : index
    %c0_11 = arith.constant 0 : index
    %c0_12 = arith.constant 0 : index
    %c0_13 = arith.constant 0 : index
    %6 = vector.load %arg1[%c0_10, %c0_11, %c0_12, %c0_13] : memref<1x16x16x128xf32, #tpu.memory_space<vmem>>, vector<1x16x16x128xf32>
    %7 = vector.shape_cast %6 : vector<1x16x16x128xf32> to vector<16x16x128xf32>
    %c2_14 = arith.constant 2 : index
    %c2_15 = arith.constant 2 : index
    %c0_16 = arith.constant 0 : index
    %8 = vector.load %arg11[%c2_14, %c2_15, %c0_16] : memref<20x20x128xf32, #tpu.memory_space<vmem>>, vector<16x16x128xf32>
    tpu.vector_store %arg11[%c2_14, %c2_15, %c0_16], %7 {strides = array<i32>} : memref<20x20x128xf32, #tpu.memory_space<vmem>>, vector<16x16x128xf32>,
    %c0_17 = arith.constant 0 : index
    %c0_18 = arith.constant 0 : index
    %9 = vector.load %arg3[%c0_17, %c0_18] : memref<25x128xf32, #tpu.memory_space<vmem>>, vector<25x128xf32>
    %c0_19 = arith.constant 0 : index
    %c0_20 = arith.constant 0 : index
    %10 = vector.load %arg4[%c0_19, %c0_20] : memref<1x128xf32, #tpu.memory_space<vmem>>, vector<1x128xf32>
    %11 = vector.shape_cast %10 : vector<1x128xf32> to vector<128xf32>
    %12 = vector.shape_cast %11 : vector<128xf32> to vector<1x1x128xf32>
    %c0_21 = arith.constant 0 : index
    %c0_22 = arith.constant 0 : index
    %13 = vector.load %arg5[%c0_21, %c0_22] : memref<1x128xf32, #tpu.memory_space<vmem>>, vector<1x128xf32>
    %14 = vector.shape_cast %13 : vector<1x128xf32> to vector<128xf32>
    %15 = vector.shape_cast %14 : vector<128xf32> to vector<1x1x128xf32>
    %cst_23 = arith.constant 0.000000e+00 : f32
    %16 = vector.broadcast %cst_23 : f32 to vector<8x16x128xf32>
    %c0_24 = arith.constant 0 : index
    %c0_25 = arith.constant 0 : index
    %c0_26 = arith.constant 0 : index
    %17 = vector.load %arg11[%c0_24, %c0_25, %c0_26] : memref<20x20x128xf32, #tpu.memory_space<vmem>>, vector<12x16x128xf32>
    %18 = vector.extract_strided_slice %17 {offsets = [0, 0, 0], sizes = [8, 16, 128], strides = [1, 1, 1]} : vector<12x16x128xf32> to vector<8x16x128xf32>
    %19 = vector.extract_strided_slice %9 {offsets = [0, 0], sizes = [1, 128], strides = [1, 1]} : vector<25x128xf32> to vector<1x128xf32>
    %20 = vector.shape_cast %19 : vector<1x128xf32> to vector<128xf32>
    %21 = vector.shape_cast %20 : vector<128xf32> to vector<1x1x128xf32>
    %22 = vector.broadcast %21 : vector<1x1x128xf32> to vector<8x16x128xf32>
    %23 = arith.mulf %18, %22 : vector<8x16x128xf32>
    %24 = arith.addf %16, %23 : vector<8x16x128xf32>
    %25 = vector.extract_strided_slice %17 {offsets = [1, 0, 0], sizes = [8, 16, 128], strides = [1, 1, 1]} : vector<12x16x128xf32> to vector<8x16x128xf32>
    %26 = vector.extract_strided_slice %9 {offsets = [5, 0], sizes = [1, 128], strides = [1, 1]} : vector<25x128xf32> to vector<1x128xf32>
    %27 = vector.shape_cast %26 : vector<1x128xf32> to vector<128xf32>
    %28 = vector.shape_cast %27 : vector<128xf32> to vector<1x1x128xf32>
    %29 = vector.broadcast %28 : vector<1x1x128xf32> to vector<8x16x128xf32>
    %30 = arith.mulf %25, %29 : vector<8x16x128xf32>
    %31 = arith.addf %24, %30 : vector<8x16x128xf32>
    %32 = vector.extract_strided_slice %17 {offsets = [2, 0, 0], sizes = [8, 16, 128], strides = [1, 1, 1]} : vector<12x16x128xf32> to vector<8x16x128xf32>
    %33 = vector.extract_strided_slice %9 {offsets = [10, 0], sizes = [1, 128], strides = [1, 1]} : vector<25x128xf32> to vector<1x128xf32>
    %34 = vector.shape_cast %33 : vector<1x128xf32> to vector<128xf32>
    %35 = vector.shape_cast %34 : vector<128xf32> to vector<1x1x128xf32>
    %36 = vector.broadcast %35 : vector<1x1x128xf32> to vector<8x16x128xf32>
    %37 = arith.mulf %32, %36 : vector<8x16x128xf32>
    %38 = arith.addf %31, %37 : vector<8x16x128xf32>
    %39 = vector.extract_strided_slice %17 {offsets = [3, 0, 0], sizes = [8, 16, 128], strides = [1, 1, 1]} : vector<12x16x128xf32> to vector<8x16x128xf32>
    %40 = vector.extract_strided_slice %9 {offsets = [15, 0], sizes = [1, 128], strides = [1, 1]} : vector<25x128xf32> to vector<1x128xf32>
    %41 = vector.shape_cast %40 : vector<1x128xf32> to vector<128xf32>
    %42 = vector.shape_cast %41 : vector<128xf32> to vector<1x1x128xf32>
    %43 = vector.broadcast %42 : vector<1x1x128xf32> to vector<8x16x128xf32>
    %44 = arith.mulf %39, %43 : vector<8x16x128xf32>
    %45 = arith.addf %38, %44 : vector<8x16x128xf32>
    %46 = vector.extract_strided_slice %17 {offsets = [4, 0, 0], sizes = [8, 16, 128], strides = [1, 1, 1]} : vector<12x16x128xf32> to vector<8x16x128xf32>
    %47 = vector.extract_strided_slice %9 {offsets = [20, 0], sizes = [1, 128], strides = [1, 1]} : vector<25x128xf32> to vector<1x128xf32>
    %48 = vector.shape_cast %47 : vector<1x128xf32> to vector<128xf32>
    %49 = vector.shape_cast %48 : vector<128xf32> to vector<1x1x128xf32>
    %50 = vector.broadcast %49 : vector<1x1x128xf32> to vector<8x16x128xf32>
    %51 = arith.mulf %46, %50 : vector<8x16x128xf32>
    %52 = arith.addf %45, %51 : vector<8x16x128xf32>
    %c0_27 = arith.constant 0 : index
    %c1 = arith.constant 1 : index
    %c0_28 = arith.constant 0 : index
    %53 = vector.load %arg11[%c0_27, %c1, %c0_28] : memref<20x20x128xf32, #tpu.memory_space<vmem>>, vector<12x16x128xf32>
    %54 = vector.extract_strided_slice %53 {offsets = [0, 0, 0], sizes = [8, 16, 128], strides = [1, 1, 1]} : vector<12x16x128xf32> to vector<8x16x128xf32>
    %55 = vector.extract_strided_slice %9 {offsets = [1, 0], sizes = [1, 128], strides = [1, 1]} : vector<25x128xf32> to vector<1x128xf32>
    %56 = vector.shape_cast %55 : vector<1x128xf32> to vector<128xf32>
    %57 = vector.shape_cast %56 : vector<128xf32> to vector<1x1x128xf32>
    %58 = vector.broadcast %57 : vector<1x1x128xf32> to vector<8x16x128xf32>
    %59 = arith.mulf %54, %58 : vector<8x16x128xf32>
    %60 = arith.addf %52, %59 : vector<8x16x128xf32>
    %61 = vector.extract_strided_slice %53 {offsets = [1, 0, 0], sizes = [8, 16, 128], strides = [1, 1, 1]} : vector<12x16x128xf32> to vector<8x16x128xf32>
    %62 = vector.extract_strided_slice %9 {offsets = [6, 0], sizes = [1, 128], strides = [1, 1]} : vector<25x128xf32> to vector<1x128xf32>
    %63 = vector.shape_cast %62 : vector<1x128xf32> to vector<128xf32>
    %64 = vector.shape_cast %63 : vector<128xf32> to vector<1x1x128xf32>
    %65 = vector.broadcast %64 : vector<1x1x128xf32> to vector<8x16x128xf32>
    %66 = arith.mulf %61, %65 : vector<8x16x128xf32>
    %67 = arith.addf %60, %66 : vector<8x16x128xf32>
    %68 = vector.extract_strided_slice %53 {offsets = [2, 0, 0], sizes = [8, 16, 128], strides = [1, 1, 1]} : vector<12x16x128xf32> to vector<8x16x128xf32>
    %69 = vector.extract_strided_slice %9 {offsets = [11, 0], sizes = [1, 128], strides = [1, 1]} : vector<25x128xf32> to vector<1x128xf32>
    %70 = vector.shape_cast %69 : vector<1x128xf32> to vector<128xf32>
    %71 = vector.shape_cast %70 : vector<128xf32> to vector<1x1x128xf32>
    %72 = vector.broadcast %71 : vector<1x1x128xf32> to vector<8x16x128xf32>
    %73 = arith.mulf %68, %72 : vector<8x16x128xf32>
    %74 = arith.addf %67, %73 : vector<8x16x128xf32>
    %75 = vector.extract_strided_slice %53 {offsets = [3, 0, 0], sizes = [8, 16, 128], strides = [1, 1, 1]} : vector<12x16x128xf32> to vector<8x16x128xf32>
    %76 = vector.extract_strided_slice %9 {offsets = [16, 0], sizes = [1, 128], strides = [1, 1]} : vector<25x128xf32> to vector<1x128xf32>
    %77 = vector.shape_cast %76 : vector<1x128xf32> to vector<128xf32>
    %78 = vector.shape_cast %77 : vector<128xf32> to vector<1x1x128xf32>
    %79 = vector.broadcast %78 : vector<1x1x128xf32> to vector<8x16x128xf32>
    %80 = arith.mulf %75, %79 : vector<8x16x128xf32>
    %81 = arith.addf %74, %80 : vector<8x16x128xf32>
    %82 = vector.extract_strided_slice %53 {offsets = [4, 0, 0], sizes = [8, 16, 128], strides = [1, 1, 1]} : vector<12x16x128xf32> to vector<8x16x128xf32>
    %83 = vector.extract_strided_slice %9 {offsets = [21, 0], sizes = [1, 128], strides = [1, 1]} : vector<25x128xf32> to vector<1x128xf32>
    %84 = vector.shape_cast %83 : vector<1x128xf32> to vector<128xf32>
    %85 = vector.shape_cast %84 : vector<128xf32> to vector<1x1x128xf32>
    %86 = vector.broadcast %85 : vector<1x1x128xf32> to vector<8x16x128xf32>
    %87 = arith.mulf %82, %86 : vector<8x16x128xf32>
    %88 = arith.addf %81, %87 : vector<8x16x128xf32>
    %c0_29 = arith.constant 0 : index
    %c2_30 = arith.constant 2 : index
    %c0_31 = arith.constant 0 : index
    %89 = vector.load %arg11[%c0_29, %c2_30, %c0_31] : memref<20x20x128xf32, #tpu.memory_space<vmem>>, vector<12x16x128xf32>
    %90 = vector.extract_strided_slice %89 {offsets = [0, 0, 0], sizes = [8, 16, 128], strides = [1, 1, 1]} : vector<12x16x128xf32> to vector<8x16x128xf32>
    %91 = vector.extract_strided_slice %9 {offsets = [2, 0], sizes = [1, 128], strides = [1, 1]} : vector<25x128xf32> to vector<1x128xf32>
    %92 = vector.shape_cast %91 : vector<1x128xf32> to vector<128xf32>
    %93 = vector.shape_cast %92 : vector<128xf32> to vector<1x1x128xf32>
    %94 = vector.broadcast %93 : vector<1x1x128xf32> to vector<8x16x128xf32>
    %95 = arith.mulf %90, %94 : vector<8x16x128xf32>
    %96 = arith.addf %88, %95 : vector<8x16x128xf32>
    %97 = vector.extract_strided_slice %89 {offsets = [1, 0, 0], sizes = [8, 16, 128], strides = [1, 1, 1]} : vector<12x16x128xf32> to vector<8x16x128xf32>
    %98 = vector.extract_strided_slice %9 {offsets = [7, 0], sizes = [1, 128], strides = [1, 1]} : vector<25x128xf32> to vector<1x128xf32>
    %99 = vector.shape_cast %98 : vector<1x128xf32> to vector<128xf32>
    %100 = vector.shape_cast %99 : vector<128xf32> to vector<1x1x128xf32>
    %101 = vector.broadcast %100 : vector<1x1x128xf32> to vector<8x16x128xf32>
    %102 = arith.mulf %97, %101 : vector<8x16x128xf32>
    %103 = arith.addf %96, %102 : vector<8x16x128xf32>
    %104 = vector.extract_strided_slice %89 {offsets = [2, 0, 0], sizes = [8, 16, 128], strides = [1, 1, 1]} : vector<12x16x128xf32> to vector<8x16x128xf32>
    %105 = vector.extract_strided_slice %9 {offsets = [12, 0], sizes = [1, 128], strides = [1, 1]} : vector<25x128xf32> to vector<1x128xf32>
    %106 = vector.shape_cast %105 : vector<1x128xf32> to vector<128xf32>
    %107 = vector.shape_cast %106 : vector<128xf32> to vector<1x1x128xf32>
    %108 = vector.broadcast %107 : vector<1x1x128xf32> to vector<8x16x128xf32>
    %109 = arith.mulf %104, %108 : vector<8x16x128xf32>
    %110 = arith.addf %103, %109 : vector<8x16x128xf32>
    %111 = vector.extract_strided_slice %89 {offsets = [3, 0, 0], sizes = [8, 16, 128], strides = [1, 1, 1]} : vector<12x16x128xf32> to vector<8x16x128xf32>
    %112 = vector.extract_strided_slice %9 {offsets = [17, 0], sizes = [1, 128], strides = [1, 1]} : vector<25x128xf32> to vector<1x128xf32>
    %113 = vector.shape_cast %112 : vector<1x128xf32> to vector<128xf32>
    %114 = vector.shape_cast %113 : vector<128xf32> to vector<1x1x128xf32>
    %115 = vector.broadcast %114 : vector<1x1x128xf32> to vector<8x16x128xf32>
    %116 = arith.mulf %111, %115 : vector<8x16x128xf32>
    %117 = arith.addf %110, %116 : vector<8x16x128xf32>
    %118 = vector.extract_strided_slice %89 {offsets = [4, 0, 0], sizes = [8, 16, 128], strides = [1, 1, 1]} : vector<12x16x128xf32> to vector<8x16x128xf32>
    %119 = vector.extract_strided_slice %9 {offsets = [22, 0], sizes = [1, 128], strides = [1, 1]} : vector<25x128xf32> to vector<1x128xf32>
    %120 = vector.shape_cast %119 : vector<1x128xf32> to vector<128xf32>
    %121 = vector.shape_cast %120 : vector<128xf32> to vector<1x1x128xf32>
    %122 = vector.broadcast %121 : vector<1x1x128xf32> to vector<8x16x128xf32>
    %123 = arith.mulf %118, %122 : vector<8x16x128xf32>
    %124 = arith.addf %117, %123 : vector<8x16x128xf32>
    %c0_32 = arith.constant 0 : index
    %c3 = arith.constant 3 : index
    %c0_33 = arith.constant 0 : index
    %125 = vector.load %arg11[%c0_32, %c3, %c0_33] : memref<20x20x128xf32, #tpu.memory_space<vmem>>, vector<12x16x128xf32>
    %126 = vector.extract_strided_slice %125 {offsets = [0, 0, 0], sizes = [8, 16, 128], strides = [1, 1, 1]} : vector<12x16x128xf32> to vector<8x16x128xf32>
    %127 = vector.extract_strided_slice %9 {offsets = [3, 0], sizes = [1, 128], strides = [1, 1]} : vector<25x128xf32> to vector<1x128xf32>
    %128 = vector.shape_cast %127 : vector<1x128xf32> to vector<128xf32>
    %129 = vector.shape_cast %128 : vector<128xf32> to vector<1x1x128xf32>
    %130 = vector.broadcast %129 : vector<1x1x128xf32> to vector<8x16x128xf32>
    %131 = arith.mulf %126, %130 : vector<8x16x128xf32>
    %132 = arith.addf %124, %131 : vector<8x16x128xf32>
    %133 = vector.extract_strided_slice %125 {offsets = [1, 0, 0], sizes = [8, 16, 128], strides = [1, 1, 1]} : vector<12x16x128xf32> to vector<8x16x128xf32>
    %134 = vector.extract_strided_slice %9 {offsets = [8, 0], sizes = [1, 128], strides = [1, 1]} : vector<25x128xf32> to vector<1x128xf32>
    %135 = vector.shape_cast %134 : vector<1x128xf32> to vector<128xf32>
    %136 = vector.shape_cast %135 : vector<128xf32> to vector<1x1x128xf32>
    %137 = vector.broadcast %136 : vector<1x1x128xf32> to vector<8x16x128xf32>
    %138 = arith.mulf %133, %137 : vector<8x16x128xf32>
    %139 = arith.addf %132, %138 : vector<8x16x128xf32>
    %140 = vector.extract_strided_slice %125 {offsets = [2, 0, 0], sizes = [8, 16, 128], strides = [1, 1, 1]} : vector<12x16x128xf32> to vector<8x16x128xf32>
    %141 = vector.extract_strided_slice %9 {offsets = [13, 0], sizes = [1, 128], strides = [1, 1]} : vector<25x128xf32> to vector<1x128xf32>
    %142 = vector.shape_cast %141 : vector<1x128xf32> to vector<128xf32>
    %143 = vector.shape_cast %142 : vector<128xf32> to vector<1x1x128xf32>
    %144 = vector.broadcast %143 : vector<1x1x128xf32> to vector<8x16x128xf32>
    %145 = arith.mulf %140, %144 : vector<8x16x128xf32>
    %146 = arith.addf %139, %145 : vector<8x16x128xf32>
    %147 = vector.extract_strided_slice %125 {offsets = [3, 0, 0], sizes = [8, 16, 128], strides = [1, 1, 1]} : vector<12x16x128xf32> to vector<8x16x128xf32>
    %148 = vector.extract_strided_slice %9 {offsets = [18, 0], sizes = [1, 128], strides = [1, 1]} : vector<25x128xf32> to vector<1x128xf32>
    %149 = vector.shape_cast %148 : vector<1x128xf32> to vector<128xf32>
    %150 = vector.shape_cast %149 : vector<128xf32> to vector<1x1x128xf32>
    %151 = vector.broadcast %150 : vector<1x1x128xf32> to vector<8x16x128xf32>
    %152 = arith.mulf %147, %151 : vector<8x16x128xf32>
    %153 = arith.addf %146, %152 : vector<8x16x128xf32>
    %154 = vector.extract_strided_slice %125 {offsets = [4, 0, 0], sizes = [8, 16, 128], strides = [1, 1, 1]} : vector<12x16x128xf32> to vector<8x16x128xf32>
    %155 = vector.extract_strided_slice %9 {offsets = [23, 0], sizes = [1, 128], strides = [1, 1]} : vector<25x128xf32> to vector<1x128xf32>
    %156 = vector.shape_cast %155 : vector<1x128xf32> to vector<128xf32>
    %157 = vector.shape_cast %156 : vector<128xf32> to vector<1x1x128xf32>
    %158 = vector.broadcast %157 : vector<1x1x128xf32> to vector<8x16x128xf32>
    %159 = arith.mulf %154, %158 : vector<8x16x128xf32>
    %160 = arith.addf %153, %159 : vector<8x16x128xf32>
    %c0_34 = arith.constant 0 : index
    %c4 = arith.constant 4 : index
    %c0_35 = arith.constant 0 : index
    %161 = vector.load %arg11[%c0_34, %c4, %c0_35] : memref<20x20x128xf32, #tpu.memory_space<vmem>>, vector<12x16x128xf32>
    %162 = vector.extract_strided_slice %161 {offsets = [0, 0, 0], sizes = [8, 16, 128], strides = [1, 1, 1]} : vector<12x16x128xf32> to vector<8x16x128xf32>
    %163 = vector.extract_strided_slice %9 {offsets = [4, 0], sizes = [1, 128], strides = [1, 1]} : vector<25x128xf32> to vector<1x128xf32>
    %164 = vector.shape_cast %163 : vector<1x128xf32> to vector<128xf32>
    %165 = vector.shape_cast %164 : vector<128xf32> to vector<1x1x128xf32>
    %166 = vector.broadcast %165 : vector<1x1x128xf32> to vector<8x16x128xf32>
    %167 = arith.mulf %162, %166 : vector<8x16x128xf32>
    %168 = arith.addf %160, %167 : vector<8x16x128xf32>
    %169 = vector.extract_strided_slice %161 {offsets = [1, 0, 0], sizes = [8, 16, 128], strides = [1, 1, 1]} : vector<12x16x128xf32> to vector<8x16x128xf32>
    %170 = vector.extract_strided_slice %9 {offsets = [9, 0], sizes = [1, 128], strides = [1, 1]} : vector<25x128xf32> to vector<1x128xf32>
    %171 = vector.shape_cast %170 : vector<1x128xf32> to vector<128xf32>
    %172 = vector.shape_cast %171 : vector<128xf32> to vector<1x1x128xf32>
    %173 = vector.broadcast %172 : vector<1x1x128xf32> to vector<8x16x128xf32>
    %174 = arith.mulf %169, %173 : vector<8x16x128xf32>
    %175 = arith.addf %168, %174 : vector<8x16x128xf32>
    %176 = vector.extract_strided_slice %161 {offsets = [2, 0, 0], sizes = [8, 16, 128], strides = [1, 1, 1]} : vector<12x16x128xf32> to vector<8x16x128xf32>
    %177 = vector.extract_strided_slice %9 {offsets = [14, 0], sizes = [1, 128], strides = [1, 1]} : vector<25x128xf32> to vector<1x128xf32>
    %178 = vector.shape_cast %177 : vector<1x128xf32> to vector<128xf32>
    %179 = vector.shape_cast %178 : vector<128xf32> to vector<1x1x128xf32>
    %180 = vector.broadcast %179 : vector<1x1x128xf32> to vector<8x16x128xf32>
    %181 = arith.mulf %176, %180 : vector<8x16x128xf32>
    %182 = arith.addf %175, %181 : vector<8x16x128xf32>
    %183 = vector.extract_strided_slice %161 {offsets = [3, 0, 0], sizes = [8, 16, 128], strides = [1, 1, 1]} : vector<12x16x128xf32> to vector<8x16x128xf32>
    %184 = vector.extract_strided_slice %9 {offsets = [19, 0], sizes = [1, 128], strides = [1, 1]} : vector<25x128xf32> to vector<1x128xf32>
    %185 = vector.shape_cast %184 : vector<1x128xf32> to vector<128xf32>
    %186 = vector.shape_cast %185 : vector<128xf32> to vector<1x1x128xf32>
    %187 = vector.broadcast %186 : vector<1x1x128xf32> to vector<8x16x128xf32>
    %188 = arith.mulf %183, %187 : vector<8x16x128xf32>
    %189 = arith.addf %182, %188 : vector<8x16x128xf32>
    %190 = vector.extract_strided_slice %161 {offsets = [4, 0, 0], sizes = [8, 16, 128], strides = [1, 1, 1]} : vector<12x16x128xf32> to vector<8x16x128xf32>
    %191 = vector.extract_strided_slice %9 {offsets = [24, 0], sizes = [1, 128], strides = [1, 1]} : vector<25x128xf32> to vector<1x128xf32>
    %192 = vector.shape_cast %191 : vector<1x128xf32> to vector<128xf32>
    %193 = vector.shape_cast %192 : vector<128xf32> to vector<1x1x128xf32>
    %194 = vector.broadcast %193 : vector<1x1x128xf32> to vector<8x16x128xf32>
    %195 = arith.mulf %190, %194 : vector<8x16x128xf32>
    %196 = arith.addf %189, %195 : vector<8x16x128xf32>
    %197 = vector.broadcast %12 : vector<1x1x128xf32> to vector<8x16x128xf32>
    %198 = arith.mulf %196, %197 : vector<8x16x128xf32>
    %199 = vector.broadcast %15 : vector<1x1x128xf32> to vector<8x16x128xf32>
    %200 = arith.addf %198, %199 : vector<8x16x128xf32>
    %201 = arith.negf %200 : vector<8x16x128xf32>
    %202 = math.exp %201 : vector<8x16x128xf32>
    %cst_36 = arith.constant 1.000000e+00 : f32
    %203 = vector.broadcast %cst_36 : f32 to vector<8x16x128xf32>
    %204 = arith.addf %203, %202 : vector<8x16x128xf32>
    %205 = arith.divf %203, %204 : vector<8x16x128xf32>
    %206 = arith.mulf %200, %205 : vector<8x16x128xf32>
    %c0_37 = arith.constant 0 : index
    %c0_38 = arith.constant 0 : index
    %c0_39 = arith.constant 0 : index
    %c0_40 = arith.constant 0 : index
    %207 = vector.load %arg9[%c0_37, %c0_38, %c0_39, %c0_40] : memref<1x16x16x128xf32, #tpu.memory_space<vmem>>, vector<1x8x16x128xf32>
    %208 = vector.shape_cast %207 : vector<1x8x16x128xf32> to vector<8x16x128xf32>
    %209 = vector.shape_cast %206 : vector<8x16x128xf32> to vector<1x8x16x128xf32>
    tpu.vector_store %arg9[%c0_37, %c0_38, %c0_39, %c0_40], %209 {strides = array<i32>} : memref<1x16x16x128xf32, #tpu.memory_space<vmem>>, vector<1x8x16x128xf32>,
    %cst_41 = arith.constant 0.000000e+00 : f32
    %210 = vector.broadcast %cst_41 : f32 to vector<8x16x128xf32>
    %c8 = arith.constant 8 : index
    %c0_42 = arith.constant 0 : index
    %c0_43 = arith.constant 0 : index
    %211 = vector.load %arg11[%c8, %c0_42, %c0_43] : memref<20x20x128xf32, #tpu.memory_space<vmem>>, vector<12x16x128xf32>
    %212 = vector.extract_strided_slice %211 {offsets = [0, 0, 0], sizes = [8, 16, 128], strides = [1, 1, 1]} : vector<12x16x128xf32> to vector<8x16x128xf32>
    %213 = vector.extract_strided_slice %9 {offsets = [0, 0], sizes = [1, 128], strides = [1, 1]} : vector<25x128xf32> to vector<1x128xf32>
    %214 = vector.shape_cast %213 : vector<1x128xf32> to vector<128xf32>
    %215 = vector.shape_cast %214 : vector<128xf32> to vector<1x1x128xf32>
    %216 = vector.broadcast %215 : vector<1x1x128xf32> to vector<8x16x128xf32>
    %217 = arith.mulf %212, %216 : vector<8x16x128xf32>
    %218 = arith.addf %210, %217 : vector<8x16x128xf32>
    %219 = vector.extract_strided_slice %211 {offsets = [1, 0, 0], sizes = [8, 16, 128], strides = [1, 1, 1]} : vector<12x16x128xf32> to vector<8x16x128xf32>
    %220 = vector.extract_strided_slice %9 {offsets = [5, 0], sizes = [1, 128], strides = [1, 1]} : vector<25x128xf32> to vector<1x128xf32>
    %221 = vector.shape_cast %220 : vector<1x128xf32> to vector<128xf32>
    %222 = vector.shape_cast %221 : vector<128xf32> to vector<1x1x128xf32>
    %223 = vector.broadcast %222 : vector<1x1x128xf32> to vector<8x16x128xf32>
    %224 = arith.mulf %219, %223 : vector<8x16x128xf32>
    %225 = arith.addf %218, %224 : vector<8x16x128xf32>
    %226 = vector.extract_strided_slice %211 {offsets = [2, 0, 0], sizes = [8, 16, 128], strides = [1, 1, 1]} : vector<12x16x128xf32> to vector<8x16x128xf32>
    %227 = vector.extract_strided_slice %9 {offsets = [10, 0], sizes = [1, 128], strides = [1, 1]} : vector<25x128xf32> to vector<1x128xf32>
    %228 = vector.shape_cast %227 : vector<1x128xf32> to vector<128xf32>
    %229 = vector.shape_cast %228 : vector<128xf32> to vector<1x1x128xf32>
    %230 = vector.broadcast %229 : vector<1x1x128xf32> to vector<8x16x128xf32>
    %231 = arith.mulf %226, %230 : vector<8x16x128xf32>
    %232 = arith.addf %225, %231 : vector<8x16x128xf32>
    %233 = vector.extract_strided_slice %211 {offsets = [3, 0, 0], sizes = [8, 16, 128], strides = [1, 1, 1]} : vector<12x16x128xf32> to vector<8x16x128xf32>
    %234 = vector.extract_strided_slice %9 {offsets = [15, 0], sizes = [1, 128], strides = [1, 1]} : vector<25x128xf32> to vector<1x128xf32>
    %235 = vector.shape_cast %234 : vector<1x128xf32> to vector<128xf32>
    %236 = vector.shape_cast %235 : vector<128xf32> to vector<1x1x128xf32>
    %237 = vector.broadcast %236 : vector<1x1x128xf32> to vector<8x16x128xf32>
    %238 = arith.mulf %233, %237 : vector<8x16x128xf32>
    %239 = arith.addf %232, %238 : vector<8x16x128xf32>
    %240 = vector.extract_strided_slice %211 {offsets = [4, 0, 0], sizes = [8, 16, 128], strides = [1, 1, 1]} : vector<12x16x128xf32> to vector<8x16x128xf32>
    %241 = vector.extract_strided_slice %9 {offsets = [20, 0], sizes = [1, 128], strides = [1, 1]} : vector<25x128xf32> to vector<1x128xf32>
    %242 = vector.shape_cast %241 : vector<1x128xf32> to vector<128xf32>
    %243 = vector.shape_cast %242 : vector<128xf32> to vector<1x1x128xf32>
    %244 = vector.broadcast %243 : vector<1x1x128xf32> to vector<8x16x128xf32>
    %245 = arith.mulf %240, %244 : vector<8x16x128xf32>
    %246 = arith.addf %239, %245 : vector<8x16x128xf32>
    %c8_44 = arith.constant 8 : index
    %c1_45 = arith.constant 1 : index
    %c0_46 = arith.constant 0 : index
    %247 = vector.load %arg11[%c8_44, %c1_45, %c0_46] : memref<20x20x128xf32, #tpu.memory_space<vmem>>, vector<12x16x128xf32>
    %248 = vector.extract_strided_slice %247 {offsets = [0, 0, 0], sizes = [8, 16, 128], strides = [1, 1, 1]} : vector<12x16x128xf32> to vector<8x16x128xf32>
    %249 = vector.extract_strided_slice %9 {offsets = [1, 0], sizes = [1, 128], strides = [1, 1]} : vector<25x128xf32> to vector<1x128xf32>
    %250 = vector.shape_cast %249 : vector<1x128xf32> to vector<128xf32>
    %251 = vector.shape_cast %250 : vector<128xf32> to vector<1x1x128xf32>
    %252 = vector.broadcast %251 : vector<1x1x128xf32> to vector<8x16x128xf32>
    %253 = arith.mulf %248, %252 : vector<8x16x128xf32>
    %254 = arith.addf %246, %253 : vector<8x16x128xf32>
    %255 = vector.extract_strided_slice %247 {offsets = [1, 0, 0], sizes = [8, 16, 128], strides = [1, 1, 1]} : vector<12x16x128xf32> to vector<8x16x128xf32>
    %256 = vector.extract_strided_slice %9 {offsets = [6, 0], sizes = [1, 128], strides = [1, 1]} : vector<25x128xf32> to vector<1x128xf32>
    %257 = vector.shape_cast %256 : vector<1x128xf32> to vector<128xf32>
    %258 = vector.shape_cast %257 : vector<128xf32> to vector<1x1x128xf32>
    %259 = vector.broadcast %258 : vector<1x1x128xf32> to vector<8x16x128xf32>
    %260 = arith.mulf %255, %259 : vector<8x16x128xf32>
    %261 = arith.addf %254, %260 : vector<8x16x128xf32>
    %262 = vector.extract_strided_slice %247 {offsets = [2, 0, 0], sizes = [8, 16, 128], strides = [1, 1, 1]} : vector<12x16x128xf32> to vector<8x16x128xf32>
    %263 = vector.extract_strided_slice %9 {offsets = [11, 0], sizes = [1, 128], strides = [1, 1]} : vector<25x128xf32> to vector<1x128xf32>
    %264 = vector.shape_cast %263 : vector<1x128xf32> to vector<128xf32>
    %265 = vector.shape_cast %264 : vector<128xf32> to vector<1x1x128xf32>
    %266 = vector.broadcast %265 : vector<1x1x128xf32> to vector<8x16x128xf32>
    %267 = arith.mulf %262, %266 : vector<8x16x128xf32>
    %268 = arith.addf %261, %267 : vector<8x16x128xf32>
    %269 = vector.extract_strided_slice %247 {offsets = [3, 0, 0], sizes = [8, 16, 128], strides = [1, 1, 1]} : vector<12x16x128xf32> to vector<8x16x128xf32>
    %270 = vector.extract_strided_slice %9 {offsets = [16, 0], sizes = [1, 128], strides = [1, 1]} : vector<25x128xf32> to vector<1x128xf32>
    %271 = vector.shape_cast %270 : vector<1x128xf32> to vector<128xf32>
    %272 = vector.shape_cast %271 : vector<128xf32> to vector<1x1x128xf32>
    %273 = vector.broadcast %272 : vector<1x1x128xf32> to vector<8x16x128xf32>
    %274 = arith.mulf %269, %273 : vector<8x16x128xf32>
    %275 = arith.addf %268, %274 : vector<8x16x128xf32>
    %276 = vector.extract_strided_slice %247 {offsets = [4, 0, 0], sizes = [8, 16, 128], strides = [1, 1, 1]} : vector<12x16x128xf32> to vector<8x16x128xf32>
    %277 = vector.extract_strided_slice %9 {offsets = [21, 0], sizes = [1, 128], strides = [1, 1]} : vector<25x128xf32> to vector<1x128xf32>
    %278 = vector.shape_cast %277 : vector<1x128xf32> to vector<128xf32>
    %279 = vector.shape_cast %278 : vector<128xf32> to vector<1x1x128xf32>
    %280 = vector.broadcast %279 : vector<1x1x128xf32> to vector<8x16x128xf32>
    %281 = arith.mulf %276, %280 : vector<8x16x128xf32>
    %282 = arith.addf %275, %281 : vector<8x16x128xf32>
    %c8_47 = arith.constant 8 : index
    %c2_48 = arith.constant 2 : index
    %c0_49 = arith.constant 0 : index
    %283 = vector.load %arg11[%c8_47, %c2_48, %c0_49] : memref<20x20x128xf32, #tpu.memory_space<vmem>>, vector<12x16x128xf32>
    %284 = vector.extract_strided_slice %283 {offsets = [0, 0, 0], sizes = [8, 16, 128], strides = [1, 1, 1]} : vector<12x16x128xf32> to vector<8x16x128xf32>
    %285 = vector.extract_strided_slice %9 {offsets = [2, 0], sizes = [1, 128], strides = [1, 1]} : vector<25x128xf32> to vector<1x128xf32>
    %286 = vector.shape_cast %285 : vector<1x128xf32> to vector<128xf32>
    %287 = vector.shape_cast %286 : vector<128xf32> to vector<1x1x128xf32>
    %288 = vector.broadcast %287 : vector<1x1x128xf32> to vector<8x16x128xf32>
    %289 = arith.mulf %284, %288 : vector<8x16x128xf32>
    %290 = arith.addf %282, %289 : vector<8x16x128xf32>
    %291 = vector.extract_strided_slice %283 {offsets = [1, 0, 0], sizes = [8, 16, 128], strides = [1, 1, 1]} : vector<12x16x128xf32> to vector<8x16x128xf32>
    %292 = vector.extract_strided_slice %9 {offsets = [7, 0], sizes = [1, 128], strides = [1, 1]} : vector<25x128xf32> to vector<1x128xf32>
    %293 = vector.shape_cast %292 : vector<1x128xf32> to vector<128xf32>
    %294 = vector.shape_cast %293 : vector<128xf32> to vector<1x1x128xf32>
    %295 = vector.broadcast %294 : vector<1x1x128xf32> to vector<8x16x128xf32>
    %296 = arith.mulf %291, %295 : vector<8x16x128xf32>
    %297 = arith.addf %290, %296 : vector<8x16x128xf32>
    %298 = vector.extract_strided_slice %283 {offsets = [2, 0, 0], sizes = [8, 16, 128], strides = [1, 1, 1]} : vector<12x16x128xf32> to vector<8x16x128xf32>
    %299 = vector.extract_strided_slice %9 {offsets = [12, 0], sizes = [1, 128], strides = [1, 1]} : vector<25x128xf32> to vector<1x128xf32>
    %300 = vector.shape_cast %299 : vector<1x128xf32> to vector<128xf32>
    %301 = vector.shape_cast %300 : vector<128xf32> to vector<1x1x128xf32>
    %302 = vector.broadcast %301 : vector<1x1x128xf32> to vector<8x16x128xf32>
    %303 = arith.mulf %298, %302 : vector<8x16x128xf32>
    %304 = arith.addf %297, %303 : vector<8x16x128xf32>
    %305 = vector.extract_strided_slice %283 {offsets = [3, 0, 0], sizes = [8, 16, 128], strides = [1, 1, 1]} : vector<12x16x128xf32> to vector<8x16x128xf32>
    %306 = vector.extract_strided_slice %9 {offsets = [17, 0], sizes = [1, 128], strides = [1, 1]} : vector<25x128xf32> to vector<1x128xf32>
    %307 = vector.shape_cast %306 : vector<1x128xf32> to vector<128xf32>
    %308 = vector.shape_cast %307 : vector<128xf32> to vector<1x1x128xf32>
    %309 = vector.broadcast %308 : vector<1x1x128xf32> to vector<8x16x128xf32>
    %310 = arith.mulf %305, %309 : vector<8x16x128xf32>
    %311 = arith.addf %304, %310 : vector<8x16x128xf32>
    %312 = vector.extract_strided_slice %283 {offsets = [4, 0, 0], sizes = [8, 16, 128], strides = [1, 1, 1]} : vector<12x16x128xf32> to vector<8x16x128xf32>
    %313 = vector.extract_strided_slice %9 {offsets = [22, 0], sizes = [1, 128], strides = [1, 1]} : vector<25x128xf32> to vector<1x128xf32>
    %314 = vector.shape_cast %313 : vector<1x128xf32> to vector<128xf32>
    %315 = vector.shape_cast %314 : vector<128xf32> to vector<1x1x128xf32>
    %316 = vector.broadcast %315 : vector<1x1x128xf32> to vector<8x16x128xf32>
    %317 = arith.mulf %312, %316 : vector<8x16x128xf32>
    %318 = arith.addf %311, %317 : vector<8x16x128xf32>
    %c8_50 = arith.constant 8 : index
    %c3_51 = arith.constant 3 : index
    %c0_52 = arith.constant 0 : index
    %319 = vector.load %arg11[%c8_50, %c3_51, %c0_52] : memref<20x20x128xf32, #tpu.memory_space<vmem>>, vector<12x16x128xf32>
    %320 = vector.extract_strided_slice %319 {offsets = [0, 0, 0], sizes = [8, 16, 128], strides = [1, 1, 1]} : vector<12x16x128xf32> to vector<8x16x128xf32>
    %321 = vector.extract_strided_slice %9 {offsets = [3, 0], sizes = [1, 128], strides = [1, 1]} : vector<25x128xf32> to vector<1x128xf32>
    %322 = vector.shape_cast %321 : vector<1x128xf32> to vector<128xf32>
    %323 = vector.shape_cast %322 : vector<128xf32> to vector<1x1x128xf32>
    %324 = vector.broadcast %323 : vector<1x1x128xf32> to vector<8x16x128xf32>
    %325 = arith.mulf %320, %324 : vector<8x16x128xf32>
    %326 = arith.addf %318, %325 : vector<8x16x128xf32>
    %327 = vector.extract_strided_slice %319 {offsets = [1, 0, 0], sizes = [8, 16, 128], strides = [1, 1, 1]} : vector<12x16x128xf32> to vector<8x16x128xf32>
    %328 = vector.extract_strided_slice %9 {offsets = [8, 0], sizes = [1, 128], strides = [1, 1]} : vector<25x128xf32> to vector<1x128xf32>
    %329 = vector.shape_cast %328 : vector<1x128xf32> to vector<128xf32>
    %330 = vector.shape_cast %329 : vector<128xf32> to vector<1x1x128xf32>
    %331 = vector.broadcast %330 : vector<1x1x128xf32> to vector<8x16x128xf32>
    %332 = arith.mulf %327, %331 : vector<8x16x128xf32>
    %333 = arith.addf %326, %332 : vector<8x16x128xf32>
    %334 = vector.extract_strided_slice %319 {offsets = [2, 0, 0], sizes = [8, 16, 128], strides = [1, 1, 1]} : vector<12x16x128xf32> to vector<8x16x128xf32>
    %335 = vector.extract_strided_slice %9 {offsets = [13, 0], sizes = [1, 128], strides = [1, 1]} : vector<25x128xf32> to vector<1x128xf32>
    %336 = vector.shape_cast %335 : vector<1x128xf32> to vector<128xf32>
    %337 = vector.shape_cast %336 : vector<128xf32> to vector<1x1x128xf32>
    %338 = vector.broadcast %337 : vector<1x1x128xf32> to vector<8x16x128xf32>
    %339 = arith.mulf %334, %338 : vector<8x16x128xf32>
    %340 = arith.addf %333, %339 : vector<8x16x128xf32>
    %341 = vector.extract_strided_slice %319 {offsets = [3, 0, 0], sizes = [8, 16, 128], strides = [1, 1, 1]} : vector<12x16x128xf32> to vector<8x16x128xf32>
    %342 = vector.extract_strided_slice %9 {offsets = [18, 0], sizes = [1, 128], strides = [1, 1]} : vector<25x128xf32> to vector<1x128xf32>
    %343 = vector.shape_cast %342 : vector<1x128xf32> to vector<128xf32>
    %344 = vector.shape_cast %343 : vector<128xf32> to vector<1x1x128xf32>
    %345 = vector.broadcast %344 : vector<1x1x128xf32> to vector<8x16x128xf32>
    %346 = arith.mulf %341, %345 : vector<8x16x128xf32>
    %347 = arith.addf %340, %346 : vector<8x16x128xf32>
    %348 = vector.extract_strided_slice %319 {offsets = [4, 0, 0], sizes = [8, 16, 128], strides = [1, 1, 1]} : vector<12x16x128xf32> to vector<8x16x128xf32>
    %349 = vector.extract_strided_slice %9 {offsets = [23, 0], sizes = [1, 128], strides = [1, 1]} : vector<25x128xf32> to vector<1x128xf32>
    %350 = vector.shape_cast %349 : vector<1x128xf32> to vector<128xf32>
    %351 = vector.shape_cast %350 : vector<128xf32> to vector<1x1x128xf32>
    %352 = vector.broadcast %351 : vector<1x1x128xf32> to vector<8x16x128xf32>
    %353 = arith.mulf %348, %352 : vector<8x16x128xf32>
    %354 = arith.addf %347, %353 : vector<8x16x128xf32>
    %c8_53 = arith.constant 8 : index
    %c4_54 = arith.constant 4 : index
    %c0_55 = arith.constant 0 : index
    %355 = vector.load %arg11[%c8_53, %c4_54, %c0_55] : memref<20x20x128xf32, #tpu.memory_space<vmem>>, vector<12x16x128xf32>
    %356 = vector.extract_strided_slice %355 {offsets = [0, 0, 0], sizes = [8, 16, 128], strides = [1, 1, 1]} : vector<12x16x128xf32> to vector<8x16x128xf32>
    %357 = vector.extract_strided_slice %9 {offsets = [4, 0], sizes = [1, 128], strides = [1, 1]} : vector<25x128xf32> to vector<1x128xf32>
    %358 = vector.shape_cast %357 : vector<1x128xf32> to vector<128xf32>
    %359 = vector.shape_cast %358 : vector<128xf32> to vector<1x1x128xf32>
    %360 = vector.broadcast %359 : vector<1x1x128xf32> to vector<8x16x128xf32>
    %361 = arith.mulf %356, %360 : vector<8x16x128xf32>
    %362 = arith.addf %354, %361 : vector<8x16x128xf32>
    %363 = vector.extract_strided_slice %355 {offsets = [1, 0, 0], sizes = [8, 16, 128], strides = [1, 1, 1]} : vector<12x16x128xf32> to vector<8x16x128xf32>
    %364 = vector.extract_strided_slice %9 {offsets = [9, 0], sizes = [1, 128], strides = [1, 1]} : vector<25x128xf32> to vector<1x128xf32>
    %365 = vector.shape_cast %364 : vector<1x128xf32> to vector<128xf32>
    %366 = vector.shape_cast %365 : vector<128xf32> to vector<1x1x128xf32>
    %367 = vector.broadcast %366 : vector<1x1x128xf32> to vector<8x16x128xf32>
    %368 = arith.mulf %363, %367 : vector<8x16x128xf32>
    %369 = arith.addf %362, %368 : vector<8x16x128xf32>
    %370 = vector.extract_strided_slice %355 {offsets = [2, 0, 0], sizes = [8, 16, 128], strides = [1, 1, 1]} : vector<12x16x128xf32> to vector<8x16x128xf32>
    %371 = vector.extract_strided_slice %9 {offsets = [14, 0], sizes = [1, 128], strides = [1, 1]} : vector<25x128xf32> to vector<1x128xf32>
    %372 = vector.shape_cast %371 : vector<1x128xf32> to vector<128xf32>
    %373 = vector.shape_cast %372 : vector<128xf32> to vector<1x1x128xf32>
    %374 = vector.broadcast %373 : vector<1x1x128xf32> to vector<8x16x128xf32>
    %375 = arith.mulf %370, %374 : vector<8x16x128xf32>
    %376 = arith.addf %369, %375 : vector<8x16x128xf32>
    %377 = vector.extract_strided_slice %355 {offsets = [3, 0, 0], sizes = [8, 16, 128], strides = [1, 1, 1]} : vector<12x16x128xf32> to vector<8x16x128xf32>
    %378 = vector.extract_strided_slice %9 {offsets = [19, 0], sizes = [1, 128], strides = [1, 1]} : vector<25x128xf32> to vector<1x128xf32>
    %379 = vector.shape_cast %378 : vector<1x128xf32> to vector<128xf32>
    %380 = vector.shape_cast %379 : vector<128xf32> to vector<1x1x128xf32>
    %381 = vector.broadcast %380 : vector<1x1x128xf32> to vector<8x16x128xf32>
    %382 = arith.mulf %377, %381 : vector<8x16x128xf32>
    %383 = arith.addf %376, %382 : vector<8x16x128xf32>
    %384 = vector.extract_strided_slice %355 {offsets = [4, 0, 0], sizes = [8, 16, 128], strides = [1, 1, 1]} : vector<12x16x128xf32> to vector<8x16x128xf32>
    %385 = vector.extract_strided_slice %9 {offsets = [24, 0], sizes = [1, 128], strides = [1, 1]} : vector<25x128xf32> to vector<1x128xf32>
    %386 = vector.shape_cast %385 : vector<1x128xf32> to vector<128xf32>
    %387 = vector.shape_cast %386 : vector<128xf32> to vector<1x1x128xf32>
    %388 = vector.broadcast %387 : vector<1x1x128xf32> to vector<8x16x128xf32>
    %389 = arith.mulf %384, %388 : vector<8x16x128xf32>
    %390 = arith.addf %383, %389 : vector<8x16x128xf32>
    %391 = vector.broadcast %12 : vector<1x1x128xf32> to vector<8x16x128xf32>
    %392 = arith.mulf %390, %391 : vector<8x16x128xf32>
    %393 = vector.broadcast %15 : vector<1x1x128xf32> to vector<8x16x128xf32>
    %394 = arith.addf %392, %393 : vector<8x16x128xf32>
    %395 = arith.negf %394 : vector<8x16x128xf32>
    %396 = math.exp %395 : vector<8x16x128xf32>
    %cst_56 = arith.constant 1.000000e+00 : f32
    %397 = vector.broadcast %cst_56 : f32 to vector<8x16x128xf32>
    %398 = arith.addf %397, %396 : vector<8x16x128xf32>
    %399 = arith.divf %397, %398 : vector<8x16x128xf32>
    %400 = arith.mulf %394, %399 : vector<8x16x128xf32>
    %c0_57 = arith.constant 0 : index
    %c8_58 = arith.constant 8 : index
    %c0_59 = arith.constant 0 : index
    %c0_60 = arith.constant 0 : index
    %401 = vector.load %arg9[%c0_57, %c8_58, %c0_59, %c0_60] : memref<1x16x16x128xf32, #tpu.memory_space<vmem>>, vector<1x8x16x128xf32>
    %402 = vector.shape_cast %401 : vector<1x8x16x128xf32> to vector<8x16x128xf32>
    %403 = vector.shape_cast %400 : vector<8x16x128xf32> to vector<1x8x16x128xf32>
    tpu.vector_store %arg9[%c0_57, %c8_58, %c0_59, %c0_60], %403 {strides = array<i32>} : memref<1x16x16x128xf32, #tpu.memory_space<vmem>>, vector<1x8x16x128xf32>,
    %cst_61 = arith.constant 0.000000e+00 : f32
    %404 = vector.broadcast %cst_61 : f32 to vector<1x18x128xf32>
    %cst_62 = arith.constant 0.000000e+00 : f32
    %405 = vector.broadcast %cst_62 : f32 to vector<16x1x128xf32>
    %c0_63 = arith.constant 0 : index
    %c0_64 = arith.constant 0 : index
    %c0_65 = arith.constant 0 : index
    %406 = vector.load %arg12[%c0_63, %c0_64, %c0_65] : memref<18x18x128xf32, #tpu.memory_space<vmem>>, vector<1x18x128xf32>
    tpu.vector_store %arg12[%c0_63, %c0_64, %c0_65], %404 {strides = array<i32>} : memref<18x18x128xf32, #tpu.memory_space<vmem>>, vector<1x18x128xf32>,
    %c17 = arith.constant 17 : index
    %c0_66 = arith.constant 0 : index
    %c0_67 = arith.constant 0 : index
    %407 = vector.load %arg12[%c17, %c0_66, %c0_67] : memref<18x18x128xf32, #tpu.memory_space<vmem>>, vector<1x18x128xf32>
    tpu.vector_store %arg12[%c17, %c0_66, %c0_67], %404 {strides = array<i32>} : memref<18x18x128xf32, #tpu.memory_space<vmem>>, vector<1x18x128xf32>,
    %c1_68 = arith.constant 1 : index
    %c0_69 = arith.constant 0 : index
    %c0_70 = arith.constant 0 : index
    %408 = vector.load %arg12[%c1_68, %c0_69, %c0_70] : memref<18x18x128xf32, #tpu.memory_space<vmem>>, vector<16x1x128xf32>
    tpu.vector_store %arg12[%c1_68, %c0_69, %c0_70], %405 {strides = array<i32>} : memref<18x18x128xf32, #tpu.memory_space<vmem>>, vector<16x1x128xf32>,
    %c1_71 = arith.constant 1 : index
    %c17_72 = arith.constant 17 : index
    %c0_73 = arith.constant 0 : index
    %409 = vector.load %arg12[%c1_71, %c17_72, %c0_73] : memref<18x18x128xf32, #tpu.memory_space<vmem>>, vector<16x1x128xf32>
    tpu.vector_store %arg12[%c1_71, %c17_72, %c0_73], %405 {strides = array<i32>} : memref<18x18x128xf32, #tpu.memory_space<vmem>>, vector<16x1x128xf32>,
    %c0_74 = arith.constant 0 : index
    %c0_75 = arith.constant 0 : index
    %c0_76 = arith.constant 0 : index
    %c0_77 = arith.constant 0 : index
    %410 = vector.load %arg2[%c0_74, %c0_75, %c0_76, %c0_77] : memref<1x16x16x128xf32, #tpu.memory_space<vmem>>, vector<1x16x16x128xf32>
    %411 = vector.shape_cast %410 : vector<1x16x16x128xf32> to vector<16x16x128xf32>
    %c1_78 = arith.constant 1 : index
    %c1_79 = arith.constant 1 : index
    %c0_80 = arith.constant 0 : index
    %412 = vector.load %arg12[%c1_78, %c1_79, %c0_80] : memref<18x18x128xf32, #tpu.memory_space<vmem>>, vector<16x16x128xf32>
    tpu.vector_store %arg12[%c1_78, %c1_79, %c0_80], %411 {strides = array<i32>} : memref<18x18x128xf32, #tpu.memory_space<vmem>>, vector<16x16x128xf32>,
    %c0_81 = arith.constant 0 : index
    %c0_82 = arith.constant 0 : index
    %413 = vector.load %arg6[%c0_81, %c0_82] : memref<9x128xf32, #tpu.memory_space<vmem>>, vector<9x128xf32>
    %c0_83 = arith.constant 0 : index
    %c0_84 = arith.constant 0 : index
    %414 = vector.load %arg7[%c0_83, %c0_84] : memref<1x128xf32, #tpu.memory_space<vmem>>, vector<1x128xf32>
    %415 = vector.shape_cast %414 : vector<1x128xf32> to vector<128xf32>
    %416 = vector.shape_cast %415 : vector<128xf32> to vector<1x1x128xf32>
    %c0_85 = arith.constant 0 : index
    %c0_86 = arith.constant 0 : index
    %417 = vector.load %arg8[%c0_85, %c0_86] : memref<1x128xf32, #tpu.memory_space<vmem>>, vector<1x128xf32>
    %418 = vector.shape_cast %417 : vector<1x128xf32> to vector<128xf32>
    %419 = vector.shape_cast %418 : vector<128xf32> to vector<1x1x128xf32>
    %cst_87 = arith.constant 0.000000e+00 : f32
    %420 = vector.broadcast %cst_87 : f32 to vector<8x16x128xf32>
    %c0_88 = arith.constant 0 : index
    %c0_89 = arith.constant 0 : index
    %c0_90 = arith.constant 0 : index
    %421 = vector.load %arg12[%c0_88, %c0_89, %c0_90] : memref<18x18x128xf32, #tpu.memory_space<vmem>>, vector<10x16x128xf32>
    %422 = vector.extract_strided_slice %421 {offsets = [0, 0, 0], sizes = [8, 16, 128], strides = [1, 1, 1]} : vector<10x16x128xf32> to vector<8x16x128xf32>
    %423 = vector.extract_strided_slice %413 {offsets = [0, 0], sizes = [1, 128], strides = [1, 1]} : vector<9x128xf32> to vector<1x128xf32>
    %424 = vector.shape_cast %423 : vector<1x128xf32> to vector<128xf32>
    %425 = vector.shape_cast %424 : vector<128xf32> to vector<1x1x128xf32>
    %426 = vector.broadcast %425 : vector<1x1x128xf32> to vector<8x16x128xf32>
    %427 = arith.mulf %422, %426 : vector<8x16x128xf32>
    %428 = arith.addf %420, %427 : vector<8x16x128xf32>
    %429 = vector.extract_strided_slice %421 {offsets = [1, 0, 0], sizes = [8, 16, 128], strides = [1, 1, 1]} : vector<10x16x128xf32> to vector<8x16x128xf32>
    %430 = vector.extract_strided_slice %413 {offsets = [3, 0], sizes = [1, 128], strides = [1, 1]} : vector<9x128xf32> to vector<1x128xf32>
    %431 = vector.shape_cast %430 : vector<1x128xf32> to vector<128xf32>
    %432 = vector.shape_cast %431 : vector<128xf32> to vector<1x1x128xf32>
    %433 = vector.broadcast %432 : vector<1x1x128xf32> to vector<8x16x128xf32>
    %434 = arith.mulf %429, %433 : vector<8x16x128xf32>
    %435 = arith.addf %428, %434 : vector<8x16x128xf32>
    %436 = vector.extract_strided_slice %421 {offsets = [2, 0, 0], sizes = [8, 16, 128], strides = [1, 1, 1]} : vector<10x16x128xf32> to vector<8x16x128xf32>
    %437 = vector.extract_strided_slice %413 {offsets = [6, 0], sizes = [1, 128], strides = [1, 1]} : vector<9x128xf32> to vector<1x128xf32>
    %438 = vector.shape_cast %437 : vector<1x128xf32> to vector<128xf32>
    %439 = vector.shape_cast %438 : vector<128xf32> to vector<1x1x128xf32>
    %440 = vector.broadcast %439 : vector<1x1x128xf32> to vector<8x16x128xf32>
    %441 = arith.mulf %436, %440 : vector<8x16x128xf32>
    %442 = arith.addf %435, %441 : vector<8x16x128xf32>
    %c0_91 = arith.constant 0 : index
    %c1_92 = arith.constant 1 : index
    %c0_93 = arith.constant 0 : index
    %443 = vector.load %arg12[%c0_91, %c1_92, %c0_93] : memref<18x18x128xf32, #tpu.memory_space<vmem>>, vector<10x16x128xf32>
    %444 = vector.extract_strided_slice %443 {offsets = [0, 0, 0], sizes = [8, 16, 128], strides = [1, 1, 1]} : vector<10x16x128xf32> to vector<8x16x128xf32>
    %445 = vector.extract_strided_slice %413 {offsets = [1, 0], sizes = [1, 128], strides = [1, 1]} : vector<9x128xf32> to vector<1x128xf32>
    %446 = vector.shape_cast %445 : vector<1x128xf32> to vector<128xf32>
    %447 = vector.shape_cast %446 : vector<128xf32> to vector<1x1x128xf32>
    %448 = vector.broadcast %447 : vector<1x1x128xf32> to vector<8x16x128xf32>
    %449 = arith.mulf %444, %448 : vector<8x16x128xf32>
    %450 = arith.addf %442, %449 : vector<8x16x128xf32>
    %451 = vector.extract_strided_slice %443 {offsets = [1, 0, 0], sizes = [8, 16, 128], strides = [1, 1, 1]} : vector<10x16x128xf32> to vector<8x16x128xf32>
    %452 = vector.extract_strided_slice %413 {offsets = [4, 0], sizes = [1, 128], strides = [1, 1]} : vector<9x128xf32> to vector<1x128xf32>
    %453 = vector.shape_cast %452 : vector<1x128xf32> to vector<128xf32>
    %454 = vector.shape_cast %453 : vector<128xf32> to vector<1x1x128xf32>
    %455 = vector.broadcast %454 : vector<1x1x128xf32> to vector<8x16x128xf32>
    %456 = arith.mulf %451, %455 : vector<8x16x128xf32>
    %457 = arith.addf %450, %456 : vector<8x16x128xf32>
    %458 = vector.extract_strided_slice %443 {offsets = [2, 0, 0], sizes = [8, 16, 128], strides = [1, 1, 1]} : vector<10x16x128xf32> to vector<8x16x128xf32>
    %459 = vector.extract_strided_slice %413 {offsets = [7, 0], sizes = [1, 128], strides = [1, 1]} : vector<9x128xf32> to vector<1x128xf32>
    %460 = vector.shape_cast %459 : vector<1x128xf32> to vector<128xf32>
    %461 = vector.shape_cast %460 : vector<128xf32> to vector<1x1x128xf32>
    %462 = vector.broadcast %461 : vector<1x1x128xf32> to vector<8x16x128xf32>
    %463 = arith.mulf %458, %462 : vector<8x16x128xf32>
    %464 = arith.addf %457, %463 : vector<8x16x128xf32>
    %c0_94 = arith.constant 0 : index
    %c2_95 = arith.constant 2 : index
    %c0_96 = arith.constant 0 : index
    %465 = vector.load %arg12[%c0_94, %c2_95, %c0_96] : memref<18x18x128xf32, #tpu.memory_space<vmem>>, vector<10x16x128xf32>
    %466 = vector.extract_strided_slice %465 {offsets = [0, 0, 0], sizes = [8, 16, 128], strides = [1, 1, 1]} : vector<10x16x128xf32> to vector<8x16x128xf32>
    %467 = vector.extract_strided_slice %413 {offsets = [2, 0], sizes = [1, 128], strides = [1, 1]} : vector<9x128xf32> to vector<1x128xf32>
    %468 = vector.shape_cast %467 : vector<1x128xf32> to vector<128xf32>
    %469 = vector.shape_cast %468 : vector<128xf32> to vector<1x1x128xf32>
    %470 = vector.broadcast %469 : vector<1x1x128xf32> to vector<8x16x128xf32>
    %471 = arith.mulf %466, %470 : vector<8x16x128xf32>
    %472 = arith.addf %464, %471 : vector<8x16x128xf32>
    %473 = vector.extract_strided_slice %465 {offsets = [1, 0, 0], sizes = [8, 16, 128], strides = [1, 1, 1]} : vector<10x16x128xf32> to vector<8x16x128xf32>
    %474 = vector.extract_strided_slice %413 {offsets = [5, 0], sizes = [1, 128], strides = [1, 1]} : vector<9x128xf32> to vector<1x128xf32>
    %475 = vector.shape_cast %474 : vector<1x128xf32> to vector<128xf32>
    %476 = vector.shape_cast %475 : vector<128xf32> to vector<1x1x128xf32>
    %477 = vector.broadcast %476 : vector<1x1x128xf32> to vector<8x16x128xf32>
    %478 = arith.mulf %473, %477 : vector<8x16x128xf32>
    %479 = arith.addf %472, %478 : vector<8x16x128xf32>
    %480 = vector.extract_strided_slice %465 {offsets = [2, 0, 0], sizes = [8, 16, 128], strides = [1, 1, 1]} : vector<10x16x128xf32> to vector<8x16x128xf32>
    %481 = vector.extract_strided_slice %413 {offsets = [8, 0], sizes = [1, 128], strides = [1, 1]} : vector<9x128xf32> to vector<1x128xf32>
    %482 = vector.shape_cast %481 : vector<1x128xf32> to vector<128xf32>
    %483 = vector.shape_cast %482 : vector<128xf32> to vector<1x1x128xf32>
    %484 = vector.broadcast %483 : vector<1x1x128xf32> to vector<8x16x128xf32>
    %485 = arith.mulf %480, %484 : vector<8x16x128xf32>
    %486 = arith.addf %479, %485 : vector<8x16x128xf32>
    %487 = vector.broadcast %416 : vector<1x1x128xf32> to vector<8x16x128xf32>
    %488 = arith.mulf %486, %487 : vector<8x16x128xf32>
    %489 = vector.broadcast %419 : vector<1x1x128xf32> to vector<8x16x128xf32>
    %490 = arith.addf %488, %489 : vector<8x16x128xf32>
    %c0_97 = arith.constant 0 : index
    %c0_98 = arith.constant 0 : index
    %c0_99 = arith.constant 0 : index
    %c0_100 = arith.constant 0 : index
    %491 = vector.load %arg10[%c0_97, %c0_98, %c0_99, %c0_100] : memref<1x16x16x128xf32, #tpu.memory_space<vmem>>, vector<1x8x16x128xf32>
    %492 = vector.shape_cast %491 : vector<1x8x16x128xf32> to vector<8x16x128xf32>
    %493 = vector.shape_cast %490 : vector<8x16x128xf32> to vector<1x8x16x128xf32>
    tpu.vector_store %arg10[%c0_97, %c0_98, %c0_99, %c0_100], %493 {strides = array<i32>} : memref<1x16x16x128xf32, #tpu.memory_space<vmem>>, vector<1x8x16x128xf32>,
    %cst_101 = arith.constant 0.000000e+00 : f32
    %494 = vector.broadcast %cst_101 : f32 to vector<8x16x128xf32>
    %c8_102 = arith.constant 8 : index
    %c0_103 = arith.constant 0 : index
    %c0_104 = arith.constant 0 : index
    %495 = vector.load %arg12[%c8_102, %c0_103, %c0_104] : memref<18x18x128xf32, #tpu.memory_space<vmem>>, vector<10x16x128xf32>
    %496 = vector.extract_strided_slice %495 {offsets = [0, 0, 0], sizes = [8, 16, 128], strides = [1, 1, 1]} : vector<10x16x128xf32> to vector<8x16x128xf32>
    %497 = vector.extract_strided_slice %413 {offsets = [0, 0], sizes = [1, 128], strides = [1, 1]} : vector<9x128xf32> to vector<1x128xf32>
    %498 = vector.shape_cast %497 : vector<1x128xf32> to vector<128xf32>
    %499 = vector.shape_cast %498 : vector<128xf32> to vector<1x1x128xf32>
    %500 = vector.broadcast %499 : vector<1x1x128xf32> to vector<8x16x128xf32>
    %501 = arith.mulf %496, %500 : vector<8x16x128xf32>
    %502 = arith.addf %494, %501 : vector<8x16x128xf32>
    %503 = vector.extract_strided_slice %495 {offsets = [1, 0, 0], sizes = [8, 16, 128], strides = [1, 1, 1]} : vector<10x16x128xf32> to vector<8x16x128xf32>
    %504 = vector.extract_strided_slice %413 {offsets = [3, 0], sizes = [1, 128], strides = [1, 1]} : vector<9x128xf32> to vector<1x128xf32>
    %505 = vector.shape_cast %504 : vector<1x128xf32> to vector<128xf32>
    %506 = vector.shape_cast %505 : vector<128xf32> to vector<1x1x128xf32>
    %507 = vector.broadcast %506 : vector<1x1x128xf32> to vector<8x16x128xf32>
    %508 = arith.mulf %503, %507 : vector<8x16x128xf32>
    %509 = arith.addf %502, %508 : vector<8x16x128xf32>
    %510 = vector.extract_strided_slice %495 {offsets = [2, 0, 0], sizes = [8, 16, 128], strides = [1, 1, 1]} : vector<10x16x128xf32> to vector<8x16x128xf32>
    %511 = vector.extract_strided_slice %413 {offsets = [6, 0], sizes = [1, 128], strides = [1, 1]} : vector<9x128xf32> to vector<1x128xf32>
    %512 = vector.shape_cast %511 : vector<1x128xf32> to vector<128xf32>
    %513 = vector.shape_cast %512 : vector<128xf32> to vector<1x1x128xf32>
    %514 = vector.broadcast %513 : vector<1x1x128xf32> to vector<8x16x128xf32>
    %515 = arith.mulf %510, %514 : vector<8x16x128xf32>
    %516 = arith.addf %509, %515 : vector<8x16x128xf32>
    %c8_105 = arith.constant 8 : index
    %c1_106 = arith.constant 1 : index
    %c0_107 = arith.constant 0 : index
    %517 = vector.load %arg12[%c8_105, %c1_106, %c0_107] : memref<18x18x128xf32, #tpu.memory_space<vmem>>, vector<10x16x128xf32>
    %518 = vector.extract_strided_slice %517 {offsets = [0, 0, 0], sizes = [8, 16, 128], strides = [1, 1, 1]} : vector<10x16x128xf32> to vector<8x16x128xf32>
    %519 = vector.extract_strided_slice %413 {offsets = [1, 0], sizes = [1, 128], strides = [1, 1]} : vector<9x128xf32> to vector<1x128xf32>
    %520 = vector.shape_cast %519 : vector<1x128xf32> to vector<128xf32>
    %521 = vector.shape_cast %520 : vector<128xf32> to vector<1x1x128xf32>
    %522 = vector.broadcast %521 : vector<1x1x128xf32> to vector<8x16x128xf32>
    %523 = arith.mulf %518, %522 : vector<8x16x128xf32>
    %524 = arith.addf %516, %523 : vector<8x16x128xf32>
    %525 = vector.extract_strided_slice %517 {offsets = [1, 0, 0], sizes = [8, 16, 128], strides = [1, 1, 1]} : vector<10x16x128xf32> to vector<8x16x128xf32>
    %526 = vector.extract_strided_slice %413 {offsets = [4, 0], sizes = [1, 128], strides = [1, 1]} : vector<9x128xf32> to vector<1x128xf32>
    %527 = vector.shape_cast %526 : vector<1x128xf32> to vector<128xf32>
    %528 = vector.shape_cast %527 : vector<128xf32> to vector<1x1x128xf32>
    %529 = vector.broadcast %528 : vector<1x1x128xf32> to vector<8x16x128xf32>
    %530 = arith.mulf %525, %529 : vector<8x16x128xf32>
    %531 = arith.addf %524, %530 : vector<8x16x128xf32>
    %532 = vector.extract_strided_slice %517 {offsets = [2, 0, 0], sizes = [8, 16, 128], strides = [1, 1, 1]} : vector<10x16x128xf32> to vector<8x16x128xf32>
    %533 = vector.extract_strided_slice %413 {offsets = [7, 0], sizes = [1, 128], strides = [1, 1]} : vector<9x128xf32> to vector<1x128xf32>
    %534 = vector.shape_cast %533 : vector<1x128xf32> to vector<128xf32>
    %535 = vector.shape_cast %534 : vector<128xf32> to vector<1x1x128xf32>
    %536 = vector.broadcast %535 : vector<1x1x128xf32> to vector<8x16x128xf32>
    %537 = arith.mulf %532, %536 : vector<8x16x128xf32>
    %538 = arith.addf %531, %537 : vector<8x16x128xf32>
    %c8_108 = arith.constant 8 : index
    %c2_109 = arith.constant 2 : index
    %c0_110 = arith.constant 0 : index
    %539 = vector.load %arg12[%c8_108, %c2_109, %c0_110] : memref<18x18x128xf32, #tpu.memory_space<vmem>>, vector<10x16x128xf32>
    %540 = vector.extract_strided_slice %539 {offsets = [0, 0, 0], sizes = [8, 16, 128], strides = [1, 1, 1]} : vector<10x16x128xf32> to vector<8x16x128xf32>
    %541 = vector.extract_strided_slice %413 {offsets = [2, 0], sizes = [1, 128], strides = [1, 1]} : vector<9x128xf32> to vector<1x128xf32>
    %542 = vector.shape_cast %541 : vector<1x128xf32> to vector<128xf32>
    %543 = vector.shape_cast %542 : vector<128xf32> to vector<1x1x128xf32>
    %544 = vector.broadcast %543 : vector<1x1x128xf32> to vector<8x16x128xf32>
    %545 = arith.mulf %540, %544 : vector<8x16x128xf32>
    %546 = arith.addf %538, %545 : vector<8x16x128xf32>
    %547 = vector.extract_strided_slice %539 {offsets = [1, 0, 0], sizes = [8, 16, 128], strides = [1, 1, 1]} : vector<10x16x128xf32> to vector<8x16x128xf32>
    %548 = vector.extract_strided_slice %413 {offsets = [5, 0], sizes = [1, 128], strides = [1, 1]} : vector<9x128xf32> to vector<1x128xf32>
    %549 = vector.shape_cast %548 : vector<1x128xf32> to vector<128xf32>
    %550 = vector.shape_cast %549 : vector<128xf32> to vector<1x1x128xf32>
    %551 = vector.broadcast %550 : vector<1x1x128xf32> to vector<8x16x128xf32>
    %552 = arith.mulf %547, %551 : vector<8x16x128xf32>
    %553 = arith.addf %546, %552 : vector<8x16x128xf32>
    %554 = vector.extract_strided_slice %539 {offsets = [2, 0, 0], sizes = [8, 16, 128], strides = [1, 1, 1]} : vector<10x16x128xf32> to vector<8x16x128xf32>
    %555 = vector.extract_strided_slice %413 {offsets = [8, 0], sizes = [1, 128], strides = [1, 1]} : vector<9x128xf32> to vector<1x128xf32>
    %556 = vector.shape_cast %555 : vector<1x128xf32> to vector<128xf32>
    %557 = vector.shape_cast %556 : vector<128xf32> to vector<1x1x128xf32>
    %558 = vector.broadcast %557 : vector<1x1x128xf32> to vector<8x16x128xf32>
    %559 = arith.mulf %554, %558 : vector<8x16x128xf32>
    %560 = arith.addf %553, %559 : vector<8x16x128xf32>
    %561 = vector.broadcast %416 : vector<1x1x128xf32> to vector<8x16x128xf32>
    %562 = arith.mulf %560, %561 : vector<8x16x128xf32>
    %563 = vector.broadcast %419 : vector<1x1x128xf32> to vector<8x16x128xf32>
    %564 = arith.addf %562, %563 : vector<8x16x128xf32>
    %c0_111 = arith.constant 0 : index
    %c8_112 = arith.constant 8 : index
    %c0_113 = arith.constant 0 : index
    %c0_114 = arith.constant 0 : index
    %565 = vector.load %arg10[%c0_111, %c8_112, %c0_113, %c0_114] : memref<1x16x16x128xf32, #tpu.memory_space<vmem>>, vector<1x8x16x128xf32>
    %566 = vector.shape_cast %565 : vector<1x8x16x128xf32> to vector<8x16x128xf32>
    %567 = vector.shape_cast %564 : vector<8x16x128xf32> to vector<1x8x16x128xf32>
    tpu.vector_store %arg10[%c0_111, %c8_112, %c0_113, %c0_114], %567 {strides = array<i32>} : memref<1x16x16x128xf32, #tpu.memory_space<vmem>>, vector<1x8x16x128xf32>,
    return
  }
  func.func @transform_0(%arg0: i32) -> (i32, i32, i32, i32) {
    %c0_i32 = arith.constant 0 : i32
    %c0_i32_0 = arith.constant 0 : i32
    %c0_i32_1 = arith.constant 0 : i32
    %c0_i32_2 = arith.constant 0 : i32
    return %arg0, %c0_i32, %c0_i32_0, %c0_i32_1 : i32, i32, i32, i32
  }
  func.func @transform_1(%arg0: i32) -> (i32, i32, i32, i32) {
    %c0_i32 = arith.constant 0 : i32
    %c0_i32_0 = arith.constant 0 : i32
    %c0_i32_1 = arith.constant 0 : i32
    %c0_i32_2 = arith.constant 0 : i32
    return %arg0, %c0_i32, %c0_i32_0, %c0_i32_1 : i32, i32, i32, i32
  }
  func.func @transform_2(%arg0: i32) -> (i32, i32) {
    %c0_i32 = arith.constant 0 : i32
    %c0_i32_0 = arith.constant 0 : i32
    %c0_i32_1 = arith.constant 0 : i32
    return %c0_i32, %c0_i32_0 : i32, i32
  }
  func.func @transform_3(%arg0: i32) -> (i32, i32) {
    %c0_i32 = arith.constant 0 : i32
    %c0_i32_0 = arith.constant 0 : i32
    %c0_i32_1 = arith.constant 0 : i32
    return %c0_i32, %c0_i32_0 : i32, i32
  }
  func.func @transform_4(%arg0: i32) -> (i32, i32) {
    %c0_i32 = arith.constant 0 : i32
    %c0_i32_0 = arith.constant 0 : i32
    %c0_i32_1 = arith.constant 0 : i32
    return %c0_i32, %c0_i32_0 : i32, i32
  }
  func.func @transform_5(%arg0: i32) -> (i32, i32) {
    %c0_i32 = arith.constant 0 : i32
    %c0_i32_0 = arith.constant 0 : i32
    %c0_i32_1 = arith.constant 0 : i32
    return %c0_i32, %c0_i32_0 : i32, i32
  }
  func.func @transform_6(%arg0: i32) -> (i32, i32) {
    %c0_i32 = arith.constant 0 : i32
    %c0_i32_0 = arith.constant 0 : i32
    %c0_i32_1 = arith.constant 0 : i32
    return %c0_i32, %c0_i32_0 : i32, i32
  }
  func.func @transform_7(%arg0: i32) -> (i32, i32) {
    %c0_i32 = arith.constant 0 : i32
    %c0_i32_0 = arith.constant 0 : i32
    %c0_i32_1 = arith.constant 0 : i32
    return %c0_i32, %c0_i32_0 : i32, i32
  }
  func.func @transform_8(%arg0: i32) -> (i32, i32, i32, i32) {
    %c0_i32 = arith.constant 0 : i32
    %c0_i32_0 = arith.constant 0 : i32
    %c0_i32_1 = arith.constant 0 : i32
    %c0_i32_2 = arith.constant 0 : i32
    return %arg0, %c0_i32, %c0_i32_0, %c0_i32_1 : i32, i32, i32, i32
  }
  func.func @transform_9(%arg0: i32) -> (i32, i32, i32, i32) {
    %c0_i32 = arith.constant 0 : i32
    %c0_i32_0 = arith.constant 0 : i32
    %c0_i32_1 = arith.constant 0 : i32
    %c0_i32_2 = arith.constant 0 : i32
    return %arg0, %c0_i32, %c0_i32_0, %c0_i32_1 : i32, i32, i32, i32
  }
}

module attributes {stable_mosaic.version = 11 : i64} {
  func.func @_head_kernel(%arg0: i32, %arg1: memref<512x128xf32, #tpu.memory_space<vmem>>, %arg2: memref<512x128xf32, #tpu.memory_space<vmem>>, %arg3: memref<512x128xf32, #tpu.memory_space<vmem>>, %arg4: memref<128x128xf32, #tpu.memory_space<vmem>>, %arg5: memref<128x128xf32, #tpu.memory_space<vmem>>, %arg6: memref<128x128xf32, #tpu.memory_space<vmem>>, %arg7: memref<1x128xf32, #tpu.memory_space<vmem>>, %arg8: memref<1x128xf32, #tpu.memory_space<vmem>>, %arg9: memref<1x128xf32, #tpu.memory_space<vmem>>, %arg10: memref<1x128xf32, #tpu.memory_space<vmem>>, %arg11: memref<512x128xf32, #tpu.memory_space<vmem>>) attributes {dimension_semantics = [#tpu.dimension_semantics<parallel>], iteration_bounds = array<i64: 1>, scalar_prefetch = 0 : i64, scratch_operands = 0 : i64, tpu.core_type = #tpu.core_type<tc>, window_params = [{transform_indices = @transform_0, window_bounds = array<i64: 512, 128>}, {transform_indices = @transform_1, window_bounds = array<i64: 512, 128>}, {transform_indices = @transform_2, window_bounds = array<i64: 512, 128>}, {pipeline_mode = #tpu.pipeline_mode<synchronous>, transform_indices = @transform_3, window_bounds = array<i64: 128, 128>}, {pipeline_mode = #tpu.pipeline_mode<synchronous>, transform_indices = @transform_4, window_bounds = array<i64: 128, 128>}, {pipeline_mode = #tpu.pipeline_mode<synchronous>, transform_indices = @transform_5, window_bounds = array<i64: 128, 128>}, {pipeline_mode = #tpu.pipeline_mode<synchronous>, transform_indices = @transform_6, window_bounds = array<i64: 1, 128>}, {pipeline_mode = #tpu.pipeline_mode<synchronous>, transform_indices = @transform_7, window_bounds = array<i64: 1, 128>}, {pipeline_mode = #tpu.pipeline_mode<synchronous>, transform_indices = @transform_8, window_bounds = array<i64: 1, 128>}, {pipeline_mode = #tpu.pipeline_mode<synchronous>, transform_indices = @transform_9, window_bounds = array<i64: 1, 128>}, {transform_indices = @transform_10, window_bounds = array<i64: 512, 128>}]} {
    %c0 = arith.constant 0 : index
    %c0_0 = arith.constant 0 : index
    %0 = vector.load %arg1[%c0, %c0_0] : memref<512x128xf32, #tpu.memory_space<vmem>>, vector<512x128xf32>
    %c0_1 = arith.constant 0 : index
    %c0_2 = arith.constant 0 : index
    %1 = vector.load %arg4[%c0_1, %c0_2] : memref<128x128xf32, #tpu.memory_space<vmem>>, vector<128x128xf32>
    %cst = arith.constant dense<0.000000e+00> : vector<512x128xf32>
    %2 = tpu.matmul %0, %1, %cst {dimension_numbers = #tpu.dot_dimension_numbers<[1], [0], [0], [1], [0, 0, 1, 1], [], []>} : vector<512x128xf32>, vector<128x128xf32>, vector<512x128xf32> -> vector<512x128xf32>
    %c0_3 = arith.constant 0 : index
    %c0_4 = arith.constant 0 : index
    %3 = vector.load %arg2[%c0_3, %c0_4] : memref<512x128xf32, #tpu.memory_space<vmem>>, vector<512x128xf32>
    %c0_5 = arith.constant 0 : index
    %c0_6 = arith.constant 0 : index
    %4 = vector.load %arg5[%c0_5, %c0_6] : memref<128x128xf32, #tpu.memory_space<vmem>>, vector<128x128xf32>
    %cst_7 = arith.constant dense<0.000000e+00> : vector<512x128xf32>
    %5 = tpu.matmul %3, %4, %cst_7 {dimension_numbers = #tpu.dot_dimension_numbers<[1], [0], [0], [1], [0, 0, 1, 1], [], []>} : vector<512x128xf32>, vector<128x128xf32>, vector<512x128xf32> -> vector<512x128xf32>
    %6 = arith.addf %2, %5 : vector<512x128xf32>
    %c0_8 = arith.constant 0 : index
    %c0_9 = arith.constant 0 : index
    %7 = vector.load %arg7[%c0_8, %c0_9] : memref<1x128xf32, #tpu.memory_space<vmem>>, vector<1x128xf32>
    %8 = vector.broadcast %7 : vector<1x128xf32> to vector<512x128xf32>
    %9 = arith.mulf %6, %8 : vector<512x128xf32>
    %c0_10 = arith.constant 0 : index
    %c0_11 = arith.constant 0 : index
    %10 = vector.load %arg8[%c0_10, %c0_11] : memref<1x128xf32, #tpu.memory_space<vmem>>, vector<1x128xf32>
    %11 = vector.broadcast %10 : vector<1x128xf32> to vector<512x128xf32>
    %12 = arith.addf %9, %11 : vector<512x128xf32>
    %13 = arith.negf %12 : vector<512x128xf32>
    %14 = math.exp %13 : vector<512x128xf32>
    %cst_12 = arith.constant 1.000000e+00 : f32
    %15 = vector.broadcast %cst_12 : f32 to vector<512x128xf32>
    %16 = arith.addf %15, %14 : vector<512x128xf32>
    %17 = arith.divf %15, %16 : vector<512x128xf32>
    %18 = arith.mulf %12, %17 : vector<512x128xf32>
    %c0_13 = arith.constant 0 : index
    %c0_14 = arith.constant 0 : index
    %19 = vector.load %arg3[%c0_13, %c0_14] : memref<512x128xf32, #tpu.memory_space<vmem>>, vector<512x128xf32>
    %c0_15 = arith.constant 0 : index
    %c0_16 = arith.constant 0 : index
    %20 = vector.load %arg6[%c0_15, %c0_16] : memref<128x128xf32, #tpu.memory_space<vmem>>, vector<128x128xf32>
    %cst_17 = arith.constant dense<0.000000e+00> : vector<512x128xf32>
    %21 = tpu.matmul %19, %20, %cst_17 {dimension_numbers = #tpu.dot_dimension_numbers<[1], [0], [0], [1], [0, 0, 1, 1], [], []>} : vector<512x128xf32>, vector<128x128xf32>, vector<512x128xf32> -> vector<512x128xf32>
    %c0_18 = arith.constant 0 : index
    %c0_19 = arith.constant 0 : index
    %22 = vector.load %arg9[%c0_18, %c0_19] : memref<1x128xf32, #tpu.memory_space<vmem>>, vector<1x128xf32>
    %23 = vector.broadcast %22 : vector<1x128xf32> to vector<512x128xf32>
    %24 = arith.mulf %21, %23 : vector<512x128xf32>
    %25 = arith.addf %18, %24 : vector<512x128xf32>
    %c0_20 = arith.constant 0 : index
    %c0_21 = arith.constant 0 : index
    %26 = vector.load %arg10[%c0_20, %c0_21] : memref<1x128xf32, #tpu.memory_space<vmem>>, vector<1x128xf32>
    %27 = vector.broadcast %26 : vector<1x128xf32> to vector<512x128xf32>
    %28 = arith.addf %25, %27 : vector<512x128xf32>
    %c0_22 = arith.constant 0 : index
    %c0_23 = arith.constant 0 : index
    %29 = vector.load %arg11[%c0_22, %c0_23] : memref<512x128xf32, #tpu.memory_space<vmem>>, vector<512x128xf32>
    tpu.vector_store %arg11[%c0_22, %c0_23], %28 {strides = array<i32>} : memref<512x128xf32, #tpu.memory_space<vmem>>, vector<512x128xf32>,
    return
  }
  func.func @transform_0(%arg0: i32) -> (i32, i32) {
    %c0_i32 = arith.constant 0 : i32
    %c0_i32_0 = arith.constant 0 : i32
    return %arg0, %c0_i32 : i32, i32
  }
  func.func @transform_1(%arg0: i32) -> (i32, i32) {
    %c0_i32 = arith.constant 0 : i32
    %c0_i32_0 = arith.constant 0 : i32
    return %arg0, %c0_i32 : i32, i32
  }
  func.func @transform_2(%arg0: i32) -> (i32, i32) {
    %c0_i32 = arith.constant 0 : i32
    %c0_i32_0 = arith.constant 0 : i32
    return %arg0, %c0_i32 : i32, i32
  }
  func.func @transform_3(%arg0: i32) -> (i32, i32) {
    %c0_i32 = arith.constant 0 : i32
    %c0_i32_0 = arith.constant 0 : i32
    %c0_i32_1 = arith.constant 0 : i32
    return %c0_i32, %c0_i32_0 : i32, i32
  }
  func.func @transform_4(%arg0: i32) -> (i32, i32) {
    %c0_i32 = arith.constant 0 : i32
    %c0_i32_0 = arith.constant 0 : i32
    %c0_i32_1 = arith.constant 0 : i32
    return %c0_i32, %c0_i32_0 : i32, i32
  }
  func.func @transform_5(%arg0: i32) -> (i32, i32) {
    %c0_i32 = arith.constant 0 : i32
    %c0_i32_0 = arith.constant 0 : i32
    %c0_i32_1 = arith.constant 0 : i32
    return %c0_i32, %c0_i32_0 : i32, i32
  }
  func.func @transform_6(%arg0: i32) -> (i32, i32) {
    %c0_i32 = arith.constant 0 : i32
    %c0_i32_0 = arith.constant 0 : i32
    %c0_i32_1 = arith.constant 0 : i32
    return %c0_i32, %c0_i32_0 : i32, i32
  }
  func.func @transform_7(%arg0: i32) -> (i32, i32) {
    %c0_i32 = arith.constant 0 : i32
    %c0_i32_0 = arith.constant 0 : i32
    %c0_i32_1 = arith.constant 0 : i32
    return %c0_i32, %c0_i32_0 : i32, i32
  }
  func.func @transform_8(%arg0: i32) -> (i32, i32) {
    %c0_i32 = arith.constant 0 : i32
    %c0_i32_0 = arith.constant 0 : i32
    %c0_i32_1 = arith.constant 0 : i32
    return %c0_i32, %c0_i32_0 : i32, i32
  }
  func.func @transform_9(%arg0: i32) -> (i32, i32) {
    %c0_i32 = arith.constant 0 : i32
    %c0_i32_0 = arith.constant 0 : i32
    %c0_i32_1 = arith.constant 0 : i32
    return %c0_i32, %c0_i32_0 : i32, i32
  }
  func.func @transform_10(%arg0: i32) -> (i32, i32) {
    %c0_i32 = arith.constant 0 : i32
    %c0_i32_0 = arith.constant 0 : i32
    return %arg0, %c0_i32 : i32, i32
  }
}

</mosaic_0001>

<llo_original>
// kernel: _lambda_.3
$region0: #{_lambda_.3}
  #allocation0 [shape = 'u32[]', space=smem, size = 0x4, offset = 0x4, fixed_abs, tag = 'smem constant byte address 0x4 - core index']
  #allocation1 [shape = 'u32[72,128]{1,0:T(1,128)}', space=vmem, size = 0x9000, scoped, tag = 'internal scratch']
  %s0 = inlined_call_operand.vmem [shape: f32[512,128], index: 0, kind: input, shape index: {}]
  %s1 = inlined_call_operand.vmem [shape: f32[128,128], index: 1, kind: input, shape index: {}]
  %s2 = inlined_call_operand.vmem [shape: f32[1,128], index: 2, kind: input, shape index: {}]
  %s3 = inlined_call_operand.vmem [shape: f32[1,128], index: 3, kind: input, shape index: {}]
  %s4 = inlined_call_operand.vmem [shape: f32[512,128], index: 4, kind: output, shape index: {}]
  %s5 = sld [smem:[#allocation0]]
  $region26: #{_lambda_.3} parent=0
    _
  %s7 = ssub.s32 1, %s5
  %s8 = scalar_select 0, %s7, %s5
  // Predicated region
  $region2: #{_lambda_.3} parent=0 // pred_check
    _
  $region3: #{_lambda_.3} parent=0 // pred_check_branch
    %10 = sbr.rel (0) target = $region5
  $region4: #{_lambda_.3} parent=0 // pred_region
    _
  $region5: #{_lambda_.3} parent=0 // pred_fallthru
    _
  // Predicated region
  $region6: #{_lambda_.3} parent=0 // pred_check
    _
  $region7: #{_lambda_.3} parent=0 // pred_check_branch
    %12 = sbr.rel (0) target = $region9
  $region8: #{_lambda_.3} parent=0 // pred_region
    _
  $region9: #{_lambda_.3} parent=0 // pred_fallthru
    _
  // Predicated region
  $region10: #{_lambda_.3} parent=0 // pred_check
    _
  $region11: #{_lambda_.3} parent=0 // pred_check_branch
    %14 = sbr.rel (0) target = $region13
  $region12: #{_lambda_.3} parent=0 // pred_region
    _
  $region13: #{_lambda_.3} parent=0 // pred_fallthru
    _
  // Predicated region
  $region14: #{_lambda_.3} parent=0 // pred_check
    _
  $region15: #{_lambda_.3} parent=0 // pred_check_branch
    %16 = sbr.rel (0) target = $region17
  $region16: #{_lambda_.3} parent=0 // pred_region
    _
  $region17: #{_lambda_.3} parent=0 // pred_fallthru
    _
  %v17 = vld [vmem:[%s0] sm:$0xff]
  %v18 = vld [vmem:[%s0 + $0x8] sm:$0xff]
  %v19 = vld [vmem:[%s0 + $0x10] sm:$0xff]
  %v20 = vld [vmem:[%s0 + $0x18] sm:$0xff]
  %v21 = vld [vmem:[%s0 + $0x20] sm:$0xff]
  %v22 = vld [vmem:[%s0 + $0x28] sm:$0xff]
  %v23 = vld [vmem:[%s0 + $0x30] sm:$0xff]
  %v24 = vld [vmem:[%s0 + $0x38] sm:$0xff]
  %v25 = vld [vmem:[%s0 + $0x40] sm:$0xff]
  %v26 = vld [vmem:[%s0 + $0x48] sm:$0xff]
  %v27 = vld [vmem:[%s0 + $0x50] sm:$0xff]
  %v28 = vld [vmem:[%s0 + $0x58] sm:$0xff]
  %v29 = vld [vmem:[%s0 + $0x60] sm:$0xff]
  %v30 = vld [vmem:[%s0 + $0x68] sm:$0xff]
  %v31 = vld [vmem:[%s0 + $0x70] sm:$0xff]
  %v32 = vld [vmem:[%s0 + $0x78] sm:$0xff]
  %v33 = vld [vmem:[%s0 + $0x80] sm:$0xff]
  %v34 = vld [vmem:[%s0 + $0x88] sm:$0xff]
  %v35 = vld [vmem:[%s0 + $0x90] sm:$0xff]
  %v36 = vld [vmem:[%s0 + $0x98] sm:$0xff]
  %v37 = vld [vmem:[%s0 + $0xa0] sm:$0xff]
  %v38 = vld [vmem:[%s0 + $0xa8] sm:$0xff]
  %v39 = vld [vmem:[%s0 + $0xb0] sm:$0xff]
  %v40 = vld [vmem:[%s0 + $0xb8] sm:$0xff]
  %v41 = vld [vmem:[%s0 + $0xc0] sm:$0xff]
  %v42 = vld [vmem:[%s0 + $0xc8] sm:$0xff]
  %v43 = vld [vmem:[%s0 + $0xd0] sm:$0xff]
  %v44 = vld [vmem:[%s0 + $0xd8] sm:$0xff]
  %v45 = vld [vmem:[%s0 + $0xe0] sm:$0xff]
  %v46 = vld [vmem:[%s0 + $0xe8] sm:$0xff]
  %v47 = vld [vmem:[%s0 + $0xf0] sm:$0xff]
  %v48 = vld [vmem:[%s0 + $0xf8] sm:$0xff]
  %v49 = vld [vmem:[%s0 + $0x100] sm:$0xff]
  %v50 = vld [vmem:[%s0 + $0x108] sm:$0xff]
  %v51 = vld [vmem:[%s0 + $0x110] sm:$0xff]
  %v52 = vld [vmem:[%s0 + $0x118] sm:$0xff]
  %v53 = vld [vmem:[%s0 + $0x120] sm:$0xff]
  %v54 = vld [vmem:[%s0 + $0x128] sm:$0xff]
  %v55 = vld [vmem:[%s0 + $0x130] sm:$0xff]
  %v56 = vld [vmem:[%s0 + $0x138] sm:$0xff]
  %v57 = vld [vmem:[%s0 + $0x140] sm:$0xff]
  %v58 = vld [vmem:[%s0 + $0x148] sm:$0xff]
  %v59 = vld [vmem:[%s0 + $0x150] sm:$0xff]
  %v60 = vld [vmem:[%s0 + $0x158] sm:$0xff]
  %v61 = vld [vmem:[%s0 + $0x160] sm:$0xff]
  %v62 = vld [vmem:[%s0 + $0x168] sm:$0xff]
  %v63 = vld [vmem:[%s0 + $0x170] sm:$0xff]
  %v64 = vld [vmem:[%s0 + $0x178] sm:$0xff]
  %v65 = vld [vmem:[%s0 + $0x180] sm:$0xff]
  %v66 = vld [vmem:[%s0 + $0x188] sm:$0xff]
  %v67 = vld [vmem:[%s0 + $0x190] sm:$0xff]
  %v68 = vld [vmem:[%s0 + $0x198] sm:$0xff]
  %v69 = vld [vmem:[%s0 + $0x1a0] sm:$0xff]
  %v70 = vld [vmem:[%s0 + $0x1a8] sm:$0xff]
  %v71 = vld [vmem:[%s0 + $0x1b0] sm:$0xff]
  %v72 = vld [vmem:[%s0 + $0x1b8] sm:$0xff]
  %v73 = vld [vmem:[%s0 + $0x1c0] sm:$0xff]
  %v74 = vld [vmem:[%s0 + $0x1c8] sm:$0xff]
  %v75 = vld [vmem:[%s0 + $0x1d0] sm:$0xff]
  %v76 = vld [vmem:[%s0 + $0x1d8] sm:$0xff]
  %v77 = vld [vmem:[%s0 + $0x1e0] sm:$0xff]
  %v78 = vld [vmem:[%s0 + $0x1e8] sm:$0xff]
  %v79 = vld [vmem:[%s0 + $0x1f0] sm:$0xff]
  %v80 = vld [vmem:[%s0 + $0x1f8] sm:$0xff]
  %v81 = vld [vmem:[%s1] sm:$0xff]
  %v82 = vld [vmem:[%s1 + $0x8] sm:$0xff]
  %v83 = vld [vmem:[%s1 + $0x10] sm:$0xff]
  %v84 = vld [vmem:[%s1 + $0x18] sm:$0xff]
  %v85 = vld [vmem:[%s1 + $0x20] sm:$0xff]
  %v86 = vld [vmem:[%s1 + $0x28] sm:$0xff]
  %v87 = vld [vmem:[%s1 + $0x30] sm:$0xff]
  %v88 = vld [vmem:[%s1 + $0x38] sm:$0xff]
  %v89 = vld [vmem:[%s1 + $0x40] sm:$0xff]
  %v90 = vld [vmem:[%s1 + $0x48] sm:$0xff]
  %v91 = vld [vmem:[%s1 + $0x50] sm:$0xff]
  %v92 = vld [vmem:[%s1 + $0x58] sm:$0xff]
  %v93 = vld [vmem:[%s1 + $0x60] sm:$0xff]
  %v94 = vld [vmem:[%s1 + $0x68] sm:$0xff]
  %v95 = vld [vmem:[%s1 + $0x70] sm:$0xff]
  %v96 = vld [vmem:[%s1 + $0x78] sm:$0xff]
  %97 = vmatpush.msra.mxu0 %v96
  %98 = vmatpush.msra.mxu0 %v95
  %99 = vmatpush.msra.mxu0 %v94
  %100 = vmatpush.msra.mxu0 %v93
  %101 = vmatpush.msra.mxu0 %v92
  %102 = vmatpush.msra.mxu0 %v91
  %103 = vmatpush.msra.mxu0 %v90
  %104 = vmatpush.msra.mxu0 %v89
  %105 = vmatpush.msra.mxu0 %v88
  %106 = vmatpush.msra.mxu0 %v87
  %107 = vmatpush.msra.mxu0 %v86
  %108 = vmatpush.msra.mxu0 %v85
  %109 = vmatpush.msra.mxu0 %v84
  %110 = vmatpush.msra.mxu0 %v83
  %111 = vmatpush.msra.mxu0 %v82
  %112 = vmatpush.msra.mxu0 %v81
  %113 = vmatmul.f32.gmra.mxu0 %v17
  %v114 = vpop.f32.mrf.mxu0
  %v115 = vadd.f32 0.0, %v114
  %116 = vmatmul.f32.gmra.mxu0 %v18
  %v117 = vpop.f32.mrf.mxu0
  %v118 = vadd.f32 0.0, %v117
  %119 = vmatmul.f32.gmra.mxu0 %v19
  %v120 = vpop.f32.mrf.mxu0
  %v121 = vadd.f32 0.0, %v120
  %122 = vmatmul.f32.gmra.mxu0 %v20
  %v123 = vpop.f32.mrf.mxu0
  %v124 = vadd.f32 0.0, %v123
  %125 = vmatmul.f32.gmra.mxu0 %v21
  %v126 = vpop.f32.mrf.mxu0
  %v127 = vadd.f32 0.0, %v126
  %128 = vmatmul.f32.gmra.mxu0 %v22
  %v129 = vpop.f32.mrf.mxu0
  %v130 = vadd.f32 0.0, %v129
  %131 = vmatmul.f32.gmra.mxu0 %v23
  %v132 = vpop.f32.mrf.mxu0
  %v133 = vadd.f32 0.0, %v132
  %134 = vmatmul.f32.gmra.mxu0 %v24
  %v135 = vpop.f32.mrf.mxu0
  %v136 = vadd.f32 0.0, %v135
  %137 = vmatmul.f32.gmra.mxu0 %v25
  %v138 = vpop.f32.mrf.mxu0
  %v139 = vadd.f32 0.0, %v138
  %140 = vmatmul.f32.gmra.mxu0 %v26
  %v141 = vpop.f32.mrf.mxu0
  %v142 = vadd.f32 0.0, %v141
  %143 = vmatmul.f32.gmra.mxu0 %v27
  %v144 = vpop.f32.mrf.mxu0
  %v145 = vadd.f32 0.0, %v144
  %146 = vmatmul.f32.gmra.mxu0 %v28
  %v147 = vpop.f32.mrf.mxu0
  %v148 = vadd.f32 0.0, %v147
  %149 = vmatmul.f32.gmra.mxu0 %v29
  %v150 = vpop.f32.mrf.mxu0
  %v151 = vadd.f32 0.0, %v150
  %152 = vmatmul.f32.gmra.mxu0 %v30
  %v153 = vpop.f32.mrf.mxu0
  %v154 = vadd.f32 0.0, %v153
  %155 = vmatmul.f32.gmra.mxu0 %v31
  %v156 = vpop.f32.mrf.mxu0
  %v157 = vadd.f32 0.0, %v156
  %158 = vmatmul.f32.gmra.mxu0 %v32
  %v159 = vpop.f32.mrf.mxu0
  %v160 = vadd.f32 0.0, %v159
  %161 = vmatmul.f32.gmra.mxu0 %v33
  %v162 = vpop.f32.mrf.mxu0
  %v163 = vadd.f32 0.0, %v162
  %164 = vmatmul.f32.gmra.mxu0 %v34
  %v165 = vpop.f32.mrf.mxu0
  %v166 = vadd.f32 0.0, %v165
  %167 = vmatmul.f32.gmra.mxu0 %v35
  %v168 = vpop.f32.mrf.mxu0
  %v169 = vadd.f32 0.0, %v168
  %170 = vmatmul.f32.gmra.mxu0 %v36
  %v171 = vpop.f32.mrf.mxu0
  %v172 = vadd.f32 0.0, %v171
  %173 = vmatmul.f32.gmra.mxu0 %v37
  %v174 = vpop.f32.mrf.mxu0
  %v175 = vadd.f32 0.0, %v174
  %176 = vmatmul.f32.gmra.mxu0 %v38
  %v177 = vpop.f32.mrf.mxu0
  %v178 = vadd.f32 0.0, %v177
  %179 = vmatmul.f32.gmra.mxu0 %v39
  %v180 = vpop.f32.mrf.mxu0
  %v181 = vadd.f32 0.0, %v180
  %182 = vmatmul.f32.gmra.mxu0 %v40
  %v183 = vpop.f32.mrf.mxu0
  %v184 = vadd.f32 0.0, %v183
  %185 = vmatmul.f32.gmra.mxu0 %v41
  %v186 = vpop.f32.mrf.mxu0
  %v187 = vadd.f32 0.0, %v186
  %188 = vmatmul.f32.gmra.mxu0 %v42
  %v189 = vpop.f32.mrf.mxu0
  %v190 = vadd.f32 0.0, %v189
  %191 = vmatmul.f32.gmra.mxu0 %v43
  %v192 = vpop.f32.mrf.mxu0
  %v193 = vadd.f32 0.0, %v192
  %194 = vmatmul.f32.gmra.mxu0 %v44
  %v195 = vpop.f32.mrf.mxu0
  %v196 = vadd.f32 0.0, %v195
  %197 = vmatmul.f32.gmra.mxu0 %v45
  %v198 = vpop.f32.mrf.mxu0
  %v199 = vadd.f32 0.0, %v198
  %200 = vmatmul.f32.gmra.mxu0 %v46
  %v201 = vpop.f32.mrf.mxu0
  %v202 = vadd.f32 0.0, %v201
  %203 = vmatmul.f32.gmra.mxu0 %v47
  %v204 = vpop.f32.mrf.mxu0
  %v205 = vadd.f32 0.0, %v204
  %206 = vmatmul.f32.gmra.mxu0 %v48
  %v207 = vpop.f32.mrf.mxu0
  %v208 = vadd.f32 0.0, %v207
  %209 = vmatmul.f32.gmra.mxu0 %v49
  %v210 = vpop.f32.mrf.mxu0
  %v211 = vadd.f32 0.0, %v210
  %212 = vmatmul.f32.gmra.mxu0 %v50
  %v213 = vpop.f32.mrf.mxu0
  %v214 = vadd.f32 0.0, %v213
  %215 = vmatmul.f32.gmra.mxu0 %v51
  %v216 = vpop.f32.mrf.mxu0
  %v217 = vadd.f32 0.0, %v216
  %218 = vmatmul.f32.gmra.mxu0 %v52
  %v219 = vpop.f32.mrf.mxu0
  %v220 = vadd.f32 0.0, %v219
  %221 = vmatmul.f32.gmra.mxu0 %v53
  %v222 = vpop.f32.mrf.mxu0
  %v223 = vadd.f32 0.0, %v222
  %224 = vmatmul.f32.gmra.mxu0 %v54
  %v225 = vpop.f32.mrf.mxu0
  %v226 = vadd.f32 0.0, %v225
  %227 = vmatmul.f32.gmra.mxu0 %v55
  %v228 = vpop.f32.mrf.mxu0
  %v229 = vadd.f32 0.0, %v228
  %230 = vmatmul.f32.gmra.mxu0 %v56
  %v231 = vpop.f32.mrf.mxu0
  %v232 = vadd.f32 0.0, %v231
  %233 = vmatmul.f32.gmra.mxu0 %v57
  %v234 = vpop.f32.mrf.mxu0
  %v235 = vadd.f32 0.0, %v234
  %236 = vmatmul.f32.gmra.mxu0 %v58
  %v237 = vpop.f32.mrf.mxu0
  %v238 = vadd.f32 0.0, %v237
  %239 = vmatmul.f32.gmra.mxu0 %v59
  %v240 = vpop.f32.mrf.mxu0
  %v241 = vadd.f32 0.0, %v240
  %242 = vmatmul.f32.gmra.mxu0 %v60
  %v243 = vpop.f32.mrf.mxu0
  %v244 = vadd.f32 0.0, %v243
  %245 = vmatmul.f32.gmra.mxu0 %v61
  %v246 = vpop.f32.mrf.mxu0
  %v247 = vadd.f32 0.0, %v246
  %248 = vmatmul.f32.gmra.mxu0 %v62
  %v249 = vpop.f32.mrf.mxu0
  %v250 = vadd.f32 0.0, %v249
  %251 = vmatmul.f32.gmra.mxu0 %v63
  %v252 = vpop.f32.mrf.mxu0
  %v253 = vadd.f32 0.0, %v252
  %254 = vmatmul.f32.gmra.mxu0 %v64
  %v255 = vpop.f32.mrf.mxu0
  %v256 = vadd.f32 0.0, %v255
  %257 = vmatmul.f32.gmra.mxu0 %v65
  %v258 = vpop.f32.mrf.mxu0
  %v259 = vadd.f32 0.0, %v258
  %260 = vmatmul.f32.gmra.mxu0 %v66
  %v261 = vpop.f32.mrf.mxu0
  %v262 = vadd.f32 0.0, %v261
  %263 = vmatmul.f32.gmra.mxu0 %v67
  %v264 = vpop.f32.mrf.mxu0
  %v265 = vadd.f32 0.0, %v264
  %266 = vmatmul.f32.gmra.mxu0 %v68
  %v267 = vpop.f32.mrf.mxu0
  %v268 = vadd.f32 0.0, %v267
  %269 = vmatmul.f32.gmra.mxu0 %v69
  %v270 = vpop.f32.mrf.mxu0
  %v271 = vadd.f32 0.0, %v270
  %272 = vmatmul.f32.gmra.mxu0 %v70
  %v273 = vpop.f32.mrf.mxu0
  %v274 = vadd.f32 0.0, %v273
  %275 = vmatmul.f32.gmra.mxu0 %v71
  %v276 = vpop.f32.mrf.mxu0
  %v277 = vadd.f32 0.0, %v276
  %278 = vmatmul.f32.gmra.mxu0 %v72
  %v279 = vpop.f32.mrf.mxu0
  %v280 = vadd.f32 0.0, %v279
  %281 = vmatmul.f32.gmra.mxu0 %v73
  %v282 = vpop.f32.mrf.mxu0
  %v283 = vadd.f32 0.0, %v282
  %284 = vmatmul.f32.gmra.mxu0 %v74
  %v285 = vpop.f32.mrf.mxu0
  %v286 = vadd.f32 0.0, %v285
  %287 = vmatmul.f32.gmra.mxu0 %v75
  %v288 = vpop.f32.mrf.mxu0
  %v289 = vadd.f32 0.0, %v288
  %290 = vmatmul.f32.gmra.mxu0 %v76
  %v291 = vpop.f32.mrf.mxu0
  %v292 = vadd.f32 0.0, %v291
  %293 = vmatmul.f32.gmra.mxu0 %v77
  %v294 = vpop.f32.mrf.mxu0
  %v295 = vadd.f32 0.0, %v294
  %296 = vmatmul.f32.gmra.mxu0 %v78
  %v297 = vpop.f32.mrf.mxu0
  %v298 = vadd.f32 0.0, %v297
  %299 = vmatmul.f32.gmra.mxu0 %v79
  %v300 = vpop.f32.mrf.mxu0
  %v301 = vadd.f32 0.0, %v300
  %302 = vmatmul.f32.gmra.mxu0 %v80
  %v303 = vpop.f32.mrf.mxu0
  %v304 = vadd.f32 0.0, %v303
  %305 = vdwg.mxu0
  %v306 = vld [vmem:[%s2] sm:$0x1]
  %v308 = vperm.slane %v306, 0
  %v310 = vmul.f32 %v115, %v308
  %v311 = vmul.f32 %v118, %v308
  %v312 = vmul.f32 %v121, %v308
  %v313 = vmul.f32 %v124, %v308
  %v314 = vmul.f32 %v127, %v308
  %v315 = vmul.f32 %v130, %v308
  %v316 = vmul.f32 %v133, %v308
  %v317 = vmul.f32 %v136, %v308
  %v318 = vmul.f32 %v139, %v308
  %v319 = vmul.f32 %v142, %v308
  %v320 = vmul.f32 %v145, %v308
  %v321 = vmul.f32 %v148, %v308
  %v322 = vmul.f32 %v151, %v308
  %v323 = vmul.f32 %v154, %v308
  %v324 = vmul.f32 %v157, %v308
  %v325 = vmul.f32 %v160, %v308
  %v326 = vmul.f32 %v163, %v308
  %v327 = vmul.f32 %v166, %v308
  %v328 = vmul.f32 %v169, %v308
  %v329 = vmul.f32 %v172, %v308
  %v330 = vmul.f32 %v175, %v308
  %v331 = vmul.f32 %v178, %v308
  %v332 = vmul.f32 %v181, %v308
  %v333 = vmul.f32 %v184, %v308
  %v334 = vmul.f32 %v187, %v308
  %v335 = vmul.f32 %v190, %v308
  %v336 = vmul.f32 %v193, %v308
  %v337 = vmul.f32 %v196, %v308
  %v338 = vmul.f32 %v199, %v308
  %v339 = vmul.f32 %v202, %v308
  %v340 = vmul.f32 %v205, %v308
  %v341 = vmul.f32 %v208, %v308
  %v342 = vmul.f32 %v211, %v308
  %v343 = vmul.f32 %v214, %v308
  %v344 = vmul.f32 %v217, %v308
  %v345 = vmul.f32 %v220, %v308
  %v346 = vmul.f32 %v223, %v308
  %v347 = vmul.f32 %v226, %v308
  %v348 = vmul.f32 %v229, %v308
  %v349 = vmul.f32 %v232, %v308
  %v350 = vmul.f32 %v235, %v308
  %v351 = vmul.f32 %v238, %v308
  %v352 = vmul.f32 %v241, %v308
  %v353 = vmul.f32 %v244, %v308
  %v354 = vmul.f32 %v247, %v308
  %v355 = vmul.f32 %v250, %v308
  %v356 = vmul.f32 %v253, %v308
  %v357 = vmul.f32 %v256, %v308
  %v358 = vmul.f32 %v259, %v308
  %v359 = vmul.f32 %v262, %v308
  %v360 = vmul.f32 %v265, %v308
  %v361 = vmul.f32 %v268, %v308
  %v362 = vmul.f32 %v271, %v308
  %v363 = vmul.f32 %v274, %v308
  %v364 = vmul.f32 %v277, %v308
  %v365 = vmul.f32 %v280, %v308
  %v366 = vmul.f32 %v283, %v308
  %v367 = vmul.f32 %v286, %v308
  %v368 = vmul.f32 %v289, %v308
  %v369 = vmul.f32 %v292, %v308
  %v370 = vmul.f32 %v295, %v308
  %v371 = vmul.f32 %v298, %v308
  %v372 = vmul.f32 %v301, %v308
  %v373 = vmul.f32 %v304, %v308
  %v374 = vld [vmem:[%s3] sm:$0x1]
  %v376 = vperm.slane %v374, 0
  %v378 = vadd.f32 %v310, %v376
  %v379 = vadd.f32 %v311, %v376
  %v380 = vadd.f32 %v312, %v376
  %v381 = vadd.f32 %v313, %v376
  %v382 = vadd.f32 %v314, %v376
  %v383 = vadd.f32 %v315, %v376
  %v384 = vadd.f32 %v316, %v376
  %v385 = vadd.f32 %v317, %v376
  %v386 = vadd.f32 %v318, %v376
  %v387 = vadd.f32 %v319, %v376
  %v388 = vadd.f32 %v320, %v376
  %v389 = vadd.f32 %v321, %v376
  %v390 = vadd.f32 %v322, %v376
  %v391 = vadd.f32 %v323, %v376
  %v392 = vadd.f32 %v324, %v376
  %v393 = vadd.f32 %v325, %v376
  %v394 = vadd.f32 %v326, %v376
  %v395 = vadd.f32 %v327, %v376
  %v396 = vadd.f32 %v328, %v376
  %v397 = vadd.f32 %v329, %v376
  %v398 = vadd.f32 %v330, %v376
  %v399 = vadd.f32 %v331, %v376
  %v400 = vadd.f32 %v332, %v376
  %v401 = vadd.f32 %v333, %v376
  %v402 = vadd.f32 %v334, %v376
  %v403 = vadd.f32 %v335, %v376
  %v404 = vadd.f32 %v336, %v376
  %v405 = vadd.f32 %v337, %v376
  %v406 = vadd.f32 %v338, %v376
  %v407 = vadd.f32 %v339, %v376
  %v408 = vadd.f32 %v340, %v376
  %v409 = vadd.f32 %v341, %v376
  %v410 = vadd.f32 %v342, %v376
  %v411 = vadd.f32 %v343, %v376
  %v412 = vadd.f32 %v344, %v376
  %v413 = vadd.f32 %v345, %v376
  %v414 = vadd.f32 %v346, %v376
  %v415 = vadd.f32 %v347, %v376
  %v416 = vadd.f32 %v348, %v376
  %v417 = vadd.f32 %v349, %v376
  %v418 = vadd.f32 %v350, %v376
  %v419 = vadd.f32 %v351, %v376
  %v420 = vadd.f32 %v352, %v376
  %v421 = vadd.f32 %v353, %v376
  %v422 = vadd.f32 %v354, %v376
  %v423 = vadd.f32 %v355, %v376
  %v424 = vadd.f32 %v356, %v376
  %v425 = vadd.f32 %v357, %v376
  %v426 = vadd.f32 %v358, %v376
  %v427 = vadd.f32 %v359, %v376
  %v428 = vadd.f32 %v360, %v376
  %v429 = vadd.f32 %v361, %v376
  %v430 = vadd.f32 %v362, %v376
  %v431 = vadd.f32 %v363, %v376
  %v432 = vadd.f32 %v364, %v376
  %v433 = vadd.f32 %v365, %v376
  %v434 = vadd.f32 %v366, %v376
  %v435 = vadd.f32 %v367, %v376
  %v436 = vadd.f32 %v368, %v376
  %v437 = vadd.f32 %v369, %v376
  %v438 = vadd.f32 %v370, %v376
  %v439 = vadd.f32 %v371, %v376
  %v440 = vadd.f32 %v372, %v376
  %v441 = vadd.f32 %v373, %v376
  %v442 = vxor.u32 %v378, 2147483648
  %v443 = vxor.u32 %v379, 2147483648
  %v444 = vxor.u32 %v380, 2147483648
  %v445 = vxor.u32 %v381, 2147483648
  %v446 = vxor.u32 %v382, 2147483648
  %v447 = vxor.u32 %v383, 2147483648
  %v448 = vxor.u32 %v384, 2147483648
  %v449 = vxor.u32 %v385, 2147483648
  %v450 = vxor.u32 %v386, 2147483648
  %v451 = vxor.u32 %v387, 2147483648
  %v452 = vxor.u32 %v388, 2147483648
  %v453 = vxor.u32 %v389, 2147483648
  %v454 = vxor.u32 %v390, 2147483648
  %v455 = vxor.u32 %v391, 2147483648
  %v456 = vxor.u32 %v392, 2147483648
  %v457 = vxor.u32 %v393, 2147483648
  %v458 = vxor.u32 %v394, 2147483648
  %v459 = vxor.u32 %v395, 2147483648
  %v460 = vxor.u32 %v396, 2147483648
  %v461 = vxor.u32 %v397, 2147483648
  %v462 = vxor.u32 %v398, 2147483648
  %v463 = vxor.u32 %v399, 2147483648
  %v464 = vxor.u32 %v400, 2147483648
  %v465 = vxor.u32 %v401, 2147483648
  %v466 = vxor.u32 %v402, 2147483648
  %v467 = vxor.u32 %v403, 2147483648
  %v468 = vxor.u32 %v404, 2147483648
  %v469 = vxor.u32 %v405, 2147483648
  %v470 = vxor.u32 %v406, 2147483648
  %v471 = vxor.u32 %v407, 2147483648
  %v472 = vxor.u32 %v408, 2147483648
  %v473 = vxor.u32 %v409, 2147483648
  %v474 = vxor.u32 %v410, 2147483648
  %v475 = vxor.u32 %v411, 2147483648
  %v476 = vxor.u32 %v412, 2147483648
  %v477 = vxor.u32 %v413, 2147483648
  %v478 = vxor.u32 %v414, 2147483648
  %v479 = vxor.u32 %v415, 2147483648
  %v480 = vxor.u32 %v416, 2147483648
  %v481 = vxor.u32 %v417, 2147483648
  %v482 = vxor.u32 %v418, 2147483648
  %v483 = vxor.u32 %v419, 2147483648
  %v484 = vxor.u32 %v420, 2147483648
  %v485 = vxor.u32 %v421, 2147483648
  %v486 = vxor.u32 %v422, 2147483648
  %v487 = vxor.u32 %v423, 2147483648
  %v488 = vxor.u32 %v424, 2147483648
  %v489 = vxor.u32 %v425, 2147483648
  %v490 = vxor.u32 %v426, 2147483648
  %v491 = vxor.u32 %v427, 2147483648
  %v492 = vxor.u32 %v428, 2147483648
  %v493 = vxor.u32 %v429, 2147483648
  %v494 = vxor.u32 %v430, 2147483648
  %v495 = vxor.u32 %v431, 2147483648
  %v496 = vxor.u32 %v432, 2147483648
  %v497 = vxor.u32 %v433, 2147483648
  %v498 = vxor.u32 %v434, 2147483648
  %v499 = vxor.u32 %v435, 2147483648
  %v500 = vxor.u32 %v436, 2147483648
  %v501 = vxor.u32 %v437, 2147483648
  %v502 = vxor.u32 %v438, 2147483648
  %v503 = vxor.u32 %v439, 2147483648
  %v504 = vxor.u32 %v440, 2147483648
  %v505 = vxor.u32 %v441, 2147483648
  %v506 = vmul.f32 %v442, 1.442695
  %v507 = vpow.pop %v506
  %v508 = vmul.f32 %v443, 1.442695
  %v509 = vpow.pop %v508
  %v510 = vmul.f32 %v444, 1.442695
  %v511 = vpow.pop %v510
  %v512 = vmul.f32 %v445, 1.442695
  %v513 = vpow.pop %v512
  %v514 = vmul.f32 %v446, 1.442695
  %v515 = vpow.pop %v514
  %v516 = vmul.f32 %v447, 1.442695
  %v517 = vpow.pop %v516
  %v518 = vmul.f32 %v448, 1.442695
  %v519 = vpow.pop %v518
  %v520 = vmul.f32 %v449, 1.442695
  %v521 = vpow.pop %v520
  %v522 = vmul.f32 %v450, 1.442695
  %v523 = vpow.pop %v522
  %v524 = vmul.f32 %v451, 1.442695
  %v525 = vpow.pop %v524
  %v526 = vmul.f32 %v452, 1.442695
  %v527 = vpow.pop %v526
  %v528 = vmul.f32 %v453, 1.442695
  %v529 = vpow.pop %v528
  %v530 = vmul.f32 %v454, 1.442695
  %v531 = vpow.pop %v530
  %v532 = vmul.f32 %v455, 1.442695
  %v533 = vpow.pop %v532
  %v534 = vmul.f32 %v456, 1.442695
  %v535 = vpow.pop %v534
  %v536 = vmul.f32 %v457, 1.442695
  %v537 = vpow.pop %v536
  %v538 = vmul.f32 %v458, 1.442695
  %v539 = vpow.pop %v538
  %v540 = vmul.f32 %v459, 1.442695
  %v541 = vpow.pop %v540
  %v542 = vmul.f32 %v460, 1.442695
  %v543 = vpow.pop %v542
  %v544 = vmul.f32 %v461, 1.442695
  %v545 = vpow.pop %v544
  %v546 = vmul.f32 %v462, 1.442695
  %v547 = vpow.pop %v546
  %v548 = vmul.f32 %v463, 1.442695
  %v549 = vpow.pop %v548
  %v550 = vmul.f32 %v464, 1.442695
  %v551 = vpow.pop %v550
  %v552 = vmul.f32 %v465, 1.442695
  %v553 = vpow.pop %v552
  %v554 = vmul.f32 %v466, 1.442695
  %v555 = vpow.pop %v554
  %v556 = vmul.f32 %v467, 1.442695
  %v557 = vpow.pop %v556
  %v558 = vmul.f32 %v468, 1.442695
  %v559 = vpow.pop %v558
  %v560 = vmul.f32 %v469, 1.442695
  %v561 = vpow.pop %v560
  %v562 = vmul.f32 %v470, 1.442695
  %v563 = vpow.pop %v562
  %v564 = vmul.f32 %v471, 1.442695
  %v565 = vpow.pop %v564
  %v566 = vmul.f32 %v472, 1.442695
  %v567 = vpow.pop %v566
  %v568 = vmul.f32 %v473, 1.442695
  %v569 = vpow.pop %v568
  %v570 = vmul.f32 %v474, 1.442695
  %v571 = vpow.pop %v570
  %v572 = vmul.f32 %v475, 1.442695
  %v573 = vpow.pop %v572
  %v574 = vmul.f32 %v476, 1.442695
  %v575 = vpow.pop %v574
  %v576 = vmul.f32 %v477, 1.442695
  %v577 = vpow.pop %v576
  %v578 = vmul.f32 %v478, 1.442695
  %v579 = vpow.pop %v578
  %v580 = vmul.f32 %v479, 1.442695
  %v581 = vpow.pop %v580
  %v582 = vmul.f32 %v480, 1.442695
  %v583 = vpow.pop %v582
  %v584 = vmul.f32 %v481, 1.442695
  %v585 = vpow.pop %v584
  %v586 = vmul.f32 %v482, 1.442695
  %v587 = vpow.pop %v586
  %v588 = vmul.f32 %v483, 1.442695
  %v589 = vpow.pop %v588
  %v590 = vmul.f32 %v484, 1.442695
  %v591 = vpow.pop %v590
  %v592 = vmul.f32 %v485, 1.442695
  %v593 = vpow.pop %v592
  %v594 = vmul.f32 %v486, 1.442695
  %v595 = vpow.pop %v594
  %v596 = vmul.f32 %v487, 1.442695
  %v597 = vpow.pop %v596
  %v598 = vmul.f32 %v488, 1.442695
  %v599 = vpow.pop %v598
  %v600 = vmul.f32 %v489, 1.442695
  %v601 = vpow.pop %v600
  %v602 = vmul.f32 %v490, 1.442695
  %v603 = vpow.pop %v602
  %v604 = vmul.f32 %v491, 1.442695
  %v605 = vpow.pop %v604
  %v606 = vmul.f32 %v492, 1.442695
  %v607 = vpow.pop %v606
  %v608 = vmul.f32 %v493, 1.442695
  %v609 = vpow.pop %v608
  %v610 = vmul.f32 %v494, 1.442695
  %v611 = vpow.pop %v610
  %v612 = vmul.f32 %v495, 1.442695
  %v613 = vpow.pop %v612
  %v614 = vmul.f32 %v496, 1.442695
  %v615 = vpow.pop %v614
  %v616 = vmul.f32 %v497, 1.442695
  %v617 = vpow.pop %v616
  %v618 = vmul.f32 %v498, 1.442695
  %v619 = vpow.pop %v618
  %v620 = vmul.f32 %v499, 1.442695
  %v621 = vpow.pop %v620
  %v622 = vmul.f32 %v500, 1.442695
  %v623 = vpow.pop %v622
  %v624 = vmul.f32 %v501, 1.442695
  %v625 = vpow.pop %v624
  %v626 = vmul.f32 %v502, 1.442695
  %v627 = vpow.pop %v626
  %v628 = vmul.f32 %v503, 1.442695
  %v629 = vpow.pop %v628
  %v630 = vmul.f32 %v504, 1.442695
  %v631 = vpow.pop %v630
  %v632 = vmul.f32 %v505, 1.442695
  %v633 = vpow.pop %v632
  %v634 = vadd.f32 %v507, 1.0
  %v635 = vadd.f32 %v509, 1.0
  %v636 = vadd.f32 %v511, 1.0
  %v637 = vadd.f32 %v513, 1.0
  %v638 = vadd.f32 %v515, 1.0
  %v639 = vadd.f32 %v517, 1.0
  %v640 = vadd.f32 %v519, 1.0
  %v641 = vadd.f32 %v521, 1.0
  %v642 = vadd.f32 %v523, 1.0
  %v643 = vadd.f32 %v525, 1.0
  %v644 = vadd.f32 %v527, 1.0
  %v645 = vadd.f32 %v529, 1.0
  %v646 = vadd.f32 %v531, 1.0
  %v647 = vadd.f32 %v533, 1.0
  %v648 = vadd.f32 %v535, 1.0
  %v649 = vadd.f32 %v537, 1.0
  %v650 = vadd.f32 %v539, 1.0
  %v651 = vadd.f32 %v541, 1.0
  %v652 = vadd.f32 %v543, 1.0
  %v653 = vadd.f32 %v545, 1.0
  %v654 = vadd.f32 %v547, 1.0
  %v655 = vadd.f32 %v549, 1.0
  %v656 = vadd.f32 %v551, 1.0
  %v657 = vadd.f32 %v553, 1.0
  %v658 = vadd.f32 %v555, 1.0
  %v659 = vadd.f32 %v557, 1.0
  %v660 = vadd.f32 %v559, 1.0
  %v661 = vadd.f32 %v561, 1.0
  %v662 = vadd.f32 %v563, 1.0
  %v663 = vadd.f32 %v565, 1.0
  %v664 = vadd.f32 %v567, 1.0
  %v665 = vadd.f32 %v569, 1.0
  %v666 = vadd.f32 %v571, 1.0
  %v667 = vadd.f32 %v573, 1.0
  %v668 = vadd.f32 %v575, 1.0
  %v669 = vadd.f32 %v577, 1.0
  %v670 = vadd.f32 %v579, 1.0
  %v671 = vadd.f32 %v581, 1.0
  %v672 = vadd.f32 %v583, 1.0
  %v673 = vadd.f32 %v585, 1.0
  %v674 = vadd.f32 %v587, 1.0
  %v675 = vadd.f32 %v589, 1.0
  %v676 = vadd.f32 %v591, 1.0
  %v677 = vadd.f32 %v593, 1.0
  %v678 = vadd.f32 %v595, 1.0
  %v679 = vadd.f32 %v597, 1.0
  %v680 = vadd.f32 %v599, 1.0
  %v681 = vadd.f32 %v601, 1.0
  %v682 = vadd.f32 %v603, 1.0
  %v683 = vadd.f32 %v605, 1.0
  %v684 = vadd.f32 %v607, 1.0
  %v685 = vadd.f32 %v609, 1.0
  %v686 = vadd.f32 %v611, 1.0
  %v687 = vadd.f32 %v613, 1.0
  %v688 = vadd.f32 %v615, 1.0
  %v689 = vadd.f32 %v617, 1.0
  %v690 = vadd.f32 %v619, 1.0
  %v691 = vadd.f32 %v621, 1.0
  %v692 = vadd.f32 %v623, 1.0
  %v693 = vadd.f32 %v625, 1.0
  %v694 = vadd.f32 %v627, 1.0
  %v695 = vadd.f32 %v629, 1.0
  %v696 = vadd.f32 %v631, 1.0
  %v697 = vadd.f32 %v633, 1.0
  %v698 = vrcp.pop %v634
  %v699 = vmul.f32 %v634, %v698
  %v700 = vsub.f32 1.0, %v699
  %v701 = vmul.f32 %v698, %v700
  %v702 = vadd.f32 %v698, %v701
  %vm703 = vweird.f32 %v634
  %vm704 = vweird.f32 %v698
  %vm705 = vmor %vm703, %vm704
  %v706 = vsel %vm705, %v698, %v702
  %v707 = vand.u32 2147483647, %v634
  %vm708 = vcmp.eq.f32.partialorder %v707, 8.507059e+37
  %v709 = vand.u32 %v634, 2147483648
  %v710 = vor.u32 1.1754944e-38, %v709
  %v711 = vsel %vm708, %v710, %v706
  %v712 = vmul.f32 1.0, %v711
  %v713 = vrcp.pop %v635
  %v714 = vmul.f32 %v635, %v713
  %v715 = vsub.f32 1.0, %v714
  %v716 = vmul.f32 %v713, %v715
  %v717 = vadd.f32 %v713, %v716
  %vm718 = vweird.f32 %v635
  %vm719 = vweird.f32 %v713
  %vm720 = vmor %vm718, %vm719
  %v721 = vsel %vm720, %v713, %v717
  %v722 = vand.u32 2147483647, %v635
  %vm723 = vcmp.eq.f32.partialorder %v722, 8.507059e+37
  %v724 = vand.u32 %v635, 2147483648
  %v725 = vor.u32 1.1754944e-38, %v724
  %v726 = vsel %vm723, %v725, %v721
  %v727 = vmul.f32 1.0, %v726
  %v728 = vrcp.pop %v636
  %v729 = vmul.f32 %v636, %v728
  %v730 = vsub.f32 1.0, %v729
  %v731 = vmul.f32 %v728, %v730
  %v732 = vadd.f32 %v728, %v731
  %vm733 = vweird.f32 %v636
  %vm734 = vweird.f32 %v728
  %vm735 = vmor %vm733, %vm734
  %v736 = vsel %vm735, %v728, %v732
  %v737 = vand.u32 2147483647, %v636
  %vm738 = vcmp.eq.f32.partialorder %v737, 8.507059e+37
  %v739 = vand.u32 %v636, 2147483648
  %v740 = vor.u32 1.1754944e-38, %v739
  %v741 = vsel %vm738, %v740, %v736
  %v742 = vmul.f32 1.0, %v741
  %v743 = vrcp.pop %v637
  %v744 = vmul.f32 %v637, %v743
  %v745 = vsub.f32 1.0, %v744
  %v746 = vmul.f32 %v743, %v745
  %v747 = vadd.f32 %v743, %v746
  %vm748 = vweird.f32 %v637
  %vm749 = vweird.f32 %v743
  %vm750 = vmor %vm748, %vm749
  %v751 = vsel %vm750, %v743, %v747
  %v752 = vand.u32 2147483647, %v637
  %vm753 = vcmp.eq.f32.partialorder %v752, 8.507059e+37
  %v754 = vand.u32 %v637, 2147483648
  %v755 = vor.u32 1.1754944e-38, %v754
  %v756 = vsel %vm753, %v755, %v751
  %v757 = vmul.f32 1.0, %v756
  %v758 = vrcp.pop %v638
  %v759 = vmul.f32 %v638, %v758
  %v760 = vsub.f32 1.0, %v759
  %v761 = vmul.f32 %v758, %v760
  %v762 = vadd.f32 %v758, %v761
  %vm763 = vweird.f32 %v638
  %vm764 = vweird.f32 %v758
  %vm765 = vmor %vm763, %vm764
  %v766 = vsel %vm765, %v758, %v762
  %v767 = vand.u32 2147483647, %v638
  %vm768 = vcmp.eq.f32.partialorder %v767, 8.507059e+37
  %v769 = vand.u32 %v638, 2147483648
  %v770 = vor.u32 1.1754944e-38, %v769
  %v771 = vsel %vm768, %v770, %v766
  %v772 = vmul.f32 1.0, %v771
  %v773 = vrcp.pop %v639
  %v774 = vmul.f32 %v639, %v773
  %v775 = vsub.f32 1.0, %v774
  %v776 = vmul.f32 %v773, %v775
  %v777 = vadd.f32 %v773, %v776
  %vm778 = vweird.f32 %v639
  %vm779 = vweird.f32 %v773
  %vm780 = vmor %vm778, %vm779
  %v781 = vsel %vm780, %v773, %v777
  %v782 = vand.u32 2147483647, %v639
  %vm783 = vcmp.eq.f32.partialorder %v782, 8.507059e+37
  %v784 = vand.u32 %v639, 2147483648
  %v785 = vor.u32 1.1754944e-38, %v784
  %v786 = vsel %vm783, %v785, %v781
  %v787 = vmul.f32 1.0, %v786
  %v788 = vrcp.pop %v640
  %v789 = vmul.f32 %v640, %v788
  %v790 = vsub.f32 1.0, %v789
  %v791 = vmul.f32 %v788, %v790
  %v792 = vadd.f32 %v788, %v791
  %vm793 = vweird.f32 %v640
  %vm794 = vweird.f32 %v788
  %vm795 = vmor %vm793, %vm794
  %v796 = vsel %vm795, %v788, %v792
  %v797 = vand.u32 2147483647, %v640
  %vm798 = vcmp.eq.f32.partialorder %v797, 8.507059e+37
  %v799 = vand.u32 %v640, 2147483648
  %v800 = vor.u32 1.1754944e-38, %v799
  %v801 = vsel %vm798, %v800, %v796
  %v802 = vmul.f32 1.0, %v801
  %v803 = vrcp.pop %v641
  %v804 = vmul.f32 %v641, %v803
  %v805 = vsub.f32 1.0, %v804
  %v806 = vmul.f32 %v803, %v805
  %v807 = vadd.f32 %v803, %v806
  %vm808 = vweird.f32 %v641
  %vm809 = vweird.f32 %v803
  %vm810 = vmor %vm808, %vm809
  %v811 = vsel %vm810, %v803, %v807
  %v812 = vand.u32 2147483647, %v641
  %vm813 = vcmp.eq.f32.partialorder %v812, 8.507059e+37
  %v814 = vand.u32 %v641, 2147483648
  %v815 = vor.u32 1.1754944e-38, %v814
  %v816 = vsel %vm813, %v815, %v811
  %v817 = vmul.f32 1.0, %v816
  %v818 = vrcp.pop %v642
  %v819 = vmul.f32 %v642, %v818
  %v820 = vsub.f32 1.0, %v819
  %v821 = vmul.f32 %v818, %v820
  %v822 = vadd.f32 %v818, %v821
  %vm823 = vweird.f32 %v642
  %vm824 = vweird.f32 %v818
  %vm825 = vmor %vm823, %vm824
  %v826 = vsel %vm825, %v818, %v822
  %v827 = vand.u32 2147483647, %v642
  %vm828 = vcmp.eq.f32.partialorder %v827, 8.507059e+37
  %v829 = vand.u32 %v642, 2147483648
  %v830 = vor.u32 1.1754944e-38, %v829
  %v831 = vsel %vm828, %v830, %v826
  %v832 = vmul.f32 1.0, %v831
  %v833 = vrcp.pop %v643
  %v834 = vmul.f32 %v643, %v833
  %v835 = vsub.f32 1.0, %v834
  %v836 = vmul.f32 %v833, %v835
  %v837 = vadd.f32 %v833, %v836
  %vm838 = vweird.f32 %v643
  %vm839 = vweird.f32 %v833
  %vm840 = vmor %vm838, %vm839
  %v841 = vsel %vm840, %v833, %v837
  %v842 = vand.u32 2147483647, %v643
  %vm843 = vcmp.eq.f32.partialorder %v842, 8.507059e+37
  %v844 = vand.u32 %v643, 2147483648
  %v845 = vor.u32 1.1754944e-38, %v844
  %v846 = vsel %vm843, %v845, %v841
  %v847 = vmul.f32 1.0, %v846
  %v848 = vrcp.pop %v644
  %v849 = vmul.f32 %v644, %v848
  %v850 = vsub.f32 1.0, %v849
  %v851 = vmul.f32 %v848, %v850
  %v852 = vadd.f32 %v848, %v851
  %vm853 = vweird.f32 %v644
  %vm854 = vweird.f32 %v848
  %vm855 = vmor %vm853, %vm854
  %v856 = vsel %vm855, %v848, %v852
  %v857 = vand.u32 2147483647, %v644
  %vm858 = vcmp.eq.f32.partialorder %v857, 8.507059e+37
  %v859 = vand.u32 %v644, 2147483648
  %v860 = vor.u32 1.1754944e-38, %v859
  %v861 = vsel %vm858, %v860, %v856
  %v862 = vmul.f32 1.0, %v861
  %v863 = vrcp.pop %v645
  %v864 = vmul.f32 %v645, %v863
  %v865 = vsub.f32 1.0, %v864
  %v866 = vmul.f32 %v863, %v865
  %v867 = vadd.f32 %v863, %v866
  %vm868 = vweird.f32 %v645
  %vm869 = vweird.f32 %v863
  %vm870 = vmor %vm868, %vm869
  %v871 = vsel %vm870, %v863, %v867
  %v872 = vand.u32 2147483647, %v645
  %vm873 = vcmp.eq.f32.partialorder %v872, 8.507059e+37
  %v874 = vand.u32 %v645, 2147483648
  %v875 = vor.u32 1.1754944e-38, %v874
  %v876 = vsel %vm873, %v875, %v871
  %v877 = vmul.f32 1.0, %v876
  %v878 = vrcp.pop %v646
  %v879 = vmul.f32 %v646, %v878
  %v880 = vsub.f32 1.0, %v879
  %v881 = vmul.f32 %v878, %v880
  %v882 = vadd.f32 %v878, %v881
  %vm883 = vweird.f32 %v646
  %vm884 = vweird.f32 %v878
  %vm885 = vmor %vm883, %vm884
  %v886 = vsel %vm885, %v878, %v882
  %v887 = vand.u32 2147483647, %v646
  %vm888 = vcmp.eq.f32.partialorder %v887, 8.507059e+37
  %v889 = vand.u32 %v646, 2147483648
  %v890 = vor.u32 1.1754944e-38, %v889
  %v891 = vsel %vm888, %v890, %v886
  %v892 = vmul.f32 1.0, %v891
  %v893 = vrcp.pop %v647
  %v894 = vmul.f32 %v647, %v893
  %v895 = vsub.f32 1.0, %v894
  %v896 = vmul.f32 %v893, %v895
  %v897 = vadd.f32 %v893, %v896
  %vm898 = vweird.f32 %v647
  %vm899 = vweird.f32 %v893
  %vm900 = vmor %vm898, %vm899
  %v901 = vsel %vm900, %v893, %v897
  %v902 = vand.u32 2147483647, %v647
  %vm903 = vcmp.eq.f32.partialorder %v902, 8.507059e+37
  %v904 = vand.u32 %v647, 2147483648
  %v905 = vor.u32 1.1754944e-38, %v904
  %v906 = vsel %vm903, %v905, %v901
  %v907 = vmul.f32 1.0, %v906
  %v908 = vrcp.pop %v648
  %v909 = vmul.f32 %v648, %v908
  %v910 = vsub.f32 1.0, %v909
  %v911 = vmul.f32 %v908, %v910
  %v912 = vadd.f32 %v908, %v911
  %vm913 = vweird.f32 %v648
  %vm914 = vweird.f32 %v908
  %vm915 = vmor %vm913, %vm914
  %v916 = vsel %vm915, %v908, %v912
  %v917 = vand.u32 2147483647, %v648
  %vm918 = vcmp.eq.f32.partialorder %v917, 8.507059e+37
  %v919 = vand.u32 %v648, 2147483648
  %v920 = vor.u32 1.1754944e-38, %v919
  %v921 = vsel %vm918, %v920, %v916
  %v922 = vmul.f32 1.0, %v921
  %v923 = vrcp.pop %v649
  %v924 = vmul.f32 %v649, %v923
  %v925 = vsub.f32 1.0, %v924
  %v926 = vmul.f32 %v923, %v925
  %v927 = vadd.f32 %v923, %v926
  %vm928 = vweird.f32 %v649
  %vm929 = vweird.f32 %v923
  %vm930 = vmor %vm928, %vm929
  %v931 = vsel %vm930, %v923, %v927
  %v932 = vand.u32 2147483647, %v649
  %vm933 = vcmp.eq.f32.partialorder %v932, 8.507059e+37
  %v934 = vand.u32 %v649, 2147483648
  %v935 = vor.u32 1.1754944e-38, %v934
  %v936 = vsel %vm933, %v935, %v931
  %v937 = vmul.f32 1.0, %v936
  %v938 = vrcp.pop %v650
  %v939 = vmul.f32 %v650, %v938
  %v940 = vsub.f32 1.0, %v939
  %v941 = vmul.f32 %v938, %v940
  %v942 = vadd.f32 %v938, %v941
  %vm943 = vweird.f32 %v650
  %vm944 = vweird.f32 %v938
  %vm945 = vmor %vm943, %vm944
  %v946 = vsel %vm945, %v938, %v942
  %v947 = vand.u32 2147483647, %v650
  %vm948 = vcmp.eq.f32.partialorder %v947, 8.507059e+37
  %v949 = vand.u32 %v650, 2147483648
  %v950 = vor.u32 1.1754944e-38, %v949
  %v951 = vsel %vm948, %v950, %v946
  %v952 = vmul.f32 1.0, %v951
  %v953 = vrcp.pop %v651
  %v954 = vmul.f32 %v651, %v953
  %v955 = vsub.f32 1.0, %v954
  %v956 = vmul.f32 %v953, %v955
  %v957 = vadd.f32 %v953, %v956
  %vm958 = vweird.f32 %v651
  %vm959 = vweird.f32 %v953
  %vm960 = vmor %vm958, %vm959
  %v961 = vsel %vm960, %v953, %v957
  %v962 = vand.u32 2147483647, %v651
  %vm963 = vcmp.eq.f32.partialorder %v962, 8.507059e+37
  %v964 = vand.u32 %v651, 2147483648
  %v965 = vor.u32 1.1754944e-38, %v964
  %v966 = vsel %vm963, %v965, %v961
  %v967 = vmul.f32 1.0, %v966
  %v968 = vrcp.pop %v652
  %v969 = vmul.f32 %v652, %v968
  %v970 = vsub.f32 1.0, %v969
  %v971 = vmul.f32 %v968, %v970
  %v972 = vadd.f32 %v968, %v971
  %vm973 = vweird.f32 %v652
  %vm974 = vweird.f32 %v968
  %vm975 = vmor %vm973, %vm974
  %v976 = vsel %vm975, %v968, %v972
  %v977 = vand.u32 2147483647, %v652
  %vm978 = vcmp.eq.f32.partialorder %v977, 8.507059e+37
  %v979 = vand.u32 %v652, 2147483648
  %v980 = vor.u32 1.1754944e-38, %v979
  %v981 = vsel %vm978, %v980, %v976
  %v982 = vmul.f32 1.0, %v981
  %v983 = vrcp.pop %v653
  %v984 = vmul.f32 %v653, %v983
  %v985 = vsub.f32 1.0, %v984
  %v986 = vmul.f32 %v983, %v985
  %v987 = vadd.f32 %v983, %v986
  %vm988 = vweird.f32 %v653
  %vm989 = vweird.f32 %v983
  %vm990 = vmor %vm988, %vm989
  %v991 = vsel %vm990, %v983, %v987
  %v992 = vand.u32 2147483647, %v653
  %vm993 = vcmp.eq.f32.partialorder %v992, 8.507059e+37
  %v994 = vand.u32 %v653, 2147483648
  %v995 = vor.u32 1.1754944e-38, %v994
  %v996 = vsel %vm993, %v995, %v991
  %v997 = vmul.f32 1.0, %v996
  %v998 = vrcp.pop %v654
  %v999 = vmul.f32 %v654, %v998
  %v1000 = vsub.f32 1.0, %v999
  %v1001 = vmul.f32 %v998, %v1000
  %v1002 = vadd.f32 %v998, %v1001
  %vm1003 = vweird.f32 %v654
  %vm1004 = vweird.f32 %v998
  %vm1005 = vmor %vm1003, %vm1004
  %v1006 = vsel %vm1005, %v998, %v1002
  %v1007 = vand.u32 2147483647, %v654
  %vm1008 = vcmp.eq.f32.partialorder %v1007, 8.507059e+37
  %v1009 = vand.u32 %v654, 2147483648
  %v1010 = vor.u32 1.1754944e-38, %v1009
  %v1011 = vsel %vm1008, %v1010, %v1006
  %v1012 = vmul.f32 1.0, %v1011
  %v1013 = vrcp.pop %v655
  %v1014 = vmul.f32 %v655, %v1013
  %v1015 = vsub.f32 1.0, %v1014
  %v1016 = vmul.f32 %v1013, %v1015
  %v1017 = vadd.f32 %v1013, %v1016
  %vm1018 = vweird.f32 %v655
  %vm1019 = vweird.f32 %v1013
  %vm1020 = vmor %vm1018, %vm1019
  %v1021 = vsel %vm1020, %v1013, %v1017
  %v1022 = vand.u32 2147483647, %v655
  %vm1023 = vcmp.eq.f32.partialorder %v1022, 8.507059e+37
  %v1024 = vand.u32 %v655, 2147483648
  %v1025 = vor.u32 1.1754944e-38, %v1024
  %v1026 = vsel %vm1023, %v1025, %v1021
  %v1027 = vmul.f32 1.0, %v1026
  %v1028 = vrcp.pop %v656
  %v1029 = vmul.f32 %v656, %v1028
  %v1030 = vsub.f32 1.0, %v1029
  %v1031 = vmul.f32 %v1028, %v1030
  %v1032 = vadd.f32 %v1028, %v1031
  %vm1033 = vweird.f32 %v656
  %vm1034 = vweird.f32 %v1028
  %vm1035 = vmor %vm1033, %vm1034
  %v1036 = vsel %vm1035, %v1028, %v1032
  %v1037 = vand.u32 2147483647, %v656
  %vm1038 = vcmp.eq.f32.partialorder %v1037, 8.507059e+37
  %v1039 = vand.u32 %v656, 2147483648
  %v1040 = vor.u32 1.1754944e-38, %v1039
  %v1041 = vsel %vm1038, %v1040, %v1036
  %v1042 = vmul.f32 1.0, %v1041
  %v1043 = vrcp.pop %v657
  %v1044 = vmul.f32 %v657, %v1043
  %v1045 = vsub.f32 1.0, %v1044
  %v1046 = vmul.f32 %v1043, %v1045
  %v1047 = vadd.f32 %v1043, %v1046
  %vm1048 = vweird.f32 %v657
  %vm1049 = vweird.f32 %v1043
  %vm1050 = vmor %vm1048, %vm1049
  %v1051 = vsel %vm1050, %v1043, %v1047
  %v1052 = vand.u32 2147483647, %v657
  %vm1053 = vcmp.eq.f32.partialorder %v1052, 8.507059e+37
  %v1054 = vand.u32 %v657, 2147483648
  %v1055 = vor.u32 1.1754944e-38, %v1054
  %v1056 = vsel %vm1053, %v1055, %v1051
  %v1057 = vmul.f32 1.0, %v1056
  %v1058 = vrcp.pop %v658
  %v1059 = vmul.f32 %v658, %v1058
  %v1060 = vsub.f32 1.0, %v1059
  %v1061 = vmul.f32 %v1058, %v1060
  %v1062 = vadd.f32 %v1058, %v1061
  %vm1063 = vweird.f32 %v658
  %vm1064 = vweird.f32 %v1058
  %vm1065 = vmor %vm1063, %vm1064
  %v1066 = vsel %vm1065, %v1058, %v1062
  %v1067 = vand.u32 2147483647, %v658
  %vm1068 = vcmp.eq.f32.partialorder %v1067, 8.507059e+37
  %v1069 = vand.u32 %v658, 2147483648
  %v1070 = vor.u32 1.1754944e-38, %v1069
  %v1071 = vsel %vm1068, %v1070, %v1066
  %v1072 = vmul.f32 1.0, %v1071
  %v1073 = vrcp.pop %v659
  %v1074 = vmul.f32 %v659, %v1073
  %v1075 = vsub.f32 1.0, %v1074
  %v1076 = vmul.f32 %v1073, %v1075
  %v1077 = vadd.f32 %v1073, %v1076
  %vm1078 = vweird.f32 %v659
  %vm1079 = vweird.f32 %v1073
  %vm1080 = vmor %vm1078, %vm1079
  %v1081 = vsel %vm1080, %v1073, %v1077
  %v1082 = vand.u32 2147483647, %v659
  %vm1083 = vcmp.eq.f32.partialorder %v1082, 8.507059e+37
  %v1084 = vand.u32 %v659, 2147483648
  %v1085 = vor.u32 1.1754944e-38, %v1084
  %v1086 = vsel %vm1083, %v1085, %v1081
  %v1087 = vmul.f32 1.0, %v1086
  %v1088 = vrcp.pop %v660
  %v1089 = vmul.f32 %v660, %v1088
  %v1090 = vsub.f32 1.0, %v1089
  %v1091 = vmul.f32 %v1088, %v1090
  %v1092 = vadd.f32 %v1088, %v1091
  %vm1093 = vweird.f32 %v660
  %vm1094 = vweird.f32 %v1088
  %vm1095 = vmor %vm1093, %vm1094
  %v1096 = vsel %vm1095, %v1088, %v1092
  %v1097 = vand.u32 2147483647, %v660
  %vm1098 = vcmp.eq.f32.partialorder %v1097, 8.507059e+37
  %v1099 = vand.u32 %v660, 2147483648
  %v1100 = vor.u32 1.1754944e-38, %v1099
  %v1101 = vsel %vm1098, %v1100, %v1096
  %v1102 = vmul.f32 1.0, %v1101
  %v1103 = vrcp.pop %v661
  %v1104 = vmul.f32 %v661, %v1103
  %v1105 = vsub.f32 1.0, %v1104
  %v1106 = vmul.f32 %v1103, %v1105
  %v1107 = vadd.f32 %v1103, %v1106
  %vm1108 = vweird.f32 %v661
  %vm1109 = vweird.f32 %v1103
  %vm1110 = vmor %vm1108, %vm1109
  %v1111 = vsel %vm1110, %v1103, %v1107
  %v1112 = vand.u32 2147483647, %v661
  %vm1113 = vcmp.eq.f32.partialorder %v1112, 8.507059e+37
  %v1114 = vand.u32 %v661, 2147483648
  %v1115 = vor.u32 1.1754944e-38, %v1114
  %v1116 = vsel %vm1113, %v1115, %v1111
  %v1117 = vmul.f32 1.0, %v1116
  %v1118 = vrcp.pop %v662
  %v1119 = vmul.f32 %v662, %v1118
  %v1120 = vsub.f32 1.0, %v1119
  %v1121 = vmul.f32 %v1118, %v1120
  %v1122 = vadd.f32 %v1118, %v1121
  %vm1123 = vweird.f32 %v662
  %vm1124 = vweird.f32 %v1118
  %vm1125 = vmor %vm1123, %vm1124
  %v1126 = vsel %vm1125, %v1118, %v1122
  %v1127 = vand.u32 2147483647, %v662
  %vm1128 = vcmp.eq.f32.partialorder %v1127, 8.507059e+37
  %v1129 = vand.u32 %v662, 2147483648
  %v1130 = vor.u32 1.1754944e-38, %v1129
  %v1131 = vsel %vm1128, %v1130, %v1126
  %v1132 = vmul.f32 1.0, %v1131
  %v1133 = vrcp.pop %v663
  %v1134 = vmul.f32 %v663, %v1133
  %v1135 = vsub.f32 1.0, %v1134
  %v1136 = vmul.f32 %v1133, %v1135
  %v1137 = vadd.f32 %v1133, %v1136
  %vm1138 = vweird.f32 %v663
  %vm1139 = vweird.f32 %v1133
  %vm1140 = vmor %vm1138, %vm1139
  %v1141 = vsel %vm1140, %v1133, %v1137
  %v1142 = vand.u32 2147483647, %v663
  %vm1143 = vcmp.eq.f32.partialorder %v1142, 8.507059e+37
  %v1144 = vand.u32 %v663, 2147483648
  %v1145 = vor.u32 1.1754944e-38, %v1144
  %v1146 = vsel %vm1143, %v1145, %v1141
  %v1147 = vmul.f32 1.0, %v1146
  %v1148 = vrcp.pop %v664
  %v1149 = vmul.f32 %v664, %v1148
  %v1150 = vsub.f32 1.0, %v1149
  %v1151 = vmul.f32 %v1148, %v1150
  %v1152 = vadd.f32 %v1148, %v1151
  %vm1153 = vweird.f32 %v664
  %vm1154 = vweird.f32 %v1148
  %vm1155 = vmor %vm1153, %vm1154
  %v1156 = vsel %vm1155, %v1148, %v1152
  %v1157 = vand.u32 2147483647, %v664
  %vm1158 = vcmp.eq.f32.partialorder %v1157, 8.507059e+37
  %v1159 = vand.u32 %v664, 2147483648
  %v1160 = vor.u32 1.1754944e-38, %v1159
  %v1161 = vsel %vm1158, %v1160, %v1156
  %v1162 = vmul.f32 1.0, %v1161
  %v1163 = vrcp.pop %v665
  %v1164 = vmul.f32 %v665, %v1163
  %v1165 = vsub.f32 1.0, %v1164
  %v1166 = vmul.f32 %v1163, %v1165
  %v1167 = vadd.f32 %v1163, %v1166
  %vm1168 = vweird.f32 %v665
  %vm1169 = vweird.f32 %v1163
  %vm1170 = vmor %vm1168, %vm1169
  %v1171 = vsel %vm1170, %v1163, %v1167
  %v1172 = vand.u32 2147483647, %v665
  %vm1173 = vcmp.eq.f32.partialorder %v1172, 8.507059e+37
  %v1174 = vand.u32 %v665, 2147483648
  %v1175 = vor.u32 1.1754944e-38, %v1174
  %v1176 = vsel %vm1173, %v1175, %v1171
  %v1177 = vmul.f32 1.0, %v1176
  %v1178 = vrcp.pop %v666
  %v1179 = vmul.f32 %v666, %v1178
  %v1180 = vsub.f32 1.0, %v1179
  %v1181 = vmul.f32 %v1178, %v1180
  %v1182 = vadd.f32 %v1178, %v1181
  %vm1183 = vweird.f32 %v666
  %vm1184 = vweird.f32 %v1178
  %vm1185 = vmor %vm1183, %vm1184
  %v1186 = vsel %vm1185, %v1178, %v1182
  %v1187 = vand.u32 2147483647, %v666
  %vm1188 = vcmp.eq.f32.partialorder %v1187, 8.507059e+37
  %v1189 = vand.u32 %v666, 2147483648
  %v1190 = vor.u32 1.1754944e-38, %v1189
  %v1191 = vsel %vm1188, %v1190, %v1186
  %v1192 = vmul.f32 1.0, %v1191
  %v1193 = vrcp.pop %v667
  %v1194 = vmul.f32 %v667, %v1193
  %v1195 = vsub.f32 1.0, %v1194
  %v1196 = vmul.f32 %v1193, %v1195
  %v1197 = vadd.f32 %v1193, %v1196
  %vm1198 = vweird.f32 %v667
  %vm1199 = vweird.f32 %v1193
  %vm1200 = vmor %vm1198, %vm1199
  %v1201 = vsel %vm1200, %v1193, %v1197
  %v1202 = vand.u32 2147483647, %v667
  %vm1203 = vcmp.eq.f32.partialorder %v1202, 8.507059e+37
  %v1204 = vand.u32 %v667, 2147483648
  %v1205 = vor.u32 1.1754944e-38, %v1204
  %v1206 = vsel %vm1203, %v1205, %v1201
  %v1207 = vmul.f32 1.0, %v1206
  %v1208 = vrcp.pop %v668
  %v1209 = vmul.f32 %v668, %v1208
  %v1210 = vsub.f32 1.0, %v1209
  %v1211 = vmul.f32 %v1208, %v1210
  %v1212 = vadd.f32 %v1208, %v1211
  %vm1213 = vweird.f32 %v668
  %vm1214 = vweird.f32 %v1208
  %vm1215 = vmor %vm1213, %vm1214
  %v1216 = vsel %vm1215, %v1208, %v1212
  %v1217 = vand.u32 2147483647, %v668
  %vm1218 = vcmp.eq.f32.partialorder %v1217, 8.507059e+37
  %v1219 = vand.u32 %v668, 2147483648
  %v1220 = vor.u32 1.1754944e-38, %v1219
  %v1221 = vsel %vm1218, %v1220, %v1216
  %v1222 = vmul.f32 1.0, %v1221
  %v1223 = vrcp.pop %v669
  %v1224 = vmul.f32 %v669, %v1223
  %v1225 = vsub.f32 1.0, %v1224
  %v1226 = vmul.f32 %v1223, %v1225
  %v1227 = vadd.f32 %v1223, %v1226
  %vm1228 = vweird.f32 %v669
  %vm1229 = vweird.f32 %v1223
  %vm1230 = vmor %vm1228, %vm1229
  %v1231 = vsel %vm1230, %v1223, %v1227
  %v1232 = vand.u32 2147483647, %v669
  %vm1233 = vcmp.eq.f32.partialorder %v1232, 8.507059e+37
  %v1234 = vand.u32 %v669, 2147483648
  %v1235 = vor.u32 1.1754944e-38, %v1234
  %v1236 = vsel %vm1233, %v1235, %v1231
  %v1237 = vmul.f32 1.0, %v1236
  %v1238 = vrcp.pop %v670
  %v1239 = vmul.f32 %v670, %v1238
  %v1240 = vsub.f32 1.0, %v1239
  %v1241 = vmul.f32 %v1238, %v1240
  %v1242 = vadd.f32 %v1238, %v1241
  %vm1243 = vweird.f32 %v670
  %vm1244 = vweird.f32 %v1238
  %vm1245 = vmor %vm1243, %vm1244
  %v1246 = vsel %vm1245, %v1238, %v1242
  %v1247 = vand.u32 2147483647, %v670
  %vm1248 = vcmp.eq.f32.partialorder %v1247, 8.507059e+37
  %v1249 = vand.u32 %v670, 2147483648
  %v1250 = vor.u32 1.1754944e-38, %v1249
  %v1251 = vsel %vm1248, %v1250, %v1246
  %v1252 = vmul.f32 1.0, %v1251
  %v1253 = vrcp.pop %v671
  %v1254 = vmul.f32 %v671, %v1253
  %v1255 = vsub.f32 1.0, %v1254
  %v1256 = vmul.f32 %v1253, %v1255
  %v1257 = vadd.f32 %v1253, %v1256
  %vm1258 = vweird.f32 %v671
  %vm1259 = vweird.f32 %v1253
  %vm1260 = vmor %vm1258, %vm1259
  %v1261 = vsel %vm1260, %v1253, %v1257
  %v1262 = vand.u32 2147483647, %v671
  %vm1263 = vcmp.eq.f32.partialorder %v1262, 8.507059e+37
  %v1264 = vand.u32 %v671, 2147483648
  %v1265 = vor.u32 1.1754944e-38, %v1264
  %v1266 = vsel %vm1263, %v1265, %v1261
  %v1267 = vmul.f32 1.0, %v1266
  %v1268 = vrcp.pop %v672
  %v1269 = vmul.f32 %v672, %v1268
  %v1270 = vsub.f32 1.0, %v1269
  %v1271 = vmul.f32 %v1268, %v1270
  %v1272 = vadd.f32 %v1268, %v1271
  %vm1273 = vweird.f32 %v672
  %vm1274 = vweird.f32 %v1268
  %vm1275 = vmor %vm1273, %vm1274
  %v1276 = vsel %vm1275, %v1268, %v1272
  %v1277 = vand.u32 2147483647, %v672
  %vm1278 = vcmp.eq.f32.partialorder %v1277, 8.507059e+37
  %v1279 = vand.u32 %v672, 2147483648
  %v1280 = vor.u32 1.1754944e-38, %v1279
  %v1281 = vsel %vm1278, %v1280, %v1276
  %v1282 = vmul.f32 1.0, %v1281
  %v1283 = vrcp.pop %v673
  %v1284 = vmul.f32 %v673, %v1283
  %v1285 = vsub.f32 1.0, %v1284
  %v1286 = vmul.f32 %v1283, %v1285
  %v1287 = vadd.f32 %v1283, %v1286
  %vm1288 = vweird.f32 %v673
  %vm1289 = vweird.f32 %v1283
  %vm1290 = vmor %vm1288, %vm1289
  %v1291 = vsel %vm1290, %v1283, %v1287
  %v1292 = vand.u32 2147483647, %v673
  %vm1293 = vcmp.eq.f32.partialorder %v1292, 8.507059e+37
  %v1294 = vand.u32 %v673, 2147483648
  %v1295 = vor.u32 1.1754944e-38, %v1294
  %v1296 = vsel %vm1293, %v1295, %v1291
  %v1297 = vmul.f32 1.0, %v1296
  %v1298 = vrcp.pop %v674
  %v1299 = vmul.f32 %v674, %v1298
  %v1300 = vsub.f32 1.0, %v1299
  %v1301 = vmul.f32 %v1298, %v1300
  %v1302 = vadd.f32 %v1298, %v1301
  %vm1303 = vweird.f32 %v674
  %vm1304 = vweird.f32 %v1298
  %vm1305 = vmor %vm1303, %vm1304
  %v1306 = vsel %vm1305, %v1298, %v1302
  %v1307 = vand.u32 2147483647, %v674
  %vm1308 = vcmp.eq.f32.partialorder %v1307, 8.507059e+37
  %v1309 = vand.u32 %v674, 2147483648
  %v1310 = vor.u32 1.1754944e-38, %v1309
  %v1311 = vsel %vm1308, %v1310, %v1306
  %v1312 = vmul.f32 1.0, %v1311
  %v1313 = vrcp.pop %v675
  %v1314 = vmul.f32 %v675, %v1313
  %v1315 = vsub.f32 1.0, %v1314
  %v1316 = vmul.f32 %v1313, %v1315
  %v1317 = vadd.f32 %v1313, %v1316
  %vm1318 = vweird.f32 %v675
  %vm1319 = vweird.f32 %v1313
  %vm1320 = vmor %vm1318, %vm1319
  %v1321 = vsel %vm1320, %v1313, %v1317
  %v1322 = vand.u32 2147483647, %v675
  %vm1323 = vcmp.eq.f32.partialorder %v1322, 8.507059e+37
  %v1324 = vand.u32 %v675, 2147483648
  %v1325 = vor.u32 1.1754944e-38, %v1324
  %v1326 = vsel %vm1323, %v1325, %v1321
  %v1327 = vmul.f32 1.0, %v1326
  %v1328 = vrcp.pop %v676
  %v1329 = vmul.f32 %v676, %v1328
  %v1330 = vsub.f32 1.0, %v1329
  %v1331 = vmul.f32 %v1328, %v1330
  %v1332 = vadd.f32 %v1328, %v1331
  %vm1333 = vweird.f32 %v676
  %vm1334 = vweird.f32 %v1328
  %vm1335 = vmor %vm1333, %vm1334
  %v1336 = vsel %vm1335, %v1328, %v1332
  %v1337 = vand.u32 2147483647, %v676
  %vm1338 = vcmp.eq.f32.partialorder %v1337, 8.507059e+37
  %v1339 = vand.u32 %v676, 2147483648
  %v1340 = vor.u32 1.1754944e-38, %v1339
  %v1341 = vsel %vm1338, %v1340, %v1336
  %v1342 = vmul.f32 1.0, %v1341
  %v1343 = vrcp.pop %v677
  %v1344 = vmul.f32 %v677, %v1343
  %v1345 = vsub.f32 1.0, %v1344
  %v1346 = vmul.f32 %v1343, %v1345
  %v1347 = vadd.f32 %v1343, %v1346
  %vm1348 = vweird.f32 %v677
  %vm1349 = vweird.f32 %v1343
  %vm1350 = vmor %vm1348, %vm1349
  %v1351 = vsel %vm1350, %v1343, %v1347
  %v1352 = vand.u32 2147483647, %v677
  %vm1353 = vcmp.eq.f32.partialorder %v1352, 8.507059e+37
  %v1354 = vand.u32 %v677, 2147483648
  %v1355 = vor.u32 1.1754944e-38, %v1354
  %v1356 = vsel %vm1353, %v1355, %v1351
  %v1357 = vmul.f32 1.0, %v1356
  %v1358 = vrcp.pop %v678
  %v1359 = vmul.f32 %v678, %v1358
  %v1360 = vsub.f32 1.0, %v1359
  %v1361 = vmul.f32 %v1358, %v1360
  %v1362 = vadd.f32 %v1358, %v1361
  %vm1363 = vweird.f32 %v678
  %vm1364 = vweird.f32 %v1358
  %vm1365 = vmor %vm1363, %vm1364
  %v1366 = vsel %vm1365, %v1358, %v1362
  %v1367 = vand.u32 2147483647, %v678
  %vm1368 = vcmp.eq.f32.partialorder %v1367, 8.507059e+37
  %v1369 = vand.u32 %v678, 2147483648
  %v1370 = vor.u32 1.1754944e-38, %v1369
  %v1371 = vsel %vm1368, %v1370, %v1366
  %v1372 = vmul.f32 1.0, %v1371
  %v1373 = vrcp.pop %v679
  %v1374 = vmul.f32 %v679, %v1373
  %v1375 = vsub.f32 1.0, %v1374
  %v1376 = vmul.f32 %v1373, %v1375
  %v1377 = vadd.f32 %v1373, %v1376
  %vm1378 = vweird.f32 %v679
  %vm1379 = vweird.f32 %v1373
  %vm1380 = vmor %vm1378, %vm1379
  %v1381 = vsel %vm1380, %v1373, %v1377
  %v1382 = vand.u32 2147483647, %v679
  %vm1383 = vcmp.eq.f32.partialorder %v1382, 8.507059e+37
  %v1384 = vand.u32 %v679, 2147483648
  %v1385 = vor.u32 1.1754944e-38, %v1384
  %v1386 = vsel %vm1383, %v1385, %v1381
  %v1387 = vmul.f32 1.0, %v1386
  %v1388 = vrcp.pop %v680
  %v1389 = vmul.f32 %v680, %v1388
  %v1390 = vsub.f32 1.0, %v1389
  %v1391 = vmul.f32 %v1388, %v1390
  %v1392 = vadd.f32 %v1388, %v1391
  %vm1393 = vweird.f32 %v680
  %vm1394 = vweird.f32 %v1388
  %vm1395 = vmor %vm1393, %vm1394
  %v1396 = vsel %vm1395, %v1388, %v1392
  %v1397 = vand.u32 2147483647, %v680
  %vm1398 = vcmp.eq.f32.partialorder %v1397, 8.507059e+37
  %v1399 = vand.u32 %v680, 2147483648
  %v1400 = vor.u32 1.1754944e-38, %v1399
  %v1401 = vsel %vm1398, %v1400, %v1396
  %v1402 = vmul.f32 1.0, %v1401
  %v1403 = vrcp.pop %v681
  %v1404 = vmul.f32 %v681, %v1403
  %v1405 = vsub.f32 1.0, %v1404
  %v1406 = vmul.f32 %v1403, %v1405
  %v1407 = vadd.f32 %v1403, %v1406
  %vm1408 = vweird.f32 %v681
  %vm1409 = vweird.f32 %v1403
  %vm1410 = vmor %vm1408, %vm1409
  %v1411 = vsel %vm1410, %v1403, %v1407
  %v1412 = vand.u32 2147483647, %v681
  %vm1413 = vcmp.eq.f32.partialorder %v1412, 8.507059e+37
  %v1414 = vand.u32 %v681, 2147483648
  %v1415 = vor.u32 1.1754944e-38, %v1414
  %v1416 = vsel %vm1413, %v1415, %v1411
  %v1417 = vmul.f32 1.0, %v1416
  %v1418 = vrcp.pop %v682
  %v1419 = vmul.f32 %v682, %v1418
  %v1420 = vsub.f32 1.0, %v1419
  %v1421 = vmul.f32 %v1418, %v1420
  %v1422 = vadd.f32 %v1418, %v1421
  %vm1423 = vweird.f32 %v682
  %vm1424 = vweird.f32 %v1418
  %vm1425 = vmor %vm1423, %vm1424
  %v1426 = vsel %vm1425, %v1418, %v1422
  %v1427 = vand.u32 2147483647, %v682
  %vm1428 = vcmp.eq.f32.partialorder %v1427, 8.507059e+37
  %v1429 = vand.u32 %v682, 2147483648
  %v1430 = vor.u32 1.1754944e-38, %v1429
  %v1431 = vsel %vm1428, %v1430, %v1426
  %v1432 = vmul.f32 1.0, %v1431
  %v1433 = vrcp.pop %v683
  %v1434 = vmul.f32 %v683, %v1433
  %v1435 = vsub.f32 1.0, %v1434
  %v1436 = vmul.f32 %v1433, %v1435
  %v1437 = vadd.f32 %v1433, %v1436
  %vm1438 = vweird.f32 %v683
  %vm1439 = vweird.f32 %v1433
  %vm1440 = vmor %vm1438, %vm1439
  %v1441 = vsel %vm1440, %v1433, %v1437
  %v1442 = vand.u32 2147483647, %v683
  %vm1443 = vcmp.eq.f32.partialorder %v1442, 8.507059e+37
  %v1444 = vand.u32 %v683, 2147483648
  %v1445 = vor.u32 1.1754944e-38, %v1444
  %v1446 = vsel %vm1443, %v1445, %v1441
  %v1447 = vmul.f32 1.0, %v1446
  %v1448 = vrcp.pop %v684
  %v1449 = vmul.f32 %v684, %v1448
  %v1450 = vsub.f32 1.0, %v1449
  %v1451 = vmul.f32 %v1448, %v1450
  %v1452 = vadd.f32 %v1448, %v1451
  %vm1453 = vweird.f32 %v684
  %vm1454 = vweird.f32 %v1448
  %vm1455 = vmor %vm1453, %vm1454
  %v1456 = vsel %vm1455, %v1448, %v1452
  %v1457 = vand.u32 2147483647, %v684
  %vm1458 = vcmp.eq.f32.partialorder %v1457, 8.507059e+37
  %v1459 = vand.u32 %v684, 2147483648
  %v1460 = vor.u32 1.1754944e-38, %v1459
  %v1461 = vsel %vm1458, %v1460, %v1456
  %v1462 = vmul.f32 1.0, %v1461
  %v1463 = vrcp.pop %v685
  %v1464 = vmul.f32 %v685, %v1463
  %v1465 = vsub.f32 1.0, %v1464
  %v1466 = vmul.f32 %v1463, %v1465
  %v1467 = vadd.f32 %v1463, %v1466
  %vm1468 = vweird.f32 %v685
  %vm1469 = vweird.f32 %v1463
  %vm1470 = vmor %vm1468, %vm1469
  %v1471 = vsel %vm1470, %v1463, %v1467
  %v1472 = vand.u32 2147483647, %v685
  %vm1473 = vcmp.eq.f32.partialorder %v1472, 8.507059e+37
  %v1474 = vand.u32 %v685, 2147483648
  %v1475 = vor.u32 1.1754944e-38, %v1474
  %v1476 = vsel %vm1473, %v1475, %v1471
  %v1477 = vmul.f32 1.0, %v1476
  %v1478 = vrcp.pop %v686
  %v1479 = vmul.f32 %v686, %v1478
  %v1480 = vsub.f32 1.0, %v1479
  %v1481 = vmul.f32 %v1478, %v1480
  %v1482 = vadd.f32 %v1478, %v1481
  %vm1483 = vweird.f32 %v686
  %vm1484 = vweird.f32 %v1478
  %vm1485 = vmor %vm1483, %vm1484
  %v1486 = vsel %vm1485, %v1478, %v1482
  %v1487 = vand.u32 2147483647, %v686
  %vm1488 = vcmp.eq.f32.partialorder %v1487, 8.507059e+37
  %v1489 = vand.u32 %v686, 2147483648
  %v1490 = vor.u32 1.1754944e-38, %v1489
  %v1491 = vsel %vm1488, %v1490, %v1486
  %v1492 = vmul.f32 1.0, %v1491
  %v1493 = vrcp.pop %v687
  %v1494 = vmul.f32 %v687, %v1493
  %v1495 = vsub.f32 1.0, %v1494
  %v1496 = vmul.f32 %v1493, %v1495
  %v1497 = vadd.f32 %v1493, %v1496
  %vm1498 = vweird.f32 %v687
  %vm1499 = vweird.f32 %v1493
  %vm1500 = vmor %vm1498, %vm1499
  %v1501 = vsel %vm1500, %v1493, %v1497
  %v1502 = vand.u32 2147483647, %v687
  %vm1503 = vcmp.eq.f32.partialorder %v1502, 8.507059e+37
  %v1504 = vand.u32 %v687, 2147483648
  %v1505 = vor.u32 1.1754944e-38, %v1504
  %v1506 = vsel %vm1503, %v1505, %v1501
  %v1507 = vmul.f32 1.0, %v1506
  %v1508 = vrcp.pop %v688
  %v1509 = vmul.f32 %v688, %v1508
  %v1510 = vsub.f32 1.0, %v1509
  %v1511 = vmul.f32 %v1508, %v1510
  %v1512 = vadd.f32 %v1508, %v1511
  %vm1513 = vweird.f32 %v688
  %vm1514 = vweird.f32 %v1508
  %vm1515 = vmor %vm1513, %vm1514
  %v1516 = vsel %vm1515, %v1508, %v1512
  %v1517 = vand.u32 2147483647, %v688
  %vm1518 = vcmp.eq.f32.partialorder %v1517, 8.507059e+37
  %v1519 = vand.u32 %v688, 2147483648
  %v1520 = vor.u32 1.1754944e-38, %v1519
  %v1521 = vsel %vm1518, %v1520, %v1516
  %v1522 = vmul.f32 1.0, %v1521
  %v1523 = vrcp.pop %v689
  %v1524 = vmul.f32 %v689, %v1523
  %v1525 = vsub.f32 1.0, %v1524
  %v1526 = vmul.f32 %v1523, %v1525
  %v1527 = vadd.f32 %v1523, %v1526
  %vm1528 = vweird.f32 %v689
  %vm1529 = vweird.f32 %v1523
  %vm1530 = vmor %vm1528, %vm1529
  %v1531 = vsel %vm1530, %v1523, %v1527
  %v1532 = vand.u32 2147483647, %v689
  %vm1533 = vcmp.eq.f32.partialorder %v1532, 8.507059e+37
  %v1534 = vand.u32 %v689, 2147483648
  %v1535 = vor.u32 1.1754944e-38, %v1534
  %v1536 = vsel %vm1533, %v1535, %v1531
  %v1537 = vmul.f32 1.0, %v1536
  %v1538 = vrcp.pop %v690
  %v1539 = vmul.f32 %v690, %v1538
  %v1540 = vsub.f32 1.0, %v1539
  %v1541 = vmul.f32 %v1538, %v1540
  %v1542 = vadd.f32 %v1538, %v1541
  %vm1543 = vweird.f32 %v690
  %vm1544 = vweird.f32 %v1538
  %vm1545 = vmor %vm1543, %vm1544
  %v1546 = vsel %vm1545, %v1538, %v1542
  %v1547 = vand.u32 2147483647, %v690
  %vm1548 = vcmp.eq.f32.partialorder %v1547, 8.507059e+37
  %v1549 = vand.u32 %v690, 2147483648
  %v1550 = vor.u32 1.1754944e-38, %v1549
  %v1551 = vsel %vm1548, %v1550, %v1546
  %v1552 = vmul.f32 1.0, %v1551
  %v1553 = vrcp.pop %v691
  %v1554 = vmul.f32 %v691, %v1553
  %v1555 = vsub.f32 1.0, %v1554
  %v1556 = vmul.f32 %v1553, %v1555
  %v1557 = vadd.f32 %v1553, %v1556
  %vm1558 = vweird.f32 %v691
  %vm1559 = vweird.f32 %v1553
  %vm1560 = vmor %vm1558, %vm1559
  %v1561 = vsel %vm1560, %v1553, %v1557
  %v1562 = vand.u32 2147483647, %v691
  %vm1563 = vcmp.eq.f32.partialorder %v1562, 8.507059e+37
  %v1564 = vand.u32 %v691, 2147483648
  %v1565 = vor.u32 1.1754944e-38, %v1564
  %v1566 = vsel %vm1563, %v1565, %v1561
  %v1567 = vmul.f32 1.0, %v1566
  %v1568 = vrcp.pop %v692
  %v1569 = vmul.f32 %v692, %v1568
  %v1570 = vsub.f32 1.0, %v1569
  %v1571 = vmul.f32 %v1568, %v1570
  %v1572 = vadd.f32 %v1568, %v1571
  %vm1573 = vweird.f32 %v692
  %vm1574 = vweird.f32 %v1568
  %vm1575 = vmor %vm1573, %vm1574
  %v1576 = vsel %vm1575, %v1568, %v1572
  %v1577 = vand.u32 2147483647, %v692
  %vm1578 = vcmp.eq.f32.partialorder %v1577, 8.507059e+37
  %v1579 = vand.u32 %v692, 2147483648
  %v1580 = vor.u32 1.1754944e-38, %v1579
  %v1581 = vsel %vm1578, %v1580, %v1576
  %v1582 = vmul.f32 1.0, %v1581
  %v1583 = vrcp.pop %v693
  %v1584 = vmul.f32 %v693, %v1583
  %v1585 = vsub.f32 1.0, %v1584
  %v1586 = vmul.f32 %v1583, %v1585
  %v1587 = vadd.f32 %v1583, %v1586
  %vm1588 = vweird.f32 %v693
  %vm1589 = vweird.f32 %v1583
  %vm1590 = vmor %vm1588, %vm1589
  %v1591 = vsel %vm1590, %v1583, %v1587
  %v1592 = vand.u32 2147483647, %v693
  %vm1593 = vcmp.eq.f32.partialorder %v1592, 8.507059e+37
  %v1594 = vand.u32 %v693, 2147483648
  %v1595 = vor.u32 1.1754944e-38, %v1594
  %v1596 = vsel %vm1593, %v1595, %v1591
  %v1597 = vmul.f32 1.0, %v1596
  %v1598 = vrcp.pop %v694
  %v1599 = vmul.f32 %v694, %v1598
  %v1600 = vsub.f32 1.0, %v1599
  %v1601 = vmul.f32 %v1598, %v1600
  %v1602 = vadd.f32 %v1598, %v1601
  %vm1603 = vweird.f32 %v694
  %vm1604 = vweird.f32 %v1598
  %vm1605 = vmor %vm1603, %vm1604
  %v1606 = vsel %vm1605, %v1598, %v1602
  %v1607 = vand.u32 2147483647, %v694
  %vm1608 = vcmp.eq.f32.partialorder %v1607, 8.507059e+37
  %v1609 = vand.u32 %v694, 2147483648
  %v1610 = vor.u32 1.1754944e-38, %v1609
  %v1611 = vsel %vm1608, %v1610, %v1606
  %v1612 = vmul.f32 1.0, %v1611
  %v1613 = vrcp.pop %v695
  %v1614 = vmul.f32 %v695, %v1613
  %v1615 = vsub.f32 1.0, %v1614
  %v1616 = vmul.f32 %v1613, %v1615
  %v1617 = vadd.f32 %v1613, %v1616
  %vm1618 = vweird.f32 %v695
  %vm1619 = vweird.f32 %v1613
  %vm1620 = vmor %vm1618, %vm1619
  %v1621 = vsel %vm1620, %v1613, %v1617
  %v1622 = vand.u32 2147483647, %v695
  %vm1623 = vcmp.eq.f32.partialorder %v1622, 8.507059e+37
  %v1624 = vand.u32 %v695, 2147483648
  %v1625 = vor.u32 1.1754944e-38, %v1624
  %v1626 = vsel %vm1623, %v1625, %v1621
  %v1627 = vmul.f32 1.0, %v1626
  %v1628 = vrcp.pop %v696
  %v1629 = vmul.f32 %v696, %v1628
  %v1630 = vsub.f32 1.0, %v1629
  %v1631 = vmul.f32 %v1628, %v1630
  %v1632 = vadd.f32 %v1628, %v1631
  %vm1633 = vweird.f32 %v696
  %vm1634 = vweird.f32 %v1628
  %vm1635 = vmor %vm1633, %vm1634
  %v1636 = vsel %vm1635, %v1628, %v1632
  %v1637 = vand.u32 2147483647, %v696
  %vm1638 = vcmp.eq.f32.partialorder %v1637, 8.507059e+37
  %v1639 = vand.u32 %v696, 2147483648
  %v1640 = vor.u32 1.1754944e-38, %v1639
  %v1641 = vsel %vm1638, %v1640, %v1636
  %v1642 = vmul.f32 1.0, %v1641
  %v1643 = vrcp.pop %v697
  %v1644 = vmul.f32 %v697, %v1643
  %v1645 = vsub.f32 1.0, %v1644
  %v1646 = vmul.f32 %v1643, %v1645
  %v1647 = vadd.f32 %v1643, %v1646
  %vm1648 = vweird.f32 %v697
  %vm1649 = vweird.f32 %v1643
  %vm1650 = vmor %vm1648, %vm1649
  %v1651 = vsel %vm1650, %v1643, %v1647
  %v1652 = vand.u32 2147483647, %v697
  %vm1653 = vcmp.eq.f32.partialorder %v1652, 8.507059e+37
  %v1654 = vand.u32 %v697, 2147483648
  %v1655 = vor.u32 1.1754944e-38, %v1654
  %v1656 = vsel %vm1653, %v1655, %v1651
  %v1657 = vmul.f32 1.0, %v1656
  %v1658 = vmul.f32 %v378, %v712
  %v1659 = vmul.f32 %v379, %v727
  %v1660 = vmul.f32 %v380, %v742
  %v1661 = vmul.f32 %v381, %v757
  %v1662 = vmul.f32 %v382, %v772
  %v1663 = vmul.f32 %v383, %v787
  %v1664 = vmul.f32 %v384, %v802
  %v1665 = vmul.f32 %v385, %v817
  %v1666 = vmul.f32 %v386, %v832
  %v1667 = vmul.f32 %v387, %v847
  %v1668 = vmul.f32 %v388, %v862
  %v1669 = vmul.f32 %v389, %v877
  %v1670 = vmul.f32 %v390, %v892
  %v1671 = vmul.f32 %v391, %v907
  %v1672 = vmul.f32 %v392, %v922
  %v1673 = vmul.f32 %v393, %v937
  %v1674 = vmul.f32 %v394, %v952
  %v1675 = vmul.f32 %v395, %v967
  %v1676 = vmul.f32 %v396, %v982
  %v1677 = vmul.f32 %v397, %v997
  %v1678 = vmul.f32 %v398, %v1012
  %v1679 = vmul.f32 %v399, %v1027
  %v1680 = vmul.f32 %v400, %v1042
  %v1681 = vmul.f32 %v401, %v1057
  %v1682 = vmul.f32 %v402, %v1072
  %v1683 = vmul.f32 %v403, %v1087
  %v1684 = vmul.f32 %v404, %v1102
  %v1685 = vmul.f32 %v405, %v1117
  %v1686 = vmul.f32 %v406, %v1132
  %v1687 = vmul.f32 %v407, %v1147
  %v1688 = vmul.f32 %v408, %v1162
  %v1689 = vmul.f32 %v409, %v1177
  %v1690 = vmul.f32 %v410, %v1192
  %v1691 = vmul.f32 %v411, %v1207
  %v1692 = vmul.f32 %v412, %v1222
  %v1693 = vmul.f32 %v413, %v1237
  %v1694 = vmul.f32 %v414, %v1252
  %v1695 = vmul.f32 %v415, %v1267
  %v1696 = vmul.f32 %v416, %v1282
  %v1697 = vmul.f32 %v417, %v1297
  %v1698 = vmul.f32 %v418, %v1312
  %v1699 = vmul.f32 %v419, %v1327
  %v1700 = vmul.f32 %v420, %v1342
  %v1701 = vmul.f32 %v421, %v1357
  %v1702 = vmul.f32 %v422, %v1372
  %v1703 = vmul.f32 %v423, %v1387
  %v1704 = vmul.f32 %v424, %v1402
  %v1705 = vmul.f32 %v425, %v1417
  %v1706 = vmul.f32 %v426, %v1432
  %v1707 = vmul.f32 %v427, %v1447
  %v1708 = vmul.f32 %v428, %v1462
  %v1709 = vmul.f32 %v429, %v1477
  %v1710 = vmul.f32 %v430, %v1492
  %v1711 = vmul.f32 %v431, %v1507
  %v1712 = vmul.f32 %v432, %v1522
  %v1713 = vmul.f32 %v433, %v1537
  %v1714 = vmul.f32 %v434, %v1552
  %v1715 = vmul.f32 %v435, %v1567
  %v1716 = vmul.f32 %v436, %v1582
  %v1717 = vmul.f32 %v437, %v1597
  %v1718 = vmul.f32 %v438, %v1612
  %v1719 = vmul.f32 %v439, %v1627
  %v1720 = vmul.f32 %v440, %v1642
  %v1721 = vmul.f32 %v441, %v1657
  %1722 = vst [vmem:[%s4] sm:$0xff] %v1658
  %1723 = vst [vmem:[%s4 + $0x8] sm:$0xff] %v1659
  %1724 = vst [vmem:[%s4 + $0x10] sm:$0xff] %v1660
  %1725 = vst [vmem:[%s4 + $0x18] sm:$0xff] %v1661
  %1726 = vst [vmem:[%s4 + $0x20] sm:$0xff] %v1662
  %1727 = vst [vmem:[%s4 + $0x28] sm:$0xff] %v1663
  %1728 = vst [vmem:[%s4 + $0x30] sm:$0xff] %v1664
  %1729 = vst [vmem:[%s4 + $0x38] sm:$0xff] %v1665
  %1730 = vst [vmem:[%s4 + $0x40] sm:$0xff] %v1666
  %1731 = vst [vmem:[%s4 + $0x48] sm:$0xff] %v1667
  %1732 = vst [vmem:[%s4 + $0x50] sm:$0xff] %v1668
  %1733 = vst [vmem:[%s4 + $0x58] sm:$0xff] %v1669
  %1734 = vst [vmem:[%s4 + $0x60] sm:$0xff] %v1670
  %1735 = vst [vmem:[%s4 + $0x68] sm:$0xff] %v1671
  %1736 = vst [vmem:[%s4 + $0x70] sm:$0xff] %v1672
  %1737 = vst [vmem:[%s4 + $0x78] sm:$0xff] %v1673
  %1738 = vst [vmem:[%s4 + $0x80] sm:$0xff] %v1674
  %1739 = vst [vmem:[%s4 + $0x88] sm:$0xff] %v1675
  %1740 = vst [vmem:[%s4 + $0x90] sm:$0xff] %v1676
  %1741 = vst [vmem:[%s4 + $0x98] sm:$0xff] %v1677
  %1742 = vst [vmem:[%s4 + $0xa0] sm:$0xff] %v1678
  %1743 = vst [vmem:[%s4 + $0xa8] sm:$0xff] %v1679
  %1744 = vst [vmem:[%s4 + $0xb0] sm:$0xff] %v1680
  %1745 = vst [vmem:[%s4 + $0xb8] sm:$0xff] %v1681
  %1746 = vst [vmem:[%s4 + $0xc0] sm:$0xff] %v1682
  %1747 = vst [vmem:[%s4 + $0xc8] sm:$0xff] %v1683
  %1748 = vst [vmem:[%s4 + $0xd0] sm:$0xff] %v1684
  %1749 = vst [vmem:[%s4 + $0xd8] sm:$0xff] %v1685
  %1750 = vst [vmem:[%s4 + $0xe0] sm:$0xff] %v1686
  %1751 = vst [vmem:[%s4 + $0xe8] sm:$0xff] %v1687
  %1752 = vst [vmem:[%s4 + $0xf0] sm:$0xff] %v1688
  %1753 = vst [vmem:[%s4 + $0xf8] sm:$0xff] %v1689
  %1754 = vst [vmem:[%s4 + $0x100] sm:$0xff] %v1690
  %1755 = vst [vmem:[%s4 + $0x108] sm:$0xff] %v1691
  %1756 = vst [vmem:[%s4 + $0x110] sm:$0xff] %v1692
  %1757 = vst [vmem:[%s4 + $0x118] sm:$0xff] %v1693
  %1758 = vst [vmem:[%s4 + $0x120] sm:$0xff] %v1694
  %1759 = vst [vmem:[%s4 + $0x128] sm:$0xff] %v1695
  %1760 = vst [vmem:[%s4 + $0x130] sm:$0xff] %v1696
  %1761 = vst [vmem:[%s4 + $0x138] sm:$0xff] %v1697
  %1762 = vst [vmem:[%s4 + $0x140] sm:$0xff] %v1698
  %1763 = vst [vmem:[%s4 + $0x148] sm:$0xff] %v1699
  %1764 = vst [vmem:[%s4 + $0x150] sm:$0xff] %v1700
  %1765 = vst [vmem:[%s4 + $0x158] sm:$0xff] %v1701
  %1766 = vst [vmem:[%s4 + $0x160] sm:$0xff] %v1702
  %1767 = vst [vmem:[%s4 + $0x168] sm:$0xff] %v1703
  %1768 = vst [vmem:[%s4 + $0x170] sm:$0xff] %v1704
  %1769 = vst [vmem:[%s4 + $0x178] sm:$0xff] %v1705
  %1770 = vst [vmem:[%s4 + $0x180] sm:$0xff] %v1706
  %1771 = vst [vmem:[%s4 + $0x188] sm:$0xff] %v1707
  %1772 = vst [vmem:[%s4 + $0x190] sm:$0xff] %v1708
  %1773 = vst [vmem:[%s4 + $0x198] sm:$0xff] %v1709
  %1774 = vst [vmem:[%s4 + $0x1a0] sm:$0xff] %v1710
  %1775 = vst [vmem:[%s4 + $0x1a8] sm:$0xff] %v1711
  %1776 = vst [vmem:[%s4 + $0x1b0] sm:$0xff] %v1712
  %1777 = vst [vmem:[%s4 + $0x1b8] sm:$0xff] %v1713
  %1778 = vst [vmem:[%s4 + $0x1c0] sm:$0xff] %v1714
  %1779 = vst [vmem:[%s4 + $0x1c8] sm:$0xff] %v1715
  %1780 = vst [vmem:[%s4 + $0x1d0] sm:$0xff] %v1716
  %1781 = vst [vmem:[%s4 + $0x1d8] sm:$0xff] %v1717
  %1782 = vst [vmem:[%s4 + $0x1e0] sm:$0xff] %v1718
  %1783 = vst [vmem:[%s4 + $0x1e8] sm:$0xff] %v1719
  %1784 = vst [vmem:[%s4 + $0x1f0] sm:$0xff] %v1720
  %1785 = vst [vmem:[%s4 + $0x1f8] sm:$0xff] %v1721
  // Predicated region
  $region18: #{_lambda_.3} parent=0 // pred_check
    _
  $region19: #{_lambda_.3} parent=0 // pred_check_branch
    %1787 = sbr.rel (0) target = $region21
  $region20: #{_lambda_.3} parent=0 // pred_region
    _
  $region21: #{_lambda_.3} parent=0 // pred_fallthru
    _
  // Predicated region
  $region22: #{_lambda_.3} parent=0 // pred_check
    _
  $region23: #{_lambda_.3} parent=0 // pred_check_branch
    %1789 = sbr.rel (0) target = $region25
  $region24: #{_lambda_.3} parent=0 // pred_region
    _
  $region25: #{_lambda_.3} parent=0 // pred_fallthru
    _

// kernel: _lambda_.5
$region0: #{_lambda_.5}
  #allocation0 [shape = 'u32[]', space=smem, size = 0x4, offset = 0x4, fixed_abs, tag = 'smem constant byte address 0x4 - core index']
  #allocation1 [shape = 'u32[72,128]{1,0:T(1,128)}', space=vmem, size = 0x9000, scoped, tag = 'internal scratch']
  %s0 = inlined_call_operand.vmem [shape: f32[512,128], index: 0, kind: input, shape index: {}]
  %s1 = inlined_call_operand.vmem [shape: f32[512,128], index: 1, kind: input, shape index: {}]
  %s2 = inlined_call_operand.vmem [shape: f32[512,128], index: 2, kind: input, shape index: {}]
  %s3 = inlined_call_operand.vmem [shape: f32[128,128], index: 3, kind: input, shape index: {}]
  %s4 = inlined_call_operand.vmem [shape: f32[128,128], index: 4, kind: input, shape index: {}]
  %s5 = inlined_call_operand.vmem [shape: f32[128,128], index: 5, kind: input, shape index: {}]
  %s6 = inlined_call_operand.vmem [shape: f32[1,128], index: 6, kind: input, shape index: {}, may-alias: {6,8}]
  %s7 = inlined_call_operand.vmem [shape: f32[1,128], index: 7, kind: input, shape index: {}, may-alias: {7,9}]
  %s8 = inlined_call_operand.vmem [shape: f32[1,128], index: 8, kind: input, shape index: {}, may-alias: {6,8}]
  %s9 = inlined_call_operand.vmem [shape: f32[1,128], index: 9, kind: input, shape index: {}, may-alias: {7,9}]
  %s10 = inlined_call_operand.vmem [shape: f32[512,128], index: 10, kind: output, shape index: {}]
  %s11 = sld [smem:[#allocation0]]
  $region50: #{_lambda_.5} parent=0
    _
  %s13 = ssub.s32 1, %s11
  %s14 = scalar_select 0, %s13, %s11
  // Predicated region
  $region2: #{_lambda_.5} parent=0 // pred_check
    _
  $region3: #{_lambda_.5} parent=0 // pred_check_branch
    %16 = sbr.rel (0) target = $region5
  $region4: #{_lambda_.5} parent=0 // pred_region
    _
  $region5: #{_lambda_.5} parent=0 // pred_fallthru
    _
  // Predicated region
  $region6: #{_lambda_.5} parent=0 // pred_check
    _
  $region7: #{_lambda_.5} parent=0 // pred_check_branch
    %18 = sbr.rel (0) target = $region9
  $region8: #{_lambda_.5} parent=0 // pred_region
    _
  $region9: #{_lambda_.5} parent=0 // pred_fallthru
    _
  // Predicated region
  $region10: #{_lambda_.5} parent=0 // pred_check
    _
  $region11: #{_lambda_.5} parent=0 // pred_check_branch
    %20 = sbr.rel (0) target = $region13
  $region12: #{_lambda_.5} parent=0 // pred_region
    _
  $region13: #{_lambda_.5} parent=0 // pred_fallthru
    _
  // Predicated region
  $region14: #{_lambda_.5} parent=0 // pred_check
    _
  $region15: #{_lambda_.5} parent=0 // pred_check_branch
    %22 = sbr.rel (0) target = $region17
  $region16: #{_lambda_.5} parent=0 // pred_region
    _
  $region17: #{_lambda_.5} parent=0 // pred_fallthru
    _
  // Predicated region
  $region18: #{_lambda_.5} parent=0 // pred_check
    _
  $region19: #{_lambda_.5} parent=0 // pred_check_branch
    %24 = sbr.rel (0) target = $region21
  $region20: #{_lambda_.5} parent=0 // pred_region
    _
  $region21: #{_lambda_.5} parent=0 // pred_fallthru
    _
  // Predicated region
  $region22: #{_lambda_.5} parent=0 // pred_check
    _
  $region23: #{_lambda_.5} parent=0 // pred_check_branch
    %26 = sbr.rel (0) target = $region25
  $region24: #{_lambda_.5} parent=0 // pred_region
    _
  $region25: #{_lambda_.5} parent=0 // pred_fallthru
    _
  // Predicated region
  $region26: #{_lambda_.5} parent=0 // pred_check
    _
  $region27: #{_lambda_.5} parent=0 // pred_check_branch
    %28 = sbr.rel (0) target = $region29
  $region28: #{_lambda_.5} parent=0 // pred_region
    _
  $region29: #{_lambda_.5} parent=0 // pred_fallthru
    _
  // Predicated region
  $region30: #{_lambda_.5} parent=0 // pred_check
    _
  $region31: #{_lambda_.5} parent=0 // pred_check_branch
    %30 = sbr.rel (0) target = $region33
  $region32: #{_lambda_.5} parent=0 // pred_region
    _
  $region33: #{_lambda_.5} parent=0 // pred_fallthru
    _
  // Predicated region
  $region34: #{_lambda_.5} parent=0 // pred_check
    _
  $region35: #{_lambda_.5} parent=0 // pred_check_branch
    %32 = sbr.rel (0) target = $region37
  $region36: #{_lambda_.5} parent=0 // pred_region
    _
  $region37: #{_lambda_.5} parent=0 // pred_fallthru
    _
  // Predicated region
  $region38: #{_lambda_.5} parent=0 // pred_check
    _
  $region39: #{_lambda_.5} parent=0 // pred_check_branch
    %34 = sbr.rel (0) target = $region41
  $region40: #{_lambda_.5} parent=0 // pred_region
    _
  $region41: #{_lambda_.5} parent=0 // pred_fallthru
    _
  %v35 = vld [vmem:[%s0] sm:$0xff]
  %v36 = vld [vmem:[%s0 + $0x8] sm:$0xff]
  %v37 = vld [vmem:[%s0 + $0x10] sm:$0xff]
  %v38 = vld [vmem:[%s0 + $0x18] sm:$0xff]
  %v39 = vld [vmem:[%s0 + $0x20] sm:$0xff]
  %v40 = vld [vmem:[%s0 + $0x28] sm:$0xff]
  %v41 = vld [vmem:[%s0 + $0x30] sm:$0xff]
  %v42 = vld [vmem:[%s0 + $0x38] sm:$0xff]
  %v43 = vld [vmem:[%s0 + $0x40] sm:$0xff]
  %v44 = vld [vmem:[%s0 + $0x48] sm:$0xff]
  %v45 = vld [vmem:[%s0 + $0x50] sm:$0xff]
  %v46 = vld [vmem:[%s0 + $0x58] sm:$0xff]
  %v47 = vld [vmem:[%s0 + $0x60] sm:$0xff]
  %v48 = vld [vmem:[%s0 + $0x68] sm:$0xff]
  %v49 = vld [vmem:[%s0 + $0x70] sm:$0xff]
  %v50 = vld [vmem:[%s0 + $0x78] sm:$0xff]
  %v51 = vld [vmem:[%s0 + $0x80] sm:$0xff]
  %v52 = vld [vmem:[%s0 + $0x88] sm:$0xff]
  %v53 = vld [vmem:[%s0 + $0x90] sm:$0xff]
  %v54 = vld [vmem:[%s0 + $0x98] sm:$0xff]
  %v55 = vld [vmem:[%s0 + $0xa0] sm:$0xff]
  %v56 = vld [vmem:[%s0 + $0xa8] sm:$0xff]
  %v57 = vld [vmem:[%s0 + $0xb0] sm:$0xff]
  %v58 = vld [vmem:[%s0 + $0xb8] sm:$0xff]
  %v59 = vld [vmem:[%s0 + $0xc0] sm:$0xff]
  %v60 = vld [vmem:[%s0 + $0xc8] sm:$0xff]
  %v61 = vld [vmem:[%s0 + $0xd0] sm:$0xff]
  %v62 = vld [vmem:[%s0 + $0xd8] sm:$0xff]
  %v63 = vld [vmem:[%s0 + $0xe0] sm:$0xff]
  %v64 = vld [vmem:[%s0 + $0xe8] sm:$0xff]
  %v65 = vld [vmem:[%s0 + $0xf0] sm:$0xff]
  %v66 = vld [vmem:[%s0 + $0xf8] sm:$0xff]
  %v67 = vld [vmem:[%s0 + $0x100] sm:$0xff]
  %v68 = vld [vmem:[%s0 + $0x108] sm:$0xff]
  %v69 = vld [vmem:[%s0 + $0x110] sm:$0xff]
  %v70 = vld [vmem:[%s0 + $0x118] sm:$0xff]
  %v71 = vld [vmem:[%s0 + $0x120] sm:$0xff]
  %v72 = vld [vmem:[%s0 + $0x128] sm:$0xff]
  %v73 = vld [vmem:[%s0 + $0x130] sm:$0xff]
  %v74 = vld [vmem:[%s0 + $0x138] sm:$0xff]
  %v75 = vld [vmem:[%s0 + $0x140] sm:$0xff]
  %v76 = vld [vmem:[%s0 + $0x148] sm:$0xff]
  %v77 = vld [vmem:[%s0 + $0x150] sm:$0xff]
  %v78 = vld [vmem:[%s0 + $0x158] sm:$0xff]
  %v79 = vld [vmem:[%s0 + $0x160] sm:$0xff]
  %v80 = vld [vmem:[%s0 + $0x168] sm:$0xff]
  %v81 = vld [vmem:[%s0 + $0x170] sm:$0xff]
  %v82 = vld [vmem:[%s0 + $0x178] sm:$0xff]
  %v83 = vld [vmem:[%s0 + $0x180] sm:$0xff]
  %v84 = vld [vmem:[%s0 + $0x188] sm:$0xff]
  %v85 = vld [vmem:[%s0 + $0x190] sm:$0xff]
  %v86 = vld [vmem:[%s0 + $0x198] sm:$0xff]
  %v87 = vld [vmem:[%s0 + $0x1a0] sm:$0xff]
  %v88 = vld [vmem:[%s0 + $0x1a8] sm:$0xff]
  %v89 = vld [vmem:[%s0 + $0x1b0] sm:$0xff]
  %v90 = vld [vmem:[%s0 + $0x1b8] sm:$0xff]
  %v91 = vld [vmem:[%s0 + $0x1c0] sm:$0xff]
  %v92 = vld [vmem:[%s0 + $0x1c8] sm:$0xff]
  %v93 = vld [vmem:[%s0 + $0x1d0] sm:$0xff]
  %v94 = vld [vmem:[%s0 + $0x1d8] sm:$0xff]
  %v95 = vld [vmem:[%s0 + $0x1e0] sm:$0xff]
  %v96 = vld [vmem:[%s0 + $0x1e8] sm:$0xff]
  %v97 = vld [vmem:[%s0 + $0x1f0] sm:$0xff]
  %v98 = vld [vmem:[%s0 + $0x1f8] sm:$0xff]
  %v99 = vld [vmem:[%s3] sm:$0xff]
  %v100 = vld [vmem:[%s3 + $0x8] sm:$0xff]
  %v101 = vld [vmem:[%s3 + $0x10] sm:$0xff]
  %v102 = vld [vmem:[%s3 + $0x18] sm:$0xff]
  %v103 = vld [vmem:[%s3 + $0x20] sm:$0xff]
  %v104 = vld [vmem:[%s3 + $0x28] sm:$0xff]
  %v105 = vld [vmem:[%s3 + $0x30] sm:$0xff]
  %v106 = vld [vmem:[%s3 + $0x38] sm:$0xff]
  %v107 = vld [vmem:[%s3 + $0x40] sm:$0xff]
  %v108 = vld [vmem:[%s3 + $0x48] sm:$0xff]
  %v109 = vld [vmem:[%s3 + $0x50] sm:$0xff]
  %v110 = vld [vmem:[%s3 + $0x58] sm:$0xff]
  %v111 = vld [vmem:[%s3 + $0x60] sm:$0xff]
  %v112 = vld [vmem:[%s3 + $0x68] sm:$0xff]
  %v113 = vld [vmem:[%s3 + $0x70] sm:$0xff]
  %v114 = vld [vmem:[%s3 + $0x78] sm:$0xff]
  %v115 = vld [vmem:[%s1] sm:$0xff]
  %v116 = vld [vmem:[%s1 + $0x8] sm:$0xff]
  %v117 = vld [vmem:[%s1 + $0x10] sm:$0xff]
  %v118 = vld [vmem:[%s1 + $0x18] sm:$0xff]
  %v119 = vld [vmem:[%s1 + $0x20] sm:$0xff]
  %v120 = vld [vmem:[%s1 + $0x28] sm:$0xff]
  %v121 = vld [vmem:[%s1 + $0x30] sm:$0xff]
  %v122 = vld [vmem:[%s1 + $0x38] sm:$0xff]
  %v123 = vld [vmem:[%s1 + $0x40] sm:$0xff]
  %v124 = vld [vmem:[%s1 + $0x48] sm:$0xff]
  %v125 = vld [vmem:[%s1 + $0x50] sm:$0xff]
  %v126 = vld [vmem:[%s1 + $0x58] sm:$0xff]
  %v127 = vld [vmem:[%s1 + $0x60] sm:$0xff]
  %v128 = vld [vmem:[%s1 + $0x68] sm:$0xff]
  %v129 = vld [vmem:[%s1 + $0x70] sm:$0xff]
  %v130 = vld [vmem:[%s1 + $0x78] sm:$0xff]
  %v131 = vld [vmem:[%s1 + $0x80] sm:$0xff]
  %v132 = vld [vmem:[%s1 + $0x88] sm:$0xff]
  %v133 = vld [vmem:[%s1 + $0x90] sm:$0xff]
  %v134 = vld [vmem:[%s1 + $0x98] sm:$0xff]
  %v135 = vld [vmem:[%s1 + $0xa0] sm:$0xff]
  %v136 = vld [vmem:[%s1 + $0xa8] sm:$0xff]
  %v137 = vld [vmem:[%s1 + $0xb0] sm:$0xff]
  %v138 = vld [vmem:[%s1 + $0xb8] sm:$0xff]
  %v139 = vld [vmem:[%s1 + $0xc0] sm:$0xff]
  %v140 = vld [vmem:[%s1 + $0xc8] sm:$0xff]
  %v141 = vld [vmem:[%s1 + $0xd0] sm:$0xff]
  %v142 = vld [vmem:[%s1 + $0xd8] sm:$0xff]
  %v143 = vld [vmem:[%s1 + $0xe0] sm:$0xff]
  %v144 = vld [vmem:[%s1 + $0xe8] sm:$0xff]
  %v145 = vld [vmem:[%s1 + $0xf0] sm:$0xff]
  %v146 = vld [vmem:[%s1 + $0xf8] sm:$0xff]
  %v147 = vld [vmem:[%s1 + $0x100] sm:$0xff]
  %v148 = vld [vmem:[%s1 + $0x108] sm:$0xff]
  %v149 = vld [vmem:[%s1 + $0x110] sm:$0xff]
  %v150 = vld [vmem:[%s1 + $0x118] sm:$0xff]
  %v151 = vld [vmem:[%s1 + $0x120] sm:$0xff]
  %v152 = vld [vmem:[%s1 + $0x128] sm:$0xff]
  %v153 = vld [vmem:[%s1 + $0x130] sm:$0xff]
  %v154 = vld [vmem:[%s1 + $0x138] sm:$0xff]
  %v155 = vld [vmem:[%s1 + $0x140] sm:$0xff]
  %v156 = vld [vmem:[%s1 + $0x148] sm:$0xff]
  %v157 = vld [vmem:[%s1 + $0x150] sm:$0xff]
  %v158 = vld [vmem:[%s1 + $0x158] sm:$0xff]
  %v159 = vld [vmem:[%s1 + $0x160] sm:$0xff]
  %v160 = vld [vmem:[%s1 + $0x168] sm:$0xff]
  %v161 = vld [vmem:[%s1 + $0x170] sm:$0xff]
  %v162 = vld [vmem:[%s1 + $0x178] sm:$0xff]
  %v163 = vld [vmem:[%s1 + $0x180] sm:$0xff]
  %v164 = vld [vmem:[%s1 + $0x188] sm:$0xff]
  %v165 = vld [vmem:[%s1 + $0x190] sm:$0xff]
  %v166 = vld [vmem:[%s1 + $0x198] sm:$0xff]
  %v167 = vld [vmem:[%s1 + $0x1a0] sm:$0xff]
  %v168 = vld [vmem:[%s1 + $0x1a8] sm:$0xff]
  %v169 = vld [vmem:[%s1 + $0x1b0] sm:$0xff]
  %v170 = vld [vmem:[%s1 + $0x1b8] sm:$0xff]
  %v171 = vld [vmem:[%s1 + $0x1c0] sm:$0xff]
  %v172 = vld [vmem:[%s1 + $0x1c8] sm:$0xff]
  %v173 = vld [vmem:[%s1 + $0x1d0] sm:$0xff]
  %v174 = vld [vmem:[%s1 + $0x1d8] sm:$0xff]
  %v175 = vld [vmem:[%s1 + $0x1e0] sm:$0xff]
  %v176 = vld [vmem:[%s1 + $0x1e8] sm:$0xff]
  %v177 = vld [vmem:[%s1 + $0x1f0] sm:$0xff]
  %v178 = vld [vmem:[%s1 + $0x1f8] sm:$0xff]
  %v179 = vld [vmem:[%s4] sm:$0xff]
  %v180 = vld [vmem:[%s4 + $0x8] sm:$0xff]
  %v181 = vld [vmem:[%s4 + $0x10] sm:$0xff]
  %v182 = vld [vmem:[%s4 + $0x18] sm:$0xff]
  %v183 = vld [vmem:[%s4 + $0x20] sm:$0xff]
  %v184 = vld [vmem:[%s4 + $0x28] sm:$0xff]
  %v185 = vld [vmem:[%s4 + $0x30] sm:$0xff]
  %v186 = vld [vmem:[%s4 + $0x38] sm:$0xff]
  %v187 = vld [vmem:[%s4 + $0x40] sm:$0xff]
  %v188 = vld [vmem:[%s4 + $0x48] sm:$0xff]
  %v189 = vld [vmem:[%s4 + $0x50] sm:$0xff]
  %v190 = vld [vmem:[%s4 + $0x58] sm:$0xff]
  %v191 = vld [vmem:[%s4 + $0x60] sm:$0xff]
  %v192 = vld [vmem:[%s4 + $0x68] sm:$0xff]
  %v193 = vld [vmem:[%s4 + $0x70] sm:$0xff]
  %v194 = vld [vmem:[%s4 + $0x78] sm:$0xff]
  %195 = vmatpush.msra.mxu0 %v194
  %196 = vmatpush.msra.mxu0 %v193
  %197 = vmatpush.msra.mxu0 %v192
  %198 = vmatpush.msra.mxu0 %v191
  %199 = vmatpush.msra.mxu0 %v190
  %200 = vmatpush.msra.mxu0 %v189
  %201 = vmatpush.msra.mxu0 %v188
  %202 = vmatpush.msra.mxu0 %v187
  %203 = vmatpush.msra.mxu0 %v186
  %204 = vmatpush.msra.mxu0 %v185
  %205 = vmatpush.msra.mxu0 %v184
  %206 = vmatpush.msra.mxu0 %v183
  %207 = vmatpush.msra.mxu0 %v182
  %208 = vmatpush.msra.mxu0 %v181
  %209 = vmatpush.msra.mxu0 %v180
  %210 = vmatpush.msra.mxu0 %v179
  %211 = vmatmul.f32.gmra.mxu0 %v115
  %v212 = vpop.f32.mrf.mxu0
  %v213 = vadd.f32 0.0, %v212
  %214 = vmatmul.f32.gmra.mxu0 %v116
  %v215 = vpop.f32.mrf.mxu0
  %v216 = vadd.f32 0.0, %v215
  %217 = vmatmul.f32.gmra.mxu0 %v117
  %v218 = vpop.f32.mrf.mxu0
  %v219 = vadd.f32 0.0, %v218
  %220 = vmatmul.f32.gmra.mxu0 %v118
  %v221 = vpop.f32.mrf.mxu0
  %v222 = vadd.f32 0.0, %v221
  %223 = vmatmul.f32.gmra.mxu0 %v119
  %v224 = vpop.f32.mrf.mxu0
  %v225 = vadd.f32 0.0, %v224
  %226 = vmatmul.f32.gmra.mxu0 %v120
  %v227 = vpop.f32.mrf.mxu0
  %v228 = vadd.f32 0.0, %v227
  %229 = vmatmul.f32.gmra.mxu0 %v121
  %v230 = vpop.f32.mrf.mxu0
  %v231 = vadd.f32 0.0, %v230
  %232 = vmatmul.f32.gmra.mxu0 %v122
  %v233 = vpop.f32.mrf.mxu0
  %v234 = vadd.f32 0.0, %v233
  %235 = vmatmul.f32.gmra.mxu0 %v123
  %v236 = vpop.f32.mrf.mxu0
  %v237 = vadd.f32 0.0, %v236
  %238 = vmatmul.f32.gmra.mxu0 %v124
  %v239 = vpop.f32.mrf.mxu0
  %v240 = vadd.f32 0.0, %v239
  %241 = vmatmul.f32.gmra.mxu0 %v125
  %v242 = vpop.f32.mrf.mxu0
  %v243 = vadd.f32 0.0, %v242
  %244 = vmatmul.f32.gmra.mxu0 %v126
  %v245 = vpop.f32.mrf.mxu0
  %v246 = vadd.f32 0.0, %v245
  %247 = vmatmul.f32.gmra.mxu0 %v127
  %v248 = vpop.f32.mrf.mxu0
  %v249 = vadd.f32 0.0, %v248
  %250 = vmatmul.f32.gmra.mxu0 %v128
  %v251 = vpop.f32.mrf.mxu0
  %v252 = vadd.f32 0.0, %v251
  %253 = vmatmul.f32.gmra.mxu0 %v129
  %v254 = vpop.f32.mrf.mxu0
  %v255 = vadd.f32 0.0, %v254
  %256 = vmatmul.f32.gmra.mxu0 %v130
  %v257 = vpop.f32.mrf.mxu0
  %v258 = vadd.f32 0.0, %v257
  %259 = vmatmul.f32.gmra.mxu0 %v131
  %v260 = vpop.f32.mrf.mxu0
  %v261 = vadd.f32 0.0, %v260
  %262 = vmatmul.f32.gmra.mxu0 %v132
  %v263 = vpop.f32.mrf.mxu0
  %v264 = vadd.f32 0.0, %v263
  %265 = vmatmul.f32.gmra.mxu0 %v133
  %v266 = vpop.f32.mrf.mxu0
  %v267 = vadd.f32 0.0, %v266
  %268 = vmatmul.f32.gmra.mxu0 %v134
  %v269 = vpop.f32.mrf.mxu0
  %v270 = vadd.f32 0.0, %v269
  %271 = vmatmul.f32.gmra.mxu0 %v135
  %v272 = vpop.f32.mrf.mxu0
  %v273 = vadd.f32 0.0, %v272
  %274 = vmatmul.f32.gmra.mxu0 %v136
  %v275 = vpop.f32.mrf.mxu0
  %v276 = vadd.f32 0.0, %v275
  %277 = vmatmul.f32.gmra.mxu0 %v137
  %v278 = vpop.f32.mrf.mxu0
  %v279 = vadd.f32 0.0, %v278
  %280 = vmatmul.f32.gmra.mxu0 %v138
  %v281 = vpop.f32.mrf.mxu0
  %v282 = vadd.f32 0.0, %v281
  %283 = vmatmul.f32.gmra.mxu0 %v139
  %v284 = vpop.f32.mrf.mxu0
  %v285 = vadd.f32 0.0, %v284
  %286 = vmatmul.f32.gmra.mxu0 %v140
  %v287 = vpop.f32.mrf.mxu0
  %v288 = vadd.f32 0.0, %v287
  %289 = vmatmul.f32.gmra.mxu0 %v141
  %v290 = vpop.f32.mrf.mxu0
  %v291 = vadd.f32 0.0, %v290
  %292 = vmatmul.f32.gmra.mxu0 %v142
  %v293 = vpop.f32.mrf.mxu0
  %v294 = vadd.f32 0.0, %v293
  %295 = vmatmul.f32.gmra.mxu0 %v143
  %v296 = vpop.f32.mrf.mxu0
  %v297 = vadd.f32 0.0, %v296
  %298 = vmatmul.f32.gmra.mxu0 %v144
  %v299 = vpop.f32.mrf.mxu0
  %v300 = vadd.f32 0.0, %v299
  %301 = vmatmul.f32.gmra.mxu0 %v145
  %v302 = vpop.f32.mrf.mxu0
  %v303 = vadd.f32 0.0, %v302
  %304 = vmatmul.f32.gmra.mxu0 %v146
  %v305 = vpop.f32.mrf.mxu0
  %v306 = vadd.f32 0.0, %v305
  %307 = vmatmul.f32.gmra.mxu0 %v147
  %v308 = vpop.f32.mrf.mxu0
  %v309 = vadd.f32 0.0, %v308
  %310 = vmatmul.f32.gmra.mxu0 %v148
  %v311 = vpop.f32.mrf.mxu0
  %v312 = vadd.f32 0.0, %v311
  %313 = vmatmul.f32.gmra.mxu0 %v149
  %v314 = vpop.f32.mrf.mxu0
  %v315 = vadd.f32 0.0, %v314
  %316 = vmatmul.f32.gmra.mxu0 %v150
  %v317 = vpop.f32.mrf.mxu0
  %v318 = vadd.f32 0.0, %v317
  %319 = vmatmul.f32.gmra.mxu0 %v151
  %v320 = vpop.f32.mrf.mxu0
  %v321 = vadd.f32 0.0, %v320
  %322 = vmatmul.f32.gmra.mxu0 %v152
  %v323 = vpop.f32.mrf.mxu0
  %v324 = vadd.f32 0.0, %v323
  %325 = vmatmul.f32.gmra.mxu0 %v153
  %v326 = vpop.f32.mrf.mxu0
  %v327 = vadd.f32 0.0, %v326
  %328 = vmatmul.f32.gmra.mxu0 %v154
  %v329 = vpop.f32.mrf.mxu0
  %v330 = vadd.f32 0.0, %v329
  %331 = vmatmul.f32.gmra.mxu0 %v155
  %v332 = vpop.f32.mrf.mxu0
  %v333 = vadd.f32 0.0, %v332
  %334 = vmatmul.f32.gmra.mxu0 %v156
  %v335 = vpop.f32.mrf.mxu0
  %v336 = vadd.f32 0.0, %v335
  %337 = vmatmul.f32.gmra.mxu0 %v157
  %v338 = vpop.f32.mrf.mxu0
  %v339 = vadd.f32 0.0, %v338
  %340 = vmatmul.f32.gmra.mxu0 %v158
  %v341 = vpop.f32.mrf.mxu0
  %v342 = vadd.f32 0.0, %v341
  %343 = vmatmul.f32.gmra.mxu0 %v159
  %v344 = vpop.f32.mrf.mxu0
  %v345 = vadd.f32 0.0, %v344
  %346 = vmatmul.f32.gmra.mxu0 %v160
  %v347 = vpop.f32.mrf.mxu0
  %v348 = vadd.f32 0.0, %v347
  %349 = vmatmul.f32.gmra.mxu0 %v161
  %v350 = vpop.f32.mrf.mxu0
  %v351 = vadd.f32 0.0, %v350
  %352 = vmatmul.f32.gmra.mxu0 %v162
  %v353 = vpop.f32.mrf.mxu0
  %v354 = vadd.f32 0.0, %v353
  %355 = vmatmul.f32.gmra.mxu0 %v163
  %v356 = vpop.f32.mrf.mxu0
  %v357 = vadd.f32 0.0, %v356
  %358 = vmatmul.f32.gmra.mxu0 %v164
  %v359 = vpop.f32.mrf.mxu0
  %v360 = vadd.f32 0.0, %v359
  %361 = vmatmul.f32.gmra.mxu0 %v165
  %v362 = vpop.f32.mrf.mxu0
  %v363 = vadd.f32 0.0, %v362
  %364 = vmatmul.f32.gmra.mxu0 %v166
  %v365 = vpop.f32.mrf.mxu0
  %v366 = vadd.f32 0.0, %v365
  %367 = vmatmul.f32.gmra.mxu0 %v167
  %v368 = vpop.f32.mrf.mxu0
  %v369 = vadd.f32 0.0, %v368
  %370 = vmatmul.f32.gmra.mxu0 %v168
  %v371 = vpop.f32.mrf.mxu0
  %v372 = vadd.f32 0.0, %v371
  %373 = vmatmul.f32.gmra.mxu0 %v169
  %v374 = vpop.f32.mrf.mxu0
  %v375 = vadd.f32 0.0, %v374
  %376 = vmatmul.f32.gmra.mxu0 %v170
  %v377 = vpop.f32.mrf.mxu0
  %v378 = vadd.f32 0.0, %v377
  %379 = vmatmul.f32.gmra.mxu0 %v171
  %v380 = vpop.f32.mrf.mxu0
  %v381 = vadd.f32 0.0, %v380
  %382 = vmatmul.f32.gmra.mxu0 %v172
  %v383 = vpop.f32.mrf.mxu0
  %v384 = vadd.f32 0.0, %v383
  %385 = vmatmul.f32.gmra.mxu0 %v173
  %v386 = vpop.f32.mrf.mxu0
  %v387 = vadd.f32 0.0, %v386
  %388 = vmatmul.f32.gmra.mxu0 %v174
  %v389 = vpop.f32.mrf.mxu0
  %v390 = vadd.f32 0.0, %v389
  %391 = vmatmul.f32.gmra.mxu0 %v175
  %v392 = vpop.f32.mrf.mxu0
  %v393 = vadd.f32 0.0, %v392
  %394 = vmatmul.f32.gmra.mxu0 %v176
  %v395 = vpop.f32.mrf.mxu0
  %v396 = vadd.f32 0.0, %v395
  %397 = vmatmul.f32.gmra.mxu0 %v177
  %v398 = vpop.f32.mrf.mxu0
  %v399 = vadd.f32 0.0, %v398
  %400 = vmatmul.f32.gmra.mxu0 %v178
  %v401 = vpop.f32.mrf.mxu0
  %v402 = vadd.f32 0.0, %v401
  %403 = vdwg.mxu0
  %404 = vmatpush.msra.mxu0 %v114
  %405 = vmatpush.msra.mxu0 %v113
  %406 = vmatpush.msra.mxu0 %v112
  %407 = vmatpush.msra.mxu0 %v111
  %408 = vmatpush.msra.mxu0 %v110
  %409 = vmatpush.msra.mxu0 %v109
  %410 = vmatpush.msra.mxu0 %v108
  %411 = vmatpush.msra.mxu0 %v107
  %412 = vmatpush.msra.mxu0 %v106
  %413 = vmatpush.msra.mxu0 %v105
  %414 = vmatpush.msra.mxu0 %v104
  %415 = vmatpush.msra.mxu0 %v103
  %416 = vmatpush.msra.mxu0 %v102
  %417 = vmatpush.msra.mxu0 %v101
  %418 = vmatpush.msra.mxu0 %v100
  %419 = vmatpush.msra.mxu0 %v99
  %420 = vmatmul.f32.gmra.mxu0 %v35
  %v421 = vpop.f32.mrf.mxu0
  %v422 = vadd.f32 %v213, %v421
  %423 = vmatmul.f32.gmra.mxu0 %v36
  %v424 = vpop.f32.mrf.mxu0
  %v425 = vadd.f32 %v216, %v424
  %426 = vmatmul.f32.gmra.mxu0 %v37
  %v427 = vpop.f32.mrf.mxu0
  %v428 = vadd.f32 %v219, %v427
  %429 = vmatmul.f32.gmra.mxu0 %v38
  %v430 = vpop.f32.mrf.mxu0
  %v431 = vadd.f32 %v222, %v430
  %432 = vmatmul.f32.gmra.mxu0 %v39
  %v433 = vpop.f32.mrf.mxu0
  %v434 = vadd.f32 %v225, %v433
  %435 = vmatmul.f32.gmra.mxu0 %v40
  %v436 = vpop.f32.mrf.mxu0
  %v437 = vadd.f32 %v228, %v436
  %438 = vmatmul.f32.gmra.mxu0 %v41
  %v439 = vpop.f32.mrf.mxu0
  %v440 = vadd.f32 %v231, %v439
  %441 = vmatmul.f32.gmra.mxu0 %v42
  %v442 = vpop.f32.mrf.mxu0
  %v443 = vadd.f32 %v234, %v442
  %444 = vmatmul.f32.gmra.mxu0 %v43
  %v445 = vpop.f32.mrf.mxu0
  %v446 = vadd.f32 %v237, %v445
  %447 = vmatmul.f32.gmra.mxu0 %v44
  %v448 = vpop.f32.mrf.mxu0
  %v449 = vadd.f32 %v240, %v448
  %450 = vmatmul.f32.gmra.mxu0 %v45
  %v451 = vpop.f32.mrf.mxu0
  %v452 = vadd.f32 %v243, %v451
  %453 = vmatmul.f32.gmra.mxu0 %v46
  %v454 = vpop.f32.mrf.mxu0
  %v455 = vadd.f32 %v246, %v454
  %456 = vmatmul.f32.gmra.mxu0 %v47
  %v457 = vpop.f32.mrf.mxu0
  %v458 = vadd.f32 %v249, %v457
  %459 = vmatmul.f32.gmra.mxu0 %v48
  %v460 = vpop.f32.mrf.mxu0
  %v461 = vadd.f32 %v252, %v460
  %462 = vmatmul.f32.gmra.mxu0 %v49
  %v463 = vpop.f32.mrf.mxu0
  %v464 = vadd.f32 %v255, %v463
  %465 = vmatmul.f32.gmra.mxu0 %v50
  %v466 = vpop.f32.mrf.mxu0
  %v467 = vadd.f32 %v258, %v466
  %468 = vmatmul.f32.gmra.mxu0 %v51
  %v469 = vpop.f32.mrf.mxu0
  %v470 = vadd.f32 %v261, %v469
  %471 = vmatmul.f32.gmra.mxu0 %v52
  %v472 = vpop.f32.mrf.mxu0
  %v473 = vadd.f32 %v264, %v472
  %474 = vmatmul.f32.gmra.mxu0 %v53
  %v475 = vpop.f32.mrf.mxu0
  %v476 = vadd.f32 %v267, %v475
  %477 = vmatmul.f32.gmra.mxu0 %v54
  %v478 = vpop.f32.mrf.mxu0
  %v479 = vadd.f32 %v270, %v478
  %480 = vmatmul.f32.gmra.mxu0 %v55
  %v481 = vpop.f32.mrf.mxu0
  %v482 = vadd.f32 %v273, %v481
  %483 = vmatmul.f32.gmra.mxu0 %v56
  %v484 = vpop.f32.mrf.mxu0
  %v485 = vadd.f32 %v276, %v484
  %486 = vmatmul.f32.gmra.mxu0 %v57
  %v487 = vpop.f32.mrf.mxu0
  %v488 = vadd.f32 %v279, %v487
  %489 = vmatmul.f32.gmra.mxu0 %v58
  %v490 = vpop.f32.mrf.mxu0
  %v491 = vadd.f32 %v282, %v490
  %492 = vmatmul.f32.gmra.mxu0 %v59
  %v493 = vpop.f32.mrf.mxu0
  %v494 = vadd.f32 %v285, %v493
  %495 = vmatmul.f32.gmra.mxu0 %v60
  %v496 = vpop.f32.mrf.mxu0
  %v497 = vadd.f32 %v288, %v496
  %498 = vmatmul.f32.gmra.mxu0 %v61
  %v499 = vpop.f32.mrf.mxu0
  %v500 = vadd.f32 %v291, %v499
  %501 = vmatmul.f32.gmra.mxu0 %v62
  %v502 = vpop.f32.mrf.mxu0
  %v503 = vadd.f32 %v294, %v502
  %504 = vmatmul.f32.gmra.mxu0 %v63
  %v505 = vpop.f32.mrf.mxu0
  %v506 = vadd.f32 %v297, %v505
  %507 = vmatmul.f32.gmra.mxu0 %v64
  %v508 = vpop.f32.mrf.mxu0
  %v509 = vadd.f32 %v300, %v508
  %510 = vmatmul.f32.gmra.mxu0 %v65
  %v511 = vpop.f32.mrf.mxu0
  %v512 = vadd.f32 %v303, %v511
  %513 = vmatmul.f32.gmra.mxu0 %v66
  %v514 = vpop.f32.mrf.mxu0
  %v515 = vadd.f32 %v306, %v514
  %516 = vmatmul.f32.gmra.mxu0 %v67
  %v517 = vpop.f32.mrf.mxu0
  %v518 = vadd.f32 %v309, %v517
  %519 = vmatmul.f32.gmra.mxu0 %v68
  %v520 = vpop.f32.mrf.mxu0
  %v521 = vadd.f32 %v312, %v520
  %522 = vmatmul.f32.gmra.mxu0 %v69
  %v523 = vpop.f32.mrf.mxu0
  %v524 = vadd.f32 %v315, %v523
  %525 = vmatmul.f32.gmra.mxu0 %v70
  %v526 = vpop.f32.mrf.mxu0
  %v527 = vadd.f32 %v318, %v526
  %528 = vmatmul.f32.gmra.mxu0 %v71
  %v529 = vpop.f32.mrf.mxu0
  %v530 = vadd.f32 %v321, %v529
  %531 = vmatmul.f32.gmra.mxu0 %v72
  %v532 = vpop.f32.mrf.mxu0
  %v533 = vadd.f32 %v324, %v532
  %534 = vmatmul.f32.gmra.mxu0 %v73
  %v535 = vpop.f32.mrf.mxu0
  %v536 = vadd.f32 %v327, %v535
  %537 = vmatmul.f32.gmra.mxu0 %v74
  %v538 = vpop.f32.mrf.mxu0
  %v539 = vadd.f32 %v330, %v538
  %540 = vmatmul.f32.gmra.mxu0 %v75
  %v541 = vpop.f32.mrf.mxu0
  %v542 = vadd.f32 %v333, %v541
  %543 = vmatmul.f32.gmra.mxu0 %v76
  %v544 = vpop.f32.mrf.mxu0
  %v545 = vadd.f32 %v336, %v544
  %546 = vmatmul.f32.gmra.mxu0 %v77
  %v547 = vpop.f32.mrf.mxu0
  %v548 = vadd.f32 %v339, %v547
  %549 = vmatmul.f32.gmra.mxu0 %v78
  %v550 = vpop.f32.mrf.mxu0
  %v551 = vadd.f32 %v342, %v550
  %552 = vmatmul.f32.gmra.mxu0 %v79
  %v553 = vpop.f32.mrf.mxu0
  %v554 = vadd.f32 %v345, %v553
  %555 = vmatmul.f32.gmra.mxu0 %v80
  %v556 = vpop.f32.mrf.mxu0
  %v557 = vadd.f32 %v348, %v556
  %558 = vmatmul.f32.gmra.mxu0 %v81
  %v559 = vpop.f32.mrf.mxu0
  %v560 = vadd.f32 %v351, %v559
  %561 = vmatmul.f32.gmra.mxu0 %v82
  %v562 = vpop.f32.mrf.mxu0
  %v563 = vadd.f32 %v354, %v562
  %564 = vmatmul.f32.gmra.mxu0 %v83
  %v565 = vpop.f32.mrf.mxu0
  %v566 = vadd.f32 %v357, %v565
  %567 = vmatmul.f32.gmra.mxu0 %v84
  %v568 = vpop.f32.mrf.mxu0
  %v569 = vadd.f32 %v360, %v568
  %570 = vmatmul.f32.gmra.mxu0 %v85
  %v571 = vpop.f32.mrf.mxu0
  %v572 = vadd.f32 %v363, %v571
  %573 = vmatmul.f32.gmra.mxu0 %v86
  %v574 = vpop.f32.mrf.mxu0
  %v575 = vadd.f32 %v366, %v574
  %576 = vmatmul.f32.gmra.mxu0 %v87
  %v577 = vpop.f32.mrf.mxu0
  %v578 = vadd.f32 %v369, %v577
  %579 = vmatmul.f32.gmra.mxu0 %v88
  %v580 = vpop.f32.mrf.mxu0
  %v581 = vadd.f32 %v372, %v580
  %582 = vmatmul.f32.gmra.mxu0 %v89
  %v583 = vpop.f32.mrf.mxu0
  %v584 = vadd.f32 %v375, %v583
  %585 = vmatmul.f32.gmra.mxu0 %v90
  %v586 = vpop.f32.mrf.mxu0
  %v587 = vadd.f32 %v378, %v586
  %588 = vmatmul.f32.gmra.mxu0 %v91
  %v589 = vpop.f32.mrf.mxu0
  %v590 = vadd.f32 %v381, %v589
  %591 = vmatmul.f32.gmra.mxu0 %v92
  %v592 = vpop.f32.mrf.mxu0
  %v593 = vadd.f32 %v384, %v592
  %594 = vmatmul.f32.gmra.mxu0 %v93
  %v595 = vpop.f32.mrf.mxu0
  %v596 = vadd.f32 %v387, %v595
  %597 = vmatmul.f32.gmra.mxu0 %v94
  %v598 = vpop.f32.mrf.mxu0
  %v599 = vadd.f32 %v390, %v598
  %600 = vmatmul.f32.gmra.mxu0 %v95
  %v601 = vpop.f32.mrf.mxu0
  %v602 = vadd.f32 %v393, %v601
  %603 = vmatmul.f32.gmra.mxu0 %v96
  %v604 = vpop.f32.mrf.mxu0
  %v605 = vadd.f32 %v396, %v604
  %606 = vmatmul.f32.gmra.mxu0 %v97
  %v607 = vpop.f32.mrf.mxu0
  %v608 = vadd.f32 %v399, %v607
  %609 = vmatmul.f32.gmra.mxu0 %v98
  %v610 = vpop.f32.mrf.mxu0
  %v611 = vadd.f32 %v402, %v610
  %612 = vdwg.mxu0
  %v613 = vld [vmem:[%s6] sm:$0x1]
  %v615 = vperm.slane %v613, 0
  %v617 = vmul.f32 %v422, %v615
  %v618 = vmul.f32 %v425, %v615
  %v619 = vmul.f32 %v428, %v615
  %v620 = vmul.f32 %v431, %v615
  %v621 = vmul.f32 %v434, %v615
  %v622 = vmul.f32 %v437, %v615
  %v623 = vmul.f32 %v440, %v615
  %v624 = vmul.f32 %v443, %v615
  %v625 = vmul.f32 %v446, %v615
  %v626 = vmul.f32 %v449, %v615
  %v627 = vmul.f32 %v452, %v615
  %v628 = vmul.f32 %v455, %v615
  %v629 = vmul.f32 %v458, %v615
  %v630 = vmul.f32 %v461, %v615
  %v631 = vmul.f32 %v464, %v615
  %v632 = vmul.f32 %v467, %v615
  %v633 = vmul.f32 %v470, %v615
  %v634 = vmul.f32 %v473, %v615
  %v635 = vmul.f32 %v476, %v615
  %v636 = vmul.f32 %v479, %v615
  %v637 = vmul.f32 %v482, %v615
  %v638 = vmul.f32 %v485, %v615
  %v639 = vmul.f32 %v488, %v615
  %v640 = vmul.f32 %v491, %v615
  %v641 = vmul.f32 %v494, %v615
  %v642 = vmul.f32 %v497, %v615
  %v643 = vmul.f32 %v500, %v615
  %v644 = vmul.f32 %v503, %v615
  %v645 = vmul.f32 %v506, %v615
  %v646 = vmul.f32 %v509, %v615
  %v647 = vmul.f32 %v512, %v615
  %v648 = vmul.f32 %v515, %v615
  %v649 = vmul.f32 %v518, %v615
  %v650 = vmul.f32 %v521, %v615
  %v651 = vmul.f32 %v524, %v615
  %v652 = vmul.f32 %v527, %v615
  %v653 = vmul.f32 %v530, %v615
  %v654 = vmul.f32 %v533, %v615
  %v655 = vmul.f32 %v536, %v615
  %v656 = vmul.f32 %v539, %v615
  %v657 = vmul.f32 %v542, %v615
  %v658 = vmul.f32 %v545, %v615
  %v659 = vmul.f32 %v548, %v615
  %v660 = vmul.f32 %v551, %v615
  %v661 = vmul.f32 %v554, %v615
  %v662 = vmul.f32 %v557, %v615
  %v663 = vmul.f32 %v560, %v615
  %v664 = vmul.f32 %v563, %v615
  %v665 = vmul.f32 %v566, %v615
  %v666 = vmul.f32 %v569, %v615
  %v667 = vmul.f32 %v572, %v615
  %v668 = vmul.f32 %v575, %v615
  %v669 = vmul.f32 %v578, %v615
  %v670 = vmul.f32 %v581, %v615
  %v671 = vmul.f32 %v584, %v615
  %v672 = vmul.f32 %v587, %v615
  %v673 = vmul.f32 %v590, %v615
  %v674 = vmul.f32 %v593, %v615
  %v675 = vmul.f32 %v596, %v615
  %v676 = vmul.f32 %v599, %v615
  %v677 = vmul.f32 %v602, %v615
  %v678 = vmul.f32 %v605, %v615
  %v679 = vmul.f32 %v608, %v615
  %v680 = vmul.f32 %v611, %v615
  %v681 = vld [vmem:[%s7] sm:$0x1]
  %v683 = vperm.slane %v681, 0
  %v685 = vadd.f32 %v617, %v683
  %v686 = vadd.f32 %v618, %v683
  %v687 = vadd.f32 %v619, %v683
  %v688 = vadd.f32 %v620, %v683
  %v689 = vadd.f32 %v621, %v683
  %v690 = vadd.f32 %v622, %v683
  %v691 = vadd.f32 %v623, %v683
  %v692 = vadd.f32 %v624, %v683
  %v693 = vadd.f32 %v625, %v683
  %v694 = vadd.f32 %v626, %v683
  %v695 = vadd.f32 %v627, %v683
  %v696 = vadd.f32 %v628, %v683
  %v697 = vadd.f32 %v629, %v683
  %v698 = vadd.f32 %v630, %v683
  %v699 = vadd.f32 %v631, %v683
  %v700 = vadd.f32 %v632, %v683
  %v701 = vadd.f32 %v633, %v683
  %v702 = vadd.f32 %v634, %v683
  %v703 = vadd.f32 %v635, %v683
  %v704 = vadd.f32 %v636, %v683
  %v705 = vadd.f32 %v637, %v683
  %v706 = vadd.f32 %v638, %v683
  %v707 = vadd.f32 %v639, %v683
  %v708 = vadd.f32 %v640, %v683
  %v709 = vadd.f32 %v641, %v683
  %v710 = vadd.f32 %v642, %v683
  %v711 = vadd.f32 %v643, %v683
  %v712 = vadd.f32 %v644, %v683
  %v713 = vadd.f32 %v645, %v683
  %v714 = vadd.f32 %v646, %v683
  %v715 = vadd.f32 %v647, %v683
  %v716 = vadd.f32 %v648, %v683
  %v717 = vadd.f32 %v649, %v683
  %v718 = vadd.f32 %v650, %v683
  %v719 = vadd.f32 %v651, %v683
  %v720 = vadd.f32 %v652, %v683
  %v721 = vadd.f32 %v653, %v683
  %v722 = vadd.f32 %v654, %v683
  %v723 = vadd.f32 %v655, %v683
  %v724 = vadd.f32 %v656, %v683
  %v725 = vadd.f32 %v657, %v683
  %v726 = vadd.f32 %v658, %v683
  %v727 = vadd.f32 %v659, %v683
  %v728 = vadd.f32 %v660, %v683
  %v729 = vadd.f32 %v661, %v683
  %v730 = vadd.f32 %v662, %v683
  %v731 = vadd.f32 %v663, %v683
  %v732 = vadd.f32 %v664, %v683
  %v733 = vadd.f32 %v665, %v683
  %v734 = vadd.f32 %v666, %v683
  %v735 = vadd.f32 %v667, %v683
  %v736 = vadd.f32 %v668, %v683
  %v737 = vadd.f32 %v669, %v683
  %v738 = vadd.f32 %v670, %v683
  %v739 = vadd.f32 %v671, %v683
  %v740 = vadd.f32 %v672, %v683
  %v741 = vadd.f32 %v673, %v683
  %v742 = vadd.f32 %v674, %v683
  %v743 = vadd.f32 %v675, %v683
  %v744 = vadd.f32 %v676, %v683
  %v745 = vadd.f32 %v677, %v683
  %v746 = vadd.f32 %v678, %v683
  %v747 = vadd.f32 %v679, %v683
  %v748 = vadd.f32 %v680, %v683
  %v749 = vxor.u32 %v685, 2147483648
  %v750 = vxor.u32 %v686, 2147483648
  %v751 = vxor.u32 %v687, 2147483648
  %v752 = vxor.u32 %v688, 2147483648
  %v753 = vxor.u32 %v689, 2147483648
  %v754 = vxor.u32 %v690, 2147483648
  %v755 = vxor.u32 %v691, 2147483648
  %v756 = vxor.u32 %v692, 2147483648
  %v757 = vxor.u32 %v693, 2147483648
  %v758 = vxor.u32 %v694, 2147483648
  %v759 = vxor.u32 %v695, 2147483648
  %v760 = vxor.u32 %v696, 2147483648
  %v761 = vxor.u32 %v697, 2147483648
  %v762 = vxor.u32 %v698, 2147483648
  %v763 = vxor.u32 %v699, 2147483648
  %v764 = vxor.u32 %v700, 2147483648
  %v765 = vxor.u32 %v701, 2147483648
  %v766 = vxor.u32 %v702, 2147483648
  %v767 = vxor.u32 %v703, 2147483648
  %v768 = vxor.u32 %v704, 2147483648
  %v769 = vxor.u32 %v705, 2147483648
  %v770 = vxor.u32 %v706, 2147483648
  %v771 = vxor.u32 %v707, 2147483648
  %v772 = vxor.u32 %v708, 2147483648
  %v773 = vxor.u32 %v709, 2147483648
  %v774 = vxor.u32 %v710, 2147483648
  %v775 = vxor.u32 %v711, 2147483648
  %v776 = vxor.u32 %v712, 2147483648
  %v777 = vxor.u32 %v713, 2147483648
  %v778 = vxor.u32 %v714, 2147483648
  %v779 = vxor.u32 %v715, 2147483648
  %v780 = vxor.u32 %v716, 2147483648
  %v781 = vxor.u32 %v717, 2147483648
  %v782 = vxor.u32 %v718, 2147483648
  %v783 = vxor.u32 %v719, 2147483648
  %v784 = vxor.u32 %v720, 2147483648
  %v785 = vxor.u32 %v721, 2147483648
  %v786 = vxor.u32 %v722, 2147483648
  %v787 = vxor.u32 %v723, 2147483648
  %v788 = vxor.u32 %v724, 2147483648
  %v789 = vxor.u32 %v725, 2147483648
  %v790 = vxor.u32 %v726, 2147483648
  %v791 = vxor.u32 %v727, 2147483648
  %v792 = vxor.u32 %v728, 2147483648
  %v793 = vxor.u32 %v729, 2147483648
  %v794 = vxor.u32 %v730, 2147483648
  %v795 = vxor.u32 %v731, 2147483648
  %v796 = vxor.u32 %v732, 2147483648
  %v797 = vxor.u32 %v733, 2147483648
  %v798 = vxor.u32 %v734, 2147483648
  %v799 = vxor.u32 %v735, 2147483648
  %v800 = vxor.u32 %v736, 2147483648
  %v801 = vxor.u32 %v737, 2147483648
  %v802 = vxor.u32 %v738, 2147483648
  %v803 = vxor.u32 %v739, 2147483648
  %v804 = vxor.u32 %v740, 2147483648
  %v805 = vxor.u32 %v741, 2147483648
  %v806 = vxor.u32 %v742, 2147483648
  %v807 = vxor.u32 %v743, 2147483648
  %v808 = vxor.u32 %v744, 2147483648
  %v809 = vxor.u32 %v745, 2147483648
  %v810 = vxor.u32 %v746, 2147483648
  %v811 = vxor.u32 %v747, 2147483648
  %v812 = vxor.u32 %v748, 2147483648
  %v813 = vmul.f32 %v749, 1.442695
  %v814 = vpow.pop %v813
  %v815 = vmul.f32 %v750, 1.442695
  %v816 = vpow.pop %v815
  %v817 = vmul.f32 %v751, 1.442695
  %v818 = vpow.pop %v817
  %v819 = vmul.f32 %v752, 1.442695
  %v820 = vpow.pop %v819
  %v821 = vmul.f32 %v753, 1.442695
  %v822 = vpow.pop %v821
  %v823 = vmul.f32 %v754, 1.442695
  %v824 = vpow.pop %v823
  %v825 = vmul.f32 %v755, 1.442695
  %v826 = vpow.pop %v825
  %v827 = vmul.f32 %v756, 1.442695
  %v828 = vpow.pop %v827
  %v829 = vmul.f32 %v757, 1.442695
  %v830 = vpow.pop %v829
  %v831 = vmul.f32 %v758, 1.442695
  %v832 = vpow.pop %v831
  %v833 = vmul.f32 %v759, 1.442695
  %v834 = vpow.pop %v833
  %v835 = vmul.f32 %v760, 1.442695
  %v836 = vpow.pop %v835
  %v837 = vmul.f32 %v761, 1.442695
  %v838 = vpow.pop %v837
  %v839 = vmul.f32 %v762, 1.442695
  %v840 = vpow.pop %v839
  %v841 = vmul.f32 %v763, 1.442695
  %v842 = vpow.pop %v841
  %v843 = vmul.f32 %v764, 1.442695
  %v844 = vpow.pop %v843
  %v845 = vmul.f32 %v765, 1.442695
  %v846 = vpow.pop %v845
  %v847 = vmul.f32 %v766, 1.442695
  %v848 = vpow.pop %v847
  %v849 = vmul.f32 %v767, 1.442695
  %v850 = vpow.pop %v849
  %v851 = vmul.f32 %v768, 1.442695
  %v852 = vpow.pop %v851
  %v853 = vmul.f32 %v769, 1.442695
  %v854 = vpow.pop %v853
  %v855 = vmul.f32 %v770, 1.442695
  %v856 = vpow.pop %v855
  %v857 = vmul.f32 %v771, 1.442695
  %v858 = vpow.pop %v857
  %v859 = vmul.f32 %v772, 1.442695
  %v860 = vpow.pop %v859
  %v861 = vmul.f32 %v773, 1.442695
  %v862 = vpow.pop %v861
  %v863 = vmul.f32 %v774, 1.442695
  %v864 = vpow.pop %v863
  %v865 = vmul.f32 %v775, 1.442695
  %v866 = vpow.pop %v865
  %v867 = vmul.f32 %v776, 1.442695
  %v868 = vpow.pop %v867
  %v869 = vmul.f32 %v777, 1.442695
  %v870 = vpow.pop %v869
  %v871 = vmul.f32 %v778, 1.442695
  %v872 = vpow.pop %v871
  %v873 = vmul.f32 %v779, 1.442695
  %v874 = vpow.pop %v873
  %v875 = vmul.f32 %v780, 1.442695
  %v876 = vpow.pop %v875
  %v877 = vmul.f32 %v781, 1.442695
  %v878 = vpow.pop %v877
  %v879 = vmul.f32 %v782, 1.442695
  %v880 = vpow.pop %v879
  %v881 = vmul.f32 %v783, 1.442695
  %v882 = vpow.pop %v881
  %v883 = vmul.f32 %v784, 1.442695
  %v884 = vpow.pop %v883
  %v885 = vmul.f32 %v785, 1.442695
  %v886 = vpow.pop %v885
  %v887 = vmul.f32 %v786, 1.442695
  %v888 = vpow.pop %v887
  %v889 = vmul.f32 %v787, 1.442695
  %v890 = vpow.pop %v889
  %v891 = vmul.f32 %v788, 1.442695
  %v892 = vpow.pop %v891
  %v893 = vmul.f32 %v789, 1.442695
  %v894 = vpow.pop %v893
  %v895 = vmul.f32 %v790, 1.442695
  %v896 = vpow.pop %v895
  %v897 = vmul.f32 %v791, 1.442695
  %v898 = vpow.pop %v897
  %v899 = vmul.f32 %v792, 1.442695
  %v900 = vpow.pop %v899
  %v901 = vmul.f32 %v793, 1.442695
  %v902 = vpow.pop %v901
  %v903 = vmul.f32 %v794, 1.442695
  %v904 = vpow.pop %v903
  %v905 = vmul.f32 %v795, 1.442695
  %v906 = vpow.pop %v905
  %v907 = vmul.f32 %v796, 1.442695
  %v908 = vpow.pop %v907
  %v909 = vmul.f32 %v797, 1.442695
  %v910 = vpow.pop %v909
  %v911 = vmul.f32 %v798, 1.442695
  %v912 = vpow.pop %v911
  %v913 = vmul.f32 %v799, 1.442695
  %v914 = vpow.pop %v913
  %v915 = vmul.f32 %v800, 1.442695
  %v916 = vpow.pop %v915
  %v917 = vmul.f32 %v801, 1.442695
  %v918 = vpow.pop %v917
  %v919 = vmul.f32 %v802, 1.442695
  %v920 = vpow.pop %v919
  %v921 = vmul.f32 %v803, 1.442695
  %v922 = vpow.pop %v921
  %v923 = vmul.f32 %v804, 1.442695
  %v924 = vpow.pop %v923
  %v925 = vmul.f32 %v805, 1.442695
  %v926 = vpow.pop %v925
  %v927 = vmul.f32 %v806, 1.442695
  %v928 = vpow.pop %v927
  %v929 = vmul.f32 %v807, 1.442695
  %v930 = vpow.pop %v929
  %v931 = vmul.f32 %v808, 1.442695
  %v932 = vpow.pop %v931
  %v933 = vmul.f32 %v809, 1.442695
  %v934 = vpow.pop %v933
  %v935 = vmul.f32 %v810, 1.442695
  %v936 = vpow.pop %v935
  %v937 = vmul.f32 %v811, 1.442695
  %v938 = vpow.pop %v937
  %v939 = vmul.f32 %v812, 1.442695
  %v940 = vpow.pop %v939
  %v941 = vadd.f32 %v814, 1.0
  %v942 = vadd.f32 %v816, 1.0
  %v943 = vadd.f32 %v818, 1.0
  %v944 = vadd.f32 %v820, 1.0
  %v945 = vadd.f32 %v822, 1.0
  %v946 = vadd.f32 %v824, 1.0
  %v947 = vadd.f32 %v826, 1.0
  %v948 = vadd.f32 %v828, 1.0
  %v949 = vadd.f32 %v830, 1.0
  %v950 = vadd.f32 %v832, 1.0
  %v951 = vadd.f32 %v834, 1.0
  %v952 = vadd.f32 %v836, 1.0
  %v953 = vadd.f32 %v838, 1.0
  %v954 = vadd.f32 %v840, 1.0
  %v955 = vadd.f32 %v842, 1.0
  %v956 = vadd.f32 %v844, 1.0
  %v957 = vadd.f32 %v846, 1.0
  %v958 = vadd.f32 %v848, 1.0
  %v959 = vadd.f32 %v850, 1.0
  %v960 = vadd.f32 %v852, 1.0
  %v961 = vadd.f32 %v854, 1.0
  %v962 = vadd.f32 %v856, 1.0
  %v963 = vadd.f32 %v858, 1.0
  %v964 = vadd.f32 %v860, 1.0
  %v965 = vadd.f32 %v862, 1.0
  %v966 = vadd.f32 %v864, 1.0
  %v967 = vadd.f32 %v866, 1.0
  %v968 = vadd.f32 %v868, 1.0
  %v969 = vadd.f32 %v870, 1.0
  %v970 = vadd.f32 %v872, 1.0
  %v971 = vadd.f32 %v874, 1.0
  %v972 = vadd.f32 %v876, 1.0
  %v973 = vadd.f32 %v878, 1.0
  %v974 = vadd.f32 %v880, 1.0
  %v975 = vadd.f32 %v882, 1.0
  %v976 = vadd.f32 %v884, 1.0
  %v977 = vadd.f32 %v886, 1.0
  %v978 = vadd.f32 %v888, 1.0
  %v979 = vadd.f32 %v890, 1.0
  %v980 = vadd.f32 %v892, 1.0
  %v981 = vadd.f32 %v894, 1.0
  %v982 = vadd.f32 %v896, 1.0
  %v983 = vadd.f32 %v898, 1.0
  %v984 = vadd.f32 %v900, 1.0
  %v985 = vadd.f32 %v902, 1.0
  %v986 = vadd.f32 %v904, 1.0
  %v987 = vadd.f32 %v906, 1.0
  %v988 = vadd.f32 %v908, 1.0
  %v989 = vadd.f32 %v910, 1.0
  %v990 = vadd.f32 %v912, 1.0
  %v991 = vadd.f32 %v914, 1.0
  %v992 = vadd.f32 %v916, 1.0
  %v993 = vadd.f32 %v918, 1.0
  %v994 = vadd.f32 %v920, 1.0
  %v995 = vadd.f32 %v922, 1.0
  %v996 = vadd.f32 %v924, 1.0
  %v997 = vadd.f32 %v926, 1.0
  %v998 = vadd.f32 %v928, 1.0
  %v999 = vadd.f32 %v930, 1.0
  %v1000 = vadd.f32 %v932, 1.0
  %v1001 = vadd.f32 %v934, 1.0
  %v1002 = vadd.f32 %v936, 1.0
  %v1003 = vadd.f32 %v938, 1.0
  %v1004 = vadd.f32 %v940, 1.0
  %v1005 = vrcp.pop %v941
  %v1006 = vmul.f32 %v941, %v1005
  %v1007 = vsub.f32 1.0, %v1006
  %v1008 = vmul.f32 %v1005, %v1007
  %v1009 = vadd.f32 %v1005, %v1008
  %vm1010 = vweird.f32 %v941
  %vm1011 = vweird.f32 %v1005
  %vm1012 = vmor %vm1010, %vm1011
  %v1013 = vsel %vm1012, %v1005, %v1009
  %v1014 = vand.u32 2147483647, %v941
  %vm1015 = vcmp.eq.f32.partialorder %v1014, 8.507059e+37
  %v1016 = vand.u32 %v941, 2147483648
  %v1017 = vor.u32 1.1754944e-38, %v1016
  %v1018 = vsel %vm1015, %v1017, %v1013
  %v1019 = vmul.f32 1.0, %v1018
  %v1020 = vrcp.pop %v942
  %v1021 = vmul.f32 %v942, %v1020
  %v1022 = vsub.f32 1.0, %v1021
  %v1023 = vmul.f32 %v1020, %v1022
  %v1024 = vadd.f32 %v1020, %v1023
  %vm1025 = vweird.f32 %v942
  %vm1026 = vweird.f32 %v1020
  %vm1027 = vmor %vm1025, %vm1026
  %v1028 = vsel %vm1027, %v1020, %v1024
  %v1029 = vand.u32 2147483647, %v942
  %vm1030 = vcmp.eq.f32.partialorder %v1029, 8.507059e+37
  %v1031 = vand.u32 %v942, 2147483648
  %v1032 = vor.u32 1.1754944e-38, %v1031
  %v1033 = vsel %vm1030, %v1032, %v1028
  %v1034 = vmul.f32 1.0, %v1033
  %v1035 = vrcp.pop %v943
  %v1036 = vmul.f32 %v943, %v1035
  %v1037 = vsub.f32 1.0, %v1036
  %v1038 = vmul.f32 %v1035, %v1037
  %v1039 = vadd.f32 %v1035, %v1038
  %vm1040 = vweird.f32 %v943
  %vm1041 = vweird.f32 %v1035
  %vm1042 = vmor %vm1040, %vm1041
  %v1043 = vsel %vm1042, %v1035, %v1039
  %v1044 = vand.u32 2147483647, %v943
  %vm1045 = vcmp.eq.f32.partialorder %v1044, 8.507059e+37
  %v1046 = vand.u32 %v943, 2147483648
  %v1047 = vor.u32 1.1754944e-38, %v1046
  %v1048 = vsel %vm1045, %v1047, %v1043
  %v1049 = vmul.f32 1.0, %v1048
  %v1050 = vrcp.pop %v944
  %v1051 = vmul.f32 %v944, %v1050
  %v1052 = vsub.f32 1.0, %v1051
  %v1053 = vmul.f32 %v1050, %v1052
  %v1054 = vadd.f32 %v1050, %v1053
  %vm1055 = vweird.f32 %v944
  %vm1056 = vweird.f32 %v1050
  %vm1057 = vmor %vm1055, %vm1056
  %v1058 = vsel %vm1057, %v1050, %v1054
  %v1059 = vand.u32 2147483647, %v944
  %vm1060 = vcmp.eq.f32.partialorder %v1059, 8.507059e+37
  %v1061 = vand.u32 %v944, 2147483648
  %v1062 = vor.u32 1.1754944e-38, %v1061
  %v1063 = vsel %vm1060, %v1062, %v1058
  %v1064 = vmul.f32 1.0, %v1063
  %v1065 = vrcp.pop %v945
  %v1066 = vmul.f32 %v945, %v1065
  %v1067 = vsub.f32 1.0, %v1066
  %v1068 = vmul.f32 %v1065, %v1067
  %v1069 = vadd.f32 %v1065, %v1068
  %vm1070 = vweird.f32 %v945
  %vm1071 = vweird.f32 %v1065
  %vm1072 = vmor %vm1070, %vm1071
  %v1073 = vsel %vm1072, %v1065, %v1069
  %v1074 = vand.u32 2147483647, %v945
  %vm1075 = vcmp.eq.f32.partialorder %v1074, 8.507059e+37
  %v1076 = vand.u32 %v945, 2147483648
  %v1077 = vor.u32 1.1754944e-38, %v1076
  %v1078 = vsel %vm1075, %v1077, %v1073
  %v1079 = vmul.f32 1.0, %v1078
  %v1080 = vrcp.pop %v946
  %v1081 = vmul.f32 %v946, %v1080
  %v1082 = vsub.f32 1.0, %v1081
  %v1083 = vmul.f32 %v1080, %v1082
  %v1084 = vadd.f32 %v1080, %v1083
  %vm1085 = vweird.f32 %v946
  %vm1086 = vweird.f32 %v1080
  %vm1087 = vmor %vm1085, %vm1086
  %v1088 = vsel %vm1087, %v1080, %v1084
  %v1089 = vand.u32 2147483647, %v946
  %vm1090 = vcmp.eq.f32.partialorder %v1089, 8.507059e+37
  %v1091 = vand.u32 %v946, 2147483648
  %v1092 = vor.u32 1.1754944e-38, %v1091
  %v1093 = vsel %vm1090, %v1092, %v1088
  %v1094 = vmul.f32 1.0, %v1093
  %v1095 = vrcp.pop %v947
  %v1096 = vmul.f32 %v947, %v1095
  %v1097 = vsub.f32 1.0, %v1096
  %v1098 = vmul.f32 %v1095, %v1097
  %v1099 = vadd.f32 %v1095, %v1098
  %vm1100 = vweird.f32 %v947
  %vm1101 = vweird.f32 %v1095
  %vm1102 = vmor %vm1100, %vm1101
  %v1103 = vsel %vm1102, %v1095, %v1099
  %v1104 = vand.u32 2147483647, %v947
  %vm1105 = vcmp.eq.f32.partialorder %v1104, 8.507059e+37
  %v1106 = vand.u32 %v947, 2147483648
  %v1107 = vor.u32 1.1754944e-38, %v1106
  %v1108 = vsel %vm1105, %v1107, %v1103
  %v1109 = vmul.f32 1.0, %v1108
  %v1110 = vrcp.pop %v948
  %v1111 = vmul.f32 %v948, %v1110
  %v1112 = vsub.f32 1.0, %v1111
  %v1113 = vmul.f32 %v1110, %v1112
  %v1114 = vadd.f32 %v1110, %v1113
  %vm1115 = vweird.f32 %v948
  %vm1116 = vweird.f32 %v1110
  %vm1117 = vmor %vm1115, %vm1116
  %v1118 = vsel %vm1117, %v1110, %v1114
  %v1119 = vand.u32 2147483647, %v948
  %vm1120 = vcmp.eq.f32.partialorder %v1119, 8.507059e+37
  %v1121 = vand.u32 %v948, 2147483648
  %v1122 = vor.u32 1.1754944e-38, %v1121
  %v1123 = vsel %vm1120, %v1122, %v1118
  %v1124 = vmul.f32 1.0, %v1123
  %v1125 = vrcp.pop %v949
  %v1126 = vmul.f32 %v949, %v1125
  %v1127 = vsub.f32 1.0, %v1126
  %v1128 = vmul.f32 %v1125, %v1127
  %v1129 = vadd.f32 %v1125, %v1128
  %vm1130 = vweird.f32 %v949
  %vm1131 = vweird.f32 %v1125
  %vm1132 = vmor %vm1130, %vm1131
  %v1133 = vsel %vm1132, %v1125, %v1129
  %v1134 = vand.u32 2147483647, %v949
  %vm1135 = vcmp.eq.f32.partialorder %v1134, 8.507059e+37
  %v1136 = vand.u32 %v949, 2147483648
  %v1137 = vor.u32 1.1754944e-38, %v1136
  %v1138 = vsel %vm1135, %v1137, %v1133
  %v1139 = vmul.f32 1.0, %v1138
  %v1140 = vrcp.pop %v950
  %v1141 = vmul.f32 %v950, %v1140
  %v1142 = vsub.f32 1.0, %v1141
  %v1143 = vmul.f32 %v1140, %v1142
  %v1144 = vadd.f32 %v1140, %v1143
  %vm1145 = vweird.f32 %v950
  %vm1146 = vweird.f32 %v1140
  %vm1147 = vmor %vm1145, %vm1146
  %v1148 = vsel %vm1147, %v1140, %v1144
  %v1149 = vand.u32 2147483647, %v950
  %vm1150 = vcmp.eq.f32.partialorder %v1149, 8.507059e+37
  %v1151 = vand.u32 %v950, 2147483648
  %v1152 = vor.u32 1.1754944e-38, %v1151
  %v1153 = vsel %vm1150, %v1152, %v1148
  %v1154 = vmul.f32 1.0, %v1153
  %v1155 = vrcp.pop %v951
  %v1156 = vmul.f32 %v951, %v1155
  %v1157 = vsub.f32 1.0, %v1156
  %v1158 = vmul.f32 %v1155, %v1157
  %v1159 = vadd.f32 %v1155, %v1158
  %vm1160 = vweird.f32 %v951
  %vm1161 = vweird.f32 %v1155
  %vm1162 = vmor %vm1160, %vm1161
  %v1163 = vsel %vm1162, %v1155, %v1159
  %v1164 = vand.u32 2147483647, %v951
  %vm1165 = vcmp.eq.f32.partialorder %v1164, 8.507059e+37
  %v1166 = vand.u32 %v951, 2147483648
  %v1167 = vor.u32 1.1754944e-38, %v1166
  %v1168 = vsel %vm1165, %v1167, %v1163
  %v1169 = vmul.f32 1.0, %v1168
  %v1170 = vrcp.pop %v952
  %v1171 = vmul.f32 %v952, %v1170
  %v1172 = vsub.f32 1.0, %v1171
  %v1173 = vmul.f32 %v1170, %v1172
  %v1174 = vadd.f32 %v1170, %v1173
  %vm1175 = vweird.f32 %v952
  %vm1176 = vweird.f32 %v1170
  %vm1177 = vmor %vm1175, %vm1176
  %v1178 = vsel %vm1177, %v1170, %v1174
  %v1179 = vand.u32 2147483647, %v952
  %vm1180 = vcmp.eq.f32.partialorder %v1179, 8.507059e+37
  %v1181 = vand.u32 %v952, 2147483648
  %v1182 = vor.u32 1.1754944e-38, %v1181
  %v1183 = vsel %vm1180, %v1182, %v1178
  %v1184 = vmul.f32 1.0, %v1183
  %v1185 = vrcp.pop %v953
  %v1186 = vmul.f32 %v953, %v1185
  %v1187 = vsub.f32 1.0, %v1186
  %v1188 = vmul.f32 %v1185, %v1187
  %v1189 = vadd.f32 %v1185, %v1188
  %vm1190 = vweird.f32 %v953
  %vm1191 = vweird.f32 %v1185
  %vm1192 = vmor %vm1190, %vm1191
  %v1193 = vsel %vm1192, %v1185, %v1189
  %v1194 = vand.u32 2147483647, %v953
  %vm1195 = vcmp.eq.f32.partialorder %v1194, 8.507059e+37
  %v1196 = vand.u32 %v953, 2147483648
  %v1197 = vor.u32 1.1754944e-38, %v1196
  %v1198 = vsel %vm1195, %v1197, %v1193
  %v1199 = vmul.f32 1.0, %v1198
  %v1200 = vrcp.pop %v954
  %v1201 = vmul.f32 %v954, %v1200
  %v1202 = vsub.f32 1.0, %v1201
  %v1203 = vmul.f32 %v1200, %v1202
  %v1204 = vadd.f32 %v1200, %v1203
  %vm1205 = vweird.f32 %v954
  %vm1206 = vweird.f32 %v1200
  %vm1207 = vmor %vm1205, %vm1206
  %v1208 = vsel %vm1207, %v1200, %v1204
  %v1209 = vand.u32 2147483647, %v954
  %vm1210 = vcmp.eq.f32.partialorder %v1209, 8.507059e+37
  %v1211 = vand.u32 %v954, 2147483648
  %v1212 = vor.u32 1.1754944e-38, %v1211
  %v1213 = vsel %vm1210, %v1212, %v1208
  %v1214 = vmul.f32 1.0, %v1213
  %v1215 = vrcp.pop %v955
  %v1216 = vmul.f32 %v955, %v1215
  %v1217 = vsub.f32 1.0, %v1216
  %v1218 = vmul.f32 %v1215, %v1217
  %v1219 = vadd.f32 %v1215, %v1218
  %vm1220 = vweird.f32 %v955
  %vm1221 = vweird.f32 %v1215
  %vm1222 = vmor %vm1220, %vm1221
  %v1223 = vsel %vm1222, %v1215, %v1219
  %v1224 = vand.u32 2147483647, %v955
  %vm1225 = vcmp.eq.f32.partialorder %v1224, 8.507059e+37
  %v1226 = vand.u32 %v955, 2147483648
  %v1227 = vor.u32 1.1754944e-38, %v1226
  %v1228 = vsel %vm1225, %v1227, %v1223
  %v1229 = vmul.f32 1.0, %v1228
  %v1230 = vrcp.pop %v956
  %v1231 = vmul.f32 %v956, %v1230
  %v1232 = vsub.f32 1.0, %v1231
  %v1233 = vmul.f32 %v1230, %v1232
  %v1234 = vadd.f32 %v1230, %v1233
  %vm1235 = vweird.f32 %v956
  %vm1236 = vweird.f32 %v1230
  %vm1237 = vmor %vm1235, %vm1236
  %v1238 = vsel %vm1237, %v1230, %v1234
  %v1239 = vand.u32 2147483647, %v956
  %vm1240 = vcmp.eq.f32.partialorder %v1239, 8.507059e+37
  %v1241 = vand.u32 %v956, 2147483648
  %v1242 = vor.u32 1.1754944e-38, %v1241
  %v1243 = vsel %vm1240, %v1242, %v1238
  %v1244 = vmul.f32 1.0, %v1243
  %v1245 = vrcp.pop %v957
  %v1246 = vmul.f32 %v957, %v1245
  %v1247 = vsub.f32 1.0, %v1246
  %v1248 = vmul.f32 %v1245, %v1247
  %v1249 = vadd.f32 %v1245, %v1248
  %vm1250 = vweird.f32 %v957
  %vm1251 = vweird.f32 %v1245
  %vm1252 = vmor %vm1250, %vm1251
  %v1253 = vsel %vm1252, %v1245, %v1249
  %v1254 = vand.u32 2147483647, %v957
  %vm1255 = vcmp.eq.f32.partialorder %v1254, 8.507059e+37
  %v1256 = vand.u32 %v957, 2147483648
  %v1257 = vor.u32 1.1754944e-38, %v1256
  %v1258 = vsel %vm1255, %v1257, %v1253
  %v1259 = vmul.f32 1.0, %v1258
  %v1260 = vrcp.pop %v958
  %v1261 = vmul.f32 %v958, %v1260
  %v1262 = vsub.f32 1.0, %v1261
  %v1263 = vmul.f32 %v1260, %v1262
  %v1264 = vadd.f32 %v1260, %v1263
  %vm1265 = vweird.f32 %v958
  %vm1266 = vweird.f32 %v1260
  %vm1267 = vmor %vm1265, %vm1266
  %v1268 = vsel %vm1267, %v1260, %v1264
  %v1269 = vand.u32 2147483647, %v958
  %vm1270 = vcmp.eq.f32.partialorder %v1269, 8.507059e+37
  %v1271 = vand.u32 %v958, 2147483648
  %v1272 = vor.u32 1.1754944e-38, %v1271
  %v1273 = vsel %vm1270, %v1272, %v1268
  %v1274 = vmul.f32 1.0, %v1273
  %v1275 = vrcp.pop %v959
  %v1276 = vmul.f32 %v959, %v1275
  %v1277 = vsub.f32 1.0, %v1276
  %v1278 = vmul.f32 %v1275, %v1277
  %v1279 = vadd.f32 %v1275, %v1278
  %vm1280 = vweird.f32 %v959
  %vm1281 = vweird.f32 %v1275
  %vm1282 = vmor %vm1280, %vm1281
  %v1283 = vsel %vm1282, %v1275, %v1279
  %v1284 = vand.u32 2147483647, %v959
  %vm1285 = vcmp.eq.f32.partialorder %v1284, 8.507059e+37
  %v1286 = vand.u32 %v959, 2147483648
  %v1287 = vor.u32 1.1754944e-38, %v1286
  %v1288 = vsel %vm1285, %v1287, %v1283
  %v1289 = vmul.f32 1.0, %v1288
  %v1290 = vrcp.pop %v960
  %v1291 = vmul.f32 %v960, %v1290
  %v1292 = vsub.f32 1.0, %v1291
  %v1293 = vmul.f32 %v1290, %v1292
  %v1294 = vadd.f32 %v1290, %v1293
  %vm1295 = vweird.f32 %v960
  %vm1296 = vweird.f32 %v1290
  %vm1297 = vmor %vm1295, %vm1296
  %v1298 = vsel %vm1297, %v1290, %v1294
  %v1299 = vand.u32 2147483647, %v960
  %vm1300 = vcmp.eq.f32.partialorder %v1299, 8.507059e+37
  %v1301 = vand.u32 %v960, 2147483648
  %v1302 = vor.u32 1.1754944e-38, %v1301
  %v1303 = vsel %vm1300, %v1302, %v1298
  %v1304 = vmul.f32 1.0, %v1303
  %v1305 = vrcp.pop %v961
  %v1306 = vmul.f32 %v961, %v1305
  %v1307 = vsub.f32 1.0, %v1306
  %v1308 = vmul.f32 %v1305, %v1307
  %v1309 = vadd.f32 %v1305, %v1308
  %vm1310 = vweird.f32 %v961
  %vm1311 = vweird.f32 %v1305
  %vm1312 = vmor %vm1310, %vm1311
  %v1313 = vsel %vm1312, %v1305, %v1309
  %v1314 = vand.u32 2147483647, %v961
  %vm1315 = vcmp.eq.f32.partialorder %v1314, 8.507059e+37
  %v1316 = vand.u32 %v961, 2147483648
  %v1317 = vor.u32 1.1754944e-38, %v1316
  %v1318 = vsel %vm1315, %v1317, %v1313
  %v1319 = vmul.f32 1.0, %v1318
  %v1320 = vrcp.pop %v962
  %v1321 = vmul.f32 %v962, %v1320
  %v1322 = vsub.f32 1.0, %v1321
  %v1323 = vmul.f32 %v1320, %v1322
  %v1324 = vadd.f32 %v1320, %v1323
  %vm1325 = vweird.f32 %v962
  %vm1326 = vweird.f32 %v1320
  %vm1327 = vmor %vm1325, %vm1326
  %v1328 = vsel %vm1327, %v1320, %v1324
  %v1329 = vand.u32 2147483647, %v962
  %vm1330 = vcmp.eq.f32.partialorder %v1329, 8.507059e+37
  %v1331 = vand.u32 %v962, 2147483648
  %v1332 = vor.u32 1.1754944e-38, %v1331
  %v1333 = vsel %vm1330, %v1332, %v1328
  %v1334 = vmul.f32 1.0, %v1333
  %v1335 = vrcp.pop %v963
  %v1336 = vmul.f32 %v963, %v1335
  %v1337 = vsub.f32 1.0, %v1336
  %v1338 = vmul.f32 %v1335, %v1337
  %v1339 = vadd.f32 %v1335, %v1338
  %vm1340 = vweird.f32 %v963
  %vm1341 = vweird.f32 %v1335
  %vm1342 = vmor %vm1340, %vm1341
  %v1343 = vsel %vm1342, %v1335, %v1339
  %v1344 = vand.u32 2147483647, %v963
  %vm1345 = vcmp.eq.f32.partialorder %v1344, 8.507059e+37
  %v1346 = vand.u32 %v963, 2147483648
  %v1347 = vor.u32 1.1754944e-38, %v1346
  %v1348 = vsel %vm1345, %v1347, %v1343
  %v1349 = vmul.f32 1.0, %v1348
  %v1350 = vrcp.pop %v964
  %v1351 = vmul.f32 %v964, %v1350
  %v1352 = vsub.f32 1.0, %v1351
  %v1353 = vmul.f32 %v1350, %v1352
  %v1354 = vadd.f32 %v1350, %v1353
  %vm1355 = vweird.f32 %v964
  %vm1356 = vweird.f32 %v1350
  %vm1357 = vmor %vm1355, %vm1356
  %v1358 = vsel %vm1357, %v1350, %v1354
  %v1359 = vand.u32 2147483647, %v964
  %vm1360 = vcmp.eq.f32.partialorder %v1359, 8.507059e+37
  %v1361 = vand.u32 %v964, 2147483648
  %v1362 = vor.u32 1.1754944e-38, %v1361
  %v1363 = vsel %vm1360, %v1362, %v1358
  %v1364 = vmul.f32 1.0, %v1363
  %v1365 = vrcp.pop %v965
  %v1366 = vmul.f32 %v965, %v1365
  %v1367 = vsub.f32 1.0, %v1366
  %v1368 = vmul.f32 %v1365, %v1367
  %v1369 = vadd.f32 %v1365, %v1368
  %vm1370 = vweird.f32 %v965
  %vm1371 = vweird.f32 %v1365
  %vm1372 = vmor %vm1370, %vm1371
  %v1373 = vsel %vm1372, %v1365, %v1369
  %v1374 = vand.u32 2147483647, %v965
  %vm1375 = vcmp.eq.f32.partialorder %v1374, 8.507059e+37
  %v1376 = vand.u32 %v965, 2147483648
  %v1377 = vor.u32 1.1754944e-38, %v1376
  %v1378 = vsel %vm1375, %v1377, %v1373
  %v1379 = vmul.f32 1.0, %v1378
  %v1380 = vrcp.pop %v966
  %v1381 = vmul.f32 %v966, %v1380
  %v1382 = vsub.f32 1.0, %v1381
  %v1383 = vmul.f32 %v1380, %v1382
  %v1384 = vadd.f32 %v1380, %v1383
  %vm1385 = vweird.f32 %v966
  %vm1386 = vweird.f32 %v1380
  %vm1387 = vmor %vm1385, %vm1386
  %v1388 = vsel %vm1387, %v1380, %v1384
  %v1389 = vand.u32 2147483647, %v966
  %vm1390 = vcmp.eq.f32.partialorder %v1389, 8.507059e+37
  %v1391 = vand.u32 %v966, 2147483648
  %v1392 = vor.u32 1.1754944e-38, %v1391
  %v1393 = vsel %vm1390, %v1392, %v1388
  %v1394 = vmul.f32 1.0, %v1393
  %v1395 = vrcp.pop %v967
  %v1396 = vmul.f32 %v967, %v1395
  %v1397 = vsub.f32 1.0, %v1396
  %v1398 = vmul.f32 %v1395, %v1397
  %v1399 = vadd.f32 %v1395, %v1398
  %vm1400 = vweird.f32 %v967
  %vm1401 = vweird.f32 %v1395
  %vm1402 = vmor %vm1400, %vm1401
  %v1403 = vsel %vm1402, %v1395, %v1399
  %v1404 = vand.u32 2147483647, %v967
  %vm1405 = vcmp.eq.f32.partialorder %v1404, 8.507059e+37
  %v1406 = vand.u32 %v967, 2147483648
  %v1407 = vor.u32 1.1754944e-38, %v1406
  %v1408 = vsel %vm1405, %v1407, %v1403
  %v1409 = vmul.f32 1.0, %v1408
  %v1410 = vrcp.pop %v968
  %v1411 = vmul.f32 %v968, %v1410
  %v1412 = vsub.f32 1.0, %v1411
  %v1413 = vmul.f32 %v1410, %v1412
  %v1414 = vadd.f32 %v1410, %v1413
  %vm1415 = vweird.f32 %v968
  %vm1416 = vweird.f32 %v1410
  %vm1417 = vmor %vm1415, %vm1416
  %v1418 = vsel %vm1417, %v1410, %v1414
  %v1419 = vand.u32 2147483647, %v968
  %vm1420 = vcmp.eq.f32.partialorder %v1419, 8.507059e+37
  %v1421 = vand.u32 %v968, 2147483648
  %v1422 = vor.u32 1.1754944e-38, %v1421
  %v1423 = vsel %vm1420, %v1422, %v1418
  %v1424 = vmul.f32 1.0, %v1423
  %v1425 = vrcp.pop %v969
  %v1426 = vmul.f32 %v969, %v1425
  %v1427 = vsub.f32 1.0, %v1426
  %v1428 = vmul.f32 %v1425, %v1427
  %v1429 = vadd.f32 %v1425, %v1428
  %vm1430 = vweird.f32 %v969
  %vm1431 = vweird.f32 %v1425
  %vm1432 = vmor %vm1430, %vm1431
  %v1433 = vsel %vm1432, %v1425, %v1429
  %v1434 = vand.u32 2147483647, %v969
  %vm1435 = vcmp.eq.f32.partialorder %v1434, 8.507059e+37
  %v1436 = vand.u32 %v969, 2147483648
  %v1437 = vor.u32 1.1754944e-38, %v1436
  %v1438 = vsel %vm1435, %v1437, %v1433
  %v1439 = vmul.f32 1.0, %v1438
  %v1440 = vrcp.pop %v970
  %v1441 = vmul.f32 %v970, %v1440
  %v1442 = vsub.f32 1.0, %v1441
  %v1443 = vmul.f32 %v1440, %v1442
  %v1444 = vadd.f32 %v1440, %v1443
  %vm1445 = vweird.f32 %v970
  %vm1446 = vweird.f32 %v1440
  %vm1447 = vmor %vm1445, %vm1446
  %v1448 = vsel %vm1447, %v1440, %v1444
  %v1449 = vand.u32 2147483647, %v970
  %vm1450 = vcmp.eq.f32.partialorder %v1449, 8.507059e+37
  %v1451 = vand.u32 %v970, 2147483648
  %v1452 = vor.u32 1.1754944e-38, %v1451
  %v1453 = vsel %vm1450, %v1452, %v1448
  %v1454 = vmul.f32 1.0, %v1453
  %v1455 = vrcp.pop %v971
  %v1456 = vmul.f32 %v971, %v1455
  %v1457 = vsub.f32 1.0, %v1456
  %v1458 = vmul.f32 %v1455, %v1457
  %v1459 = vadd.f32 %v1455, %v1458
  %vm1460 = vweird.f32 %v971
  %vm1461 = vweird.f32 %v1455
  %vm1462 = vmor %vm1460, %vm1461
  %v1463 = vsel %vm1462, %v1455, %v1459
  %v1464 = vand.u32 2147483647, %v971
  %vm1465 = vcmp.eq.f32.partialorder %v1464, 8.507059e+37
  %v1466 = vand.u32 %v971, 2147483648
  %v1467 = vor.u32 1.1754944e-38, %v1466
  %v1468 = vsel %vm1465, %v1467, %v1463
  %v1469 = vmul.f32 1.0, %v1468
  %v1470 = vrcp.pop %v972
  %v1471 = vmul.f32 %v972, %v1470
  %v1472 = vsub.f32 1.0, %v1471
  %v1473 = vmul.f32 %v1470, %v1472
  %v1474 = vadd.f32 %v1470, %v1473
  %vm1475 = vweird.f32 %v972
  %vm1476 = vweird.f32 %v1470
  %vm1477 = vmor %vm1475, %vm1476
  %v1478 = vsel %vm1477, %v1470, %v1474
  %v1479 = vand.u32 2147483647, %v972
  %vm1480 = vcmp.eq.f32.partialorder %v1479, 8.507059e+37
  %v1481 = vand.u32 %v972, 2147483648
  %v1482 = vor.u32 1.1754944e-38, %v1481
  %v1483 = vsel %vm1480, %v1482, %v1478
  %v1484 = vmul.f32 1.0, %v1483
  %v1485 = vrcp.pop %v973
  %v1486 = vmul.f32 %v973, %v1485
  %v1487 = vsub.f32 1.0, %v1486
  %v1488 = vmul.f32 %v1485, %v1487
  %v1489 = vadd.f32 %v1485, %v1488
  %vm1490 = vweird.f32 %v973
  %vm1491 = vweird.f32 %v1485
  %vm1492 = vmor %vm1490, %vm1491
  %v1493 = vsel %vm1492, %v1485, %v1489
  %v1494 = vand.u32 2147483647, %v973
  %vm1495 = vcmp.eq.f32.partialorder %v1494, 8.507059e+37
  %v1496 = vand.u32 %v973, 2147483648
  %v1497 = vor.u32 1.1754944e-38, %v1496
  %v1498 = vsel %vm1495, %v1497, %v1493
  %v1499 = vmul.f32 1.0, %v1498
  %v1500 = vrcp.pop %v974
  %v1501 = vmul.f32 %v974, %v1500
  %v1502 = vsub.f32 1.0, %v1501
  %v1503 = vmul.f32 %v1500, %v1502
  %v1504 = vadd.f32 %v1500, %v1503
  %vm1505 = vweird.f32 %v974
  %vm1506 = vweird.f32 %v1500
  %vm1507 = vmor %vm1505, %vm1506
  %v1508 = vsel %vm1507, %v1500, %v1504
  %v1509 = vand.u32 2147483647, %v974
  %vm1510 = vcmp.eq.f32.partialorder %v1509, 8.507059e+37
  %v1511 = vand.u32 %v974, 2147483648
  %v1512 = vor.u32 1.1754944e-38, %v1511
  %v1513 = vsel %vm1510, %v1512, %v1508
  %v1514 = vmul.f32 1.0, %v1513
  %v1515 = vrcp.pop %v975
  %v1516 = vmul.f32 %v975, %v1515
  %v1517 = vsub.f32 1.0, %v1516
  %v1518 = vmul.f32 %v1515, %v1517
  %v1519 = vadd.f32 %v1515, %v1518
  %vm1520 = vweird.f32 %v975
  %vm1521 = vweird.f32 %v1515
  %vm1522 = vmor %vm1520, %vm1521
  %v1523 = vsel %vm1522, %v1515, %v1519
  %v1524 = vand.u32 2147483647, %v975
  %vm1525 = vcmp.eq.f32.partialorder %v1524, 8.507059e+37
  %v1526 = vand.u32 %v975, 2147483648
  %v1527 = vor.u32 1.1754944e-38, %v1526
  %v1528 = vsel %vm1525, %v1527, %v1523
  %v1529 = vmul.f32 1.0, %v1528
  %v1530 = vrcp.pop %v976
  %v1531 = vmul.f32 %v976, %v1530
  %v1532 = vsub.f32 1.0, %v1531
  %v1533 = vmul.f32 %v1530, %v1532
  %v1534 = vadd.f32 %v1530, %v1533
  %vm1535 = vweird.f32 %v976
  %vm1536 = vweird.f32 %v1530
  %vm1537 = vmor %vm1535, %vm1536
  %v1538 = vsel %vm1537, %v1530, %v1534
  %v1539 = vand.u32 2147483647, %v976
  %vm1540 = vcmp.eq.f32.partialorder %v1539, 8.507059e+37
  %v1541 = vand.u32 %v976, 2147483648
  %v1542 = vor.u32 1.1754944e-38, %v1541
  %v1543 = vsel %vm1540, %v1542, %v1538
  %v1544 = vmul.f32 1.0, %v1543
  %v1545 = vrcp.pop %v977
  %v1546 = vmul.f32 %v977, %v1545
  %v1547 = vsub.f32 1.0, %v1546
  %v1548 = vmul.f32 %v1545, %v1547
  %v1549 = vadd.f32 %v1545, %v1548
  %vm1550 = vweird.f32 %v977
  %vm1551 = vweird.f32 %v1545
  %vm1552 = vmor %vm1550, %vm1551
  %v1553 = vsel %vm1552, %v1545, %v1549
  %v1554 = vand.u32 2147483647, %v977
  %vm1555 = vcmp.eq.f32.partialorder %v1554, 8.507059e+37
  %v1556 = vand.u32 %v977, 2147483648
  %v1557 = vor.u32 1.1754944e-38, %v1556
  %v1558 = vsel %vm1555, %v1557, %v1553
  %v1559 = vmul.f32 1.0, %v1558
  %v1560 = vrcp.pop %v978
  %v1561 = vmul.f32 %v978, %v1560
  %v1562 = vsub.f32 1.0, %v1561
  %v1563 = vmul.f32 %v1560, %v1562
  %v1564 = vadd.f32 %v1560, %v1563
  %vm1565 = vweird.f32 %v978
  %vm1566 = vweird.f32 %v1560
  %vm1567 = vmor %vm1565, %vm1566
  %v1568 = vsel %vm1567, %v1560, %v1564
  %v1569 = vand.u32 2147483647, %v978
  %vm1570 = vcmp.eq.f32.partialorder %v1569, 8.507059e+37
  %v1571 = vand.u32 %v978, 2147483648
  %v1572 = vor.u32 1.1754944e-38, %v1571
  %v1573 = vsel %vm1570, %v1572, %v1568
  %v1574 = vmul.f32 1.0, %v1573
  %v1575 = vrcp.pop %v979
  %v1576 = vmul.f32 %v979, %v1575
  %v1577 = vsub.f32 1.0, %v1576
  %v1578 = vmul.f32 %v1575, %v1577
  %v1579 = vadd.f32 %v1575, %v1578
  %vm1580 = vweird.f32 %v979
  %vm1581 = vweird.f32 %v1575
  %vm1582 = vmor %vm1580, %vm1581
  %v1583 = vsel %vm1582, %v1575, %v1579
  %v1584 = vand.u32 2147483647, %v979
  %vm1585 = vcmp.eq.f32.partialorder %v1584, 8.507059e+37
  %v1586 = vand.u32 %v979, 2147483648
  %v1587 = vor.u32 1.1754944e-38, %v1586
  %v1588 = vsel %vm1585, %v1587, %v1583
  %v1589 = vmul.f32 1.0, %v1588
  %v1590 = vrcp.pop %v980
  %v1591 = vmul.f32 %v980, %v1590
  %v1592 = vsub.f32 1.0, %v1591
  %v1593 = vmul.f32 %v1590, %v1592
  %v1594 = vadd.f32 %v1590, %v1593
  %vm1595 = vweird.f32 %v980
  %vm1596 = vweird.f32 %v1590
  %vm1597 = vmor %vm1595, %vm1596
  %v1598 = vsel %vm1597, %v1590, %v1594
  %v1599 = vand.u32 2147483647, %v980
  %vm1600 = vcmp.eq.f32.partialorder %v1599, 8.507059e+37
  %v1601 = vand.u32 %v980, 2147483648
  %v1602 = vor.u32 1.1754944e-38, %v1601
  %v1603 = vsel %vm1600, %v1602, %v1598
  %v1604 = vmul.f32 1.0, %v1603
  %v1605 = vrcp.pop %v981
  %v1606 = vmul.f32 %v981, %v1605
  %v1607 = vsub.f32 1.0, %v1606
  %v1608 = vmul.f32 %v1605, %v1607
  %v1609 = vadd.f32 %v1605, %v1608
  %vm1610 = vweird.f32 %v981
  %vm1611 = vweird.f32 %v1605
  %vm1612 = vmor %vm1610, %vm1611
  %v1613 = vsel %vm1612, %v1605, %v1609
  %v1614 = vand.u32 2147483647, %v981
  %vm1615 = vcmp.eq.f32.partialorder %v1614, 8.507059e+37
  %v1616 = vand.u32 %v981, 2147483648
  %v1617 = vor.u32 1.1754944e-38, %v1616
  %v1618 = vsel %vm1615, %v1617, %v1613
  %v1619 = vmul.f32 1.0, %v1618
  %v1620 = vrcp.pop %v982
  %v1621 = vmul.f32 %v982, %v1620
  %v1622 = vsub.f32 1.0, %v1621
  %v1623 = vmul.f32 %v1620, %v1622
  %v1624 = vadd.f32 %v1620, %v1623
  %vm1625 = vweird.f32 %v982
  %vm1626 = vweird.f32 %v1620
  %vm1627 = vmor %vm1625, %vm1626
  %v1628 = vsel %vm1627, %v1620, %v1624
  %v1629 = vand.u32 2147483647, %v982
  %vm1630 = vcmp.eq.f32.partialorder %v1629, 8.507059e+37
  %v1631 = vand.u32 %v982, 2147483648
  %v1632 = vor.u32 1.1754944e-38, %v1631
  %v1633 = vsel %vm1630, %v1632, %v1628
  %v1634 = vmul.f32 1.0, %v1633
  %v1635 = vrcp.pop %v983
  %v1636 = vmul.f32 %v983, %v1635
  %v1637 = vsub.f32 1.0, %v1636
  %v1638 = vmul.f32 %v1635, %v1637
  %v1639 = vadd.f32 %v1635, %v1638
  %vm1640 = vweird.f32 %v983
  %vm1641 = vweird.f32 %v1635
  %vm1642 = vmor %vm1640, %vm1641
  %v1643 = vsel %vm1642, %v1635, %v1639
  %v1644 = vand.u32 2147483647, %v983
  %vm1645 = vcmp.eq.f32.partialorder %v1644, 8.507059e+37
  %v1646 = vand.u32 %v983, 2147483648
  %v1647 = vor.u32 1.1754944e-38, %v1646
  %v1648 = vsel %vm1645, %v1647, %v1643
  %v1649 = vmul.f32 1.0, %v1648
  %v1650 = vrcp.pop %v984
  %v1651 = vmul.f32 %v984, %v1650
  %v1652 = vsub.f32 1.0, %v1651
  %v1653 = vmul.f32 %v1650, %v1652
  %v1654 = vadd.f32 %v1650, %v1653
  %vm1655 = vweird.f32 %v984
  %vm1656 = vweird.f32 %v1650
  %vm1657 = vmor %vm1655, %vm1656
  %v1658 = vsel %vm1657, %v1650, %v1654
  %v1659 = vand.u32 2147483647, %v984
  %vm1660 = vcmp.eq.f32.partialorder %v1659, 8.507059e+37
  %v1661 = vand.u32 %v984, 2147483648
  %v1662 = vor.u32 1.1754944e-38, %v1661
  %v1663 = vsel %vm1660, %v1662, %v1658
  %v1664 = vmul.f32 1.0, %v1663
  %v1665 = vrcp.pop %v985
  %v1666 = vmul.f32 %v985, %v1665
  %v1667 = vsub.f32 1.0, %v1666
  %v1668 = vmul.f32 %v1665, %v1667
  %v1669 = vadd.f32 %v1665, %v1668
  %vm1670 = vweird.f32 %v985
  %vm1671 = vweird.f32 %v1665
  %vm1672 = vmor %vm1670, %vm1671
  %v1673 = vsel %vm1672, %v1665, %v1669
  %v1674 = vand.u32 2147483647, %v985
  %vm1675 = vcmp.eq.f32.partialorder %v1674, 8.507059e+37
  %v1676 = vand.u32 %v985, 2147483648
  %v1677 = vor.u32 1.1754944e-38, %v1676
  %v1678 = vsel %vm1675, %v1677, %v1673
  %v1679 = vmul.f32 1.0, %v1678
  %v1680 = vrcp.pop %v986
  %v1681 = vmul.f32 %v986, %v1680
  %v1682 = vsub.f32 1.0, %v1681
  %v1683 = vmul.f32 %v1680, %v1682
  %v1684 = vadd.f32 %v1680, %v1683
  %vm1685 = vweird.f32 %v986
  %vm1686 = vweird.f32 %v1680
  %vm1687 = vmor %vm1685, %vm1686
  %v1688 = vsel %vm1687, %v1680, %v1684
  %v1689 = vand.u32 2147483647, %v986
  %vm1690 = vcmp.eq.f32.partialorder %v1689, 8.507059e+37
  %v1691 = vand.u32 %v986, 2147483648
  %v1692 = vor.u32 1.1754944e-38, %v1691
  %v1693 = vsel %vm1690, %v1692, %v1688
  %v1694 = vmul.f32 1.0, %v1693
  %v1695 = vrcp.pop %v987
  %v1696 = vmul.f32 %v987, %v1695
  %v1697 = vsub.f32 1.0, %v1696
  %v1698 = vmul.f32 %v1695, %v1697
  %v1699 = vadd.f32 %v1695, %v1698
  %vm1700 = vweird.f32 %v987
  %vm1701 = vweird.f32 %v1695
  %vm1702 = vmor %vm1700, %vm1701
  %v1703 = vsel %vm1702, %v1695, %v1699
  %v1704 = vand.u32 2147483647, %v987
  %vm1705 = vcmp.eq.f32.partialorder %v1704, 8.507059e+37
  %v1706 = vand.u32 %v987, 2147483648
  %v1707 = vor.u32 1.1754944e-38, %v1706
  %v1708 = vsel %vm1705, %v1707, %v1703
  %v1709 = vmul.f32 1.0, %v1708
  %v1710 = vrcp.pop %v988
  %v1711 = vmul.f32 %v988, %v1710
  %v1712 = vsub.f32 1.0, %v1711
  %v1713 = vmul.f32 %v1710, %v1712
  %v1714 = vadd.f32 %v1710, %v1713
  %vm1715 = vweird.f32 %v988
  %vm1716 = vweird.f32 %v1710
  %vm1717 = vmor %vm1715, %vm1716
  %v1718 = vsel %vm1717, %v1710, %v1714
  %v1719 = vand.u32 2147483647, %v988
  %vm1720 = vcmp.eq.f32.partialorder %v1719, 8.507059e+37
  %v1721 = vand.u32 %v988, 2147483648
  %v1722 = vor.u32 1.1754944e-38, %v1721
  %v1723 = vsel %vm1720, %v1722, %v1718
  %v1724 = vmul.f32 1.0, %v1723
  %v1725 = vrcp.pop %v989
  %v1726 = vmul.f32 %v989, %v1725
  %v1727 = vsub.f32 1.0, %v1726
  %v1728 = vmul.f32 %v1725, %v1727
  %v1729 = vadd.f32 %v1725, %v1728
  %vm1730 = vweird.f32 %v989
  %vm1731 = vweird.f32 %v1725
  %vm1732 = vmor %vm1730, %vm1731
  %v1733 = vsel %vm1732, %v1725, %v1729
  %v1734 = vand.u32 2147483647, %v989
  %vm1735 = vcmp.eq.f32.partialorder %v1734, 8.507059e+37
  %v1736 = vand.u32 %v989, 2147483648
  %v1737 = vor.u32 1.1754944e-38, %v1736
  %v1738 = vsel %vm1735, %v1737, %v1733
  %v1739 = vmul.f32 1.0, %v1738
  %v1740 = vrcp.pop %v990
  %v1741 = vmul.f32 %v990, %v1740
  %v1742 = vsub.f32 1.0, %v1741
  %v1743 = vmul.f32 %v1740, %v1742
  %v1744 = vadd.f32 %v1740, %v1743
  %vm1745 = vweird.f32 %v990
  %vm1746 = vweird.f32 %v1740
  %vm1747 = vmor %vm1745, %vm1746
  %v1748 = vsel %vm1747, %v1740, %v1744
  %v1749 = vand.u32 2147483647, %v990
  %vm1750 = vcmp.eq.f32.partialorder %v1749, 8.507059e+37
  %v1751 = vand.u32 %v990, 2147483648
  %v1752 = vor.u32 1.1754944e-38, %v1751
  %v1753 = vsel %vm1750, %v1752, %v1748
  %v1754 = vmul.f32 1.0, %v1753
  %v1755 = vrcp.pop %v991
  %v1756 = vmul.f32 %v991, %v1755
  %v1757 = vsub.f32 1.0, %v1756
  %v1758 = vmul.f32 %v1755, %v1757
  %v1759 = vadd.f32 %v1755, %v1758
  %vm1760 = vweird.f32 %v991
  %vm1761 = vweird.f32 %v1755
  %vm1762 = vmor %vm1760, %vm1761
  %v1763 = vsel %vm1762, %v1755, %v1759
  %v1764 = vand.u32 2147483647, %v991
  %vm1765 = vcmp.eq.f32.partialorder %v1764, 8.507059e+37
  %v1766 = vand.u32 %v991, 2147483648
  %v1767 = vor.u32 1.1754944e-38, %v1766
  %v1768 = vsel %vm1765, %v1767, %v1763
  %v1769 = vmul.f32 1.0, %v1768
  %v1770 = vrcp.pop %v992
  %v1771 = vmul.f32 %v992, %v1770
  %v1772 = vsub.f32 1.0, %v1771
  %v1773 = vmul.f32 %v1770, %v1772
  %v1774 = vadd.f32 %v1770, %v1773
  %vm1775 = vweird.f32 %v992
  %vm1776 = vweird.f32 %v1770
  %vm1777 = vmor %vm1775, %vm1776
  %v1778 = vsel %vm1777, %v1770, %v1774
  %v1779 = vand.u32 2147483647, %v992
  %vm1780 = vcmp.eq.f32.partialorder %v1779, 8.507059e+37
  %v1781 = vand.u32 %v992, 2147483648
  %v1782 = vor.u32 1.1754944e-38, %v1781
  %v1783 = vsel %vm1780, %v1782, %v1778
  %v1784 = vmul.f32 1.0, %v1783
  %v1785 = vrcp.pop %v993
  %v1786 = vmul.f32 %v993, %v1785
  %v1787 = vsub.f32 1.0, %v1786
  %v1788 = vmul.f32 %v1785, %v1787
  %v1789 = vadd.f32 %v1785, %v1788
  %vm1790 = vweird.f32 %v993
  %vm1791 = vweird.f32 %v1785
  %vm1792 = vmor %vm1790, %vm1791
  %v1793 = vsel %vm1792, %v1785, %v1789
  %v1794 = vand.u32 2147483647, %v993
  %vm1795 = vcmp.eq.f32.partialorder %v1794, 8.507059e+37
  %v1796 = vand.u32 %v993, 2147483648
  %v1797 = vor.u32 1.1754944e-38, %v1796
  %v1798 = vsel %vm1795, %v1797, %v1793
  %v1799 = vmul.f32 1.0, %v1798
  %v1800 = vrcp.pop %v994
  %v1801 = vmul.f32 %v994, %v1800
  %v1802 = vsub.f32 1.0, %v1801
  %v1803 = vmul.f32 %v1800, %v1802
  %v1804 = vadd.f32 %v1800, %v1803
  %vm1805 = vweird.f32 %v994
  %vm1806 = vweird.f32 %v1800
  %vm1807 = vmor %vm1805, %vm1806
  %v1808 = vsel %vm1807, %v1800, %v1804
  %v1809 = vand.u32 2147483647, %v994
  %vm1810 = vcmp.eq.f32.partialorder %v1809, 8.507059e+37
  %v1811 = vand.u32 %v994, 2147483648
  %v1812 = vor.u32 1.1754944e-38, %v1811
  %v1813 = vsel %vm1810, %v1812, %v1808
  %v1814 = vmul.f32 1.0, %v1813
  %v1815 = vrcp.pop %v995
  %v1816 = vmul.f32 %v995, %v1815
  %v1817 = vsub.f32 1.0, %v1816
  %v1818 = vmul.f32 %v1815, %v1817
  %v1819 = vadd.f32 %v1815, %v1818
  %vm1820 = vweird.f32 %v995
  %vm1821 = vweird.f32 %v1815
  %vm1822 = vmor %vm1820, %vm1821
  %v1823 = vsel %vm1822, %v1815, %v1819
  %v1824 = vand.u32 2147483647, %v995
  %vm1825 = vcmp.eq.f32.partialorder %v1824, 8.507059e+37
  %v1826 = vand.u32 %v995, 2147483648
  %v1827 = vor.u32 1.1754944e-38, %v1826
  %v1828 = vsel %vm1825, %v1827, %v1823
  %v1829 = vmul.f32 1.0, %v1828
  %v1830 = vrcp.pop %v996
  %v1831 = vmul.f32 %v996, %v1830
  %v1832 = vsub.f32 1.0, %v1831
  %v1833 = vmul.f32 %v1830, %v1832
  %v1834 = vadd.f32 %v1830, %v1833
  %vm1835 = vweird.f32 %v996
  %vm1836 = vweird.f32 %v1830
  %vm1837 = vmor %vm1835, %vm1836
  %v1838 = vsel %vm1837, %v1830, %v1834
  %v1839 = vand.u32 2147483647, %v996
  %vm1840 = vcmp.eq.f32.partialorder %v1839, 8.507059e+37
  %v1841 = vand.u32 %v996, 2147483648
  %v1842 = vor.u32 1.1754944e-38, %v1841
  %v1843 = vsel %vm1840, %v1842, %v1838
  %v1844 = vmul.f32 1.0, %v1843
  %v1845 = vrcp.pop %v997
  %v1846 = vmul.f32 %v997, %v1845
  %v1847 = vsub.f32 1.0, %v1846
  %v1848 = vmul.f32 %v1845, %v1847
  %v1849 = vadd.f32 %v1845, %v1848
  %vm1850 = vweird.f32 %v997
  %vm1851 = vweird.f32 %v1845
  %vm1852 = vmor %vm1850, %vm1851
  %v1853 = vsel %vm1852, %v1845, %v1849
  %v1854 = vand.u32 2147483647, %v997
  %vm1855 = vcmp.eq.f32.partialorder %v1854, 8.507059e+37
  %v1856 = vand.u32 %v997, 2147483648
  %v1857 = vor.u32 1.1754944e-38, %v1856
  %v1858 = vsel %vm1855, %v1857, %v1853
  %v1859 = vmul.f32 1.0, %v1858
  %v1860 = vrcp.pop %v998
  %v1861 = vmul.f32 %v998, %v1860
  %v1862 = vsub.f32 1.0, %v1861
  %v1863 = vmul.f32 %v1860, %v1862
  %v1864 = vadd.f32 %v1860, %v1863
  %vm1865 = vweird.f32 %v998
  %vm1866 = vweird.f32 %v1860
  %vm1867 = vmor %vm1865, %vm1866
  %v1868 = vsel %vm1867, %v1860, %v1864
  %v1869 = vand.u32 2147483647, %v998
  %vm1870 = vcmp.eq.f32.partialorder %v1869, 8.507059e+37
  %v1871 = vand.u32 %v998, 2147483648
  %v1872 = vor.u32 1.1754944e-38, %v1871
  %v1873 = vsel %vm1870, %v1872, %v1868
  %v1874 = vmul.f32 1.0, %v1873
  %v1875 = vrcp.pop %v999
  %v1876 = vmul.f32 %v999, %v1875
  %v1877 = vsub.f32 1.0, %v1876
  %v1878 = vmul.f32 %v1875, %v1877
  %v1879 = vadd.f32 %v1875, %v1878
  %vm1880 = vweird.f32 %v999
  %vm1881 = vweird.f32 %v1875
  %vm1882 = vmor %vm1880, %vm1881
  %v1883 = vsel %vm1882, %v1875, %v1879
  %v1884 = vand.u32 2147483647, %v999
  %vm1885 = vcmp.eq.f32.partialorder %v1884, 8.507059e+37
  %v1886 = vand.u32 %v999, 2147483648
  %v1887 = vor.u32 1.1754944e-38, %v1886
  %v1888 = vsel %vm1885, %v1887, %v1883
  %v1889 = vmul.f32 1.0, %v1888
  %v1890 = vrcp.pop %v1000
  %v1891 = vmul.f32 %v1000, %v1890
  %v1892 = vsub.f32 1.0, %v1891
  %v1893 = vmul.f32 %v1890, %v1892
  %v1894 = vadd.f32 %v1890, %v1893
  %vm1895 = vweird.f32 %v1000
  %vm1896 = vweird.f32 %v1890
  %vm1897 = vmor %vm1895, %vm1896
  %v1898 = vsel %vm1897, %v1890, %v1894
  %v1899 = vand.u32 2147483647, %v1000
  %vm1900 = vcmp.eq.f32.partialorder %v1899, 8.507059e+37
  %v1901 = vand.u32 %v1000, 2147483648
  %v1902 = vor.u32 1.1754944e-38, %v1901
  %v1903 = vsel %vm1900, %v1902, %v1898
  %v1904 = vmul.f32 1.0, %v1903
  %v1905 = vrcp.pop %v1001
  %v1906 = vmul.f32 %v1001, %v1905
  %v1907 = vsub.f32 1.0, %v1906
  %v1908 = vmul.f32 %v1905, %v1907
  %v1909 = vadd.f32 %v1905, %v1908
  %vm1910 = vweird.f32 %v1001
  %vm1911 = vweird.f32 %v1905
  %vm1912 = vmor %vm1910, %vm1911
  %v1913 = vsel %vm1912, %v1905, %v1909
  %v1914 = vand.u32 2147483647, %v1001
  %vm1915 = vcmp.eq.f32.partialorder %v1914, 8.507059e+37
  %v1916 = vand.u32 %v1001, 2147483648
  %v1917 = vor.u32 1.1754944e-38, %v1916
  %v1918 = vsel %vm1915, %v1917, %v1913
  %v1919 = vmul.f32 1.0, %v1918
  %v1920 = vrcp.pop %v1002
  %v1921 = vmul.f32 %v1002, %v1920
  %v1922 = vsub.f32 1.0, %v1921
  %v1923 = vmul.f32 %v1920, %v1922
  %v1924 = vadd.f32 %v1920, %v1923
  %vm1925 = vweird.f32 %v1002
  %vm1926 = vweird.f32 %v1920
  %vm1927 = vmor %vm1925, %vm1926
  %v1928 = vsel %vm1927, %v1920, %v1924
  %v1929 = vand.u32 2147483647, %v1002
  %vm1930 = vcmp.eq.f32.partialorder %v1929, 8.507059e+37
  %v1931 = vand.u32 %v1002, 2147483648
  %v1932 = vor.u32 1.1754944e-38, %v1931
  %v1933 = vsel %vm1930, %v1932, %v1928
  %v1934 = vmul.f32 1.0, %v1933
  %v1935 = vrcp.pop %v1003
  %v1936 = vmul.f32 %v1003, %v1935
  %v1937 = vsub.f32 1.0, %v1936
  %v1938 = vmul.f32 %v1935, %v1937
  %v1939 = vadd.f32 %v1935, %v1938
  %vm1940 = vweird.f32 %v1003
  %vm1941 = vweird.f32 %v1935
  %vm1942 = vmor %vm1940, %vm1941
  %v1943 = vsel %vm1942, %v1935, %v1939
  %v1944 = vand.u32 2147483647, %v1003
  %vm1945 = vcmp.eq.f32.partialorder %v1944, 8.507059e+37
  %v1946 = vand.u32 %v1003, 2147483648
  %v1947 = vor.u32 1.1754944e-38, %v1946
  %v1948 = vsel %vm1945, %v1947, %v1943
  %v1949 = vmul.f32 1.0, %v1948
  %v1950 = vrcp.pop %v1004
  %v1951 = vmul.f32 %v1004, %v1950
  %v1952 = vsub.f32 1.0, %v1951
  %v1953 = vmul.f32 %v1950, %v1952
  %v1954 = vadd.f32 %v1950, %v1953
  %vm1955 = vweird.f32 %v1004
  %vm1956 = vweird.f32 %v1950
  %vm1957 = vmor %vm1955, %vm1956
  %v1958 = vsel %vm1957, %v1950, %v1954
  %v1959 = vand.u32 2147483647, %v1004
  %vm1960 = vcmp.eq.f32.partialorder %v1959, 8.507059e+37
  %v1961 = vand.u32 %v1004, 2147483648
  %v1962 = vor.u32 1.1754944e-38, %v1961
  %v1963 = vsel %vm1960, %v1962, %v1958
  %v1964 = vmul.f32 1.0, %v1963
  %v1965 = vmul.f32 %v685, %v1019
  %v1966 = vmul.f32 %v686, %v1034
  %v1967 = vmul.f32 %v687, %v1049
  %v1968 = vmul.f32 %v688, %v1064
  %v1969 = vmul.f32 %v689, %v1079
  %v1970 = vmul.f32 %v690, %v1094
  %v1971 = vmul.f32 %v691, %v1109
  %v1972 = vmul.f32 %v692, %v1124
  %v1973 = vmul.f32 %v693, %v1139
  %v1974 = vmul.f32 %v694, %v1154
  %v1975 = vmul.f32 %v695, %v1169
  %v1976 = vmul.f32 %v696, %v1184
  %v1977 = vmul.f32 %v697, %v1199
  %v1978 = vmul.f32 %v698, %v1214
  %v1979 = vmul.f32 %v699, %v1229
  %v1980 = vmul.f32 %v700, %v1244
  %v1981 = vmul.f32 %v701, %v1259
  %v1982 = vmul.f32 %v702, %v1274
  %v1983 = vmul.f32 %v703, %v1289
  %v1984 = vmul.f32 %v704, %v1304
  %v1985 = vmul.f32 %v705, %v1319
  %v1986 = vmul.f32 %v706, %v1334
  %v1987 = vmul.f32 %v707, %v1349
  %v1988 = vmul.f32 %v708, %v1364
  %v1989 = vmul.f32 %v709, %v1379
  %v1990 = vmul.f32 %v710, %v1394
  %v1991 = vmul.f32 %v711, %v1409
  %v1992 = vmul.f32 %v712, %v1424
  %v1993 = vmul.f32 %v713, %v1439
  %v1994 = vmul.f32 %v714, %v1454
  %v1995 = vmul.f32 %v715, %v1469
  %v1996 = vmul.f32 %v716, %v1484
  %v1997 = vmul.f32 %v717, %v1499
  %v1998 = vmul.f32 %v718, %v1514
  %v1999 = vmul.f32 %v719, %v1529
  %v2000 = vmul.f32 %v720, %v1544
  %v2001 = vmul.f32 %v721, %v1559
  %v2002 = vmul.f32 %v722, %v1574
  %v2003 = vmul.f32 %v723, %v1589
  %v2004 = vmul.f32 %v724, %v1604
  %v2005 = vmul.f32 %v725, %v1619
  %v2006 = vmul.f32 %v726, %v1634
  %v2007 = vmul.f32 %v727, %v1649
  %v2008 = vmul.f32 %v728, %v1664
  %v2009 = vmul.f32 %v729, %v1679
  %v2010 = vmul.f32 %v730, %v1694
  %v2011 = vmul.f32 %v731, %v1709
  %v2012 = vmul.f32 %v732, %v1724
  %v2013 = vmul.f32 %v733, %v1739
  %v2014 = vmul.f32 %v734, %v1754
  %v2015 = vmul.f32 %v735, %v1769
  %v2016 = vmul.f32 %v736, %v1784
  %v2017 = vmul.f32 %v737, %v1799
  %v2018 = vmul.f32 %v738, %v1814
  %v2019 = vmul.f32 %v739, %v1829
  %v2020 = vmul.f32 %v740, %v1844
  %v2021 = vmul.f32 %v741, %v1859
  %v2022 = vmul.f32 %v742, %v1874
  %v2023 = vmul.f32 %v743, %v1889
  %v2024 = vmul.f32 %v744, %v1904
  %v2025 = vmul.f32 %v745, %v1919
  %v2026 = vmul.f32 %v746, %v1934
  %v2027 = vmul.f32 %v747, %v1949
  %v2028 = vmul.f32 %v748, %v1964
  %v2029 = vld [vmem:[%s2] sm:$0xff]
  %v2030 = vld [vmem:[%s2 + $0x8] sm:$0xff]
  %v2031 = vld [vmem:[%s2 + $0x10] sm:$0xff]
  %v2032 = vld [vmem:[%s2 + $0x18] sm:$0xff]
  %v2033 = vld [vmem:[%s2 + $0x20] sm:$0xff]
  %v2034 = vld [vmem:[%s2 + $0x28] sm:$0xff]
  %v2035 = vld [vmem:[%s2 + $0x30] sm:$0xff]
  %v2036 = vld [vmem:[%s2 + $0x38] sm:$0xff]
  %v2037 = vld [vmem:[%s2 + $0x40] sm:$0xff]
  %v2038 = vld [vmem:[%s2 + $0x48] sm:$0xff]
  %v2039 = vld [vmem:[%s2 + $0x50] sm:$0xff]
  %v2040 = vld [vmem:[%s2 + $0x58] sm:$0xff]
  %v2041 = vld [vmem:[%s2 + $0x60] sm:$0xff]
  %v2042 = vld [vmem:[%s2 + $0x68] sm:$0xff]
  %v2043 = vld [vmem:[%s2 + $0x70] sm:$0xff]
  %v2044 = vld [vmem:[%s2 + $0x78] sm:$0xff]
  %v2045 = vld [vmem:[%s2 + $0x80] sm:$0xff]
  %v2046 = vld [vmem:[%s2 + $0x88] sm:$0xff]
  %v2047 = vld [vmem:[%s2 + $0x90] sm:$0xff]
  %v2048 = vld [vmem:[%s2 + $0x98] sm:$0xff]
  %v2049 = vld [vmem:[%s2 + $0xa0] sm:$0xff]
  %v2050 = vld [vmem:[%s2 + $0xa8] sm:$0xff]
  %v2051 = vld [vmem:[%s2 + $0xb0] sm:$0xff]
  %v2052 = vld [vmem:[%s2 + $0xb8] sm:$0xff]
  %v2053 = vld [vmem:[%s2 + $0xc0] sm:$0xff]
  %v2054 = vld [vmem:[%s2 + $0xc8] sm:$0xff]
  %v2055 = vld [vmem:[%s2 + $0xd0] sm:$0xff]
  %v2056 = vld [vmem:[%s2 + $0xd8] sm:$0xff]
  %v2057 = vld [vmem:[%s2 + $0xe0] sm:$0xff]
  %v2058 = vld [vmem:[%s2 + $0xe8] sm:$0xff]
  %v2059 = vld [vmem:[%s2 + $0xf0] sm:$0xff]
  %v2060 = vld [vmem:[%s2 + $0xf8] sm:$0xff]
  %v2061 = vld [vmem:[%s2 + $0x100] sm:$0xff]
  %v2062 = vld [vmem:[%s2 + $0x108] sm:$0xff]
  %v2063 = vld [vmem:[%s2 + $0x110] sm:$0xff]
  %v2064 = vld [vmem:[%s2 + $0x118] sm:$0xff]
  %v2065 = vld [vmem:[%s2 + $0x120] sm:$0xff]
  %v2066 = vld [vmem:[%s2 + $0x128] sm:$0xff]
  %v2067 = vld [vmem:[%s2 + $0x130] sm:$0xff]
  %v2068 = vld [vmem:[%s2 + $0x138] sm:$0xff]
  %v2069 = vld [vmem:[%s2 + $0x140] sm:$0xff]
  %v2070 = vld [vmem:[%s2 + $0x148] sm:$0xff]
  %v2071 = vld [vmem:[%s2 + $0x150] sm:$0xff]
  %v2072 = vld [vmem:[%s2 + $0x158] sm:$0xff]
  %v2073 = vld [vmem:[%s2 + $0x160] sm:$0xff]
  %v2074 = vld [vmem:[%s2 + $0x168] sm:$0xff]
  %v2075 = vld [vmem:[%s2 + $0x170] sm:$0xff]
  %v2076 = vld [vmem:[%s2 + $0x178] sm:$0xff]
  %v2077 = vld [vmem:[%s2 + $0x180] sm:$0xff]
  %v2078 = vld [vmem:[%s2 + $0x188] sm:$0xff]
  %v2079 = vld [vmem:[%s2 + $0x190] sm:$0xff]
  %v2080 = vld [vmem:[%s2 + $0x198] sm:$0xff]
  %v2081 = vld [vmem:[%s2 + $0x1a0] sm:$0xff]
  %v2082 = vld [vmem:[%s2 + $0x1a8] sm:$0xff]
  %v2083 = vld [vmem:[%s2 + $0x1b0] sm:$0xff]
  %v2084 = vld [vmem:[%s2 + $0x1b8] sm:$0xff]
  %v2085 = vld [vmem:[%s2 + $0x1c0] sm:$0xff]
  %v2086 = vld [vmem:[%s2 + $0x1c8] sm:$0xff]
  %v2087 = vld [vmem:[%s2 + $0x1d0] sm:$0xff]
  %v2088 = vld [vmem:[%s2 + $0x1d8] sm:$0xff]
  %v2089 = vld [vmem:[%s2 + $0x1e0] sm:$0xff]
  %v2090 = vld [vmem:[%s2 + $0x1e8] sm:$0xff]
  %v2091 = vld [vmem:[%s2 + $0x1f0] sm:$0xff]
  %v2092 = vld [vmem:[%s2 + $0x1f8] sm:$0xff]
  %v2093 = vld [vmem:[%s5] sm:$0xff]
  %v2094 = vld [vmem:[%s5 + $0x8] sm:$0xff]
  %v2095 = vld [vmem:[%s5 + $0x10] sm:$0xff]
  %v2096 = vld [vmem:[%s5 + $0x18] sm:$0xff]
  %v2097 = vld [vmem:[%s5 + $0x20] sm:$0xff]
  %v2098 = vld [vmem:[%s5 + $0x28] sm:$0xff]
  %v2099 = vld [vmem:[%s5 + $0x30] sm:$0xff]
  %v2100 = vld [vmem:[%s5 + $0x38] sm:$0xff]
  %v2101 = vld [vmem:[%s5 + $0x40] sm:$0xff]
  %v2102 = vld [vmem:[%s5 + $0x48] sm:$0xff]
  %v2103 = vld [vmem:[%s5 + $0x50] sm:$0xff]
  %v2104 = vld [vmem:[%s5 + $0x58] sm:$0xff]
  %v2105 = vld [vmem:[%s5 + $0x60] sm:$0xff]
  %v2106 = vld [vmem:[%s5 + $0x68] sm:$0xff]
  %v2107 = vld [vmem:[%s5 + $0x70] sm:$0xff]
  %v2108 = vld [vmem:[%s5 + $0x78] sm:$0xff]
  %2109 = vmatpush.msra.mxu0 %v2108
  %2110 = vmatpush.msra.mxu0 %v2107
  %2111 = vmatpush.msra.mxu0 %v2106
  %2112 = vmatpush.msra.mxu0 %v2105
  %2113 = vmatpush.msra.mxu0 %v2104
  %2114 = vmatpush.msra.mxu0 %v2103
  %2115 = vmatpush.msra.mxu0 %v2102
  %2116 = vmatpush.msra.mxu0 %v2101
  %2117 = vmatpush.msra.mxu0 %v2100
  %2118 = vmatpush.msra.mxu0 %v2099
  %2119 = vmatpush.msra.mxu0 %v2098
  %2120 = vmatpush.msra.mxu0 %v2097
  %2121 = vmatpush.msra.mxu0 %v2096
  %2122 = vmatpush.msra.mxu0 %v2095
  %2123 = vmatpush.msra.mxu0 %v2094
  %2124 = vmatpush.msra.mxu0 %v2093
  %2125 = vmatmul.f32.gmra.mxu0 %v2029
  %v2126 = vpop.f32.mrf.mxu0
  %v2127 = vadd.f32 0.0, %v2126
  %2128 = vmatmul.f32.gmra.mxu0 %v2030
  %v2129 = vpop.f32.mrf.mxu0
  %v2130 = vadd.f32 0.0, %v2129
  %2131 = vmatmul.f32.gmra.mxu0 %v2031
  %v2132 = vpop.f32.mrf.mxu0
  %v2133 = vadd.f32 0.0, %v2132
  %2134 = vmatmul.f32.gmra.mxu0 %v2032
  %v2135 = vpop.f32.mrf.mxu0
  %v2136 = vadd.f32 0.0, %v2135
  %2137 = vmatmul.f32.gmra.mxu0 %v2033
  %v2138 = vpop.f32.mrf.mxu0
  %v2139 = vadd.f32 0.0, %v2138
  %2140 = vmatmul.f32.gmra.mxu0 %v2034
  %v2141 = vpop.f32.mrf.mxu0
  %v2142 = vadd.f32 0.0, %v2141
  %2143 = vmatmul.f32.gmra.mxu0 %v2035
  %v2144 = vpop.f32.mrf.mxu0
  %v2145 = vadd.f32 0.0, %v2144
  %2146 = vmatmul.f32.gmra.mxu0 %v2036
  %v2147 = vpop.f32.mrf.mxu0
  %v2148 = vadd.f32 0.0, %v2147
  %2149 = vmatmul.f32.gmra.mxu0 %v2037
  %v2150 = vpop.f32.mrf.mxu0
  %v2151 = vadd.f32 0.0, %v2150
  %2152 = vmatmul.f32.gmra.mxu0 %v2038
  %v2153 = vpop.f32.mrf.mxu0
  %v2154 = vadd.f32 0.0, %v2153
  %2155 = vmatmul.f32.gmra.mxu0 %v2039
  %v2156 = vpop.f32.mrf.mxu0
  %v2157 = vadd.f32 0.0, %v2156
  %2158 = vmatmul.f32.gmra.mxu0 %v2040
  %v2159 = vpop.f32.mrf.mxu0
  %v2160 = vadd.f32 0.0, %v2159
  %2161 = vmatmul.f32.gmra.mxu0 %v2041
  %v2162 = vpop.f32.mrf.mxu0
  %v2163 = vadd.f32 0.0, %v2162
  %2164 = vmatmul.f32.gmra.mxu0 %v2042
  %v2165 = vpop.f32.mrf.mxu0
  %v2166 = vadd.f32 0.0, %v2165
  %2167 = vmatmul.f32.gmra.mxu0 %v2043
  %v2168 = vpop.f32.mrf.mxu0
  %v2169 = vadd.f32 0.0, %v2168
  %2170 = vmatmul.f32.gmra.mxu0 %v2044
  %v2171 = vpop.f32.mrf.mxu0
  %v2172 = vadd.f32 0.0, %v2171
  %2173 = vmatmul.f32.gmra.mxu0 %v2045
  %v2174 = vpop.f32.mrf.mxu0
  %v2175 = vadd.f32 0.0, %v2174
  %2176 = vmatmul.f32.gmra.mxu0 %v2046
  %v2177 = vpop.f32.mrf.mxu0
  %v2178 = vadd.f32 0.0, %v2177
  %2179 = vmatmul.f32.gmra.mxu0 %v2047
  %v2180 = vpop.f32.mrf.mxu0
  %v2181 = vadd.f32 0.0, %v2180
  %2182 = vmatmul.f32.gmra.mxu0 %v2048
  %v2183 = vpop.f32.mrf.mxu0
  %v2184 = vadd.f32 0.0, %v2183
  %2185 = vmatmul.f32.gmra.mxu0 %v2049
  %v2186 = vpop.f32.mrf.mxu0
  %v2187 = vadd.f32 0.0, %v2186
  %2188 = vmatmul.f32.gmra.mxu0 %v2050
  %v2189 = vpop.f32.mrf.mxu0
  %v2190 = vadd.f32 0.0, %v2189
  %2191 = vmatmul.f32.gmra.mxu0 %v2051
  %v2192 = vpop.f32.mrf.mxu0
  %v2193 = vadd.f32 0.0, %v2192
  %2194 = vmatmul.f32.gmra.mxu0 %v2052
  %v2195 = vpop.f32.mrf.mxu0
  %v2196 = vadd.f32 0.0, %v2195
  %2197 = vmatmul.f32.gmra.mxu0 %v2053
  %v2198 = vpop.f32.mrf.mxu0
  %v2199 = vadd.f32 0.0, %v2198
  %2200 = vmatmul.f32.gmra.mxu0 %v2054
  %v2201 = vpop.f32.mrf.mxu0
  %v2202 = vadd.f32 0.0, %v2201
  %2203 = vmatmul.f32.gmra.mxu0 %v2055
  %v2204 = vpop.f32.mrf.mxu0
  %v2205 = vadd.f32 0.0, %v2204
  %2206 = vmatmul.f32.gmra.mxu0 %v2056
  %v2207 = vpop.f32.mrf.mxu0
  %v2208 = vadd.f32 0.0, %v2207
  %2209 = vmatmul.f32.gmra.mxu0 %v2057
  %v2210 = vpop.f32.mrf.mxu0
  %v2211 = vadd.f32 0.0, %v2210
  %2212 = vmatmul.f32.gmra.mxu0 %v2058
  %v2213 = vpop.f32.mrf.mxu0
  %v2214 = vadd.f32 0.0, %v2213
  %2215 = vmatmul.f32.gmra.mxu0 %v2059
  %v2216 = vpop.f32.mrf.mxu0
  %v2217 = vadd.f32 0.0, %v2216
  %2218 = vmatmul.f32.gmra.mxu0 %v2060
  %v2219 = vpop.f32.mrf.mxu0
  %v2220 = vadd.f32 0.0, %v2219
  %2221 = vmatmul.f32.gmra.mxu0 %v2061
  %v2222 = vpop.f32.mrf.mxu0
  %v2223 = vadd.f32 0.0, %v2222
  %2224 = vmatmul.f32.gmra.mxu0 %v2062
  %v2225 = vpop.f32.mrf.mxu0
  %v2226 = vadd.f32 0.0, %v2225
  %2227 = vmatmul.f32.gmra.mxu0 %v2063
  %v2228 = vpop.f32.mrf.mxu0
  %v2229 = vadd.f32 0.0, %v2228
  %2230 = vmatmul.f32.gmra.mxu0 %v2064
  %v2231 = vpop.f32.mrf.mxu0
  %v2232 = vadd.f32 0.0, %v2231
  %2233 = vmatmul.f32.gmra.mxu0 %v2065
  %v2234 = vpop.f32.mrf.mxu0
  %v2235 = vadd.f32 0.0, %v2234
  %2236 = vmatmul.f32.gmra.mxu0 %v2066
  %v2237 = vpop.f32.mrf.mxu0
  %v2238 = vadd.f32 0.0, %v2237
  %2239 = vmatmul.f32.gmra.mxu0 %v2067
  %v2240 = vpop.f32.mrf.mxu0
  %v2241 = vadd.f32 0.0, %v2240
  %2242 = vmatmul.f32.gmra.mxu0 %v2068
  %v2243 = vpop.f32.mrf.mxu0
  %v2244 = vadd.f32 0.0, %v2243
  %2245 = vmatmul.f32.gmra.mxu0 %v2069
  %v2246 = vpop.f32.mrf.mxu0
  %v2247 = vadd.f32 0.0, %v2246
  %2248 = vmatmul.f32.gmra.mxu0 %v2070
  %v2249 = vpop.f32.mrf.mxu0
  %v2250 = vadd.f32 0.0, %v2249
  %2251 = vmatmul.f32.gmra.mxu0 %v2071
  %v2252 = vpop.f32.mrf.mxu0
  %v2253 = vadd.f32 0.0, %v2252
  %2254 = vmatmul.f32.gmra.mxu0 %v2072
  %v2255 = vpop.f32.mrf.mxu0
  %v2256 = vadd.f32 0.0, %v2255
  %2257 = vmatmul.f32.gmra.mxu0 %v2073
  %v2258 = vpop.f32.mrf.mxu0
  %v2259 = vadd.f32 0.0, %v2258
  %2260 = vmatmul.f32.gmra.mxu0 %v2074
  %v2261 = vpop.f32.mrf.mxu0
  %v2262 = vadd.f32 0.0, %v2261
  %2263 = vmatmul.f32.gmra.mxu0 %v2075
  %v2264 = vpop.f32.mrf.mxu0
  %v2265 = vadd.f32 0.0, %v2264
  %2266 = vmatmul.f32.gmra.mxu0 %v2076
  %v2267 = vpop.f32.mrf.mxu0
  %v2268 = vadd.f32 0.0, %v2267
  %2269 = vmatmul.f32.gmra.mxu0 %v2077
  %v2270 = vpop.f32.mrf.mxu0
  %v2271 = vadd.f32 0.0, %v2270
  %2272 = vmatmul.f32.gmra.mxu0 %v2078
  %v2273 = vpop.f32.mrf.mxu0
  %v2274 = vadd.f32 0.0, %v2273
  %2275 = vmatmul.f32.gmra.mxu0 %v2079
  %v2276 = vpop.f32.mrf.mxu0
  %v2277 = vadd.f32 0.0, %v2276
  %2278 = vmatmul.f32.gmra.mxu0 %v2080
  %v2279 = vpop.f32.mrf.mxu0
  %v2280 = vadd.f32 0.0, %v2279
  %2281 = vmatmul.f32.gmra.mxu0 %v2081
  %v2282 = vpop.f32.mrf.mxu0
  %v2283 = vadd.f32 0.0, %v2282
  %2284 = vmatmul.f32.gmra.mxu0 %v2082
  %v2285 = vpop.f32.mrf.mxu0
  %v2286 = vadd.f32 0.0, %v2285
  %2287 = vmatmul.f32.gmra.mxu0 %v2083
  %v2288 = vpop.f32.mrf.mxu0
  %v2289 = vadd.f32 0.0, %v2288
  %2290 = vmatmul.f32.gmra.mxu0 %v2084
  %v2291 = vpop.f32.mrf.mxu0
  %v2292 = vadd.f32 0.0, %v2291
  %2293 = vmatmul.f32.gmra.mxu0 %v2085
  %v2294 = vpop.f32.mrf.mxu0
  %v2295 = vadd.f32 0.0, %v2294
  %2296 = vmatmul.f32.gmra.mxu0 %v2086
  %v2297 = vpop.f32.mrf.mxu0
  %v2298 = vadd.f32 0.0, %v2297
  %2299 = vmatmul.f32.gmra.mxu0 %v2087
  %v2300 = vpop.f32.mrf.mxu0
  %v2301 = vadd.f32 0.0, %v2300
  %2302 = vmatmul.f32.gmra.mxu0 %v2088
  %v2303 = vpop.f32.mrf.mxu0
  %v2304 = vadd.f32 0.0, %v2303
  %2305 = vmatmul.f32.gmra.mxu0 %v2089
  %v2306 = vpop.f32.mrf.mxu0
  %v2307 = vadd.f32 0.0, %v2306
  %2308 = vmatmul.f32.gmra.mxu0 %v2090
  %v2309 = vpop.f32.mrf.mxu0
  %v2310 = vadd.f32 0.0, %v2309
  %2311 = vmatmul.f32.gmra.mxu0 %v2091
  %v2312 = vpop.f32.mrf.mxu0
  %v2313 = vadd.f32 0.0, %v2312
  %2314 = vmatmul.f32.gmra.mxu0 %v2092
  %v2315 = vpop.f32.mrf.mxu0
  %v2316 = vadd.f32 0.0, %v2315
  %2317 = vdwg.mxu0
  %v2318 = vld [vmem:[%s8] sm:$0x1]
  %v2320 = vperm.slane %v2318, 0
  %v2322 = vmul.f32 %v2127, %v2320
  %v2323 = vmul.f32 %v2130, %v2320
  %v2324 = vmul.f32 %v2133, %v2320
  %v2325 = vmul.f32 %v2136, %v2320
  %v2326 = vmul.f32 %v2139, %v2320
  %v2327 = vmul.f32 %v2142, %v2320
  %v2328 = vmul.f32 %v2145, %v2320
  %v2329 = vmul.f32 %v2148, %v2320
  %v2330 = vmul.f32 %v2151, %v2320
  %v2331 = vmul.f32 %v2154, %v2320
  %v2332 = vmul.f32 %v2157, %v2320
  %v2333 = vmul.f32 %v2160, %v2320
  %v2334 = vmul.f32 %v2163, %v2320
  %v2335 = vmul.f32 %v2166, %v2320
  %v2336 = vmul.f32 %v2169, %v2320
  %v2337 = vmul.f32 %v2172, %v2320
  %v2338 = vmul.f32 %v2175, %v2320
  %v2339 = vmul.f32 %v2178, %v2320
  %v2340 = vmul.f32 %v2181, %v2320
  %v2341 = vmul.f32 %v2184, %v2320
  %v2342 = vmul.f32 %v2187, %v2320
  %v2343 = vmul.f32 %v2190, %v2320
  %v2344 = vmul.f32 %v2193, %v2320
  %v2345 = vmul.f32 %v2196, %v2320
  %v2346 = vmul.f32 %v2199, %v2320
  %v2347 = vmul.f32 %v2202, %v2320
  %v2348 = vmul.f32 %v2205, %v2320
  %v2349 = vmul.f32 %v2208, %v2320
  %v2350 = vmul.f32 %v2211, %v2320
  %v2351 = vmul.f32 %v2214, %v2320
  %v2352 = vmul.f32 %v2217, %v2320
  %v2353 = vmul.f32 %v2220, %v2320
  %v2354 = vmul.f32 %v2223, %v2320
  %v2355 = vmul.f32 %v2226, %v2320
  %v2356 = vmul.f32 %v2229, %v2320
  %v2357 = vmul.f32 %v2232, %v2320
  %v2358 = vmul.f32 %v2235, %v2320
  %v2359 = vmul.f32 %v2238, %v2320
  %v2360 = vmul.f32 %v2241, %v2320
  %v2361 = vmul.f32 %v2244, %v2320
  %v2362 = vmul.f32 %v2247, %v2320
  %v2363 = vmul.f32 %v2250, %v2320
  %v2364 = vmul.f32 %v2253, %v2320
  %v2365 = vmul.f32 %v2256, %v2320
  %v2366 = vmul.f32 %v2259, %v2320
  %v2367 = vmul.f32 %v2262, %v2320
  %v2368 = vmul.f32 %v2265, %v2320
  %v2369 = vmul.f32 %v2268, %v2320
  %v2370 = vmul.f32 %v2271, %v2320
  %v2371 = vmul.f32 %v2274, %v2320
  %v2372 = vmul.f32 %v2277, %v2320
  %v2373 = vmul.f32 %v2280, %v2320
  %v2374 = vmul.f32 %v2283, %v2320
  %v2375 = vmul.f32 %v2286, %v2320
  %v2376 = vmul.f32 %v2289, %v2320
  %v2377 = vmul.f32 %v2292, %v2320
  %v2378 = vmul.f32 %v2295, %v2320
  %v2379 = vmul.f32 %v2298, %v2320
  %v2380 = vmul.f32 %v2301, %v2320
  %v2381 = vmul.f32 %v2304, %v2320
  %v2382 = vmul.f32 %v2307, %v2320
  %v2383 = vmul.f32 %v2310, %v2320
  %v2384 = vmul.f32 %v2313, %v2320
  %v2385 = vmul.f32 %v2316, %v2320
  %v2386 = vadd.f32 %v1965, %v2322
  %v2387 = vadd.f32 %v1966, %v2323
  %v2388 = vadd.f32 %v1967, %v2324
  %v2389 = vadd.f32 %v1968, %v2325
  %v2390 = vadd.f32 %v1969, %v2326
  %v2391 = vadd.f32 %v1970, %v2327
  %v2392 = vadd.f32 %v1971, %v2328
  %v2393 = vadd.f32 %v1972, %v2329
  %v2394 = vadd.f32 %v1973, %v2330
  %v2395 = vadd.f32 %v1974, %v2331
  %v2396 = vadd.f32 %v1975, %v2332
  %v2397 = vadd.f32 %v1976, %v2333
  %v2398 = vadd.f32 %v1977, %v2334
  %v2399 = vadd.f32 %v1978, %v2335
  %v2400 = vadd.f32 %v1979, %v2336
  %v2401 = vadd.f32 %v1980, %v2337
  %v2402 = vadd.f32 %v1981, %v2338
  %v2403 = vadd.f32 %v1982, %v2339
  %v2404 = vadd.f32 %v1983, %v2340
  %v2405 = vadd.f32 %v1984, %v2341
  %v2406 = vadd.f32 %v1985, %v2342
  %v2407 = vadd.f32 %v1986, %v2343
  %v2408 = vadd.f32 %v1987, %v2344
  %v2409 = vadd.f32 %v1988, %v2345
  %v2410 = vadd.f32 %v1989, %v2346
  %v2411 = vadd.f32 %v1990, %v2347
  %v2412 = vadd.f32 %v1991, %v2348
  %v2413 = vadd.f32 %v1992, %v2349
  %v2414 = vadd.f32 %v1993, %v2350
  %v2415 = vadd.f32 %v1994, %v2351
  %v2416 = vadd.f32 %v1995, %v2352
  %v2417 = vadd.f32 %v1996, %v2353
  %v2418 = vadd.f32 %v1997, %v2354
  %v2419 = vadd.f32 %v1998, %v2355
  %v2420 = vadd.f32 %v1999, %v2356
  %v2421 = vadd.f32 %v2000, %v2357
  %v2422 = vadd.f32 %v2001, %v2358
  %v2423 = vadd.f32 %v2002, %v2359
  %v2424 = vadd.f32 %v2003, %v2360
  %v2425 = vadd.f32 %v2004, %v2361
  %v2426 = vadd.f32 %v2005, %v2362
  %v2427 = vadd.f32 %v2006, %v2363
  %v2428 = vadd.f32 %v2007, %v2364
  %v2429 = vadd.f32 %v2008, %v2365
  %v2430 = vadd.f32 %v2009, %v2366
  %v2431 = vadd.f32 %v2010, %v2367
  %v2432 = vadd.f32 %v2011, %v2368
  %v2433 = vadd.f32 %v2012, %v2369
  %v2434 = vadd.f32 %v2013, %v2370
  %v2435 = vadd.f32 %v2014, %v2371
  %v2436 = vadd.f32 %v2015, %v2372
  %v2437 = vadd.f32 %v2016, %v2373
  %v2438 = vadd.f32 %v2017, %v2374
  %v2439 = vadd.f32 %v2018, %v2375
  %v2440 = vadd.f32 %v2019, %v2376
  %v2441 = vadd.f32 %v2020, %v2377
  %v2442 = vadd.f32 %v2021, %v2378
  %v2443 = vadd.f32 %v2022, %v2379
  %v2444 = vadd.f32 %v2023, %v2380
  %v2445 = vadd.f32 %v2024, %v2381
  %v2446 = vadd.f32 %v2025, %v2382
  %v2447 = vadd.f32 %v2026, %v2383
  %v2448 = vadd.f32 %v2027, %v2384
  %v2449 = vadd.f32 %v2028, %v2385
  %v2450 = vld [vmem:[%s9] sm:$0x1]
  %v2452 = vperm.slane %v2450, 0
  %v2454 = vadd.f32 %v2386, %v2452
  %v2455 = vadd.f32 %v2387, %v2452
  %v2456 = vadd.f32 %v2388, %v2452
  %v2457 = vadd.f32 %v2389, %v2452
  %v2458 = vadd.f32 %v2390, %v2452
  %v2459 = vadd.f32 %v2391, %v2452
  %v2460 = vadd.f32 %v2392, %v2452
  %v2461 = vadd.f32 %v2393, %v2452
  %v2462 = vadd.f32 %v2394, %v2452
  %v2463 = vadd.f32 %v2395, %v2452
  %v2464 = vadd.f32 %v2396, %v2452
  %v2465 = vadd.f32 %v2397, %v2452
  %v2466 = vadd.f32 %v2398, %v2452
  %v2467 = vadd.f32 %v2399, %v2452
  %v2468 = vadd.f32 %v2400, %v2452
  %v2469 = vadd.f32 %v2401, %v2452
  %v2470 = vadd.f32 %v2402, %v2452
  %v2471 = vadd.f32 %v2403, %v2452
  %v2472 = vadd.f32 %v2404, %v2452
  %v2473 = vadd.f32 %v2405, %v2452
  %v2474 = vadd.f32 %v2406, %v2452
  %v2475 = vadd.f32 %v2407, %v2452
  %v2476 = vadd.f32 %v2408, %v2452
  %v2477 = vadd.f32 %v2409, %v2452
  %v2478 = vadd.f32 %v2410, %v2452
  %v2479 = vadd.f32 %v2411, %v2452
  %v2480 = vadd.f32 %v2412, %v2452
  %v2481 = vadd.f32 %v2413, %v2452
  %v2482 = vadd.f32 %v2414, %v2452
  %v2483 = vadd.f32 %v2415, %v2452
  %v2484 = vadd.f32 %v2416, %v2452
  %v2485 = vadd.f32 %v2417, %v2452
  %v2486 = vadd.f32 %v2418, %v2452
  %v2487 = vadd.f32 %v2419, %v2452
  %v2488 = vadd.f32 %v2420, %v2452
  %v2489 = vadd.f32 %v2421, %v2452
  %v2490 = vadd.f32 %v2422, %v2452
  %v2491 = vadd.f32 %v2423, %v2452
  %v2492 = vadd.f32 %v2424, %v2452
  %v2493 = vadd.f32 %v2425, %v2452
  %v2494 = vadd.f32 %v2426, %v2452
  %v2495 = vadd.f32 %v2427, %v2452
  %v2496 = vadd.f32 %v2428, %v2452
  %v2497 = vadd.f32 %v2429, %v2452
  %v2498 = vadd.f32 %v2430, %v2452
  %v2499 = vadd.f32 %v2431, %v2452
  %v2500 = vadd.f32 %v2432, %v2452
  %v2501 = vadd.f32 %v2433, %v2452
  %v2502 = vadd.f32 %v2434, %v2452
  %v2503 = vadd.f32 %v2435, %v2452
  %v2504 = vadd.f32 %v2436, %v2452
  %v2505 = vadd.f32 %v2437, %v2452
  %v2506 = vadd.f32 %v2438, %v2452
  %v2507 = vadd.f32 %v2439, %v2452
  %v2508 = vadd.f32 %v2440, %v2452
  %v2509 = vadd.f32 %v2441, %v2452
  %v2510 = vadd.f32 %v2442, %v2452
  %v2511 = vadd.f32 %v2443, %v2452
  %v2512 = vadd.f32 %v2444, %v2452
  %v2513 = vadd.f32 %v2445, %v2452
  %v2514 = vadd.f32 %v2446, %v2452
  %v2515 = vadd.f32 %v2447, %v2452
  %v2516 = vadd.f32 %v2448, %v2452
  %v2517 = vadd.f32 %v2449, %v2452
  %2518 = vst [vmem:[%s10] sm:$0xff] %v2454
  %2519 = vst [vmem:[%s10 + $0x8] sm:$0xff] %v2455
  %2520 = vst [vmem:[%s10 + $0x10] sm:$0xff] %v2456
  %2521 = vst [vmem:[%s10 + $0x18] sm:$0xff] %v2457
  %2522 = vst [vmem:[%s10 + $0x20] sm:$0xff] %v2458
  %2523 = vst [vmem:[%s10 + $0x28] sm:$0xff] %v2459
  %2524 = vst [vmem:[%s10 + $0x30] sm:$0xff] %v2460
  %2525 = vst [vmem:[%s10 + $0x38] sm:$0xff] %v2461
  %2526 = vst [vmem:[%s10 + $0x40] sm:$0xff] %v2462
  %2527 = vst [vmem:[%s10 + $0x48] sm:$0xff] %v2463
  %2528 = vst [vmem:[%s10 + $0x50] sm:$0xff] %v2464
  %2529 = vst [vmem:[%s10 + $0x58] sm:$0xff] %v2465
  %2530 = vst [vmem:[%s10 + $0x60] sm:$0xff] %v2466
  %2531 = vst [vmem:[%s10 + $0x68] sm:$0xff] %v2467
  %2532 = vst [vmem:[%s10 + $0x70] sm:$0xff] %v2468
  %2533 = vst [vmem:[%s10 + $0x78] sm:$0xff] %v2469
  %2534 = vst [vmem:[%s10 + $0x80] sm:$0xff] %v2470
  %2535 = vst [vmem:[%s10 + $0x88] sm:$0xff] %v2471
  %2536 = vst [vmem:[%s10 + $0x90] sm:$0xff] %v2472
  %2537 = vst [vmem:[%s10 + $0x98] sm:$0xff] %v2473
  %2538 = vst [vmem:[%s10 + $0xa0] sm:$0xff] %v2474
  %2539 = vst [vmem:[%s10 + $0xa8] sm:$0xff] %v2475
  %2540 = vst [vmem:[%s10 + $0xb0] sm:$0xff] %v2476
  %2541 = vst [vmem:[%s10 + $0xb8] sm:$0xff] %v2477
  %2542 = vst [vmem:[%s10 + $0xc0] sm:$0xff] %v2478
  %2543 = vst [vmem:[%s10 + $0xc8] sm:$0xff] %v2479
  %2544 = vst [vmem:[%s10 + $0xd0] sm:$0xff] %v2480
  %2545 = vst [vmem:[%s10 + $0xd8] sm:$0xff] %v2481
  %2546 = vst [vmem:[%s10 + $0xe0] sm:$0xff] %v2482
  %2547 = vst [vmem:[%s10 + $0xe8] sm:$0xff] %v2483
  %2548 = vst [vmem:[%s10 + $0xf0] sm:$0xff] %v2484
  %2549 = vst [vmem:[%s10 + $0xf8] sm:$0xff] %v2485
  %2550 = vst [vmem:[%s10 + $0x100] sm:$0xff] %v2486
  %2551 = vst [vmem:[%s10 + $0x108] sm:$0xff] %v2487
  %2552 = vst [vmem:[%s10 + $0x110] sm:$0xff] %v2488
  %2553 = vst [vmem:[%s10 + $0x118] sm:$0xff] %v2489
  %2554 = vst [vmem:[%s10 + $0x120] sm:$0xff] %v2490
  %2555 = vst [vmem:[%s10 + $0x128] sm:$0xff] %v2491
  %2556 = vst [vmem:[%s10 + $0x130] sm:$0xff] %v2492
  %2557 = vst [vmem:[%s10 + $0x138] sm:$0xff] %v2493
  %2558 = vst [vmem:[%s10 + $0x140] sm:$0xff] %v2494
  %2559 = vst [vmem:[%s10 + $0x148] sm:$0xff] %v2495
  %2560 = vst [vmem:[%s10 + $0x150] sm:$0xff] %v2496
  %2561 = vst [vmem:[%s10 + $0x158] sm:$0xff] %v2497
  %2562 = vst [vmem:[%s10 + $0x160] sm:$0xff] %v2498
  %2563 = vst [vmem:[%s10 + $0x168] sm:$0xff] %v2499
  %2564 = vst [vmem:[%s10 + $0x170] sm:$0xff] %v2500
  %2565 = vst [vmem:[%s10 + $0x178] sm:$0xff] %v2501
  %2566 = vst [vmem:[%s10 + $0x180] sm:$0xff] %v2502
  %2567 = vst [vmem:[%s10 + $0x188] sm:$0xff] %v2503
  %2568 = vst [vmem:[%s10 + $0x190] sm:$0xff] %v2504
  %2569 = vst [vmem:[%s10 + $0x198] sm:$0xff] %v2505
  %2570 = vst [vmem:[%s10 + $0x1a0] sm:$0xff] %v2506
  %2571 = vst [vmem:[%s10 + $0x1a8] sm:$0xff] %v2507
  %2572 = vst [vmem:[%s10 + $0x1b0] sm:$0xff] %v2508
  %2573 = vst [vmem:[%s10 + $0x1b8] sm:$0xff] %v2509
  %2574 = vst [vmem:[%s10 + $0x1c0] sm:$0xff] %v2510
  %2575 = vst [vmem:[%s10 + $0x1c8] sm:$0xff] %v2511
  %2576 = vst [vmem:[%s10 + $0x1d0] sm:$0xff] %v2512
  %2577 = vst [vmem:[%s10 + $0x1d8] sm:$0xff] %v2513
  %2578 = vst [vmem:[%s10 + $0x1e0] sm:$0xff] %v2514
  %2579 = vst [vmem:[%s10 + $0x1e8] sm:$0xff] %v2515
  %2580 = vst [vmem:[%s10 + $0x1f0] sm:$0xff] %v2516
  %2581 = vst [vmem:[%s10 + $0x1f8] sm:$0xff] %v2517
  // Predicated region
  $region42: #{_lambda_.5} parent=0 // pred_check
    _
  $region43: #{_lambda_.5} parent=0 // pred_check_branch
    %2583 = sbr.rel (0) target = $region45
  $region44: #{_lambda_.5} parent=0 // pred_region
    _
  $region45: #{_lambda_.5} parent=0 // pred_fallthru
    _
  // Predicated region
  $region46: #{_lambda_.5} parent=0 // pred_check
    _
  $region47: #{_lambda_.5} parent=0 // pred_check_branch
    %2585 = sbr.rel (0) target = $region49
  $region48: #{_lambda_.5} parent=0 // pred_region
    _
  $region49: #{_lambda_.5} parent=0 // pred_fallthru
    _

// kernel: _lambda_.4
$region0: #{_lambda_.4}
  #allocation0 [shape = 'u32[]', space=smem, size = 0x4, offset = 0x4, fixed_abs, tag = 'smem constant byte address 0x4 - core index']
  #allocation1 [shape = 'u32[72,128]{1,0:T(1,128)}', space=vmem, size = 0x9000, scoped, tag = 'internal scratch']
  #allocation2 [shape = 'f32[20,20,128]{2,1,0:T(8,128)}', space=vmem, size = 0x3c000, scoped, tag = 'scratch operand']
  #allocation3 [shape = 'f32[18,18,128]{2,1,0:T(8,128)}', space=vmem, size = 0x36000, scoped, tag = 'scratch operand']
  %s0 = inlined_call_operand.vmem [shape: f32[2,16,16,128], index: 0, kind: input, shape index: {}]
  %s1 = inlined_call_operand.vmem [shape: f32[2,16,16,128], index: 1, kind: input, shape index: {}]
  %s2 = inlined_call_operand.vmem [shape: f32[25,128], index: 2, kind: input, shape index: {}]
  %s3 = inlined_call_operand.vmem [shape: f32[1,128], index: 3, kind: input, shape index: {}, may-alias: {3,6}]
  %s4 = inlined_call_operand.vmem [shape: f32[1,128], index: 4, kind: input, shape index: {}, may-alias: {4,7}]
  %s5 = inlined_call_operand.vmem [shape: f32[9,128], index: 5, kind: input, shape index: {}]
  %s6 = inlined_call_operand.vmem [shape: f32[1,128], index: 6, kind: input, shape index: {}, may-alias: {3,6}]
  %s7 = inlined_call_operand.vmem [shape: f32[1,128], index: 7, kind: input, shape index: {}, may-alias: {4,7}]
  %s8 = inlined_call_operand.vmem [shape: f32[2,16,16,128], index: 8, kind: output, shape index: {0}]
  %s9 = inlined_call_operand.vmem [shape: f32[2,16,16,128], index: 9, kind: output, shape index: {1}]
  %10 = xla_tuple %s8, %s9
  %s11 = sld [smem:[#allocation0]]
  $region73: #{_lambda_.4} parent=0
    _
  %s13 = ssub.s32 1, %s11
  %s14 = scalar_select 0, %s13, %s11
  loop: start=0, step=1, limit=4
  $region2: #{_lambda_.4} parent=0 // loop_pre_header
    _
  $region3: #{_lambda_.4} parent=0 // loop_header
    %s16 = sphi 0, %s20
    %p17 = scmp.ge.s32.totalorder %s16, 4
    %s26 = sphi 0, %s28
    %s29 = sphi 0, %s26
    %s30 = sphi 0, %s29
    %s46 = sphi 0, %s30
    %s52 = sphi 0, %s54
    %s55 = sphi 0, %s52
    %s56 = sphi 0, %s55
    %s72 = sphi 0, %s56
    %s76 = sphi 0, %s76
    %s78 = sphi 0, %s76
    %s79 = sphi 0, %s78
    %s93 = sphi 0, %s79
    %s97 = sphi 0, %s97
    %s99 = sphi 0, %s97
    %s100 = sphi 0, %s99
    %s114 = sphi 0, %s100
    %s118 = sphi 0, %s118
    %s120 = sphi 0, %s118
    %s121 = sphi 0, %s120
    %s135 = sphi 0, %s121
    %s139 = sphi 0, %s139
    %s141 = sphi 0, %s139
    %s142 = sphi 0, %s141
    %s156 = sphi 0, %s142
    %s160 = sphi 0, %s160
    %s162 = sphi 0, %s160
    %s163 = sphi 0, %s162
    %s177 = sphi 0, %s163
    %s181 = sphi 0, %s181
    %s183 = sphi 0, %s181
    %s184 = sphi 0, %s183
    %s198 = sphi 0, %s184
    %s204 = sphi 0, %s206
    %s207 = sphi 0, %s204
    %s208 = sphi 0, %s207
    %s224 = sphi 0, %s208
    %s230 = sphi 0, %s232
    %s233 = sphi 0, %s230
    %s234 = sphi 0, %s233
    %s250 = sphi 0, %s234
  $region4: #{_lambda_.4} parent=0 // loop_header_branch
    %19 = sbr.rel (%p17) target = $region8
  $region5: #{_lambda_.4} parent=0 // loop_body
    %s21 = ssub.s32 %s16, 1
    %s22 = ssub.s32 %s16, 2
    %s23 = sadd.s32 %s16, 1
    %s24 = ssub.s32 %s16, %s23
    %p25 = scmp.eq.s32.totalorder %s24, 0
    %s27 = sadd.s32 %s26, 1
    %s28 = scalar_select %p25, %s26, %s27
    %p31 = pneg %p25
    %p32 = scmp.eq.s32.totalorder %s16, 1
    %p33 = por %p31, %p32
    %p34 = scmp.ne.s32.totalorder %s26, %s29
    %p35 = scmp.eq.s32.totalorder %s16, 0
    %p36 = por %p34, %p35
    %p37 = scmp.ne.s32.totalorder %s26, %s29
    %p38 = scmp.eq.s32.totalorder %s21, 1
    %p39 = por %p37, %p38
    %p40 = scmp.ne.s32.totalorder %s29, %s30
    %p41 = scmp.eq.s32.totalorder %s21, 0
    %p42 = por %p40, %p41
    %p43 = scmp.ne.s32.totalorder %s29, %s30
    %p44 = scmp.eq.s32.totalorder %s22, 1
    %p45 = por %p43, %p44
    %p47 = scmp.ne.s32.totalorder %s30, %s46
    %p48 = scmp.eq.s32.totalorder %s22, 0
    %p49 = por %p47, %p48
    %s50 = ssub.s32 %s16, %s23
    %p51 = scmp.eq.s32.totalorder %s50, 0
    %s53 = sadd.s32 %s52, 1
    %s54 = scalar_select %p51, %s52, %s53
    %p57 = pneg %p51
    %p58 = scmp.eq.s32.totalorder %s16, 1
    %p59 = por %p57, %p58
    %p60 = scmp.ne.s32.totalorder %s52, %s55
    %p61 = scmp.eq.s32.totalorder %s16, 0
    %p62 = por %p60, %p61
    %p63 = scmp.ne.s32.totalorder %s52, %s55
    %p64 = scmp.eq.s32.totalorder %s21, 1
    %p65 = por %p63, %p64
    %p66 = scmp.ne.s32.totalorder %s55, %s56
    %p67 = scmp.eq.s32.totalorder %s21, 0
    %p68 = por %p66, %p67
    %p69 = scmp.ne.s32.totalorder %s55, %s56
    %p70 = scmp.eq.s32.totalorder %s22, 1
    %p71 = por %p69, %p70
    %p73 = scmp.ne.s32.totalorder %s56, %s72
    %p74 = scmp.eq.s32.totalorder %s22, 0
    %p75 = por %p73, %p74
    %s77 = sadd.s32 %s76, 1
    %p80 = scmp.eq.s32.totalorder %s16, 1
    %p81 = scmp.ne.s32.totalorder %s76, %s78
    %p82 = scmp.eq.s32.totalorder %s16, 0
    %p83 = por %p81, %p82
    %p84 = scmp.ne.s32.totalorder %s76, %s78
    %p85 = scmp.eq.s32.totalorder %s21, 1
    %p86 = por %p84, %p85
    %p87 = scmp.ne.s32.totalorder %s78, %s79
    %p88 = scmp.eq.s32.totalorder %s21, 0
    %p89 = por %p87, %p88
    %p90 = scmp.ne.s32.totalorder %s78, %s79
    %p91 = scmp.eq.s32.totalorder %s22, 1
    %p92 = por %p90, %p91
    %p94 = scmp.ne.s32.totalorder %s79, %s93
    %p95 = scmp.eq.s32.totalorder %s22, 0
    %p96 = por %p94, %p95
    %s98 = sadd.s32 %s97, 1
    %p101 = scmp.eq.s32.totalorder %s16, 1
    %p102 = scmp.ne.s32.totalorder %s97, %s99
    %p103 = scmp.eq.s32.totalorder %s16, 0
    %p104 = por %p102, %p103
    %p105 = scmp.ne.s32.totalorder %s97, %s99
    %p106 = scmp.eq.s32.totalorder %s21, 1
    %p107 = por %p105, %p106
    %p108 = scmp.ne.s32.totalorder %s99, %s100
    %p109 = scmp.eq.s32.totalorder %s21, 0
    %p110 = por %p108, %p109
    %p111 = scmp.ne.s32.totalorder %s99, %s100
    %p112 = scmp.eq.s32.totalorder %s22, 1
    %p113 = por %p111, %p112
    %p115 = scmp.ne.s32.totalorder %s100, %s114
    %p116 = scmp.eq.s32.totalorder %s22, 0
    %p117 = por %p115, %p116
    %s119 = sadd.s32 %s118, 1
    %p122 = scmp.eq.s32.totalorder %s16, 1
    %p123 = scmp.ne.s32.totalorder %s118, %s120
    %p124 = scmp.eq.s32.totalorder %s16, 0
    %p125 = por %p123, %p124
    %p126 = scmp.ne.s32.totalorder %s118, %s120
    %p127 = scmp.eq.s32.totalorder %s21, 1
    %p128 = por %p126, %p127
    %p129 = scmp.ne.s32.totalorder %s120, %s121
    %p130 = scmp.eq.s32.totalorder %s21, 0
    %p131 = por %p129, %p130
    %p132 = scmp.ne.s32.totalorder %s120, %s121
    %p133 = scmp.eq.s32.totalorder %s22, 1
    %p134 = por %p132, %p133
    %p136 = scmp.ne.s32.totalorder %s121, %s135
    %p137 = scmp.eq.s32.totalorder %s22, 0
    %p138 = por %p136, %p137
    %s140 = sadd.s32 %s139, 1
    %p143 = scmp.eq.s32.totalorder %s16, 1
    %p144 = scmp.ne.s32.totalorder %s139, %s141
    %p145 = scmp.eq.s32.totalorder %s16, 0
    %p146 = por %p144, %p145
    %p147 = scmp.ne.s32.totalorder %s139, %s141
    %p148 = scmp.eq.s32.totalorder %s21, 1
    %p149 = por %p147, %p148
    %p150 = scmp.ne.s32.totalorder %s141, %s142
    %p151 = scmp.eq.s32.totalorder %s21, 0
    %p152 = por %p150, %p151
    %p153 = scmp.ne.s32.totalorder %s141, %s142
    %p154 = scmp.eq.s32.totalorder %s22, 1
    %p155 = por %p153, %p154
    %p157 = scmp.ne.s32.totalorder %s142, %s156
    %p158 = scmp.eq.s32.totalorder %s22, 0
    %p159 = por %p157, %p158
    %s161 = sadd.s32 %s160, 1
    %p164 = scmp.eq.s32.totalorder %s16, 1
    %p165 = scmp.ne.s32.totalorder %s160, %s162
    %p166 = scmp.eq.s32.totalorder %s16, 0
    %p167 = por %p165, %p166
    %p168 = scmp.ne.s32.totalorder %s160, %s162
    %p169 = scmp.eq.s32.totalorder %s21, 1
    %p170 = por %p168, %p169
    %p171 = scmp.ne.s32.totalorder %s162, %s163
    %p172 = scmp.eq.s32.totalorder %s21, 0
    %p173 = por %p171, %p172
    %p174 = scmp.ne.s32.totalorder %s162, %s163
    %p175 = scmp.eq.s32.totalorder %s22, 1
    %p176 = por %p174, %p175
    %p178 = scmp.ne.s32.totalorder %s163, %s177
    %p179 = scmp.eq.s32.totalorder %s22, 0
    %p180 = por %p178, %p179
    %s182 = sadd.s32 %s181, 1
    %p185 = scmp.eq.s32.totalorder %s16, 1
    %p186 = scmp.ne.s32.totalorder %s181, %s183
    %p187 = scmp.eq.s32.totalorder %s16, 0
    %p188 = por %p186, %p187
    %p189 = scmp.ne.s32.totalorder %s181, %s183
    %p190 = scmp.eq.s32.totalorder %s21, 1
    %p191 = por %p189, %p190
    %p192 = scmp.ne.s32.totalorder %s183, %s184
    %p193 = scmp.eq.s32.totalorder %s21, 0
    %p194 = por %p192, %p193
    %p195 = scmp.ne.s32.totalorder %s183, %s184
    %p196 = scmp.eq.s32.totalorder %s22, 1
    %p197 = por %p195, %p196
    %p199 = scmp.ne.s32.totalorder %s184, %s198
    %p200 = scmp.eq.s32.totalorder %s22, 0
    %p201 = por %p199, %p200
    %s202 = ssub.s32 %s16, %s23
    %p203 = scmp.eq.s32.totalorder %s202, 0
    %s205 = sadd.s32 %s204, 1
    %s206 = scalar_select %p203, %s204, %s205
    %p209 = pneg %p203
    %p210 = scmp.eq.s32.totalorder %s16, 1
    %p211 = por %p209, %p210
    %p212 = scmp.ne.s32.totalorder %s204, %s207
    %p213 = scmp.eq.s32.totalorder %s16, 0
    %p214 = por %p212, %p213
    %p215 = scmp.ne.s32.totalorder %s204, %s207
    %p216 = scmp.eq.s32.totalorder %s21, 1
    %p217 = por %p215, %p216
    %p218 = scmp.ne.s32.totalorder %s207, %s208
    %p219 = scmp.eq.s32.totalorder %s21, 0
    %p220 = por %p218, %p219
    %p221 = scmp.ne.s32.totalorder %s207, %s208
    %p222 = scmp.eq.s32.totalorder %s22, 1
    %p223 = por %p221, %p222
    %p225 = scmp.ne.s32.totalorder %s208, %s224
    %p226 = scmp.eq.s32.totalorder %s22, 0
    %p227 = por %p225, %p226
    %s228 = ssub.s32 %s16, %s23
    %p229 = scmp.eq.s32.totalorder %s228, 0
    %s231 = sadd.s32 %s230, 1
    %s232 = scalar_select %p229, %s230, %s231
    %p235 = pneg %p229
    %p236 = scmp.eq.s32.totalorder %s16, 1
    %p237 = por %p235, %p236
    %p238 = scmp.ne.s32.totalorder %s230, %s233
    %p239 = scmp.eq.s32.totalorder %s16, 0
    %p240 = por %p238, %p239
    %p241 = scmp.ne.s32.totalorder %s230, %s233
    %p242 = scmp.eq.s32.totalorder %s21, 1
    %p243 = por %p241, %p242
    %p244 = scmp.ne.s32.totalorder %s233, %s234
    %p245 = scmp.eq.s32.totalorder %s21, 0
    %p246 = por %p244, %p245
    %p247 = scmp.ne.s32.totalorder %s233, %s234
    %p248 = scmp.eq.s32.totalorder %s22, 1
    %p249 = por %p247, %p248
    %p251 = scmp.ne.s32.totalorder %s234, %s250
    %p252 = scmp.eq.s32.totalorder %s22, 0
    %p253 = por %p251, %p252
    %p254 = scmp.le.s32.totalorder 1, %s16
    %p255 = scmp.lt.s32.totalorder %s16, 3
    %p256 = pnand %p254, %p255
    %p257 = pneg %p256
    // Predicated region
    $region9: #{_lambda_.4} parent=5 // pred_check
      _
    $region10: #{_lambda_.4} parent=5 // pred_check_branch
      %259 = sbr.rel (%p256) target = $region12
    $region11: #{_lambda_.4} parent=5 // pred_region
      %s260 = ssub.s32 %s16, 1
      // Predicated region
      $region13: #{_lambda_.4} parent=11 // pred_check
        %p261 = pneg %p89
      $region14: #{_lambda_.4} parent=11 // pred_check_branch
        %263 = sbr.rel (%p261) target = $region16
      $region15: #{_lambda_.4} parent=11 // pred_region
        _
      $region16: #{_lambda_.4} parent=11 // pred_fallthru
        _
      // Predicated region
      $region17: #{_lambda_.4} parent=11 // pred_check
        %p264 = pneg %p110
      $region18: #{_lambda_.4} parent=11 // pred_check_branch
        %266 = sbr.rel (%p264) target = $region20
      $region19: #{_lambda_.4} parent=11 // pred_region
        _
      $region20: #{_lambda_.4} parent=11 // pred_fallthru
        _
      // Predicated region
      $region21: #{_lambda_.4} parent=11 // pred_check
        %p267 = pneg %p131
      $region22: #{_lambda_.4} parent=11 // pred_check_branch
        %269 = sbr.rel (%p267) target = $region24
      $region23: #{_lambda_.4} parent=11 // pred_region
        _
      $region24: #{_lambda_.4} parent=11 // pred_fallthru
        _
      // Predicated region
      $region25: #{_lambda_.4} parent=11 // pred_check
        %p270 = pneg %p152
      $region26: #{_lambda_.4} parent=11 // pred_check_branch
        %272 = sbr.rel (%p270) target = $region28
      $region27: #{_lambda_.4} parent=11 // pred_region
        _
      $region28: #{_lambda_.4} parent=11 // pred_fallthru
        _
      // Predicated region
      $region29: #{_lambda_.4} parent=11 // pred_check
        %p273 = pneg %p173
      $region30: #{_lambda_.4} parent=11 // pred_check_branch
        %275 = sbr.rel (%p273) target = $region32
      $region31: #{_lambda_.4} parent=11 // pred_region
        _
      $region32: #{_lambda_.4} parent=11 // pred_fallthru
        _
      // Predicated region
      $region33: #{_lambda_.4} parent=11 // pred_check
        %p276 = pneg %p194
      $region34: #{_lambda_.4} parent=11 // pred_check_branch
        %278 = sbr.rel (%p276) target = $region36
      $region35: #{_lambda_.4} parent=11 // pred_region
        _
      $region36: #{_lambda_.4} parent=11 // pred_fallthru
        _
    $region12: #{_lambda_.4} parent=5 // pred_fallthru
      _
    %p279 = scmp.lt.s32.totalorder %s16, 2
    // Predicated region
    $region37: #{_lambda_.4} parent=5 // pred_check
      %p280 = pneg %p279
    $region38: #{_lambda_.4} parent=5 // pred_check_branch
      %282 = sbr.rel (%p280) target = $region40
    $region39: #{_lambda_.4} parent=5 // pred_region
      // Predicated region
      $region41: #{_lambda_.4} parent=39 // pred_check
        %p283 = pneg %p36
      $region42: #{_lambda_.4} parent=39 // pred_check_branch
        %285 = sbr.rel (%p283) target = $region44
      $region43: #{_lambda_.4} parent=39 // pred_region
        %p286 = scmp.lt.s32.totalorder %s16, 1
        %s287 = scalar_select %p286, %s16, 1
        %s288 = smul.addr %s287, 32
        %s289 = smul.addr %s288, 8
        %s290 = scalar_lea.vmem %s0, %s289
      $region44: #{_lambda_.4} parent=39 // pred_fallthru
        _
      // Predicated region
      $region45: #{_lambda_.4} parent=39 // pred_check
        %p291 = pneg %p62
      $region46: #{_lambda_.4} parent=39 // pred_check_branch
        %293 = sbr.rel (%p291) target = $region48
      $region47: #{_lambda_.4} parent=39 // pred_region
        %p294 = scmp.lt.s32.totalorder %s16, 1
        %s295 = scalar_select %p294, %s16, 1
        %s296 = smul.addr %s295, 32
        %s297 = smul.addr %s296, 8
        %s298 = scalar_lea.vmem %s1, %s297
      $region48: #{_lambda_.4} parent=39 // pred_fallthru
        _
    $region40: #{_lambda_.4} parent=5 // pred_fallthru
      _
    %p299 = scmp.le.s32.totalorder 1, %s16
    %p300 = scmp.lt.s32.totalorder %s16, 3
    %p301 = pnand %p299, %p300
    %p302 = pneg %p301
    // Predicated region
    $region49: #{_lambda_.4} parent=5 // pred_check
      _
    $region50: #{_lambda_.4} parent=5 // pred_check_branch
      %304 = sbr.rel (%p301) target = $region52
    $region51: #{_lambda_.4} parent=5 // pred_region
      %s305 = ssub.s32 %s16, 1
      %p306 = scmp.lt.s32.totalorder %s21, 1
      %s307 = scalar_select %p306, %s21, 1
      %s308 = smul.addr %s307, 32
      %s309 = smul.addr %s308, 8
      %s310 = scalar_lea.vmem %s0, %s309
      %p311 = pneg %p42
      %p312 = pneg %p39
      %p313 = scmp.lt.s32.totalorder %s21, 1
      %s314 = scalar_select %p313, %s21, 1
      %s315 = smul.addr %s314, 32
      %s316 = smul.addr %s315, 8
      %s317 = scalar_lea.vmem %s1, %s316
      %p318 = pneg %p68
      %p319 = pneg %p65
      %p320 = pneg %p89
      %p321 = pneg %p86
      %p322 = pneg %p110
      %p323 = pneg %p107
      %p324 = pneg %p131
      %p325 = pneg %p128
      %p326 = pneg %p152
      %p327 = pneg %p149
      %p328 = pneg %p173
      %p329 = pneg %p170
      %p330 = pneg %p194
      %p331 = pneg %p191
      %p332 = pneg %p220
      %p333 = pneg %p217
      %p334 = scmp.lt.s32.totalorder %s21, 1
      %s335 = scalar_select %p334, %s21, 1
      %s336 = smul.addr %s335, 32
      %s337 = smul.addr %s336, 8
      %s338 = scalar_lea.vmem %s8, %s337
      %p339 = pneg %p246
      %p340 = pneg %p243
      %p341 = scmp.lt.s32.totalorder %s21, 1
      %s342 = scalar_select %p341, %s21, 1
      %s343 = smul.addr %s342, 32
      %s344 = smul.addr %s343, 8
      %s345 = scalar_lea.vmem %s9, %s344
      %p346 = scmp.lt.s32.totalorder %s21, 1
      %s347 = scalar_select %p346, %s21, 1
      %s348 = smul.addr %s347, 32
      %s349 = smul.addr %s348, 8
      %s350 = scalar_lea.vmem %s0, %s349
      %p351 = scmp.lt.s32.totalorder %s21, 1
      %s352 = scalar_select %p351, %s21, 1
      %s353 = smul.addr %s352, 32
      %s354 = smul.addr %s353, 8
      %s355 = scalar_lea.vmem %s1, %s354
      %p356 = scmp.lt.s32.totalorder %s21, 1
      %s357 = scalar_select %p356, %s21, 1
      %s358 = smul.addr %s357, 32
      %s359 = smul.addr %s358, 8
      %s360 = scalar_lea.vmem %s8, %s359
      %p361 = scmp.lt.s32.totalorder %s21, 1
      %s362 = scalar_select %p361, %s21, 1
      %s363 = smul.addr %s362, 32
      %s364 = smul.addr %s363, 8
      %s365 = scalar_lea.vmem %s9, %s364
      %366 = vst [vmem:[#allocation2] sm:$0xff] 0.0
      %367 = vst [vmem:[#allocation2 + $0x8] sm:$0xff] 0.0
      %368 = vst [vmem:[#allocation2 + $0x10] sm:$0xf] 0.0
      %369 = vst [vmem:[#allocation2 + $0x18] sm:$0xff] 0.0
      %370 = vst [vmem:[#allocation2 + $0x20] sm:$0xff] 0.0
      %371 = vst [vmem:[#allocation2 + $0x28] sm:$0xf] 0.0
      %s372 = scalar_lea.vmem [#allocation2], 432
      %373 = vst [vmem:[%s372] sm:$0xff] 0.0
      %374 = vst [vmem:[%s372 + $0x8] sm:$0xff] 0.0
      %375 = vst [vmem:[%s372 + $0x10] sm:$0xf] 0.0
      %376 = vst [vmem:[%s372 + $0x18] sm:$0xff] 0.0
      %377 = vst [vmem:[%s372 + $0x20] sm:$0xff] 0.0
      %378 = vst [vmem:[%s372 + $0x28] sm:$0xf] 0.0
      %s379 = scalar_lea.vmem [#allocation2], 48
      %380 = vst [vmem:[%s379] sm:$0x3] 0.0
      %381 = vst [vmem:[%s379 + $0x18] sm:$0x3] 0.0
      %382 = vst [vmem:[%s379 + $0x30] sm:$0x3] 0.0
      %383 = vst [vmem:[%s379 + $0x48] sm:$0x3] 0.0
      %384 = vst [vmem:[%s379 + $0x60] sm:$0x3] 0.0
      %385 = vst [vmem:[%s379 + $0x78] sm:$0x3] 0.0
      %386 = vst [vmem:[%s379 + $0x90] sm:$0x3] 0.0
      %387 = vst [vmem:[%s379 + $0xa8] sm:$0x3] 0.0
      %388 = vst [vmem:[%s379 + $0xc0] sm:$0x3] 0.0
      %389 = vst [vmem:[%s379 + $0xd8] sm:$0x3] 0.0
      %390 = vst [vmem:[%s379 + $0xf0] sm:$0x3] 0.0
      %391 = vst [vmem:[%s379 + $0x108] sm:$0x3] 0.0
      %392 = vst [vmem:[%s379 + $0x120] sm:$0x3] 0.0
      %393 = vst [vmem:[%s379 + $0x138] sm:$0x3] 0.0
      %394 = vst [vmem:[%s379 + $0x150] sm:$0x3] 0.0
      %395 = vst [vmem:[%s379 + $0x168] sm:$0x3] 0.0
      %396 = vst [vmem:[%s379 + $0x12] sm:$0x3] 0.0
      %397 = vst [vmem:[%s379 + $0x2a] sm:$0x3] 0.0
      %398 = vst [vmem:[%s379 + $0x42] sm:$0x3] 0.0
      %399 = vst [vmem:[%s379 + $0x5a] sm:$0x3] 0.0
      %400 = vst [vmem:[%s379 + $0x72] sm:$0x3] 0.0
      %401 = vst [vmem:[%s379 + $0x8a] sm:$0x3] 0.0
      %402 = vst [vmem:[%s379 + $0xa2] sm:$0x3] 0.0
      %403 = vst [vmem:[%s379 + $0xba] sm:$0x3] 0.0
      %404 = vst [vmem:[%s379 + $0xd2] sm:$0x3] 0.0
      %405 = vst [vmem:[%s379 + $0xea] sm:$0x3] 0.0
      %406 = vst [vmem:[%s379 + $0x102] sm:$0x3] 0.0
      %407 = vst [vmem:[%s379 + $0x11a] sm:$0x3] 0.0
      %408 = vst [vmem:[%s379 + $0x132] sm:$0x3] 0.0
      %409 = vst [vmem:[%s379 + $0x14a] sm:$0x3] 0.0
      %410 = vst [vmem:[%s379 + $0x162] sm:$0x3] 0.0
      %411 = vst [vmem:[%s379 + $0x17a] sm:$0x3] 0.0
      %v412 = vld [vmem:[%s350] sm:$0xff]
      %v413 = vld [vmem:[%s350 + $0x8] sm:$0xff]
      %v414 = vld [vmem:[%s350 + $0x10] sm:$0xff]
      %v415 = vld [vmem:[%s350 + $0x18] sm:$0xff]
      %v416 = vld [vmem:[%s350 + $0x20] sm:$0xff]
      %v417 = vld [vmem:[%s350 + $0x28] sm:$0xff]
      %v418 = vld [vmem:[%s350 + $0x30] sm:$0xff]
      %v419 = vld [vmem:[%s350 + $0x38] sm:$0xff]
      %v420 = vld [vmem:[%s350 + $0x40] sm:$0xff]
      %v421 = vld [vmem:[%s350 + $0x48] sm:$0xff]
      %v422 = vld [vmem:[%s350 + $0x50] sm:$0xff]
      %v423 = vld [vmem:[%s350 + $0x58] sm:$0xff]
      %v424 = vld [vmem:[%s350 + $0x60] sm:$0xff]
      %v425 = vld [vmem:[%s350 + $0x68] sm:$0xff]
      %v426 = vld [vmem:[%s350 + $0x70] sm:$0xff]
      %v427 = vld [vmem:[%s350 + $0x78] sm:$0xff]
      %v428 = vld [vmem:[%s350 + $0x80] sm:$0xff]
      %v429 = vld [vmem:[%s350 + $0x88] sm:$0xff]
      %v430 = vld [vmem:[%s350 + $0x90] sm:$0xff]
      %v431 = vld [vmem:[%s350 + $0x98] sm:$0xff]
      %v432 = vld [vmem:[%s350 + $0xa0] sm:$0xff]
      %v433 = vld [vmem:[%s350 + $0xa8] sm:$0xff]
      %v434 = vld [vmem:[%s350 + $0xb0] sm:$0xff]
      %v435 = vld [vmem:[%s350 + $0xb8] sm:$0xff]
      %v436 = vld [vmem:[%s350 + $0xc0] sm:$0xff]
      %v437 = vld [vmem:[%s350 + $0xc8] sm:$0xff]
      %v438 = vld [vmem:[%s350 + $0xd0] sm:$0xff]
      %v439 = vld [vmem:[%s350 + $0xd8] sm:$0xff]
      %v440 = vld [vmem:[%s350 + $0xe0] sm:$0xff]
      %v441 = vld [vmem:[%s350 + $0xe8] sm:$0xff]
      %v442 = vld [vmem:[%s350 + $0xf0] sm:$0xff]
      %v443 = vld [vmem:[%s350 + $0xf8] sm:$0xff]
      %444 = vst [vmem:[%s379 + $0x2] sm:$0xff] %v412
      %445 = vst [vmem:[%s379 + $0xa] sm:$0xff] %v413
      %446 = vst [vmem:[%s379 + $0x1a] sm:$0xff] %v414
      %447 = vst [vmem:[%s379 + $0x22] sm:$0xff] %v415
      %448 = vst [vmem:[%s379 + $0x32] sm:$0xff] %v416
      %449 = vst [vmem:[%s379 + $0x3a] sm:$0xff] %v417
      %450 = vst [vmem:[%s379 + $0x4a] sm:$0xff] %v418
      %451 = vst [vmem:[%s379 + $0x52] sm:$0xff] %v419
      %452 = vst [vmem:[%s379 + $0x62] sm:$0xff] %v420
      %453 = vst [vmem:[%s379 + $0x6a] sm:$0xff] %v421
      %454 = vst [vmem:[%s379 + $0x7a] sm:$0xff] %v422
      %455 = vst [vmem:[%s379 + $0x82] sm:$0xff] %v423
      %456 = vst [vmem:[%s379 + $0x92] sm:$0xff] %v424
      %457 = vst [vmem:[%s379 + $0x9a] sm:$0xff] %v425
      %458 = vst [vmem:[%s379 + $0xaa] sm:$0xff] %v426
      %459 = vst [vmem:[%s379 + $0xb2] sm:$0xff] %v427
      %460 = vst [vmem:[%s379 + $0xc2] sm:$0xff] %v428
      %461 = vst [vmem:[%s379 + $0xca] sm:$0xff] %v429
      %462 = vst [vmem:[%s379 + $0xda] sm:$0xff] %v430
      %463 = vst [vmem:[%s379 + $0xe2] sm:$0xff] %v431
      %464 = vst [vmem:[%s379 + $0xf2] sm:$0xff] %v432
      %465 = vst [vmem:[%s379 + $0xfa] sm:$0xff] %v433
      %466 = vst [vmem:[%s379 + $0x10a] sm:$0xff] %v434
      %467 = vst [vmem:[%s379 + $0x112] sm:$0xff] %v435
      %468 = vst [vmem:[%s379 + $0x122] sm:$0xff] %v436
      %469 = vst [vmem:[%s379 + $0x12a] sm:$0xff] %v437
      %470 = vst [vmem:[%s379 + $0x13a] sm:$0xff] %v438
      %471 = vst [vmem:[%s379 + $0x142] sm:$0xff] %v439
      %472 = vst [vmem:[%s379 + $0x152] sm:$0xff] %v440
      %473 = vst [vmem:[%s379 + $0x15a] sm:$0xff] %v441
      %474 = vst [vmem:[%s379 + $0x16a] sm:$0xff] %v442
      %475 = vst [vmem:[%s379 + $0x172] sm:$0xff] %v443
      %v476 = vld [vmem:[%s2] sm:$0xff]
      %v477 = vld [vmem:[%s2 + $0x8] sm:$0xff]
      %v478 = vld [vmem:[%s2 + $0x10] sm:$0xff]
      %v479 = vld [vmem:[%s2 + $0x18] sm:$0x1]
      %v480 = vld [vmem:[%s3] sm:$0x1]
      %v481 = vld [vmem:[%s4] sm:$0x1]
      %v482 = vld [vmem:[#allocation2] sm:$0xff]
      %v483 = vld [vmem:[#allocation2 + $0x8] sm:$0xff]
      %v484 = vld [vmem:[#allocation2 + $0x18] sm:$0xff]
      %v485 = vld [vmem:[#allocation2 + $0x20] sm:$0xff]
      %v486 = vld [vmem:[#allocation2 + $0x30] sm:$0xff]
      %v487 = vld [vmem:[#allocation2 + $0x38] sm:$0xff]
      %v488 = vld [vmem:[#allocation2 + $0x48] sm:$0xff]
      %v489 = vld [vmem:[#allocation2 + $0x50] sm:$0xff]
      %v490 = vld [vmem:[#allocation2 + $0x60] sm:$0xff]
      %v491 = vld [vmem:[#allocation2 + $0x68] sm:$0xff]
      %v492 = vld [vmem:[#allocation2 + $0x78] sm:$0xff]
      %v493 = vld [vmem:[#allocation2 + $0x80] sm:$0xff]
      %v494 = vld [vmem:[#allocation2 + $0x90] sm:$0xff]
      %v495 = vld [vmem:[#allocation2 + $0x98] sm:$0xff]
      %v496 = vld [vmem:[#allocation2 + $0xa8] sm:$0xff]
      %v497 = vld [vmem:[#allocation2 + $0xb0] sm:$0xff]
      %v498 = vld [vmem:[#allocation2 + $0xc0] sm:$0xff]
      %v499 = vld [vmem:[#allocation2 + $0xc8] sm:$0xff]
      %v500 = vld [vmem:[#allocation2 + $0xd8] sm:$0xff]
      %v501 = vld [vmem:[#allocation2 + $0xe0] sm:$0xff]
      %v502 = vld [vmem:[#allocation2 + $0xf0] sm:$0xff]
      %v503 = vld [vmem:[#allocation2 + $0xf8] sm:$0xff]
      %v504 = vld [vmem:[#allocation2 + $0x108] sm:$0xff]
      %v505 = vld [vmem:[#allocation2 + $0x110] sm:$0xff]
      %v506 = vperm.slane %v476, 0
      %v507 = vmul.f32 %v482, %v506
      %v508 = vmul.f32 %v483, %v506
      %v509 = vmul.f32 %v484, %v506
      %v510 = vmul.f32 %v485, %v506
      %v511 = vmul.f32 %v486, %v506
      %v512 = vmul.f32 %v487, %v506
      %v513 = vmul.f32 %v488, %v506
      %v514 = vmul.f32 %v489, %v506
      %v515 = vmul.f32 %v490, %v506
      %v516 = vmul.f32 %v491, %v506
      %v517 = vmul.f32 %v492, %v506
      %v518 = vmul.f32 %v493, %v506
      %v519 = vmul.f32 %v494, %v506
      %v520 = vmul.f32 %v495, %v506
      %v521 = vmul.f32 %v496, %v506
      %v522 = vmul.f32 %v497, %v506
      %v523 = vadd.f32 %v507, 0.0
      %v524 = vadd.f32 %v508, 0.0
      %v525 = vadd.f32 %v509, 0.0
      %v526 = vadd.f32 %v510, 0.0
      %v527 = vadd.f32 %v511, 0.0
      %v528 = vadd.f32 %v512, 0.0
      %v529 = vadd.f32 %v513, 0.0
      %v530 = vadd.f32 %v514, 0.0
      %v531 = vadd.f32 %v515, 0.0
      %v532 = vadd.f32 %v516, 0.0
      %v533 = vadd.f32 %v517, 0.0
      %v534 = vadd.f32 %v518, 0.0
      %v535 = vadd.f32 %v519, 0.0
      %v536 = vadd.f32 %v520, 0.0
      %v537 = vadd.f32 %v521, 0.0
      %v538 = vadd.f32 %v522, 0.0
      %v539 = vperm.slane %v476, 5
      %v540 = vmul.f32 %v484, %v539
      %v541 = vmul.f32 %v485, %v539
      %v542 = vmul.f32 %v486, %v539
      %v543 = vmul.f32 %v487, %v539
      %v544 = vmul.f32 %v488, %v539
      %v545 = vmul.f32 %v489, %v539
      %v546 = vmul.f32 %v490, %v539
      %v547 = vmul.f32 %v491, %v539
      %v548 = vmul.f32 %v492, %v539
      %v549 = vmul.f32 %v493, %v539
      %v550 = vmul.f32 %v494, %v539
      %v551 = vmul.f32 %v495, %v539
      %v552 = vmul.f32 %v496, %v539
      %v553 = vmul.f32 %v497, %v539
      %v554 = vmul.f32 %v498, %v539
      %v555 = vmul.f32 %v499, %v539
      %v556 = vadd.f32 %v523, %v540
      %v557 = vadd.f32 %v524, %v541
      %v558 = vadd.f32 %v525, %v542
      %v559 = vadd.f32 %v526, %v543
      %v560 = vadd.f32 %v527, %v544
      %v561 = vadd.f32 %v528, %v545
      %v562 = vadd.f32 %v529, %v546
      %v563 = vadd.f32 %v530, %v547
      %v564 = vadd.f32 %v531, %v548
      %v565 = vadd.f32 %v532, %v549
      %v566 = vadd.f32 %v533, %v550
      %v567 = vadd.f32 %v534, %v551
      %v568 = vadd.f32 %v535, %v552
      %v569 = vadd.f32 %v536, %v553
      %v570 = vadd.f32 %v537, %v554
      %v571 = vadd.f32 %v538, %v555
      %v572 = vperm.slane %v477, 2
      %v573 = vmul.f32 %v486, %v572
      %v574 = vmul.f32 %v487, %v572
      %v575 = vmul.f32 %v488, %v572
      %v576 = vmul.f32 %v489, %v572
      %v577 = vmul.f32 %v490, %v572
      %v578 = vmul.f32 %v491, %v572
      %v579 = vmul.f32 %v492, %v572
      %v580 = vmul.f32 %v493, %v572
      %v581 = vmul.f32 %v494, %v572
      %v582 = vmul.f32 %v495, %v572
      %v583 = vmul.f32 %v496, %v572
      %v584 = vmul.f32 %v497, %v572
      %v585 = vmul.f32 %v498, %v572
      %v586 = vmul.f32 %v499, %v572
      %v587 = vmul.f32 %v500, %v572
      %v588 = vmul.f32 %v501, %v572
      %v589 = vadd.f32 %v556, %v573
      %v590 = vadd.f32 %v557, %v574
      %v591 = vadd.f32 %v558, %v575
      %v592 = vadd.f32 %v559, %v576
      %v593 = vadd.f32 %v560, %v577
      %v594 = vadd.f32 %v561, %v578
      %v595 = vadd.f32 %v562, %v579
      %v596 = vadd.f32 %v563, %v580
      %v597 = vadd.f32 %v564, %v581
      %v598 = vadd.f32 %v565, %v582
      %v599 = vadd.f32 %v566, %v583
      %v600 = vadd.f32 %v567, %v584
      %v601 = vadd.f32 %v568, %v585
      %v602 = vadd.f32 %v569, %v586
      %v603 = vadd.f32 %v570, %v587
      %v604 = vadd.f32 %v571, %v588
      %v605 = vperm.slane %v477, 7
      %v606 = vmul.f32 %v488, %v605
      %v607 = vmul.f32 %v489, %v605
      %v608 = vmul.f32 %v490, %v605
      %v609 = vmul.f32 %v491, %v605
      %v610 = vmul.f32 %v492, %v605
      %v611 = vmul.f32 %v493, %v605
      %v612 = vmul.f32 %v494, %v605
      %v613 = vmul.f32 %v495, %v605
      %v614 = vmul.f32 %v496, %v605
      %v615 = vmul.f32 %v497, %v605
      %v616 = vmul.f32 %v498, %v605
      %v617 = vmul.f32 %v499, %v605
      %v618 = vmul.f32 %v500, %v605
      %v619 = vmul.f32 %v501, %v605
      %v620 = vmul.f32 %v502, %v605
      %v621 = vmul.f32 %v503, %v605
      %v622 = vadd.f32 %v589, %v606
      %v623 = vadd.f32 %v590, %v607
      %v624 = vadd.f32 %v591, %v608
      %v625 = vadd.f32 %v592, %v609
      %v626 = vadd.f32 %v593, %v610
      %v627 = vadd.f32 %v594, %v611
      %v628 = vadd.f32 %v595, %v612
      %v629 = vadd.f32 %v596, %v613
      %v630 = vadd.f32 %v597, %v614
      %v631 = vadd.f32 %v598, %v615
      %v632 = vadd.f32 %v599, %v616
      %v633 = vadd.f32 %v600, %v617
      %v634 = vadd.f32 %v601, %v618
      %v635 = vadd.f32 %v602, %v619
      %v636 = vadd.f32 %v603, %v620
      %v637 = vadd.f32 %v604, %v621
      %v638 = vperm.slane %v478, 4
      %v639 = vmul.f32 %v490, %v638
      %v640 = vmul.f32 %v491, %v638
      %v641 = vmul.f32 %v492, %v638
      %v642 = vmul.f32 %v493, %v638
      %v643 = vmul.f32 %v494, %v638
      %v644 = vmul.f32 %v495, %v638
      %v645 = vmul.f32 %v496, %v638
      %v646 = vmul.f32 %v497, %v638
      %v647 = vmul.f32 %v498, %v638
      %v648 = vmul.f32 %v499, %v638
      %v649 = vmul.f32 %v500, %v638
      %v650 = vmul.f32 %v501, %v638
      %v651 = vmul.f32 %v502, %v638
      %v652 = vmul.f32 %v503, %v638
      %v653 = vmul.f32 %v504, %v638
      %v654 = vmul.f32 %v505, %v638
      %v655 = vadd.f32 %v622, %v639
      %v656 = vadd.f32 %v623, %v640
      %v657 = vadd.f32 %v624, %v641
      %v658 = vadd.f32 %v625, %v642
      %v659 = vadd.f32 %v626, %v643
      %v660 = vadd.f32 %v627, %v644
      %v661 = vadd.f32 %v628, %v645
      %v662 = vadd.f32 %v629, %v646
      %v663 = vadd.f32 %v630, %v647
      %v664 = vadd.f32 %v631, %v648
      %v665 = vadd.f32 %v632, %v649
      %v666 = vadd.f32 %v633, %v650
      %v667 = vadd.f32 %v634, %v651
      %v668 = vadd.f32 %v635, %v652
      %v669 = vadd.f32 %v636, %v653
      %v670 = vadd.f32 %v637, %v654
      %v671 = vld [vmem:[#allocation2 + $0x1] sm:$0xff]
      %v672 = vld [vmem:[#allocation2 + $0x9] sm:$0xff]
      %v673 = vld [vmem:[#allocation2 + $0x19] sm:$0xff]
      %v674 = vld [vmem:[#allocation2 + $0x21] sm:$0xff]
      %v675 = vld [vmem:[#allocation2 + $0x31] sm:$0xff]
      %v676 = vld [vmem:[#allocation2 + $0x39] sm:$0xff]
      %v677 = vld [vmem:[#allocation2 + $0x49] sm:$0xff]
      %v678 = vld [vmem:[#allocation2 + $0x51] sm:$0xff]
      %v679 = vld [vmem:[#allocation2 + $0x61] sm:$0xff]
      %v680 = vld [vmem:[#allocation2 + $0x69] sm:$0xff]
      %v681 = vld [vmem:[#allocation2 + $0x79] sm:$0xff]
      %v682 = vld [vmem:[#allocation2 + $0x81] sm:$0xff]
      %v683 = vld [vmem:[#allocation2 + $0x91] sm:$0xff]
      %v684 = vld [vmem:[#allocation2 + $0x99] sm:$0xff]
      %v685 = vld [vmem:[#allocation2 + $0xa9] sm:$0xff]
      %v686 = vld [vmem:[#allocation2 + $0xb1] sm:$0xff]
      %v687 = vld [vmem:[#allocation2 + $0xc1] sm:$0xff]
      %v688 = vld [vmem:[#allocation2 + $0xc9] sm:$0xff]
      %v689 = vld [vmem:[#allocation2 + $0xd9] sm:$0xff]
      %v690 = vld [vmem:[#allocation2 + $0xe1] sm:$0xff]
      %v691 = vld [vmem:[#allocation2 + $0xf1] sm:$0xff]
      %v692 = vld [vmem:[#allocation2 + $0xf9] sm:$0xff]
      %v693 = vld [vmem:[#allocation2 + $0x109] sm:$0xff]
      %v694 = vld [vmem:[#allocation2 + $0x111] sm:$0xff]
      %v695 = vperm.slane %v476, 1
      %v696 = vmul.f32 %v671, %v695
      %v697 = vmul.f32 %v672, %v695
      %v698 = vmul.f32 %v673, %v695
      %v699 = vmul.f32 %v674, %v695
      %v700 = vmul.f32 %v675, %v695
      %v701 = vmul.f32 %v676, %v695
      %v702 = vmul.f32 %v677, %v695
      %v703 = vmul.f32 %v678, %v695
      %v704 = vmul.f32 %v679, %v695
      %v705 = vmul.f32 %v680, %v695
      %v706 = vmul.f32 %v681, %v695
      %v707 = vmul.f32 %v682, %v695
      %v708 = vmul.f32 %v683, %v695
      %v709 = vmul.f32 %v684, %v695
      %v710 = vmul.f32 %v685, %v695
      %v711 = vmul.f32 %v686, %v695
      %v712 = vadd.f32 %v655, %v696
      %v713 = vadd.f32 %v656, %v697
      %v714 = vadd.f32 %v657, %v698
      %v715 = vadd.f32 %v658, %v699
      %v716 = vadd.f32 %v659, %v700
      %v717 = vadd.f32 %v660, %v701
      %v718 = vadd.f32 %v661, %v702
      %v719 = vadd.f32 %v662, %v703
      %v720 = vadd.f32 %v663, %v704
      %v721 = vadd.f32 %v664, %v705
      %v722 = vadd.f32 %v665, %v706
      %v723 = vadd.f32 %v666, %v707
      %v724 = vadd.f32 %v667, %v708
      %v725 = vadd.f32 %v668, %v709
      %v726 = vadd.f32 %v669, %v710
      %v727 = vadd.f32 %v670, %v711
      %v728 = vperm.slane %v476, 6
      %v729 = vmul.f32 %v673, %v728
      %v730 = vmul.f32 %v674, %v728
      %v731 = vmul.f32 %v675, %v728
      %v732 = vmul.f32 %v676, %v728
      %v733 = vmul.f32 %v677, %v728
      %v734 = vmul.f32 %v678, %v728
      %v735 = vmul.f32 %v679, %v728
      %v736 = vmul.f32 %v680, %v728
      %v737 = vmul.f32 %v681, %v728
      %v738 = vmul.f32 %v682, %v728
      %v739 = vmul.f32 %v683, %v728
      %v740 = vmul.f32 %v684, %v728
      %v741 = vmul.f32 %v685, %v728
      %v742 = vmul.f32 %v686, %v728
      %v743 = vmul.f32 %v687, %v728
      %v744 = vmul.f32 %v688, %v728
      %v745 = vadd.f32 %v712, %v729
      %v746 = vadd.f32 %v713, %v730
      %v747 = vadd.f32 %v714, %v731
      %v748 = vadd.f32 %v715, %v732
      %v749 = vadd.f32 %v716, %v733
      %v750 = vadd.f32 %v717, %v734
      %v751 = vadd.f32 %v718, %v735
      %v752 = vadd.f32 %v719, %v736
      %v753 = vadd.f32 %v720, %v737
      %v754 = vadd.f32 %v721, %v738
      %v755 = vadd.f32 %v722, %v739
      %v756 = vadd.f32 %v723, %v740
      %v757 = vadd.f32 %v724, %v741
      %v758 = vadd.f32 %v725, %v742
      %v759 = vadd.f32 %v726, %v743
      %v760 = vadd.f32 %v727, %v744
      %v761 = vperm.slane %v477, 3
      %v762 = vmul.f32 %v675, %v761
      %v763 = vmul.f32 %v676, %v761
      %v764 = vmul.f32 %v677, %v761
      %v765 = vmul.f32 %v678, %v761
      %v766 = vmul.f32 %v679, %v761
      %v767 = vmul.f32 %v680, %v761
      %v768 = vmul.f32 %v681, %v761
      %v769 = vmul.f32 %v682, %v761
      %v770 = vmul.f32 %v683, %v761
      %v771 = vmul.f32 %v684, %v761
      %v772 = vmul.f32 %v685, %v761
      %v773 = vmul.f32 %v686, %v761
      %v774 = vmul.f32 %v687, %v761
      %v775 = vmul.f32 %v688, %v761
      %v776 = vmul.f32 %v689, %v761
      %v777 = vmul.f32 %v690, %v761
      %v778 = vadd.f32 %v745, %v762
      %v779 = vadd.f32 %v746, %v763
      %v780 = vadd.f32 %v747, %v764
      %v781 = vadd.f32 %v748, %v765
      %v782 = vadd.f32 %v749, %v766
      %v783 = vadd.f32 %v750, %v767
      %v784 = vadd.f32 %v751, %v768
      %v785 = vadd.f32 %v752, %v769
      %v786 = vadd.f32 %v753, %v770
      %v787 = vadd.f32 %v754, %v771
      %v788 = vadd.f32 %v755, %v772
      %v789 = vadd.f32 %v756, %v773
      %v790 = vadd.f32 %v757, %v774
      %v791 = vadd.f32 %v758, %v775
      %v792 = vadd.f32 %v759, %v776
      %v793 = vadd.f32 %v760, %v777
      %v794 = vperm.slane %v478, 0
      %v795 = vmul.f32 %v677, %v794
      %v796 = vmul.f32 %v678, %v794
      %v797 = vmul.f32 %v679, %v794
      %v798 = vmul.f32 %v680, %v794
      %v799 = vmul.f32 %v681, %v794
      %v800 = vmul.f32 %v682, %v794
      %v801 = vmul.f32 %v683, %v794
      %v802 = vmul.f32 %v684, %v794
      %v803 = vmul.f32 %v685, %v794
      %v804 = vmul.f32 %v686, %v794
      %v805 = vmul.f32 %v687, %v794
      %v806 = vmul.f32 %v688, %v794
      %v807 = vmul.f32 %v689, %v794
      %v808 = vmul.f32 %v690, %v794
      %v809 = vmul.f32 %v691, %v794
      %v810 = vmul.f32 %v692, %v794
      %v811 = vadd.f32 %v778, %v795
      %v812 = vadd.f32 %v779, %v796
      %v813 = vadd.f32 %v780, %v797
      %v814 = vadd.f32 %v781, %v798
      %v815 = vadd.f32 %v782, %v799
      %v816 = vadd.f32 %v783, %v800
      %v817 = vadd.f32 %v784, %v801
      %v818 = vadd.f32 %v785, %v802
      %v819 = vadd.f32 %v786, %v803
      %v820 = vadd.f32 %v787, %v804
      %v821 = vadd.f32 %v788, %v805
      %v822 = vadd.f32 %v789, %v806
      %v823 = vadd.f32 %v790, %v807
      %v824 = vadd.f32 %v791, %v808
      %v825 = vadd.f32 %v792, %v809
      %v826 = vadd.f32 %v793, %v810
      %v827 = vperm.slane %v478, 5
      %v828 = vmul.f32 %v679, %v827
      %v829 = vmul.f32 %v680, %v827
      %v830 = vmul.f32 %v681, %v827
      %v831 = vmul.f32 %v682, %v827
      %v832 = vmul.f32 %v683, %v827
      %v833 = vmul.f32 %v684, %v827
      %v834 = vmul.f32 %v685, %v827
      %v835 = vmul.f32 %v686, %v827
      %v836 = vmul.f32 %v687, %v827
      %v837 = vmul.f32 %v688, %v827
      %v838 = vmul.f32 %v689, %v827
      %v839 = vmul.f32 %v690, %v827
      %v840 = vmul.f32 %v691, %v827
      %v841 = vmul.f32 %v692, %v827
      %v842 = vmul.f32 %v693, %v827
      %v843 = vmul.f32 %v694, %v827
      %v844 = vadd.f32 %v811, %v828
      %v845 = vadd.f32 %v812, %v829
      %v846 = vadd.f32 %v813, %v830
      %v847 = vadd.f32 %v814, %v831
      %v848 = vadd.f32 %v815, %v832
      %v849 = vadd.f32 %v816, %v833
      %v850 = vadd.f32 %v817, %v834
      %v851 = vadd.f32 %v818, %v835
      %v852 = vadd.f32 %v819, %v836
      %v853 = vadd.f32 %v820, %v837
      %v854 = vadd.f32 %v821, %v838
      %v855 = vadd.f32 %v822, %v839
      %v856 = vadd.f32 %v823, %v840
      %v857 = vadd.f32 %v824, %v841
      %v858 = vadd.f32 %v825, %v842
      %v859 = vadd.f32 %v826, %v843
      %v860 = vld [vmem:[#allocation2 + $0x2] sm:$0xff]
      %v861 = vld [vmem:[#allocation2 + $0xa] sm:$0xff]
      %v862 = vld [vmem:[#allocation2 + $0x1a] sm:$0xff]
      %v863 = vld [vmem:[#allocation2 + $0x22] sm:$0xff]
      %v864 = vld [vmem:[#allocation2 + $0x32] sm:$0xff]
      %v865 = vld [vmem:[#allocation2 + $0x3a] sm:$0xff]
      %v866 = vld [vmem:[#allocation2 + $0x4a] sm:$0xff]
      %v867 = vld [vmem:[#allocation2 + $0x52] sm:$0xff]
      %v868 = vld [vmem:[#allocation2 + $0x62] sm:$0xff]
      %v869 = vld [vmem:[#allocation2 + $0x6a] sm:$0xff]
      %v870 = vld [vmem:[#allocation2 + $0x7a] sm:$0xff]
      %v871 = vld [vmem:[#allocation2 + $0x82] sm:$0xff]
      %v872 = vld [vmem:[#allocation2 + $0x92] sm:$0xff]
      %v873 = vld [vmem:[#allocation2 + $0x9a] sm:$0xff]
      %v874 = vld [vmem:[#allocation2 + $0xaa] sm:$0xff]
      %v875 = vld [vmem:[#allocation2 + $0xb2] sm:$0xff]
      %v876 = vld [vmem:[#allocation2 + $0xc2] sm:$0xff]
      %v877 = vld [vmem:[#allocation2 + $0xca] sm:$0xff]
      %v878 = vld [vmem:[#allocation2 + $0xda] sm:$0xff]
      %v879 = vld [vmem:[#allocation2 + $0xe2] sm:$0xff]
      %v880 = vld [vmem:[#allocation2 + $0xf2] sm:$0xff]
      %v881 = vld [vmem:[#allocation2 + $0xfa] sm:$0xff]
      %v882 = vld [vmem:[#allocation2 + $0x10a] sm:$0xff]
      %v883 = vld [vmem:[#allocation2 + $0x112] sm:$0xff]
      %v884 = vperm.slane %v476, 2
      %v885 = vmul.f32 %v860, %v884
      %v886 = vmul.f32 %v861, %v884
      %v887 = vmul.f32 %v862, %v884
      %v888 = vmul.f32 %v863, %v884
      %v889 = vmul.f32 %v864, %v884
      %v890 = vmul.f32 %v865, %v884
      %v891 = vmul.f32 %v866, %v884
      %v892 = vmul.f32 %v867, %v884
      %v893 = vmul.f32 %v868, %v884
      %v894 = vmul.f32 %v869, %v884
      %v895 = vmul.f32 %v870, %v884
      %v896 = vmul.f32 %v871, %v884
      %v897 = vmul.f32 %v872, %v884
      %v898 = vmul.f32 %v873, %v884
      %v899 = vmul.f32 %v874, %v884
      %v900 = vmul.f32 %v875, %v884
      %v901 = vadd.f32 %v844, %v885
      %v902 = vadd.f32 %v845, %v886
      %v903 = vadd.f32 %v846, %v887
      %v904 = vadd.f32 %v847, %v888
      %v905 = vadd.f32 %v848, %v889
      %v906 = vadd.f32 %v849, %v890
      %v907 = vadd.f32 %v850, %v891
      %v908 = vadd.f32 %v851, %v892
      %v909 = vadd.f32 %v852, %v893
      %v910 = vadd.f32 %v853, %v894
      %v911 = vadd.f32 %v854, %v895
      %v912 = vadd.f32 %v855, %v896
      %v913 = vadd.f32 %v856, %v897
      %v914 = vadd.f32 %v857, %v898
      %v915 = vadd.f32 %v858, %v899
      %v916 = vadd.f32 %v859, %v900
      %v917 = vperm.slane %v476, 7
      %v918 = vmul.f32 %v862, %v917
      %v919 = vmul.f32 %v863, %v917
      %v920 = vmul.f32 %v864, %v917
      %v921 = vmul.f32 %v865, %v917
      %v922 = vmul.f32 %v866, %v917
      %v923 = vmul.f32 %v867, %v917
      %v924 = vmul.f32 %v868, %v917
      %v925 = vmul.f32 %v869, %v917
      %v926 = vmul.f32 %v870, %v917
      %v927 = vmul.f32 %v871, %v917
      %v928 = vmul.f32 %v872, %v917
      %v929 = vmul.f32 %v873, %v917
      %v930 = vmul.f32 %v874, %v917
      %v931 = vmul.f32 %v875, %v917
      %v932 = vmul.f32 %v876, %v917
      %v933 = vmul.f32 %v877, %v917
      %v934 = vadd.f32 %v901, %v918
      %v935 = vadd.f32 %v902, %v919
      %v936 = vadd.f32 %v903, %v920
      %v937 = vadd.f32 %v904, %v921
      %v938 = vadd.f32 %v905, %v922
      %v939 = vadd.f32 %v906, %v923
      %v940 = vadd.f32 %v907, %v924
      %v941 = vadd.f32 %v908, %v925
      %v942 = vadd.f32 %v909, %v926
      %v943 = vadd.f32 %v910, %v927
      %v944 = vadd.f32 %v911, %v928
      %v945 = vadd.f32 %v912, %v929
      %v946 = vadd.f32 %v913, %v930
      %v947 = vadd.f32 %v914, %v931
      %v948 = vadd.f32 %v915, %v932
      %v949 = vadd.f32 %v916, %v933
      %v950 = vperm.slane %v477, 4
      %v951 = vmul.f32 %v864, %v950
      %v952 = vmul.f32 %v865, %v950
      %v953 = vmul.f32 %v866, %v950
      %v954 = vmul.f32 %v867, %v950
      %v955 = vmul.f32 %v868, %v950
      %v956 = vmul.f32 %v869, %v950
      %v957 = vmul.f32 %v870, %v950
      %v958 = vmul.f32 %v871, %v950
      %v959 = vmul.f32 %v872, %v950
      %v960 = vmul.f32 %v873, %v950
      %v961 = vmul.f32 %v874, %v950
      %v962 = vmul.f32 %v875, %v950
      %v963 = vmul.f32 %v876, %v950
      %v964 = vmul.f32 %v877, %v950
      %v965 = vmul.f32 %v878, %v950
      %v966 = vmul.f32 %v879, %v950
      %v967 = vadd.f32 %v934, %v951
      %v968 = vadd.f32 %v935, %v952
      %v969 = vadd.f32 %v936, %v953
      %v970 = vadd.f32 %v937, %v954
      %v971 = vadd.f32 %v938, %v955
      %v972 = vadd.f32 %v939, %v956
      %v973 = vadd.f32 %v940, %v957
      %v974 = vadd.f32 %v941, %v958
      %v975 = vadd.f32 %v942, %v959
      %v976 = vadd.f32 %v943, %v960
      %v977 = vadd.f32 %v944, %v961
      %v978 = vadd.f32 %v945, %v962
      %v979 = vadd.f32 %v946, %v963
      %v980 = vadd.f32 %v947, %v964
      %v981 = vadd.f32 %v948, %v965
      %v982 = vadd.f32 %v949, %v966
      %v983 = vperm.slane %v478, 1
      %v984 = vmul.f32 %v866, %v983
      %v985 = vmul.f32 %v867, %v983
      %v986 = vmul.f32 %v868, %v983
      %v987 = vmul.f32 %v869, %v983
      %v988 = vmul.f32 %v870, %v983
      %v989 = vmul.f32 %v871, %v983
      %v990 = vmul.f32 %v872, %v983
      %v991 = vmul.f32 %v873, %v983
      %v992 = vmul.f32 %v874, %v983
      %v993 = vmul.f32 %v875, %v983
      %v994 = vmul.f32 %v876, %v983
      %v995 = vmul.f32 %v877, %v983
      %v996 = vmul.f32 %v878, %v983
      %v997 = vmul.f32 %v879, %v983
      %v998 = vmul.f32 %v880, %v983
      %v999 = vmul.f32 %v881, %v983
      %v1000 = vadd.f32 %v967, %v984
      %v1001 = vadd.f32 %v968, %v985
      %v1002 = vadd.f32 %v969, %v986
      %v1003 = vadd.f32 %v970, %v987
      %v1004 = vadd.f32 %v971, %v988
      %v1005 = vadd.f32 %v972, %v989
      %v1006 = vadd.f32 %v973, %v990
      %v1007 = vadd.f32 %v974, %v991
      %v1008 = vadd.f32 %v975, %v992
      %v1009 = vadd.f32 %v976, %v993
      %v1010 = vadd.f32 %v977, %v994
      %v1011 = vadd.f32 %v978, %v995
      %v1012 = vadd.f32 %v979, %v996
      %v1013 = vadd.f32 %v980, %v997
      %v1014 = vadd.f32 %v981, %v998
      %v1015 = vadd.f32 %v982, %v999
      %v1016 = vperm.slane %v478, 6
      %v1017 = vmul.f32 %v868, %v1016
      %v1018 = vmul.f32 %v869, %v1016
      %v1019 = vmul.f32 %v870, %v1016
      %v1020 = vmul.f32 %v871, %v1016
      %v1021 = vmul.f32 %v872, %v1016
      %v1022 = vmul.f32 %v873, %v1016
      %v1023 = vmul.f32 %v874, %v1016
      %v1024 = vmul.f32 %v875, %v1016
      %v1025 = vmul.f32 %v876, %v1016
      %v1026 = vmul.f32 %v877, %v1016
      %v1027 = vmul.f32 %v878, %v1016
      %v1028 = vmul.f32 %v879, %v1016
      %v1029 = vmul.f32 %v880, %v1016
      %v1030 = vmul.f32 %v881, %v1016
      %v1031 = vmul.f32 %v882, %v1016
      %v1032 = vmul.f32 %v883, %v1016
      %v1033 = vadd.f32 %v1000, %v1017
      %v1034 = vadd.f32 %v1001, %v1018
      %v1035 = vadd.f32 %v1002, %v1019
      %v1036 = vadd.f32 %v1003, %v1020
      %v1037 = vadd.f32 %v1004, %v1021
      %v1038 = vadd.f32 %v1005, %v1022
      %v1039 = vadd.f32 %v1006, %v1023
      %v1040 = vadd.f32 %v1007, %v1024
      %v1041 = vadd.f32 %v1008, %v1025
      %v1042 = vadd.f32 %v1009, %v1026
      %v1043 = vadd.f32 %v1010, %v1027
      %v1044 = vadd.f32 %v1011, %v1028
      %v1045 = vadd.f32 %v1012, %v1029
      %v1046 = vadd.f32 %v1013, %v1030
      %v1047 = vadd.f32 %v1014, %v1031
      %v1048 = vadd.f32 %v1015, %v1032
      %v1049 = vld [vmem:[#allocation2 + $0x3] sm:$0xff]
      %v1050 = vld [vmem:[#allocation2 + $0xb] sm:$0xff]
      %v1051 = vld [vmem:[#allocation2 + $0x1b] sm:$0xff]
      %v1052 = vld [vmem:[#allocation2 + $0x23] sm:$0xff]
      %v1053 = vld [vmem:[#allocation2 + $0x33] sm:$0xff]
      %v1054 = vld [vmem:[#allocation2 + $0x3b] sm:$0xff]
      %v1055 = vld [vmem:[#allocation2 + $0x4b] sm:$0xff]
      %v1056 = vld [vmem:[#allocation2 + $0x53] sm:$0xff]
      %v1057 = vld [vmem:[#allocation2 + $0x63] sm:$0xff]
      %v1058 = vld [vmem:[#allocation2 + $0x6b] sm:$0xff]
      %v1059 = vld [vmem:[#allocation2 + $0x7b] sm:$0xff]
      %v1060 = vld [vmem:[#allocation2 + $0x83] sm:$0xff]
      %v1061 = vld [vmem:[#allocation2 + $0x93] sm:$0xff]
      %v1062 = vld [vmem:[#allocation2 + $0x9b] sm:$0xff]
      %v1063 = vld [vmem:[#allocation2 + $0xab] sm:$0xff]
      %v1064 = vld [vmem:[#allocation2 + $0xb3] sm:$0xff]
      %v1065 = vld [vmem:[#allocation2 + $0xc3] sm:$0xff]
      %v1066 = vld [vmem:[#allocation2 + $0xcb] sm:$0xff]
      %v1067 = vld [vmem:[#allocation2 + $0xdb] sm:$0xff]
      %v1068 = vld [vmem:[#allocation2 + $0xe3] sm:$0xff]
      %v1069 = vld [vmem:[#allocation2 + $0xf3] sm:$0xff]
      %v1070 = vld [vmem:[#allocation2 + $0xfb] sm:$0xff]
      %v1071 = vld [vmem:[#allocation2 + $0x10b] sm:$0xff]
      %v1072 = vld [vmem:[#allocation2 + $0x113] sm:$0xff]
      %v1073 = vperm.slane %v476, 3
      %v1074 = vmul.f32 %v1049, %v1073
      %v1075 = vmul.f32 %v1050, %v1073
      %v1076 = vmul.f32 %v1051, %v1073
      %v1077 = vmul.f32 %v1052, %v1073
      %v1078 = vmul.f32 %v1053, %v1073
      %v1079 = vmul.f32 %v1054, %v1073
      %v1080 = vmul.f32 %v1055, %v1073
      %v1081 = vmul.f32 %v1056, %v1073
      %v1082 = vmul.f32 %v1057, %v1073
      %v1083 = vmul.f32 %v1058, %v1073
      %v1084 = vmul.f32 %v1059, %v1073
      %v1085 = vmul.f32 %v1060, %v1073
      %v1086 = vmul.f32 %v1061, %v1073
      %v1087 = vmul.f32 %v1062, %v1073
      %v1088 = vmul.f32 %v1063, %v1073
      %v1089 = vmul.f32 %v1064, %v1073
      %v1090 = vadd.f32 %v1033, %v1074
      %v1091 = vadd.f32 %v1034, %v1075
      %v1092 = vadd.f32 %v1035, %v1076
      %v1093 = vadd.f32 %v1036, %v1077
      %v1094 = vadd.f32 %v1037, %v1078
      %v1095 = vadd.f32 %v1038, %v1079
      %v1096 = vadd.f32 %v1039, %v1080
      %v1097 = vadd.f32 %v1040, %v1081
      %v1098 = vadd.f32 %v1041, %v1082
      %v1099 = vadd.f32 %v1042, %v1083
      %v1100 = vadd.f32 %v1043, %v1084
      %v1101 = vadd.f32 %v1044, %v1085
      %v1102 = vadd.f32 %v1045, %v1086
      %v1103 = vadd.f32 %v1046, %v1087
      %v1104 = vadd.f32 %v1047, %v1088
      %v1105 = vadd.f32 %v1048, %v1089
      %v1106 = vperm.slane %v477, 0
      %v1107 = vmul.f32 %v1051, %v1106
      %v1108 = vmul.f32 %v1052, %v1106
      %v1109 = vmul.f32 %v1053, %v1106
      %v1110 = vmul.f32 %v1054, %v1106
      %v1111 = vmul.f32 %v1055, %v1106
      %v1112 = vmul.f32 %v1056, %v1106
      %v1113 = vmul.f32 %v1057, %v1106
      %v1114 = vmul.f32 %v1058, %v1106
      %v1115 = vmul.f32 %v1059, %v1106
      %v1116 = vmul.f32 %v1060, %v1106
      %v1117 = vmul.f32 %v1061, %v1106
      %v1118 = vmul.f32 %v1062, %v1106
      %v1119 = vmul.f32 %v1063, %v1106
      %v1120 = vmul.f32 %v1064, %v1106
      %v1121 = vmul.f32 %v1065, %v1106
      %v1122 = vmul.f32 %v1066, %v1106
      %v1123 = vadd.f32 %v1090, %v1107
      %v1124 = vadd.f32 %v1091, %v1108
      %v1125 = vadd.f32 %v1092, %v1109
      %v1126 = vadd.f32 %v1093, %v1110
      %v1127 = vadd.f32 %v1094, %v1111
      %v1128 = vadd.f32 %v1095, %v1112
      %v1129 = vadd.f32 %v1096, %v1113
      %v1130 = vadd.f32 %v1097, %v1114
      %v1131 = vadd.f32 %v1098, %v1115
      %v1132 = vadd.f32 %v1099, %v1116
      %v1133 = vadd.f32 %v1100, %v1117
      %v1134 = vadd.f32 %v1101, %v1118
      %v1135 = vadd.f32 %v1102, %v1119
      %v1136 = vadd.f32 %v1103, %v1120
      %v1137 = vadd.f32 %v1104, %v1121
      %v1138 = vadd.f32 %v1105, %v1122
      %v1139 = vperm.slane %v477, 5
      %v1140 = vmul.f32 %v1053, %v1139
      %v1141 = vmul.f32 %v1054, %v1139
      %v1142 = vmul.f32 %v1055, %v1139
      %v1143 = vmul.f32 %v1056, %v1139
      %v1144 = vmul.f32 %v1057, %v1139
      %v1145 = vmul.f32 %v1058, %v1139
      %v1146 = vmul.f32 %v1059, %v1139
      %v1147 = vmul.f32 %v1060, %v1139
      %v1148 = vmul.f32 %v1061, %v1139
      %v1149 = vmul.f32 %v1062, %v1139
      %v1150 = vmul.f32 %v1063, %v1139
      %v1151 = vmul.f32 %v1064, %v1139
      %v1152 = vmul.f32 %v1065, %v1139
      %v1153 = vmul.f32 %v1066, %v1139
      %v1154 = vmul.f32 %v1067, %v1139
      %v1155 = vmul.f32 %v1068, %v1139
      %v1156 = vadd.f32 %v1123, %v1140
      %v1157 = vadd.f32 %v1124, %v1141
      %v1158 = vadd.f32 %v1125, %v1142
      %v1159 = vadd.f32 %v1126, %v1143
      %v1160 = vadd.f32 %v1127, %v1144
      %v1161 = vadd.f32 %v1128, %v1145
      %v1162 = vadd.f32 %v1129, %v1146
      %v1163 = vadd.f32 %v1130, %v1147
      %v1164 = vadd.f32 %v1131, %v1148
      %v1165 = vadd.f32 %v1132, %v1149
      %v1166 = vadd.f32 %v1133, %v1150
      %v1167 = vadd.f32 %v1134, %v1151
      %v1168 = vadd.f32 %v1135, %v1152
      %v1169 = vadd.f32 %v1136, %v1153
      %v1170 = vadd.f32 %v1137, %v1154
      %v1171 = vadd.f32 %v1138, %v1155
      %v1172 = vperm.slane %v478, 2
      %v1173 = vmul.f32 %v1055, %v1172
      %v1174 = vmul.f32 %v1056, %v1172
      %v1175 = vmul.f32 %v1057, %v1172
      %v1176 = vmul.f32 %v1058, %v1172
      %v1177 = vmul.f32 %v1059, %v1172
      %v1178 = vmul.f32 %v1060, %v1172
      %v1179 = vmul.f32 %v1061, %v1172
      %v1180 = vmul.f32 %v1062, %v1172
      %v1181 = vmul.f32 %v1063, %v1172
      %v1182 = vmul.f32 %v1064, %v1172
      %v1183 = vmul.f32 %v1065, %v1172
      %v1184 = vmul.f32 %v1066, %v1172
      %v1185 = vmul.f32 %v1067, %v1172
      %v1186 = vmul.f32 %v1068, %v1172
      %v1187 = vmul.f32 %v1069, %v1172
      %v1188 = vmul.f32 %v1070, %v1172
      %v1189 = vadd.f32 %v1156, %v1173
      %v1190 = vadd.f32 %v1157, %v1174
      %v1191 = vadd.f32 %v1158, %v1175
      %v1192 = vadd.f32 %v1159, %v1176
      %v1193 = vadd.f32 %v1160, %v1177
      %v1194 = vadd.f32 %v1161, %v1178
      %v1195 = vadd.f32 %v1162, %v1179
      %v1196 = vadd.f32 %v1163, %v1180
      %v1197 = vadd.f32 %v1164, %v1181
      %v1198 = vadd.f32 %v1165, %v1182
      %v1199 = vadd.f32 %v1166, %v1183
      %v1200 = vadd.f32 %v1167, %v1184
      %v1201 = vadd.f32 %v1168, %v1185
      %v1202 = vadd.f32 %v1169, %v1186
      %v1203 = vadd.f32 %v1170, %v1187
      %v1204 = vadd.f32 %v1171, %v1188
      %v1205 = vperm.slane %v478, 7
      %v1206 = vmul.f32 %v1057, %v1205
      %v1207 = vmul.f32 %v1058, %v1205
      %v1208 = vmul.f32 %v1059, %v1205
      %v1209 = vmul.f32 %v1060, %v1205
      %v1210 = vmul.f32 %v1061, %v1205
      %v1211 = vmul.f32 %v1062, %v1205
      %v1212 = vmul.f32 %v1063, %v1205
      %v1213 = vmul.f32 %v1064, %v1205
      %v1214 = vmul.f32 %v1065, %v1205
      %v1215 = vmul.f32 %v1066, %v1205
      %v1216 = vmul.f32 %v1067, %v1205
      %v1217 = vmul.f32 %v1068, %v1205
      %v1218 = vmul.f32 %v1069, %v1205
      %v1219 = vmul.f32 %v1070, %v1205
      %v1220 = vmul.f32 %v1071, %v1205
      %v1221 = vmul.f32 %v1072, %v1205
      %v1222 = vadd.f32 %v1189, %v1206
      %v1223 = vadd.f32 %v1190, %v1207
      %v1224 = vadd.f32 %v1191, %v1208
      %v1225 = vadd.f32 %v1192, %v1209
      %v1226 = vadd.f32 %v1193, %v1210
      %v1227 = vadd.f32 %v1194, %v1211
      %v1228 = vadd.f32 %v1195, %v1212
      %v1229 = vadd.f32 %v1196, %v1213
      %v1230 = vadd.f32 %v1197, %v1214
      %v1231 = vadd.f32 %v1198, %v1215
      %v1232 = vadd.f32 %v1199, %v1216
      %v1233 = vadd.f32 %v1200, %v1217
      %v1234 = vadd.f32 %v1201, %v1218
      %v1235 = vadd.f32 %v1202, %v1219
      %v1236 = vadd.f32 %v1203, %v1220
      %v1237 = vadd.f32 %v1204, %v1221
      %v1238 = vld [vmem:[#allocation2 + $0x4] sm:$0xff]
      %v1239 = vld [vmem:[#allocation2 + $0xc] sm:$0xff]
      %v1240 = vld [vmem:[#allocation2 + $0x1c] sm:$0xff]
      %v1241 = vld [vmem:[#allocation2 + $0x24] sm:$0xff]
      %v1242 = vld [vmem:[#allocation2 + $0x34] sm:$0xff]
      %v1243 = vld [vmem:[#allocation2 + $0x3c] sm:$0xff]
      %v1244 = vld [vmem:[#allocation2 + $0x4c] sm:$0xff]
      %v1245 = vld [vmem:[#allocation2 + $0x54] sm:$0xff]
      %v1246 = vld [vmem:[#allocation2 + $0x64] sm:$0xff]
      %v1247 = vld [vmem:[#allocation2 + $0x6c] sm:$0xff]
      %v1248 = vld [vmem:[#allocation2 + $0x7c] sm:$0xff]
      %v1249 = vld [vmem:[#allocation2 + $0x84] sm:$0xff]
      %v1250 = vld [vmem:[#allocation2 + $0x94] sm:$0xff]
      %v1251 = vld [vmem:[#allocation2 + $0x9c] sm:$0xff]
      %v1252 = vld [vmem:[#allocation2 + $0xac] sm:$0xff]
      %v1253 = vld [vmem:[#allocation2 + $0xb4] sm:$0xff]
      %v1254 = vld [vmem:[#allocation2 + $0xc4] sm:$0xff]
      %v1255 = vld [vmem:[#allocation2 + $0xcc] sm:$0xff]
      %v1256 = vld [vmem:[#allocation2 + $0xdc] sm:$0xff]
      %v1257 = vld [vmem:[#allocation2 + $0xe4] sm:$0xff]
      %v1258 = vld [vmem:[#allocation2 + $0xf4] sm:$0xff]
      %v1259 = vld [vmem:[#allocation2 + $0xfc] sm:$0xff]
      %v1260 = vld [vmem:[#allocation2 + $0x10c] sm:$0xff]
      %v1261 = vld [vmem:[#allocation2 + $0x114] sm:$0xff]
      %v1262 = vperm.slane %v476, 4
      %v1263 = vmul.f32 %v1238, %v1262
      %v1264 = vmul.f32 %v1239, %v1262
      %v1265 = vmul.f32 %v1240, %v1262
      %v1266 = vmul.f32 %v1241, %v1262
      %v1267 = vmul.f32 %v1242, %v1262
      %v1268 = vmul.f32 %v1243, %v1262
      %v1269 = vmul.f32 %v1244, %v1262
      %v1270 = vmul.f32 %v1245, %v1262
      %v1271 = vmul.f32 %v1246, %v1262
      %v1272 = vmul.f32 %v1247, %v1262
      %v1273 = vmul.f32 %v1248, %v1262
      %v1274 = vmul.f32 %v1249, %v1262
      %v1275 = vmul.f32 %v1250, %v1262
      %v1276 = vmul.f32 %v1251, %v1262
      %v1277 = vmul.f32 %v1252, %v1262
      %v1278 = vmul.f32 %v1253, %v1262
      %v1279 = vadd.f32 %v1222, %v1263
      %v1280 = vadd.f32 %v1223, %v1264
      %v1281 = vadd.f32 %v1224, %v1265
      %v1282 = vadd.f32 %v1225, %v1266
      %v1283 = vadd.f32 %v1226, %v1267
      %v1284 = vadd.f32 %v1227, %v1268
      %v1285 = vadd.f32 %v1228, %v1269
      %v1286 = vadd.f32 %v1229, %v1270
      %v1287 = vadd.f32 %v1230, %v1271
      %v1288 = vadd.f32 %v1231, %v1272
      %v1289 = vadd.f32 %v1232, %v1273
      %v1290 = vadd.f32 %v1233, %v1274
      %v1291 = vadd.f32 %v1234, %v1275
      %v1292 = vadd.f32 %v1235, %v1276
      %v1293 = vadd.f32 %v1236, %v1277
      %v1294 = vadd.f32 %v1237, %v1278
      %v1295 = vperm.slane %v477, 1
      %v1296 = vmul.f32 %v1240, %v1295
      %v1297 = vmul.f32 %v1241, %v1295
      %v1298 = vmul.f32 %v1242, %v1295
      %v1299 = vmul.f32 %v1243, %v1295
      %v1300 = vmul.f32 %v1244, %v1295
      %v1301 = vmul.f32 %v1245, %v1295
      %v1302 = vmul.f32 %v1246, %v1295
      %v1303 = vmul.f32 %v1247, %v1295
      %v1304 = vmul.f32 %v1248, %v1295
      %v1305 = vmul.f32 %v1249, %v1295
      %v1306 = vmul.f32 %v1250, %v1295
      %v1307 = vmul.f32 %v1251, %v1295
      %v1308 = vmul.f32 %v1252, %v1295
      %v1309 = vmul.f32 %v1253, %v1295
      %v1310 = vmul.f32 %v1254, %v1295
      %v1311 = vmul.f32 %v1255, %v1295
      %v1312 = vadd.f32 %v1279, %v1296
      %v1313 = vadd.f32 %v1280, %v1297
      %v1314 = vadd.f32 %v1281, %v1298
      %v1315 = vadd.f32 %v1282, %v1299
      %v1316 = vadd.f32 %v1283, %v1300
      %v1317 = vadd.f32 %v1284, %v1301
      %v1318 = vadd.f32 %v1285, %v1302
      %v1319 = vadd.f32 %v1286, %v1303
      %v1320 = vadd.f32 %v1287, %v1304
      %v1321 = vadd.f32 %v1288, %v1305
      %v1322 = vadd.f32 %v1289, %v1306
      %v1323 = vadd.f32 %v1290, %v1307
      %v1324 = vadd.f32 %v1291, %v1308
      %v1325 = vadd.f32 %v1292, %v1309
      %v1326 = vadd.f32 %v1293, %v1310
      %v1327 = vadd.f32 %v1294, %v1311
      %v1328 = vperm.slane %v477, 6
      %v1329 = vmul.f32 %v1242, %v1328
      %v1330 = vmul.f32 %v1243, %v1328
      %v1331 = vmul.f32 %v1244, %v1328
      %v1332 = vmul.f32 %v1245, %v1328
      %v1333 = vmul.f32 %v1246, %v1328
      %v1334 = vmul.f32 %v1247, %v1328
      %v1335 = vmul.f32 %v1248, %v1328
      %v1336 = vmul.f32 %v1249, %v1328
      %v1337 = vmul.f32 %v1250, %v1328
      %v1338 = vmul.f32 %v1251, %v1328
      %v1339 = vmul.f32 %v1252, %v1328
      %v1340 = vmul.f32 %v1253, %v1328
      %v1341 = vmul.f32 %v1254, %v1328
      %v1342 = vmul.f32 %v1255, %v1328
      %v1343 = vmul.f32 %v1256, %v1328
      %v1344 = vmul.f32 %v1257, %v1328
      %v1345 = vadd.f32 %v1312, %v1329
      %v1346 = vadd.f32 %v1313, %v1330
      %v1347 = vadd.f32 %v1314, %v1331
      %v1348 = vadd.f32 %v1315, %v1332
      %v1349 = vadd.f32 %v1316, %v1333
      %v1350 = vadd.f32 %v1317, %v1334
      %v1351 = vadd.f32 %v1318, %v1335
      %v1352 = vadd.f32 %v1319, %v1336
      %v1353 = vadd.f32 %v1320, %v1337
      %v1354 = vadd.f32 %v1321, %v1338
      %v1355 = vadd.f32 %v1322, %v1339
      %v1356 = vadd.f32 %v1323, %v1340
      %v1357 = vadd.f32 %v1324, %v1341
      %v1358 = vadd.f32 %v1325, %v1342
      %v1359 = vadd.f32 %v1326, %v1343
      %v1360 = vadd.f32 %v1327, %v1344
      %v1361 = vperm.slane %v478, 3
      %v1362 = vmul.f32 %v1244, %v1361
      %v1363 = vmul.f32 %v1245, %v1361
      %v1364 = vmul.f32 %v1246, %v1361
      %v1365 = vmul.f32 %v1247, %v1361
      %v1366 = vmul.f32 %v1248, %v1361
      %v1367 = vmul.f32 %v1249, %v1361
      %v1368 = vmul.f32 %v1250, %v1361
      %v1369 = vmul.f32 %v1251, %v1361
      %v1370 = vmul.f32 %v1252, %v1361
      %v1371 = vmul.f32 %v1253, %v1361
      %v1372 = vmul.f32 %v1254, %v1361
      %v1373 = vmul.f32 %v1255, %v1361
      %v1374 = vmul.f32 %v1256, %v1361
      %v1375 = vmul.f32 %v1257, %v1361
      %v1376 = vmul.f32 %v1258, %v1361
      %v1377 = vmul.f32 %v1259, %v1361
      %v1378 = vadd.f32 %v1345, %v1362
      %v1379 = vadd.f32 %v1346, %v1363
      %v1380 = vadd.f32 %v1347, %v1364
      %v1381 = vadd.f32 %v1348, %v1365
      %v1382 = vadd.f32 %v1349, %v1366
      %v1383 = vadd.f32 %v1350, %v1367
      %v1384 = vadd.f32 %v1351, %v1368
      %v1385 = vadd.f32 %v1352, %v1369
      %v1386 = vadd.f32 %v1353, %v1370
      %v1387 = vadd.f32 %v1354, %v1371
      %v1388 = vadd.f32 %v1355, %v1372
      %v1389 = vadd.f32 %v1356, %v1373
      %v1390 = vadd.f32 %v1357, %v1374
      %v1391 = vadd.f32 %v1358, %v1375
      %v1392 = vadd.f32 %v1359, %v1376
      %v1393 = vadd.f32 %v1360, %v1377
      %v1394 = vperm.slane %v479, 0
      %v1395 = vmul.f32 %v1246, %v1394
      %v1396 = vmul.f32 %v1247, %v1394
      %v1397 = vmul.f32 %v1248, %v1394
      %v1398 = vmul.f32 %v1249, %v1394
      %v1399 = vmul.f32 %v1250, %v1394
      %v1400 = vmul.f32 %v1251, %v1394
      %v1401 = vmul.f32 %v1252, %v1394
      %v1402 = vmul.f32 %v1253, %v1394
      %v1403 = vmul.f32 %v1254, %v1394
      %v1404 = vmul.f32 %v1255, %v1394
      %v1405 = vmul.f32 %v1256, %v1394
      %v1406 = vmul.f32 %v1257, %v1394
      %v1407 = vmul.f32 %v1258, %v1394
      %v1408 = vmul.f32 %v1259, %v1394
      %v1409 = vmul.f32 %v1260, %v1394
      %v1410 = vmul.f32 %v1261, %v1394
      %v1411 = vadd.f32 %v1378, %v1395
      %v1412 = vadd.f32 %v1379, %v1396
      %v1413 = vadd.f32 %v1380, %v1397
      %v1414 = vadd.f32 %v1381, %v1398
      %v1415 = vadd.f32 %v1382, %v1399
      %v1416 = vadd.f32 %v1383, %v1400
      %v1417 = vadd.f32 %v1384, %v1401
      %v1418 = vadd.f32 %v1385, %v1402
      %v1419 = vadd.f32 %v1386, %v1403
      %v1420 = vadd.f32 %v1387, %v1404
      %v1421 = vadd.f32 %v1388, %v1405
      %v1422 = vadd.f32 %v1389, %v1406
      %v1423 = vadd.f32 %v1390, %v1407
      %v1424 = vadd.f32 %v1391, %v1408
      %v1425 = vadd.f32 %v1392, %v1409
      %v1426 = vadd.f32 %v1393, %v1410
      %v1428 = vperm.slane %v480, 0
      %v1430 = vmul.f32 %v1411, %v1428
      %v1431 = vmul.f32 %v1412, %v1428
      %v1432 = vmul.f32 %v1413, %v1428
      %v1433 = vmul.f32 %v1414, %v1428
      %v1434 = vmul.f32 %v1415, %v1428
      %v1435 = vmul.f32 %v1416, %v1428
      %v1436 = vmul.f32 %v1417, %v1428
      %v1437 = vmul.f32 %v1418, %v1428
      %v1438 = vmul.f32 %v1419, %v1428
      %v1439 = vmul.f32 %v1420, %v1428
      %v1440 = vmul.f32 %v1421, %v1428
      %v1441 = vmul.f32 %v1422, %v1428
      %v1442 = vmul.f32 %v1423, %v1428
      %v1443 = vmul.f32 %v1424, %v1428
      %v1444 = vmul.f32 %v1425, %v1428
      %v1445 = vmul.f32 %v1426, %v1428
      %v1447 = vperm.slane %v481, 0
      %v1449 = vadd.f32 %v1430, %v1447
      %v1450 = vadd.f32 %v1431, %v1447
      %v1451 = vadd.f32 %v1432, %v1447
      %v1452 = vadd.f32 %v1433, %v1447
      %v1453 = vadd.f32 %v1434, %v1447
      %v1454 = vadd.f32 %v1435, %v1447
      %v1455 = vadd.f32 %v1436, %v1447
      %v1456 = vadd.f32 %v1437, %v1447
      %v1457 = vadd.f32 %v1438, %v1447
      %v1458 = vadd.f32 %v1439, %v1447
      %v1459 = vadd.f32 %v1440, %v1447
      %v1460 = vadd.f32 %v1441, %v1447
      %v1461 = vadd.f32 %v1442, %v1447
      %v1462 = vadd.f32 %v1443, %v1447
      %v1463 = vadd.f32 %v1444, %v1447
      %v1464 = vadd.f32 %v1445, %v1447
      %v1465 = vxor.u32 %v1449, 2147483648
      %v1466 = vxor.u32 %v1450, 2147483648
      %v1467 = vxor.u32 %v1451, 2147483648
      %v1468 = vxor.u32 %v1452, 2147483648
      %v1469 = vxor.u32 %v1453, 2147483648
      %v1470 = vxor.u32 %v1454, 2147483648
      %v1471 = vxor.u32 %v1455, 2147483648
      %v1472 = vxor.u32 %v1456, 2147483648
      %v1473 = vxor.u32 %v1457, 2147483648
      %v1474 = vxor.u32 %v1458, 2147483648
      %v1475 = vxor.u32 %v1459, 2147483648
      %v1476 = vxor.u32 %v1460, 2147483648
      %v1477 = vxor.u32 %v1461, 2147483648
      %v1478 = vxor.u32 %v1462, 2147483648
      %v1479 = vxor.u32 %v1463, 2147483648
      %v1480 = vxor.u32 %v1464, 2147483648
      %v1481 = vmul.f32 %v1465, 1.442695
      %v1482 = vpow.pop %v1481
      %v1483 = vmul.f32 %v1466, 1.442695
      %v1484 = vpow.pop %v1483
      %v1485 = vmul.f32 %v1467, 1.442695
      %v1486 = vpow.pop %v1485
      %v1487 = vmul.f32 %v1468, 1.442695
      %v1488 = vpow.pop %v1487
      %v1489 = vmul.f32 %v1469, 1.442695
      %v1490 = vpow.pop %v1489
      %v1491 = vmul.f32 %v1470, 1.442695
      %v1492 = vpow.pop %v1491
      %v1493 = vmul.f32 %v1471, 1.442695
      %v1494 = vpow.pop %v1493
      %v1495 = vmul.f32 %v1472, 1.442695
      %v1496 = vpow.pop %v1495
      %v1497 = vmul.f32 %v1473, 1.442695
      %v1498 = vpow.pop %v1497
      %v1499 = vmul.f32 %v1474, 1.442695
      %v1500 = vpow.pop %v1499
      %v1501 = vmul.f32 %v1475, 1.442695
      %v1502 = vpow.pop %v1501
      %v1503 = vmul.f32 %v1476, 1.442695
      %v1504 = vpow.pop %v1503
      %v1505 = vmul.f32 %v1477, 1.442695
      %v1506 = vpow.pop %v1505
      %v1507 = vmul.f32 %v1478, 1.442695
      %v1508 = vpow.pop %v1507
      %v1509 = vmul.f32 %v1479, 1.442695
      %v1510 = vpow.pop %v1509
      %v1511 = vmul.f32 %v1480, 1.442695
      %v1512 = vpow.pop %v1511
      %v1513 = vadd.f32 %v1482, 1.0
      %v1514 = vadd.f32 %v1484, 1.0
      %v1515 = vadd.f32 %v1486, 1.0
      %v1516 = vadd.f32 %v1488, 1.0
      %v1517 = vadd.f32 %v1490, 1.0
      %v1518 = vadd.f32 %v1492, 1.0
      %v1519 = vadd.f32 %v1494, 1.0
      %v1520 = vadd.f32 %v1496, 1.0
      %v1521 = vadd.f32 %v1498, 1.0
      %v1522 = vadd.f32 %v1500, 1.0
      %v1523 = vadd.f32 %v1502, 1.0
      %v1524 = vadd.f32 %v1504, 1.0
      %v1525 = vadd.f32 %v1506, 1.0
      %v1526 = vadd.f32 %v1508, 1.0
      %v1527 = vadd.f32 %v1510, 1.0
      %v1528 = vadd.f32 %v1512, 1.0
      %v1529 = vrcp.pop %v1513
      %v1530 = vmul.f32 %v1513, %v1529
      %v1531 = vsub.f32 1.0, %v1530
      %v1532 = vmul.f32 %v1529, %v1531
      %v1533 = vadd.f32 %v1529, %v1532
      %vm1534 = vweird.f32 %v1513
      %vm1535 = vweird.f32 %v1529
      %vm1536 = vmor %vm1534, %vm1535
      %v1537 = vsel %vm1536, %v1529, %v1533
      %v1538 = vand.u32 2147483647, %v1513
      %vm1539 = vcmp.eq.f32.partialorder %v1538, 8.507059e+37
      %v1540 = vand.u32 %v1513, 2147483648
      %v1541 = vor.u32 1.1754944e-38, %v1540
      %v1542 = vsel %vm1539, %v1541, %v1537
      %v1543 = vmul.f32 1.0, %v1542
      %v1544 = vrcp.pop %v1514
      %v1545 = vmul.f32 %v1514, %v1544
      %v1546 = vsub.f32 1.0, %v1545
      %v1547 = vmul.f32 %v1544, %v1546
      %v1548 = vadd.f32 %v1544, %v1547
      %vm1549 = vweird.f32 %v1514
      %vm1550 = vweird.f32 %v1544
      %vm1551 = vmor %vm1549, %vm1550
      %v1552 = vsel %vm1551, %v1544, %v1548
      %v1553 = vand.u32 2147483647, %v1514
      %vm1554 = vcmp.eq.f32.partialorder %v1553, 8.507059e+37
      %v1555 = vand.u32 %v1514, 2147483648
      %v1556 = vor.u32 1.1754944e-38, %v1555
      %v1557 = vsel %vm1554, %v1556, %v1552
      %v1558 = vmul.f32 1.0, %v1557
      %v1559 = vrcp.pop %v1515
      %v1560 = vmul.f32 %v1515, %v1559
      %v1561 = vsub.f32 1.0, %v1560
      %v1562 = vmul.f32 %v1559, %v1561
      %v1563 = vadd.f32 %v1559, %v1562
      %vm1564 = vweird.f32 %v1515
      %vm1565 = vweird.f32 %v1559
      %vm1566 = vmor %vm1564, %vm1565
      %v1567 = vsel %vm1566, %v1559, %v1563
      %v1568 = vand.u32 2147483647, %v1515
      %vm1569 = vcmp.eq.f32.partialorder %v1568, 8.507059e+37
      %v1570 = vand.u32 %v1515, 2147483648
      %v1571 = vor.u32 1.1754944e-38, %v1570
      %v1572 = vsel %vm1569, %v1571, %v1567
      %v1573 = vmul.f32 1.0, %v1572
      %v1574 = vrcp.pop %v1516
      %v1575 = vmul.f32 %v1516, %v1574
      %v1576 = vsub.f32 1.0, %v1575
      %v1577 = vmul.f32 %v1574, %v1576
      %v1578 = vadd.f32 %v1574, %v1577
      %vm1579 = vweird.f32 %v1516
      %vm1580 = vweird.f32 %v1574
      %vm1581 = vmor %vm1579, %vm1580
      %v1582 = vsel %vm1581, %v1574, %v1578
      %v1583 = vand.u32 2147483647, %v1516
      %vm1584 = vcmp.eq.f32.partialorder %v1583, 8.507059e+37
      %v1585 = vand.u32 %v1516, 2147483648
      %v1586 = vor.u32 1.1754944e-38, %v1585
      %v1587 = vsel %vm1584, %v1586, %v1582
      %v1588 = vmul.f32 1.0, %v1587
      %v1589 = vrcp.pop %v1517
      %v1590 = vmul.f32 %v1517, %v1589
      %v1591 = vsub.f32 1.0, %v1590
      %v1592 = vmul.f32 %v1589, %v1591
      %v1593 = vadd.f32 %v1589, %v1592
      %vm1594 = vweird.f32 %v1517
      %vm1595 = vweird.f32 %v1589
      %vm1596 = vmor %vm1594, %vm1595
      %v1597 = vsel %vm1596, %v1589, %v1593
      %v1598 = vand.u32 2147483647, %v1517
      %vm1599 = vcmp.eq.f32.partialorder %v1598, 8.507059e+37
      %v1600 = vand.u32 %v1517, 2147483648
      %v1601 = vor.u32 1.1754944e-38, %v1600
      %v1602 = vsel %vm1599, %v1601, %v1597
      %v1603 = vmul.f32 1.0, %v1602
      %v1604 = vrcp.pop %v1518
      %v1605 = vmul.f32 %v1518, %v1604
      %v1606 = vsub.f32 1.0, %v1605
      %v1607 = vmul.f32 %v1604, %v1606
      %v1608 = vadd.f32 %v1604, %v1607
      %vm1609 = vweird.f32 %v1518
      %vm1610 = vweird.f32 %v1604
      %vm1611 = vmor %vm1609, %vm1610
      %v1612 = vsel %vm1611, %v1604, %v1608
      %v1613 = vand.u32 2147483647, %v1518
      %vm1614 = vcmp.eq.f32.partialorder %v1613, 8.507059e+37
      %v1615 = vand.u32 %v1518, 2147483648
      %v1616 = vor.u32 1.1754944e-38, %v1615
      %v1617 = vsel %vm1614, %v1616, %v1612
      %v1618 = vmul.f32 1.0, %v1617
      %v1619 = vrcp.pop %v1519
      %v1620 = vmul.f32 %v1519, %v1619
      %v1621 = vsub.f32 1.0, %v1620
      %v1622 = vmul.f32 %v1619, %v1621
      %v1623 = vadd.f32 %v1619, %v1622
      %vm1624 = vweird.f32 %v1519
      %vm1625 = vweird.f32 %v1619
      %vm1626 = vmor %vm1624, %vm1625
      %v1627 = vsel %vm1626, %v1619, %v1623
      %v1628 = vand.u32 2147483647, %v1519
      %vm1629 = vcmp.eq.f32.partialorder %v1628, 8.507059e+37
      %v1630 = vand.u32 %v1519, 2147483648
      %v1631 = vor.u32 1.1754944e-38, %v1630
      %v1632 = vsel %vm1629, %v1631, %v1627
      %v1633 = vmul.f32 1.0, %v1632
      %v1634 = vrcp.pop %v1520
      %v1635 = vmul.f32 %v1520, %v1634
      %v1636 = vsub.f32 1.0, %v1635
      %v1637 = vmul.f32 %v1634, %v1636
      %v1638 = vadd.f32 %v1634, %v1637
      %vm1639 = vweird.f32 %v1520
      %vm1640 = vweird.f32 %v1634
      %vm1641 = vmor %vm1639, %vm1640
      %v1642 = vsel %vm1641, %v1634, %v1638
      %v1643 = vand.u32 2147483647, %v1520
      %vm1644 = vcmp.eq.f32.partialorder %v1643, 8.507059e+37
      %v1645 = vand.u32 %v1520, 2147483648
      %v1646 = vor.u32 1.1754944e-38, %v1645
      %v1647 = vsel %vm1644, %v1646, %v1642
      %v1648 = vmul.f32 1.0, %v1647
      %v1649 = vrcp.pop %v1521
      %v1650 = vmul.f32 %v1521, %v1649
      %v1651 = vsub.f32 1.0, %v1650
      %v1652 = vmul.f32 %v1649, %v1651
      %v1653 = vadd.f32 %v1649, %v1652
      %vm1654 = vweird.f32 %v1521
      %vm1655 = vweird.f32 %v1649
      %vm1656 = vmor %vm1654, %vm1655
      %v1657 = vsel %vm1656, %v1649, %v1653
      %v1658 = vand.u32 2147483647, %v1521
      %vm1659 = vcmp.eq.f32.partialorder %v1658, 8.507059e+37
      %v1660 = vand.u32 %v1521, 2147483648
      %v1661 = vor.u32 1.1754944e-38, %v1660
      %v1662 = vsel %vm1659, %v1661, %v1657
      %v1663 = vmul.f32 1.0, %v1662
      %v1664 = vrcp.pop %v1522
      %v1665 = vmul.f32 %v1522, %v1664
      %v1666 = vsub.f32 1.0, %v1665
      %v1667 = vmul.f32 %v1664, %v1666
      %v1668 = vadd.f32 %v1664, %v1667
      %vm1669 = vweird.f32 %v1522
      %vm1670 = vweird.f32 %v1664
      %vm1671 = vmor %vm1669, %vm1670
      %v1672 = vsel %vm1671, %v1664, %v1668
      %v1673 = vand.u32 2147483647, %v1522
      %vm1674 = vcmp.eq.f32.partialorder %v1673, 8.507059e+37
      %v1675 = vand.u32 %v1522, 2147483648
      %v1676 = vor.u32 1.1754944e-38, %v1675
      %v1677 = vsel %vm1674, %v1676, %v1672
      %v1678 = vmul.f32 1.0, %v1677
      %v1679 = vrcp.pop %v1523
      %v1680 = vmul.f32 %v1523, %v1679
      %v1681 = vsub.f32 1.0, %v1680
      %v1682 = vmul.f32 %v1679, %v1681
      %v1683 = vadd.f32 %v1679, %v1682
      %vm1684 = vweird.f32 %v1523
      %vm1685 = vweird.f32 %v1679
      %vm1686 = vmor %vm1684, %vm1685
      %v1687 = vsel %vm1686, %v1679, %v1683
      %v1688 = vand.u32 2147483647, %v1523
      %vm1689 = vcmp.eq.f32.partialorder %v1688, 8.507059e+37
      %v1690 = vand.u32 %v1523, 2147483648
      %v1691 = vor.u32 1.1754944e-38, %v1690
      %v1692 = vsel %vm1689, %v1691, %v1687
      %v1693 = vmul.f32 1.0, %v1692
      %v1694 = vrcp.pop %v1524
      %v1695 = vmul.f32 %v1524, %v1694
      %v1696 = vsub.f32 1.0, %v1695
      %v1697 = vmul.f32 %v1694, %v1696
      %v1698 = vadd.f32 %v1694, %v1697
      %vm1699 = vweird.f32 %v1524
      %vm1700 = vweird.f32 %v1694
      %vm1701 = vmor %vm1699, %vm1700
      %v1702 = vsel %vm1701, %v1694, %v1698
      %v1703 = vand.u32 2147483647, %v1524
      %vm1704 = vcmp.eq.f32.partialorder %v1703, 8.507059e+37
      %v1705 = vand.u32 %v1524, 2147483648
      %v1706 = vor.u32 1.1754944e-38, %v1705
      %v1707 = vsel %vm1704, %v1706, %v1702
      %v1708 = vmul.f32 1.0, %v1707
      %v1709 = vrcp.pop %v1525
      %v1710 = vmul.f32 %v1525, %v1709
      %v1711 = vsub.f32 1.0, %v1710
      %v1712 = vmul.f32 %v1709, %v1711
      %v1713 = vadd.f32 %v1709, %v1712
      %vm1714 = vweird.f32 %v1525
      %vm1715 = vweird.f32 %v1709
      %vm1716 = vmor %vm1714, %vm1715
      %v1717 = vsel %vm1716, %v1709, %v1713
      %v1718 = vand.u32 2147483647, %v1525
      %vm1719 = vcmp.eq.f32.partialorder %v1718, 8.507059e+37
      %v1720 = vand.u32 %v1525, 2147483648
      %v1721 = vor.u32 1.1754944e-38, %v1720
      %v1722 = vsel %vm1719, %v1721, %v1717
      %v1723 = vmul.f32 1.0, %v1722
      %v1724 = vrcp.pop %v1526
      %v1725 = vmul.f32 %v1526, %v1724
      %v1726 = vsub.f32 1.0, %v1725
      %v1727 = vmul.f32 %v1724, %v1726
      %v1728 = vadd.f32 %v1724, %v1727
      %vm1729 = vweird.f32 %v1526
      %vm1730 = vweird.f32 %v1724
      %vm1731 = vmor %vm1729, %vm1730
      %v1732 = vsel %vm1731, %v1724, %v1728
      %v1733 = vand.u32 2147483647, %v1526
      %vm1734 = vcmp.eq.f32.partialorder %v1733, 8.507059e+37
      %v1735 = vand.u32 %v1526, 2147483648
      %v1736 = vor.u32 1.1754944e-38, %v1735
      %v1737 = vsel %vm1734, %v1736, %v1732
      %v1738 = vmul.f32 1.0, %v1737
      %v1739 = vrcp.pop %v1527
      %v1740 = vmul.f32 %v1527, %v1739
      %v1741 = vsub.f32 1.0, %v1740
      %v1742 = vmul.f32 %v1739, %v1741
      %v1743 = vadd.f32 %v1739, %v1742
      %vm1744 = vweird.f32 %v1527
      %vm1745 = vweird.f32 %v1739
      %vm1746 = vmor %vm1744, %vm1745
      %v1747 = vsel %vm1746, %v1739, %v1743
      %v1748 = vand.u32 2147483647, %v1527
      %vm1749 = vcmp.eq.f32.partialorder %v1748, 8.507059e+37
      %v1750 = vand.u32 %v1527, 2147483648
      %v1751 = vor.u32 1.1754944e-38, %v1750
      %v1752 = vsel %vm1749, %v1751, %v1747
      %v1753 = vmul.f32 1.0, %v1752
      %v1754 = vrcp.pop %v1528
      %v1755 = vmul.f32 %v1528, %v1754
      %v1756 = vsub.f32 1.0, %v1755
      %v1757 = vmul.f32 %v1754, %v1756
      %v1758 = vadd.f32 %v1754, %v1757
      %vm1759 = vweird.f32 %v1528
      %vm1760 = vweird.f32 %v1754
      %vm1761 = vmor %vm1759, %vm1760
      %v1762 = vsel %vm1761, %v1754, %v1758
      %v1763 = vand.u32 2147483647, %v1528
      %vm1764 = vcmp.eq.f32.partialorder %v1763, 8.507059e+37
      %v1765 = vand.u32 %v1528, 2147483648
      %v1766 = vor.u32 1.1754944e-38, %v1765
      %v1767 = vsel %vm1764, %v1766, %v1762
      %v1768 = vmul.f32 1.0, %v1767
      %v1769 = vmul.f32 %v1449, %v1543
      %v1770 = vmul.f32 %v1450, %v1558
      %v1771 = vmul.f32 %v1451, %v1573
      %v1772 = vmul.f32 %v1452, %v1588
      %v1773 = vmul.f32 %v1453, %v1603
      %v1774 = vmul.f32 %v1454, %v1618
      %v1775 = vmul.f32 %v1455, %v1633
      %v1776 = vmul.f32 %v1456, %v1648
      %v1777 = vmul.f32 %v1457, %v1663
      %v1778 = vmul.f32 %v1458, %v1678
      %v1779 = vmul.f32 %v1459, %v1693
      %v1780 = vmul.f32 %v1460, %v1708
      %v1781 = vmul.f32 %v1461, %v1723
      %v1782 = vmul.f32 %v1462, %v1738
      %v1783 = vmul.f32 %v1463, %v1753
      %v1784 = vmul.f32 %v1464, %v1768
      %1785 = vst [vmem:[%s360] sm:$0xff] %v1769
      %1786 = vst [vmem:[%s360 + $0x8] sm:$0xff] %v1770
      %1787 = vst [vmem:[%s360 + $0x10] sm:$0xff] %v1771
      %1788 = vst [vmem:[%s360 + $0x18] sm:$0xff] %v1772
      %1789 = vst [vmem:[%s360 + $0x20] sm:$0xff] %v1773
      %1790 = vst [vmem:[%s360 + $0x28] sm:$0xff] %v1774
      %1791 = vst [vmem:[%s360 + $0x30] sm:$0xff] %v1775
      %1792 = vst [vmem:[%s360 + $0x38] sm:$0xff] %v1776
      %1793 = vst [vmem:[%s360 + $0x40] sm:$0xff] %v1777
      %1794 = vst [vmem:[%s360 + $0x48] sm:$0xff] %v1778
      %1795 = vst [vmem:[%s360 + $0x50] sm:$0xff] %v1779
      %1796 = vst [vmem:[%s360 + $0x58] sm:$0xff] %v1780
      %1797 = vst [vmem:[%s360 + $0x60] sm:$0xff] %v1781
      %1798 = vst [vmem:[%s360 + $0x68] sm:$0xff] %v1782
      %1799 = vst [vmem:[%s360 + $0x70] sm:$0xff] %v1783
      %1800 = vst [vmem:[%s360 + $0x78] sm:$0xff] %v1784
      %s1801 = scalar_lea.vmem [#allocation2], 192
      %v1802 = vld [vmem:[%s1801] sm:$0xff]
      %v1803 = vld [vmem:[%s1801 + $0x8] sm:$0xff]
      %v1804 = vld [vmem:[%s1801 + $0x18] sm:$0xff]
      %v1805 = vld [vmem:[%s1801 + $0x20] sm:$0xff]
      %v1806 = vld [vmem:[%s1801 + $0x30] sm:$0xff]
      %v1807 = vld [vmem:[%s1801 + $0x38] sm:$0xff]
      %v1808 = vld [vmem:[%s1801 + $0x48] sm:$0xff]
      %v1809 = vld [vmem:[%s1801 + $0x50] sm:$0xff]
      %v1810 = vld [vmem:[%s1801 + $0x60] sm:$0xff]
      %v1811 = vld [vmem:[%s1801 + $0x68] sm:$0xff]
      %v1812 = vld [vmem:[%s1801 + $0x78] sm:$0xff]
      %v1813 = vld [vmem:[%s1801 + $0x80] sm:$0xff]
      %v1814 = vld [vmem:[%s1801 + $0x90] sm:$0xff]
      %v1815 = vld [vmem:[%s1801 + $0x98] sm:$0xff]
      %v1816 = vld [vmem:[%s1801 + $0xa8] sm:$0xff]
      %v1817 = vld [vmem:[%s1801 + $0xb0] sm:$0xff]
      %v1818 = vld [vmem:[%s1801 + $0xc0] sm:$0xff]
      %v1819 = vld [vmem:[%s1801 + $0xc8] sm:$0xff]
      %v1820 = vld [vmem:[%s1801 + $0xd8] sm:$0xff]
      %v1821 = vld [vmem:[%s1801 + $0xe0] sm:$0xff]
      %v1822 = vld [vmem:[%s1801 + $0xf0] sm:$0xff]
      %v1823 = vld [vmem:[%s1801 + $0xf8] sm:$0xff]
      %v1824 = vld [vmem:[%s1801 + $0x108] sm:$0xff]
      %v1825 = vld [vmem:[%s1801 + $0x110] sm:$0xff]
      %v1826 = vmul.f32 %v1802, %v506
      %v1827 = vmul.f32 %v1803, %v506
      %v1828 = vmul.f32 %v1804, %v506
      %v1829 = vmul.f32 %v1805, %v506
      %v1830 = vmul.f32 %v1806, %v506
      %v1831 = vmul.f32 %v1807, %v506
      %v1832 = vmul.f32 %v1808, %v506
      %v1833 = vmul.f32 %v1809, %v506
      %v1834 = vmul.f32 %v1810, %v506
      %v1835 = vmul.f32 %v1811, %v506
      %v1836 = vmul.f32 %v1812, %v506
      %v1837 = vmul.f32 %v1813, %v506
      %v1838 = vmul.f32 %v1814, %v506
      %v1839 = vmul.f32 %v1815, %v506
      %v1840 = vmul.f32 %v1816, %v506
      %v1841 = vmul.f32 %v1817, %v506
      %v1842 = vadd.f32 %v1826, 0.0
      %v1843 = vadd.f32 %v1827, 0.0
      %v1844 = vadd.f32 %v1828, 0.0
      %v1845 = vadd.f32 %v1829, 0.0
      %v1846 = vadd.f32 %v1830, 0.0
      %v1847 = vadd.f32 %v1831, 0.0
      %v1848 = vadd.f32 %v1832, 0.0
      %v1849 = vadd.f32 %v1833, 0.0
      %v1850 = vadd.f32 %v1834, 0.0
      %v1851 = vadd.f32 %v1835, 0.0
      %v1852 = vadd.f32 %v1836, 0.0
      %v1853 = vadd.f32 %v1837, 0.0
      %v1854 = vadd.f32 %v1838, 0.0
      %v1855 = vadd.f32 %v1839, 0.0
      %v1856 = vadd.f32 %v1840, 0.0
      %v1857 = vadd.f32 %v1841, 0.0
      %v1858 = vmul.f32 %v1804, %v539
      %v1859 = vmul.f32 %v1805, %v539
      %v1860 = vmul.f32 %v1806, %v539
      %v1861 = vmul.f32 %v1807, %v539
      %v1862 = vmul.f32 %v1808, %v539
      %v1863 = vmul.f32 %v1809, %v539
      %v1864 = vmul.f32 %v1810, %v539
      %v1865 = vmul.f32 %v1811, %v539
      %v1866 = vmul.f32 %v1812, %v539
      %v1867 = vmul.f32 %v1813, %v539
      %v1868 = vmul.f32 %v1814, %v539
      %v1869 = vmul.f32 %v1815, %v539
      %v1870 = vmul.f32 %v1816, %v539
      %v1871 = vmul.f32 %v1817, %v539
      %v1872 = vmul.f32 %v1818, %v539
      %v1873 = vmul.f32 %v1819, %v539
      %v1874 = vadd.f32 %v1842, %v1858
      %v1875 = vadd.f32 %v1843, %v1859
      %v1876 = vadd.f32 %v1844, %v1860
      %v1877 = vadd.f32 %v1845, %v1861
      %v1878 = vadd.f32 %v1846, %v1862
      %v1879 = vadd.f32 %v1847, %v1863
      %v1880 = vadd.f32 %v1848, %v1864
      %v1881 = vadd.f32 %v1849, %v1865
      %v1882 = vadd.f32 %v1850, %v1866
      %v1883 = vadd.f32 %v1851, %v1867
      %v1884 = vadd.f32 %v1852, %v1868
      %v1885 = vadd.f32 %v1853, %v1869
      %v1886 = vadd.f32 %v1854, %v1870
      %v1887 = vadd.f32 %v1855, %v1871
      %v1888 = vadd.f32 %v1856, %v1872
      %v1889 = vadd.f32 %v1857, %v1873
      %v1890 = vmul.f32 %v1806, %v572
      %v1891 = vmul.f32 %v1807, %v572
      %v1892 = vmul.f32 %v1808, %v572
      %v1893 = vmul.f32 %v1809, %v572
      %v1894 = vmul.f32 %v1810, %v572
      %v1895 = vmul.f32 %v1811, %v572
      %v1896 = vmul.f32 %v1812, %v572
      %v1897 = vmul.f32 %v1813, %v572
      %v1898 = vmul.f32 %v1814, %v572
      %v1899 = vmul.f32 %v1815, %v572
      %v1900 = vmul.f32 %v1816, %v572
      %v1901 = vmul.f32 %v1817, %v572
      %v1902 = vmul.f32 %v1818, %v572
      %v1903 = vmul.f32 %v1819, %v572
      %v1904 = vmul.f32 %v1820, %v572
      %v1905 = vmul.f32 %v1821, %v572
      %v1906 = vadd.f32 %v1874, %v1890
      %v1907 = vadd.f32 %v1875, %v1891
      %v1908 = vadd.f32 %v1876, %v1892
      %v1909 = vadd.f32 %v1877, %v1893
      %v1910 = vadd.f32 %v1878, %v1894
      %v1911 = vadd.f32 %v1879, %v1895
      %v1912 = vadd.f32 %v1880, %v1896
      %v1913 = vadd.f32 %v1881, %v1897
      %v1914 = vadd.f32 %v1882, %v1898
      %v1915 = vadd.f32 %v1883, %v1899
      %v1916 = vadd.f32 %v1884, %v1900
      %v1917 = vadd.f32 %v1885, %v1901
      %v1918 = vadd.f32 %v1886, %v1902
      %v1919 = vadd.f32 %v1887, %v1903
      %v1920 = vadd.f32 %v1888, %v1904
      %v1921 = vadd.f32 %v1889, %v1905
      %v1922 = vmul.f32 %v1808, %v605
      %v1923 = vmul.f32 %v1809, %v605
      %v1924 = vmul.f32 %v1810, %v605
      %v1925 = vmul.f32 %v1811, %v605
      %v1926 = vmul.f32 %v1812, %v605
      %v1927 = vmul.f32 %v1813, %v605
      %v1928 = vmul.f32 %v1814, %v605
      %v1929 = vmul.f32 %v1815, %v605
      %v1930 = vmul.f32 %v1816, %v605
      %v1931 = vmul.f32 %v1817, %v605
      %v1932 = vmul.f32 %v1818, %v605
      %v1933 = vmul.f32 %v1819, %v605
      %v1934 = vmul.f32 %v1820, %v605
      %v1935 = vmul.f32 %v1821, %v605
      %v1936 = vmul.f32 %v1822, %v605
      %v1937 = vmul.f32 %v1823, %v605
      %v1938 = vadd.f32 %v1906, %v1922
      %v1939 = vadd.f32 %v1907, %v1923
      %v1940 = vadd.f32 %v1908, %v1924
      %v1941 = vadd.f32 %v1909, %v1925
      %v1942 = vadd.f32 %v1910, %v1926
      %v1943 = vadd.f32 %v1911, %v1927
      %v1944 = vadd.f32 %v1912, %v1928
      %v1945 = vadd.f32 %v1913, %v1929
      %v1946 = vadd.f32 %v1914, %v1930
      %v1947 = vadd.f32 %v1915, %v1931
      %v1948 = vadd.f32 %v1916, %v1932
      %v1949 = vadd.f32 %v1917, %v1933
      %v1950 = vadd.f32 %v1918, %v1934
      %v1951 = vadd.f32 %v1919, %v1935
      %v1952 = vadd.f32 %v1920, %v1936
      %v1953 = vadd.f32 %v1921, %v1937
      %v1954 = vmul.f32 %v1810, %v638
      %v1955 = vmul.f32 %v1811, %v638
      %v1956 = vmul.f32 %v1812, %v638
      %v1957 = vmul.f32 %v1813, %v638
      %v1958 = vmul.f32 %v1814, %v638
      %v1959 = vmul.f32 %v1815, %v638
      %v1960 = vmul.f32 %v1816, %v638
      %v1961 = vmul.f32 %v1817, %v638
      %v1962 = vmul.f32 %v1818, %v638
      %v1963 = vmul.f32 %v1819, %v638
      %v1964 = vmul.f32 %v1820, %v638
      %v1965 = vmul.f32 %v1821, %v638
      %v1966 = vmul.f32 %v1822, %v638
      %v1967 = vmul.f32 %v1823, %v638
      %v1968 = vmul.f32 %v1824, %v638
      %v1969 = vmul.f32 %v1825, %v638
      %v1970 = vadd.f32 %v1938, %v1954
      %v1971 = vadd.f32 %v1939, %v1955
      %v1972 = vadd.f32 %v1940, %v1956
      %v1973 = vadd.f32 %v1941, %v1957
      %v1974 = vadd.f32 %v1942, %v1958
      %v1975 = vadd.f32 %v1943, %v1959
      %v1976 = vadd.f32 %v1944, %v1960
      %v1977 = vadd.f32 %v1945, %v1961
      %v1978 = vadd.f32 %v1946, %v1962
      %v1979 = vadd.f32 %v1947, %v1963
      %v1980 = vadd.f32 %v1948, %v1964
      %v1981 = vadd.f32 %v1949, %v1965
      %v1982 = vadd.f32 %v1950, %v1966
      %v1983 = vadd.f32 %v1951, %v1967
      %v1984 = vadd.f32 %v1952, %v1968
      %v1985 = vadd.f32 %v1953, %v1969
      %v1986 = vld [vmem:[%s1801 + $0x1] sm:$0xff]
      %v1987 = vld [vmem:[%s1801 + $0x9] sm:$0xff]
      %v1988 = vld [vmem:[%s1801 + $0x19] sm:$0xff]
      %v1989 = vld [vmem:[%s1801 + $0x21] sm:$0xff]
      %v1990 = vld [vmem:[%s1801 + $0x31] sm:$0xff]
      %v1991 = vld [vmem:[%s1801 + $0x39] sm:$0xff]
      %v1992 = vld [vmem:[%s1801 + $0x49] sm:$0xff]
      %v1993 = vld [vmem:[%s1801 + $0x51] sm:$0xff]
      %v1994 = vld [vmem:[%s1801 + $0x61] sm:$0xff]
      %v1995 = vld [vmem:[%s1801 + $0x69] sm:$0xff]
      %v1996 = vld [vmem:[%s1801 + $0x79] sm:$0xff]
      %v1997 = vld [vmem:[%s1801 + $0x81] sm:$0xff]
      %v1998 = vld [vmem:[%s1801 + $0x91] sm:$0xff]
      %v1999 = vld [vmem:[%s1801 + $0x99] sm:$0xff]
      %v2000 = vld [vmem:[%s1801 + $0xa9] sm:$0xff]
      %v2001 = vld [vmem:[%s1801 + $0xb1] sm:$0xff]
      %v2002 = vld [vmem:[%s1801 + $0xc1] sm:$0xff]
      %v2003 = vld [vmem:[%s1801 + $0xc9] sm:$0xff]
      %v2004 = vld [vmem:[%s1801 + $0xd9] sm:$0xff]
      %v2005 = vld [vmem:[%s1801 + $0xe1] sm:$0xff]
      %v2006 = vld [vmem:[%s1801 + $0xf1] sm:$0xff]
      %v2007 = vld [vmem:[%s1801 + $0xf9] sm:$0xff]
      %v2008 = vld [vmem:[%s1801 + $0x109] sm:$0xff]
      %v2009 = vld [vmem:[%s1801 + $0x111] sm:$0xff]
      %v2010 = vmul.f32 %v1986, %v695
      %v2011 = vmul.f32 %v1987, %v695
      %v2012 = vmul.f32 %v1988, %v695
      %v2013 = vmul.f32 %v1989, %v695
      %v2014 = vmul.f32 %v1990, %v695
      %v2015 = vmul.f32 %v1991, %v695
      %v2016 = vmul.f32 %v1992, %v695
      %v2017 = vmul.f32 %v1993, %v695
      %v2018 = vmul.f32 %v1994, %v695
      %v2019 = vmul.f32 %v1995, %v695
      %v2020 = vmul.f32 %v1996, %v695
      %v2021 = vmul.f32 %v1997, %v695
      %v2022 = vmul.f32 %v1998, %v695
      %v2023 = vmul.f32 %v1999, %v695
      %v2024 = vmul.f32 %v2000, %v695
      %v2025 = vmul.f32 %v2001, %v695
      %v2026 = vadd.f32 %v1970, %v2010
      %v2027 = vadd.f32 %v1971, %v2011
      %v2028 = vadd.f32 %v1972, %v2012
      %v2029 = vadd.f32 %v1973, %v2013
      %v2030 = vadd.f32 %v1974, %v2014
      %v2031 = vadd.f32 %v1975, %v2015
      %v2032 = vadd.f32 %v1976, %v2016
      %v2033 = vadd.f32 %v1977, %v2017
      %v2034 = vadd.f32 %v1978, %v2018
      %v2035 = vadd.f32 %v1979, %v2019
      %v2036 = vadd.f32 %v1980, %v2020
      %v2037 = vadd.f32 %v1981, %v2021
      %v2038 = vadd.f32 %v1982, %v2022
      %v2039 = vadd.f32 %v1983, %v2023
      %v2040 = vadd.f32 %v1984, %v2024
      %v2041 = vadd.f32 %v1985, %v2025
      %v2042 = vmul.f32 %v1988, %v728
      %v2043 = vmul.f32 %v1989, %v728
      %v2044 = vmul.f32 %v1990, %v728
      %v2045 = vmul.f32 %v1991, %v728
      %v2046 = vmul.f32 %v1992, %v728
      %v2047 = vmul.f32 %v1993, %v728
      %v2048 = vmul.f32 %v1994, %v728
      %v2049 = vmul.f32 %v1995, %v728
      %v2050 = vmul.f32 %v1996, %v728
      %v2051 = vmul.f32 %v1997, %v728
      %v2052 = vmul.f32 %v1998, %v728
      %v2053 = vmul.f32 %v1999, %v728
      %v2054 = vmul.f32 %v2000, %v728
      %v2055 = vmul.f32 %v2001, %v728
      %v2056 = vmul.f32 %v2002, %v728
      %v2057 = vmul.f32 %v2003, %v728
      %v2058 = vadd.f32 %v2026, %v2042
      %v2059 = vadd.f32 %v2027, %v2043
      %v2060 = vadd.f32 %v2028, %v2044
      %v2061 = vadd.f32 %v2029, %v2045
      %v2062 = vadd.f32 %v2030, %v2046
      %v2063 = vadd.f32 %v2031, %v2047
      %v2064 = vadd.f32 %v2032, %v2048
      %v2065 = vadd.f32 %v2033, %v2049
      %v2066 = vadd.f32 %v2034, %v2050
      %v2067 = vadd.f32 %v2035, %v2051
      %v2068 = vadd.f32 %v2036, %v2052
      %v2069 = vadd.f32 %v2037, %v2053
      %v2070 = vadd.f32 %v2038, %v2054
      %v2071 = vadd.f32 %v2039, %v2055
      %v2072 = vadd.f32 %v2040, %v2056
      %v2073 = vadd.f32 %v2041, %v2057
      %v2074 = vmul.f32 %v1990, %v761
      %v2075 = vmul.f32 %v1991, %v761
      %v2076 = vmul.f32 %v1992, %v761
      %v2077 = vmul.f32 %v1993, %v761
      %v2078 = vmul.f32 %v1994, %v761
      %v2079 = vmul.f32 %v1995, %v761
      %v2080 = vmul.f32 %v1996, %v761
      %v2081 = vmul.f32 %v1997, %v761
      %v2082 = vmul.f32 %v1998, %v761
      %v2083 = vmul.f32 %v1999, %v761
      %v2084 = vmul.f32 %v2000, %v761
      %v2085 = vmul.f32 %v2001, %v761
      %v2086 = vmul.f32 %v2002, %v761
      %v2087 = vmul.f32 %v2003, %v761
      %v2088 = vmul.f32 %v2004, %v761
      %v2089 = vmul.f32 %v2005, %v761
      %v2090 = vadd.f32 %v2058, %v2074
      %v2091 = vadd.f32 %v2059, %v2075
      %v2092 = vadd.f32 %v2060, %v2076
      %v2093 = vadd.f32 %v2061, %v2077
      %v2094 = vadd.f32 %v2062, %v2078
      %v2095 = vadd.f32 %v2063, %v2079
      %v2096 = vadd.f32 %v2064, %v2080
      %v2097 = vadd.f32 %v2065, %v2081
      %v2098 = vadd.f32 %v2066, %v2082
      %v2099 = vadd.f32 %v2067, %v2083
      %v2100 = vadd.f32 %v2068, %v2084
      %v2101 = vadd.f32 %v2069, %v2085
      %v2102 = vadd.f32 %v2070, %v2086
      %v2103 = vadd.f32 %v2071, %v2087
      %v2104 = vadd.f32 %v2072, %v2088
      %v2105 = vadd.f32 %v2073, %v2089
      %v2106 = vmul.f32 %v1992, %v794
      %v2107 = vmul.f32 %v1993, %v794
      %v2108 = vmul.f32 %v1994, %v794
      %v2109 = vmul.f32 %v1995, %v794
      %v2110 = vmul.f32 %v1996, %v794
      %v2111 = vmul.f32 %v1997, %v794
      %v2112 = vmul.f32 %v1998, %v794
      %v2113 = vmul.f32 %v1999, %v794
      %v2114 = vmul.f32 %v2000, %v794
      %v2115 = vmul.f32 %v2001, %v794
      %v2116 = vmul.f32 %v2002, %v794
      %v2117 = vmul.f32 %v2003, %v794
      %v2118 = vmul.f32 %v2004, %v794
      %v2119 = vmul.f32 %v2005, %v794
      %v2120 = vmul.f32 %v2006, %v794
      %v2121 = vmul.f32 %v2007, %v794
      %v2122 = vadd.f32 %v2090, %v2106
      %v2123 = vadd.f32 %v2091, %v2107
      %v2124 = vadd.f32 %v2092, %v2108
      %v2125 = vadd.f32 %v2093, %v2109
      %v2126 = vadd.f32 %v2094, %v2110
      %v2127 = vadd.f32 %v2095, %v2111
      %v2128 = vadd.f32 %v2096, %v2112
      %v2129 = vadd.f32 %v2097, %v2113
      %v2130 = vadd.f32 %v2098, %v2114
      %v2131 = vadd.f32 %v2099, %v2115
      %v2132 = vadd.f32 %v2100, %v2116
      %v2133 = vadd.f32 %v2101, %v2117
      %v2134 = vadd.f32 %v2102, %v2118
      %v2135 = vadd.f32 %v2103, %v2119
      %v2136 = vadd.f32 %v2104, %v2120
      %v2137 = vadd.f32 %v2105, %v2121
      %v2138 = vmul.f32 %v1994, %v827
      %v2139 = vmul.f32 %v1995, %v827
      %v2140 = vmul.f32 %v1996, %v827
      %v2141 = vmul.f32 %v1997, %v827
      %v2142 = vmul.f32 %v1998, %v827
      %v2143 = vmul.f32 %v1999, %v827
      %v2144 = vmul.f32 %v2000, %v827
      %v2145 = vmul.f32 %v2001, %v827
      %v2146 = vmul.f32 %v2002, %v827
      %v2147 = vmul.f32 %v2003, %v827
      %v2148 = vmul.f32 %v2004, %v827
      %v2149 = vmul.f32 %v2005, %v827
      %v2150 = vmul.f32 %v2006, %v827
      %v2151 = vmul.f32 %v2007, %v827
      %v2152 = vmul.f32 %v2008, %v827
      %v2153 = vmul.f32 %v2009, %v827
      %v2154 = vadd.f32 %v2122, %v2138
      %v2155 = vadd.f32 %v2123, %v2139
      %v2156 = vadd.f32 %v2124, %v2140
      %v2157 = vadd.f32 %v2125, %v2141
      %v2158 = vadd.f32 %v2126, %v2142
      %v2159 = vadd.f32 %v2127, %v2143
      %v2160 = vadd.f32 %v2128, %v2144
      %v2161 = vadd.f32 %v2129, %v2145
      %v2162 = vadd.f32 %v2130, %v2146
      %v2163 = vadd.f32 %v2131, %v2147
      %v2164 = vadd.f32 %v2132, %v2148
      %v2165 = vadd.f32 %v2133, %v2149
      %v2166 = vadd.f32 %v2134, %v2150
      %v2167 = vadd.f32 %v2135, %v2151
      %v2168 = vadd.f32 %v2136, %v2152
      %v2169 = vadd.f32 %v2137, %v2153
      %v2170 = vld [vmem:[%s1801 + $0x2] sm:$0xff]
      %v2171 = vld [vmem:[%s1801 + $0xa] sm:$0xff]
      %v2172 = vld [vmem:[%s1801 + $0x1a] sm:$0xff]
      %v2173 = vld [vmem:[%s1801 + $0x22] sm:$0xff]
      %v2174 = vld [vmem:[%s1801 + $0x32] sm:$0xff]
      %v2175 = vld [vmem:[%s1801 + $0x3a] sm:$0xff]
      %v2176 = vld [vmem:[%s1801 + $0x4a] sm:$0xff]
      %v2177 = vld [vmem:[%s1801 + $0x52] sm:$0xff]
      %v2178 = vld [vmem:[%s1801 + $0x62] sm:$0xff]
      %v2179 = vld [vmem:[%s1801 + $0x6a] sm:$0xff]
      %v2180 = vld [vmem:[%s1801 + $0x7a] sm:$0xff]
      %v2181 = vld [vmem:[%s1801 + $0x82] sm:$0xff]
      %v2182 = vld [vmem:[%s1801 + $0x92] sm:$0xff]
      %v2183 = vld [vmem:[%s1801 + $0x9a] sm:$0xff]
      %v2184 = vld [vmem:[%s1801 + $0xaa] sm:$0xff]
      %v2185 = vld [vmem:[%s1801 + $0xb2] sm:$0xff]
      %v2186 = vld [vmem:[%s1801 + $0xc2] sm:$0xff]
      %v2187 = vld [vmem:[%s1801 + $0xca] sm:$0xff]
      %v2188 = vld [vmem:[%s1801 + $0xda] sm:$0xff]
      %v2189 = vld [vmem:[%s1801 + $0xe2] sm:$0xff]
      %v2190 = vld [vmem:[%s1801 + $0xf2] sm:$0xff]
      %v2191 = vld [vmem:[%s1801 + $0xfa] sm:$0xff]
      %v2192 = vld [vmem:[%s1801 + $0x10a] sm:$0xff]
      %v2193 = vld [vmem:[%s1801 + $0x112] sm:$0xff]
      %v2194 = vmul.f32 %v2170, %v884
      %v2195 = vmul.f32 %v2171, %v884
      %v2196 = vmul.f32 %v2172, %v884
      %v2197 = vmul.f32 %v2173, %v884
      %v2198 = vmul.f32 %v2174, %v884
      %v2199 = vmul.f32 %v2175, %v884
      %v2200 = vmul.f32 %v2176, %v884
      %v2201 = vmul.f32 %v2177, %v884
      %v2202 = vmul.f32 %v2178, %v884
      %v2203 = vmul.f32 %v2179, %v884
      %v2204 = vmul.f32 %v2180, %v884
      %v2205 = vmul.f32 %v2181, %v884
      %v2206 = vmul.f32 %v2182, %v884
      %v2207 = vmul.f32 %v2183, %v884
      %v2208 = vmul.f32 %v2184, %v884
      %v2209 = vmul.f32 %v2185, %v884
      %v2210 = vadd.f32 %v2154, %v2194
      %v2211 = vadd.f32 %v2155, %v2195
      %v2212 = vadd.f32 %v2156, %v2196
      %v2213 = vadd.f32 %v2157, %v2197
      %v2214 = vadd.f32 %v2158, %v2198
      %v2215 = vadd.f32 %v2159, %v2199
      %v2216 = vadd.f32 %v2160, %v2200
      %v2217 = vadd.f32 %v2161, %v2201
      %v2218 = vadd.f32 %v2162, %v2202
      %v2219 = vadd.f32 %v2163, %v2203
      %v2220 = vadd.f32 %v2164, %v2204
      %v2221 = vadd.f32 %v2165, %v2205
      %v2222 = vadd.f32 %v2166, %v2206
      %v2223 = vadd.f32 %v2167, %v2207
      %v2224 = vadd.f32 %v2168, %v2208
      %v2225 = vadd.f32 %v2169, %v2209
      %v2226 = vmul.f32 %v2172, %v917
      %v2227 = vmul.f32 %v2173, %v917
      %v2228 = vmul.f32 %v2174, %v917
      %v2229 = vmul.f32 %v2175, %v917
      %v2230 = vmul.f32 %v2176, %v917
      %v2231 = vmul.f32 %v2177, %v917
      %v2232 = vmul.f32 %v2178, %v917
      %v2233 = vmul.f32 %v2179, %v917
      %v2234 = vmul.f32 %v2180, %v917
      %v2235 = vmul.f32 %v2181, %v917
      %v2236 = vmul.f32 %v2182, %v917
      %v2237 = vmul.f32 %v2183, %v917
      %v2238 = vmul.f32 %v2184, %v917
      %v2239 = vmul.f32 %v2185, %v917
      %v2240 = vmul.f32 %v2186, %v917
      %v2241 = vmul.f32 %v2187, %v917
      %v2242 = vadd.f32 %v2210, %v2226
      %v2243 = vadd.f32 %v2211, %v2227
      %v2244 = vadd.f32 %v2212, %v2228
      %v2245 = vadd.f32 %v2213, %v2229
      %v2246 = vadd.f32 %v2214, %v2230
      %v2247 = vadd.f32 %v2215, %v2231
      %v2248 = vadd.f32 %v2216, %v2232
      %v2249 = vadd.f32 %v2217, %v2233
      %v2250 = vadd.f32 %v2218, %v2234
      %v2251 = vadd.f32 %v2219, %v2235
      %v2252 = vadd.f32 %v2220, %v2236
      %v2253 = vadd.f32 %v2221, %v2237
      %v2254 = vadd.f32 %v2222, %v2238
      %v2255 = vadd.f32 %v2223, %v2239
      %v2256 = vadd.f32 %v2224, %v2240
      %v2257 = vadd.f32 %v2225, %v2241
      %v2258 = vmul.f32 %v2174, %v950
      %v2259 = vmul.f32 %v2175, %v950
      %v2260 = vmul.f32 %v2176, %v950
      %v2261 = vmul.f32 %v2177, %v950
      %v2262 = vmul.f32 %v2178, %v950
      %v2263 = vmul.f32 %v2179, %v950
      %v2264 = vmul.f32 %v2180, %v950
      %v2265 = vmul.f32 %v2181, %v950
      %v2266 = vmul.f32 %v2182, %v950
      %v2267 = vmul.f32 %v2183, %v950
      %v2268 = vmul.f32 %v2184, %v950
      %v2269 = vmul.f32 %v2185, %v950
      %v2270 = vmul.f32 %v2186, %v950
      %v2271 = vmul.f32 %v2187, %v950
      %v2272 = vmul.f32 %v2188, %v950
      %v2273 = vmul.f32 %v2189, %v950
      %v2274 = vadd.f32 %v2242, %v2258
      %v2275 = vadd.f32 %v2243, %v2259
      %v2276 = vadd.f32 %v2244, %v2260
      %v2277 = vadd.f32 %v2245, %v2261
      %v2278 = vadd.f32 %v2246, %v2262
      %v2279 = vadd.f32 %v2247, %v2263
      %v2280 = vadd.f32 %v2248, %v2264
      %v2281 = vadd.f32 %v2249, %v2265
      %v2282 = vadd.f32 %v2250, %v2266
      %v2283 = vadd.f32 %v2251, %v2267
      %v2284 = vadd.f32 %v2252, %v2268
      %v2285 = vadd.f32 %v2253, %v2269
      %v2286 = vadd.f32 %v2254, %v2270
      %v2287 = vadd.f32 %v2255, %v2271
      %v2288 = vadd.f32 %v2256, %v2272
      %v2289 = vadd.f32 %v2257, %v2273
      %v2290 = vmul.f32 %v2176, %v983
      %v2291 = vmul.f32 %v2177, %v983
      %v2292 = vmul.f32 %v2178, %v983
      %v2293 = vmul.f32 %v2179, %v983
      %v2294 = vmul.f32 %v2180, %v983
      %v2295 = vmul.f32 %v2181, %v983
      %v2296 = vmul.f32 %v2182, %v983
      %v2297 = vmul.f32 %v2183, %v983
      %v2298 = vmul.f32 %v2184, %v983
      %v2299 = vmul.f32 %v2185, %v983
      %v2300 = vmul.f32 %v2186, %v983
      %v2301 = vmul.f32 %v2187, %v983
      %v2302 = vmul.f32 %v2188, %v983
      %v2303 = vmul.f32 %v2189, %v983
      %v2304 = vmul.f32 %v2190, %v983
      %v2305 = vmul.f32 %v2191, %v983
      %v2306 = vadd.f32 %v2274, %v2290
      %v2307 = vadd.f32 %v2275, %v2291
      %v2308 = vadd.f32 %v2276, %v2292
      %v2309 = vadd.f32 %v2277, %v2293
      %v2310 = vadd.f32 %v2278, %v2294
      %v2311 = vadd.f32 %v2279, %v2295
      %v2312 = vadd.f32 %v2280, %v2296
      %v2313 = vadd.f32 %v2281, %v2297
      %v2314 = vadd.f32 %v2282, %v2298
      %v2315 = vadd.f32 %v2283, %v2299
      %v2316 = vadd.f32 %v2284, %v2300
      %v2317 = vadd.f32 %v2285, %v2301
      %v2318 = vadd.f32 %v2286, %v2302
      %v2319 = vadd.f32 %v2287, %v2303
      %v2320 = vadd.f32 %v2288, %v2304
      %v2321 = vadd.f32 %v2289, %v2305
      %v2322 = vmul.f32 %v2178, %v1016
      %v2323 = vmul.f32 %v2179, %v1016
      %v2324 = vmul.f32 %v2180, %v1016
      %v2325 = vmul.f32 %v2181, %v1016
      %v2326 = vmul.f32 %v2182, %v1016
      %v2327 = vmul.f32 %v2183, %v1016
      %v2328 = vmul.f32 %v2184, %v1016
      %v2329 = vmul.f32 %v2185, %v1016
      %v2330 = vmul.f32 %v2186, %v1016
      %v2331 = vmul.f32 %v2187, %v1016
      %v2332 = vmul.f32 %v2188, %v1016
      %v2333 = vmul.f32 %v2189, %v1016
      %v2334 = vmul.f32 %v2190, %v1016
      %v2335 = vmul.f32 %v2191, %v1016
      %v2336 = vmul.f32 %v2192, %v1016
      %v2337 = vmul.f32 %v2193, %v1016
      %v2338 = vadd.f32 %v2306, %v2322
      %v2339 = vadd.f32 %v2307, %v2323
      %v2340 = vadd.f32 %v2308, %v2324
      %v2341 = vadd.f32 %v2309, %v2325
      %v2342 = vadd.f32 %v2310, %v2326
      %v2343 = vadd.f32 %v2311, %v2327
      %v2344 = vadd.f32 %v2312, %v2328
      %v2345 = vadd.f32 %v2313, %v2329
      %v2346 = vadd.f32 %v2314, %v2330
      %v2347 = vadd.f32 %v2315, %v2331
      %v2348 = vadd.f32 %v2316, %v2332
      %v2349 = vadd.f32 %v2317, %v2333
      %v2350 = vadd.f32 %v2318, %v2334
      %v2351 = vadd.f32 %v2319, %v2335
      %v2352 = vadd.f32 %v2320, %v2336
      %v2353 = vadd.f32 %v2321, %v2337
      %v2354 = vld [vmem:[%s1801 + $0x3] sm:$0xff]
      %v2355 = vld [vmem:[%s1801 + $0xb] sm:$0xff]
      %v2356 = vld [vmem:[%s1801 + $0x1b] sm:$0xff]
      %v2357 = vld [vmem:[%s1801 + $0x23] sm:$0xff]
      %v2358 = vld [vmem:[%s1801 + $0x33] sm:$0xff]
      %v2359 = vld [vmem:[%s1801 + $0x3b] sm:$0xff]
      %v2360 = vld [vmem:[%s1801 + $0x4b] sm:$0xff]
      %v2361 = vld [vmem:[%s1801 + $0x53] sm:$0xff]
      %v2362 = vld [vmem:[%s1801 + $0x63] sm:$0xff]
      %v2363 = vld [vmem:[%s1801 + $0x6b] sm:$0xff]
      %v2364 = vld [vmem:[%s1801 + $0x7b] sm:$0xff]
      %v2365 = vld [vmem:[%s1801 + $0x83] sm:$0xff]
      %v2366 = vld [vmem:[%s1801 + $0x93] sm:$0xff]
      %v2367 = vld [vmem:[%s1801 + $0x9b] sm:$0xff]
      %v2368 = vld [vmem:[%s1801 + $0xab] sm:$0xff]
      %v2369 = vld [vmem:[%s1801 + $0xb3] sm:$0xff]
      %v2370 = vld [vmem:[%s1801 + $0xc3] sm:$0xff]
      %v2371 = vld [vmem:[%s1801 + $0xcb] sm:$0xff]
      %v2372 = vld [vmem:[%s1801 + $0xdb] sm:$0xff]
      %v2373 = vld [vmem:[%s1801 + $0xe3] sm:$0xff]
      %v2374 = vld [vmem:[%s1801 + $0xf3] sm:$0xff]
      %v2375 = vld [vmem:[%s1801 + $0xfb] sm:$0xff]
      %v2376 = vld [vmem:[%s1801 + $0x10b] sm:$0xff]
      %v2377 = vld [vmem:[%s1801 + $0x113] sm:$0xff]
      %v2378 = vmul.f32 %v2354, %v1073
      %v2379 = vmul.f32 %v2355, %v1073
      %v2380 = vmul.f32 %v2356, %v1073
      %v2381 = vmul.f32 %v2357, %v1073
      %v2382 = vmul.f32 %v2358, %v1073
      %v2383 = vmul.f32 %v2359, %v1073
      %v2384 = vmul.f32 %v2360, %v1073
      %v2385 = vmul.f32 %v2361, %v1073
      %v2386 = vmul.f32 %v2362, %v1073
      %v2387 = vmul.f32 %v2363, %v1073
      %v2388 = vmul.f32 %v2364, %v1073
      %v2389 = vmul.f32 %v2365, %v1073
      %v2390 = vmul.f32 %v2366, %v1073
      %v2391 = vmul.f32 %v2367, %v1073
      %v2392 = vmul.f32 %v2368, %v1073
      %v2393 = vmul.f32 %v2369, %v1073
      %v2394 = vadd.f32 %v2338, %v2378
      %v2395 = vadd.f32 %v2339, %v2379
      %v2396 = vadd.f32 %v2340, %v2380
      %v2397 = vadd.f32 %v2341, %v2381
      %v2398 = vadd.f32 %v2342, %v2382
      %v2399 = vadd.f32 %v2343, %v2383
      %v2400 = vadd.f32 %v2344, %v2384
      %v2401 = vadd.f32 %v2345, %v2385
      %v2402 = vadd.f32 %v2346, %v2386
      %v2403 = vadd.f32 %v2347, %v2387
      %v2404 = vadd.f32 %v2348, %v2388
      %v2405 = vadd.f32 %v2349, %v2389
      %v2406 = vadd.f32 %v2350, %v2390
      %v2407 = vadd.f32 %v2351, %v2391
      %v2408 = vadd.f32 %v2352, %v2392
      %v2409 = vadd.f32 %v2353, %v2393
      %v2410 = vmul.f32 %v2356, %v1106
      %v2411 = vmul.f32 %v2357, %v1106
      %v2412 = vmul.f32 %v2358, %v1106
      %v2413 = vmul.f32 %v2359, %v1106
      %v2414 = vmul.f32 %v2360, %v1106
      %v2415 = vmul.f32 %v2361, %v1106
      %v2416 = vmul.f32 %v2362, %v1106
      %v2417 = vmul.f32 %v2363, %v1106
      %v2418 = vmul.f32 %v2364, %v1106
      %v2419 = vmul.f32 %v2365, %v1106
      %v2420 = vmul.f32 %v2366, %v1106
      %v2421 = vmul.f32 %v2367, %v1106
      %v2422 = vmul.f32 %v2368, %v1106
      %v2423 = vmul.f32 %v2369, %v1106
      %v2424 = vmul.f32 %v2370, %v1106
      %v2425 = vmul.f32 %v2371, %v1106
      %v2426 = vadd.f32 %v2394, %v2410
      %v2427 = vadd.f32 %v2395, %v2411
      %v2428 = vadd.f32 %v2396, %v2412
      %v2429 = vadd.f32 %v2397, %v2413
      %v2430 = vadd.f32 %v2398, %v2414
      %v2431 = vadd.f32 %v2399, %v2415
      %v2432 = vadd.f32 %v2400, %v2416
      %v2433 = vadd.f32 %v2401, %v2417
      %v2434 = vadd.f32 %v2402, %v2418
      %v2435 = vadd.f32 %v2403, %v2419
      %v2436 = vadd.f32 %v2404, %v2420
      %v2437 = vadd.f32 %v2405, %v2421
      %v2438 = vadd.f32 %v2406, %v2422
      %v2439 = vadd.f32 %v2407, %v2423
      %v2440 = vadd.f32 %v2408, %v2424
      %v2441 = vadd.f32 %v2409, %v2425
      %v2442 = vmul.f32 %v2358, %v1139
      %v2443 = vmul.f32 %v2359, %v1139
      %v2444 = vmul.f32 %v2360, %v1139
      %v2445 = vmul.f32 %v2361, %v1139
      %v2446 = vmul.f32 %v2362, %v1139
      %v2447 = vmul.f32 %v2363, %v1139
      %v2448 = vmul.f32 %v2364, %v1139
      %v2449 = vmul.f32 %v2365, %v1139
      %v2450 = vmul.f32 %v2366, %v1139
      %v2451 = vmul.f32 %v2367, %v1139
      %v2452 = vmul.f32 %v2368, %v1139
      %v2453 = vmul.f32 %v2369, %v1139
      %v2454 = vmul.f32 %v2370, %v1139
      %v2455 = vmul.f32 %v2371, %v1139
      %v2456 = vmul.f32 %v2372, %v1139
      %v2457 = vmul.f32 %v2373, %v1139
      %v2458 = vadd.f32 %v2426, %v2442
      %v2459 = vadd.f32 %v2427, %v2443
      %v2460 = vadd.f32 %v2428, %v2444
      %v2461 = vadd.f32 %v2429, %v2445
      %v2462 = vadd.f32 %v2430, %v2446
      %v2463 = vadd.f32 %v2431, %v2447
      %v2464 = vadd.f32 %v2432, %v2448
      %v2465 = vadd.f32 %v2433, %v2449
      %v2466 = vadd.f32 %v2434, %v2450
      %v2467 = vadd.f32 %v2435, %v2451
      %v2468 = vadd.f32 %v2436, %v2452
      %v2469 = vadd.f32 %v2437, %v2453
      %v2470 = vadd.f32 %v2438, %v2454
      %v2471 = vadd.f32 %v2439, %v2455
      %v2472 = vadd.f32 %v2440, %v2456
      %v2473 = vadd.f32 %v2441, %v2457
      %v2474 = vmul.f32 %v2360, %v1172
      %v2475 = vmul.f32 %v2361, %v1172
      %v2476 = vmul.f32 %v2362, %v1172
      %v2477 = vmul.f32 %v2363, %v1172
      %v2478 = vmul.f32 %v2364, %v1172
      %v2479 = vmul.f32 %v2365, %v1172
      %v2480 = vmul.f32 %v2366, %v1172
      %v2481 = vmul.f32 %v2367, %v1172
      %v2482 = vmul.f32 %v2368, %v1172
      %v2483 = vmul.f32 %v2369, %v1172
      %v2484 = vmul.f32 %v2370, %v1172
      %v2485 = vmul.f32 %v2371, %v1172
      %v2486 = vmul.f32 %v2372, %v1172
      %v2487 = vmul.f32 %v2373, %v1172
      %v2488 = vmul.f32 %v2374, %v1172
      %v2489 = vmul.f32 %v2375, %v1172
      %v2490 = vadd.f32 %v2458, %v2474
      %v2491 = vadd.f32 %v2459, %v2475
      %v2492 = vadd.f32 %v2460, %v2476
      %v2493 = vadd.f32 %v2461, %v2477
      %v2494 = vadd.f32 %v2462, %v2478
      %v2495 = vadd.f32 %v2463, %v2479
      %v2496 = vadd.f32 %v2464, %v2480
      %v2497 = vadd.f32 %v2465, %v2481
      %v2498 = vadd.f32 %v2466, %v2482
      %v2499 = vadd.f32 %v2467, %v2483
      %v2500 = vadd.f32 %v2468, %v2484
      %v2501 = vadd.f32 %v2469, %v2485
      %v2502 = vadd.f32 %v2470, %v2486
      %v2503 = vadd.f32 %v2471, %v2487
      %v2504 = vadd.f32 %v2472, %v2488
      %v2505 = vadd.f32 %v2473, %v2489
      %v2506 = vmul.f32 %v2362, %v1205
      %v2507 = vmul.f32 %v2363, %v1205
      %v2508 = vmul.f32 %v2364, %v1205
      %v2509 = vmul.f32 %v2365, %v1205
      %v2510 = vmul.f32 %v2366, %v1205
      %v2511 = vmul.f32 %v2367, %v1205
      %v2512 = vmul.f32 %v2368, %v1205
      %v2513 = vmul.f32 %v2369, %v1205
      %v2514 = vmul.f32 %v2370, %v1205
      %v2515 = vmul.f32 %v2371, %v1205
      %v2516 = vmul.f32 %v2372, %v1205
      %v2517 = vmul.f32 %v2373, %v1205
      %v2518 = vmul.f32 %v2374, %v1205
      %v2519 = vmul.f32 %v2375, %v1205
      %v2520 = vmul.f32 %v2376, %v1205
      %v2521 = vmul.f32 %v2377, %v1205
      %v2522 = vadd.f32 %v2490, %v2506
      %v2523 = vadd.f32 %v2491, %v2507
      %v2524 = vadd.f32 %v2492, %v2508
      %v2525 = vadd.f32 %v2493, %v2509
      %v2526 = vadd.f32 %v2494, %v2510
      %v2527 = vadd.f32 %v2495, %v2511
      %v2528 = vadd.f32 %v2496, %v2512
      %v2529 = vadd.f32 %v2497, %v2513
      %v2530 = vadd.f32 %v2498, %v2514
      %v2531 = vadd.f32 %v2499, %v2515
      %v2532 = vadd.f32 %v2500, %v2516
      %v2533 = vadd.f32 %v2501, %v2517
      %v2534 = vadd.f32 %v2502, %v2518
      %v2535 = vadd.f32 %v2503, %v2519
      %v2536 = vadd.f32 %v2504, %v2520
      %v2537 = vadd.f32 %v2505, %v2521
      %v2538 = vld [vmem:[%s1801 + $0x4] sm:$0xff]
      %v2539 = vld [vmem:[%s1801 + $0xc] sm:$0xff]
      %v2540 = vld [vmem:[%s1801 + $0x1c] sm:$0xff]
      %v2541 = vld [vmem:[%s1801 + $0x24] sm:$0xff]
      %v2542 = vld [vmem:[%s1801 + $0x34] sm:$0xff]
      %v2543 = vld [vmem:[%s1801 + $0x3c] sm:$0xff]
      %v2544 = vld [vmem:[%s1801 + $0x4c] sm:$0xff]
      %v2545 = vld [vmem:[%s1801 + $0x54] sm:$0xff]
      %v2546 = vld [vmem:[%s1801 + $0x64] sm:$0xff]
      %v2547 = vld [vmem:[%s1801 + $0x6c] sm:$0xff]
      %v2548 = vld [vmem:[%s1801 + $0x7c] sm:$0xff]
      %v2549 = vld [vmem:[%s1801 + $0x84] sm:$0xff]
      %v2550 = vld [vmem:[%s1801 + $0x94] sm:$0xff]
      %v2551 = vld [vmem:[%s1801 + $0x9c] sm:$0xff]
      %v2552 = vld [vmem:[%s1801 + $0xac] sm:$0xff]
      %v2553 = vld [vmem:[%s1801 + $0xb4] sm:$0xff]
      %v2554 = vld [vmem:[%s1801 + $0xc4] sm:$0xff]
      %v2555 = vld [vmem:[%s1801 + $0xcc] sm:$0xff]
      %v2556 = vld [vmem:[%s1801 + $0xdc] sm:$0xff]
      %v2557 = vld [vmem:[%s1801 + $0xe4] sm:$0xff]
      %v2558 = vld [vmem:[%s1801 + $0xf4] sm:$0xff]
      %v2559 = vld [vmem:[%s1801 + $0xfc] sm:$0xff]
      %v2560 = vld [vmem:[%s1801 + $0x10c] sm:$0xff]
      %v2561 = vld [vmem:[%s1801 + $0x114] sm:$0xff]
      %v2562 = vmul.f32 %v2538, %v1262
      %v2563 = vmul.f32 %v2539, %v1262
      %v2564 = vmul.f32 %v2540, %v1262
      %v2565 = vmul.f32 %v2541, %v1262
      %v2566 = vmul.f32 %v2542, %v1262
      %v2567 = vmul.f32 %v2543, %v1262
      %v2568 = vmul.f32 %v2544, %v1262
      %v2569 = vmul.f32 %v2545, %v1262
      %v2570 = vmul.f32 %v2546, %v1262
      %v2571 = vmul.f32 %v2547, %v1262
      %v2572 = vmul.f32 %v2548, %v1262
      %v2573 = vmul.f32 %v2549, %v1262
      %v2574 = vmul.f32 %v2550, %v1262
      %v2575 = vmul.f32 %v2551, %v1262
      %v2576 = vmul.f32 %v2552, %v1262
      %v2577 = vmul.f32 %v2553, %v1262
      %v2578 = vadd.f32 %v2522, %v2562
      %v2579 = vadd.f32 %v2523, %v2563
      %v2580 = vadd.f32 %v2524, %v2564
      %v2581 = vadd.f32 %v2525, %v2565
      %v2582 = vadd.f32 %v2526, %v2566
      %v2583 = vadd.f32 %v2527, %v2567
      %v2584 = vadd.f32 %v2528, %v2568
      %v2585 = vadd.f32 %v2529, %v2569
      %v2586 = vadd.f32 %v2530, %v2570
      %v2587 = vadd.f32 %v2531, %v2571
      %v2588 = vadd.f32 %v2532, %v2572
      %v2589 = vadd.f32 %v2533, %v2573
      %v2590 = vadd.f32 %v2534, %v2574
      %v2591 = vadd.f32 %v2535, %v2575
      %v2592 = vadd.f32 %v2536, %v2576
      %v2593 = vadd.f32 %v2537, %v2577
      %v2594 = vmul.f32 %v2540, %v1295
      %v2595 = vmul.f32 %v2541, %v1295
      %v2596 = vmul.f32 %v2542, %v1295
      %v2597 = vmul.f32 %v2543, %v1295
      %v2598 = vmul.f32 %v2544, %v1295
      %v2599 = vmul.f32 %v2545, %v1295
      %v2600 = vmul.f32 %v2546, %v1295
      %v2601 = vmul.f32 %v2547, %v1295
      %v2602 = vmul.f32 %v2548, %v1295
      %v2603 = vmul.f32 %v2549, %v1295
      %v2604 = vmul.f32 %v2550, %v1295
      %v2605 = vmul.f32 %v2551, %v1295
      %v2606 = vmul.f32 %v2552, %v1295
      %v2607 = vmul.f32 %v2553, %v1295
      %v2608 = vmul.f32 %v2554, %v1295
      %v2609 = vmul.f32 %v2555, %v1295
      %v2610 = vadd.f32 %v2578, %v2594
      %v2611 = vadd.f32 %v2579, %v2595
      %v2612 = vadd.f32 %v2580, %v2596
      %v2613 = vadd.f32 %v2581, %v2597
      %v2614 = vadd.f32 %v2582, %v2598
      %v2615 = vadd.f32 %v2583, %v2599
      %v2616 = vadd.f32 %v2584, %v2600
      %v2617 = vadd.f32 %v2585, %v2601
      %v2618 = vadd.f32 %v2586, %v2602
      %v2619 = vadd.f32 %v2587, %v2603
      %v2620 = vadd.f32 %v2588, %v2604
      %v2621 = vadd.f32 %v2589, %v2605
      %v2622 = vadd.f32 %v2590, %v2606
      %v2623 = vadd.f32 %v2591, %v2607
      %v2624 = vadd.f32 %v2592, %v2608
      %v2625 = vadd.f32 %v2593, %v2609
      %v2626 = vmul.f32 %v2542, %v1328
      %v2627 = vmul.f32 %v2543, %v1328
      %v2628 = vmul.f32 %v2544, %v1328
      %v2629 = vmul.f32 %v2545, %v1328
      %v2630 = vmul.f32 %v2546, %v1328
      %v2631 = vmul.f32 %v2547, %v1328
      %v2632 = vmul.f32 %v2548, %v1328
      %v2633 = vmul.f32 %v2549, %v1328
      %v2634 = vmul.f32 %v2550, %v1328
      %v2635 = vmul.f32 %v2551, %v1328
      %v2636 = vmul.f32 %v2552, %v1328
      %v2637 = vmul.f32 %v2553, %v1328
      %v2638 = vmul.f32 %v2554, %v1328
      %v2639 = vmul.f32 %v2555, %v1328
      %v2640 = vmul.f32 %v2556, %v1328
      %v2641 = vmul.f32 %v2557, %v1328
      %v2642 = vadd.f32 %v2610, %v2626
      %v2643 = vadd.f32 %v2611, %v2627
      %v2644 = vadd.f32 %v2612, %v2628
      %v2645 = vadd.f32 %v2613, %v2629
      %v2646 = vadd.f32 %v2614, %v2630
      %v2647 = vadd.f32 %v2615, %v2631
      %v2648 = vadd.f32 %v2616, %v2632
      %v2649 = vadd.f32 %v2617, %v2633
      %v2650 = vadd.f32 %v2618, %v2634
      %v2651 = vadd.f32 %v2619, %v2635
      %v2652 = vadd.f32 %v2620, %v2636
      %v2653 = vadd.f32 %v2621, %v2637
      %v2654 = vadd.f32 %v2622, %v2638
      %v2655 = vadd.f32 %v2623, %v2639
      %v2656 = vadd.f32 %v2624, %v2640
      %v2657 = vadd.f32 %v2625, %v2641
      %v2658 = vmul.f32 %v2544, %v1361
      %v2659 = vmul.f32 %v2545, %v1361
      %v2660 = vmul.f32 %v2546, %v1361
      %v2661 = vmul.f32 %v2547, %v1361
      %v2662 = vmul.f32 %v2548, %v1361
      %v2663 = vmul.f32 %v2549, %v1361
      %v2664 = vmul.f32 %v2550, %v1361
      %v2665 = vmul.f32 %v2551, %v1361
      %v2666 = vmul.f32 %v2552, %v1361
      %v2667 = vmul.f32 %v2553, %v1361
      %v2668 = vmul.f32 %v2554, %v1361
      %v2669 = vmul.f32 %v2555, %v1361
      %v2670 = vmul.f32 %v2556, %v1361
      %v2671 = vmul.f32 %v2557, %v1361
      %v2672 = vmul.f32 %v2558, %v1361
      %v2673 = vmul.f32 %v2559, %v1361
      %v2674 = vadd.f32 %v2642, %v2658
      %v2675 = vadd.f32 %v2643, %v2659
      %v2676 = vadd.f32 %v2644, %v2660
      %v2677 = vadd.f32 %v2645, %v2661
      %v2678 = vadd.f32 %v2646, %v2662
      %v2679 = vadd.f32 %v2647, %v2663
      %v2680 = vadd.f32 %v2648, %v2664
      %v2681 = vadd.f32 %v2649, %v2665
      %v2682 = vadd.f32 %v2650, %v2666
      %v2683 = vadd.f32 %v2651, %v2667
      %v2684 = vadd.f32 %v2652, %v2668
      %v2685 = vadd.f32 %v2653, %v2669
      %v2686 = vadd.f32 %v2654, %v2670
      %v2687 = vadd.f32 %v2655, %v2671
      %v2688 = vadd.f32 %v2656, %v2672
      %v2689 = vadd.f32 %v2657, %v2673
      %v2690 = vmul.f32 %v2546, %v1394
      %v2691 = vmul.f32 %v2547, %v1394
      %v2692 = vmul.f32 %v2548, %v1394
      %v2693 = vmul.f32 %v2549, %v1394
      %v2694 = vmul.f32 %v2550, %v1394
      %v2695 = vmul.f32 %v2551, %v1394
      %v2696 = vmul.f32 %v2552, %v1394
      %v2697 = vmul.f32 %v2553, %v1394
      %v2698 = vmul.f32 %v2554, %v1394
      %v2699 = vmul.f32 %v2555, %v1394
      %v2700 = vmul.f32 %v2556, %v1394
      %v2701 = vmul.f32 %v2557, %v1394
      %v2702 = vmul.f32 %v2558, %v1394
      %v2703 = vmul.f32 %v2559, %v1394
      %v2704 = vmul.f32 %v2560, %v1394
      %v2705 = vmul.f32 %v2561, %v1394
      %v2706 = vadd.f32 %v2674, %v2690
      %v2707 = vadd.f32 %v2675, %v2691
      %v2708 = vadd.f32 %v2676, %v2692
      %v2709 = vadd.f32 %v2677, %v2693
      %v2710 = vadd.f32 %v2678, %v2694
      %v2711 = vadd.f32 %v2679, %v2695
      %v2712 = vadd.f32 %v2680, %v2696
      %v2713 = vadd.f32 %v2681, %v2697
      %v2714 = vadd.f32 %v2682, %v2698
      %v2715 = vadd.f32 %v2683, %v2699
      %v2716 = vadd.f32 %v2684, %v2700
      %v2717 = vadd.f32 %v2685, %v2701
      %v2718 = vadd.f32 %v2686, %v2702
      %v2719 = vadd.f32 %v2687, %v2703
      %v2720 = vadd.f32 %v2688, %v2704
      %v2721 = vadd.f32 %v2689, %v2705
      %v2722 = vmul.f32 %v2706, %v1428
      %v2723 = vmul.f32 %v2707, %v1428
      %v2724 = vmul.f32 %v2708, %v1428
      %v2725 = vmul.f32 %v2709, %v1428
      %v2726 = vmul.f32 %v2710, %v1428
      %v2727 = vmul.f32 %v2711, %v1428
      %v2728 = vmul.f32 %v2712, %v1428
      %v2729 = vmul.f32 %v2713, %v1428
      %v2730 = vmul.f32 %v2714, %v1428
      %v2731 = vmul.f32 %v2715, %v1428
      %v2732 = vmul.f32 %v2716, %v1428
      %v2733 = vmul.f32 %v2717, %v1428
      %v2734 = vmul.f32 %v2718, %v1428
      %v2735 = vmul.f32 %v2719, %v1428
      %v2736 = vmul.f32 %v2720, %v1428
      %v2737 = vmul.f32 %v2721, %v1428
      %v2738 = vadd.f32 %v2722, %v1447
      %v2739 = vadd.f32 %v2723, %v1447
      %v2740 = vadd.f32 %v2724, %v1447
      %v2741 = vadd.f32 %v2725, %v1447
      %v2742 = vadd.f32 %v2726, %v1447
      %v2743 = vadd.f32 %v2727, %v1447
      %v2744 = vadd.f32 %v2728, %v1447
      %v2745 = vadd.f32 %v2729, %v1447
      %v2746 = vadd.f32 %v2730, %v1447
      %v2747 = vadd.f32 %v2731, %v1447
      %v2748 = vadd.f32 %v2732, %v1447
      %v2749 = vadd.f32 %v2733, %v1447
      %v2750 = vadd.f32 %v2734, %v1447
      %v2751 = vadd.f32 %v2735, %v1447
      %v2752 = vadd.f32 %v2736, %v1447
      %v2753 = vadd.f32 %v2737, %v1447
      %v2754 = vxor.u32 %v2738, 2147483648
      %v2755 = vxor.u32 %v2739, 2147483648
      %v2756 = vxor.u32 %v2740, 2147483648
      %v2757 = vxor.u32 %v2741, 2147483648
      %v2758 = vxor.u32 %v2742, 2147483648
      %v2759 = vxor.u32 %v2743, 2147483648
      %v2760 = vxor.u32 %v2744, 2147483648
      %v2761 = vxor.u32 %v2745, 2147483648
      %v2762 = vxor.u32 %v2746, 2147483648
      %v2763 = vxor.u32 %v2747, 2147483648
      %v2764 = vxor.u32 %v2748, 2147483648
      %v2765 = vxor.u32 %v2749, 2147483648
      %v2766 = vxor.u32 %v2750, 2147483648
      %v2767 = vxor.u32 %v2751, 2147483648
      %v2768 = vxor.u32 %v2752, 2147483648
      %v2769 = vxor.u32 %v2753, 2147483648
      %v2770 = vmul.f32 %v2754, 1.442695
      %v2771 = vpow.pop %v2770
      %v2772 = vmul.f32 %v2755, 1.442695
      %v2773 = vpow.pop %v2772
      %v2774 = vmul.f32 %v2756, 1.442695
      %v2775 = vpow.pop %v2774
      %v2776 = vmul.f32 %v2757, 1.442695
      %v2777 = vpow.pop %v2776
      %v2778 = vmul.f32 %v2758, 1.442695
      %v2779 = vpow.pop %v2778
      %v2780 = vmul.f32 %v2759, 1.442695
      %v2781 = vpow.pop %v2780
      %v2782 = vmul.f32 %v2760, 1.442695
      %v2783 = vpow.pop %v2782
      %v2784 = vmul.f32 %v2761, 1.442695
      %v2785 = vpow.pop %v2784
      %v2786 = vmul.f32 %v2762, 1.442695
      %v2787 = vpow.pop %v2786
      %v2788 = vmul.f32 %v2763, 1.442695
      %v2789 = vpow.pop %v2788
      %v2790 = vmul.f32 %v2764, 1.442695
      %v2791 = vpow.pop %v2790
      %v2792 = vmul.f32 %v2765, 1.442695
      %v2793 = vpow.pop %v2792
      %v2794 = vmul.f32 %v2766, 1.442695
      %v2795 = vpow.pop %v2794
      %v2796 = vmul.f32 %v2767, 1.442695
      %v2797 = vpow.pop %v2796
      %v2798 = vmul.f32 %v2768, 1.442695
      %v2799 = vpow.pop %v2798
      %v2800 = vmul.f32 %v2769, 1.442695
      %v2801 = vpow.pop %v2800
      %v2802 = vadd.f32 %v2771, 1.0
      %v2803 = vadd.f32 %v2773, 1.0
      %v2804 = vadd.f32 %v2775, 1.0
      %v2805 = vadd.f32 %v2777, 1.0
      %v2806 = vadd.f32 %v2779, 1.0
      %v2807 = vadd.f32 %v2781, 1.0
      %v2808 = vadd.f32 %v2783, 1.0
      %v2809 = vadd.f32 %v2785, 1.0
      %v2810 = vadd.f32 %v2787, 1.0
      %v2811 = vadd.f32 %v2789, 1.0
      %v2812 = vadd.f32 %v2791, 1.0
      %v2813 = vadd.f32 %v2793, 1.0
      %v2814 = vadd.f32 %v2795, 1.0
      %v2815 = vadd.f32 %v2797, 1.0
      %v2816 = vadd.f32 %v2799, 1.0
      %v2817 = vadd.f32 %v2801, 1.0
      %v2818 = vrcp.pop %v2802
      %v2819 = vmul.f32 %v2802, %v2818
      %v2820 = vsub.f32 1.0, %v2819
      %v2821 = vmul.f32 %v2818, %v2820
      %v2822 = vadd.f32 %v2818, %v2821
      %vm2823 = vweird.f32 %v2802
      %vm2824 = vweird.f32 %v2818
      %vm2825 = vmor %vm2823, %vm2824
      %v2826 = vsel %vm2825, %v2818, %v2822
      %v2827 = vand.u32 2147483647, %v2802
      %vm2828 = vcmp.eq.f32.partialorder %v2827, 8.507059e+37
      %v2829 = vand.u32 %v2802, 2147483648
      %v2830 = vor.u32 1.1754944e-38, %v2829
      %v2831 = vsel %vm2828, %v2830, %v2826
      %v2832 = vmul.f32 1.0, %v2831
      %v2833 = vrcp.pop %v2803
      %v2834 = vmul.f32 %v2803, %v2833
      %v2835 = vsub.f32 1.0, %v2834
      %v2836 = vmul.f32 %v2833, %v2835
      %v2837 = vadd.f32 %v2833, %v2836
      %vm2838 = vweird.f32 %v2803
      %vm2839 = vweird.f32 %v2833
      %vm2840 = vmor %vm2838, %vm2839
      %v2841 = vsel %vm2840, %v2833, %v2837
      %v2842 = vand.u32 2147483647, %v2803
      %vm2843 = vcmp.eq.f32.partialorder %v2842, 8.507059e+37
      %v2844 = vand.u32 %v2803, 2147483648
      %v2845 = vor.u32 1.1754944e-38, %v2844
      %v2846 = vsel %vm2843, %v2845, %v2841
      %v2847 = vmul.f32 1.0, %v2846
      %v2848 = vrcp.pop %v2804
      %v2849 = vmul.f32 %v2804, %v2848
      %v2850 = vsub.f32 1.0, %v2849
      %v2851 = vmul.f32 %v2848, %v2850
      %v2852 = vadd.f32 %v2848, %v2851
      %vm2853 = vweird.f32 %v2804
      %vm2854 = vweird.f32 %v2848
      %vm2855 = vmor %vm2853, %vm2854
      %v2856 = vsel %vm2855, %v2848, %v2852
      %v2857 = vand.u32 2147483647, %v2804
      %vm2858 = vcmp.eq.f32.partialorder %v2857, 8.507059e+37
      %v2859 = vand.u32 %v2804, 2147483648
      %v2860 = vor.u32 1.1754944e-38, %v2859
      %v2861 = vsel %vm2858, %v2860, %v2856
      %v2862 = vmul.f32 1.0, %v2861
      %v2863 = vrcp.pop %v2805
      %v2864 = vmul.f32 %v2805, %v2863
      %v2865 = vsub.f32 1.0, %v2864
      %v2866 = vmul.f32 %v2863, %v2865
      %v2867 = vadd.f32 %v2863, %v2866
      %vm2868 = vweird.f32 %v2805
      %vm2869 = vweird.f32 %v2863
      %vm2870 = vmor %vm2868, %vm2869
      %v2871 = vsel %vm2870, %v2863, %v2867
      %v2872 = vand.u32 2147483647, %v2805
      %vm2873 = vcmp.eq.f32.partialorder %v2872, 8.507059e+37
      %v2874 = vand.u32 %v2805, 2147483648
      %v2875 = vor.u32 1.1754944e-38, %v2874
      %v2876 = vsel %vm2873, %v2875, %v2871
      %v2877 = vmul.f32 1.0, %v2876
      %v2878 = vrcp.pop %v2806
      %v2879 = vmul.f32 %v2806, %v2878
      %v2880 = vsub.f32 1.0, %v2879
      %v2881 = vmul.f32 %v2878, %v2880
      %v2882 = vadd.f32 %v2878, %v2881
      %vm2883 = vweird.f32 %v2806
      %vm2884 = vweird.f32 %v2878
      %vm2885 = vmor %vm2883, %vm2884
      %v2886 = vsel %vm2885, %v2878, %v2882
      %v2887 = vand.u32 2147483647, %v2806
      %vm2888 = vcmp.eq.f32.partialorder %v2887, 8.507059e+37
      %v2889 = vand.u32 %v2806, 2147483648
      %v2890 = vor.u32 1.1754944e-38, %v2889
      %v2891 = vsel %vm2888, %v2890, %v2886
      %v2892 = vmul.f32 1.0, %v2891
      %v2893 = vrcp.pop %v2807
      %v2894 = vmul.f32 %v2807, %v2893
      %v2895 = vsub.f32 1.0, %v2894
      %v2896 = vmul.f32 %v2893, %v2895
      %v2897 = vadd.f32 %v2893, %v2896
      %vm2898 = vweird.f32 %v2807
      %vm2899 = vweird.f32 %v2893
      %vm2900 = vmor %vm2898, %vm2899
      %v2901 = vsel %vm2900, %v2893, %v2897
      %v2902 = vand.u32 2147483647, %v2807
      %vm2903 = vcmp.eq.f32.partialorder %v2902, 8.507059e+37
      %v2904 = vand.u32 %v2807, 2147483648
      %v2905 = vor.u32 1.1754944e-38, %v2904
      %v2906 = vsel %vm2903, %v2905, %v2901
      %v2907 = vmul.f32 1.0, %v2906
      %v2908 = vrcp.pop %v2808
      %v2909 = vmul.f32 %v2808, %v2908
      %v2910 = vsub.f32 1.0, %v2909
      %v2911 = vmul.f32 %v2908, %v2910
      %v2912 = vadd.f32 %v2908, %v2911
      %vm2913 = vweird.f32 %v2808
      %vm2914 = vweird.f32 %v2908
      %vm2915 = vmor %vm2913, %vm2914
      %v2916 = vsel %vm2915, %v2908, %v2912
      %v2917 = vand.u32 2147483647, %v2808
      %vm2918 = vcmp.eq.f32.partialorder %v2917, 8.507059e+37
      %v2919 = vand.u32 %v2808, 2147483648
      %v2920 = vor.u32 1.1754944e-38, %v2919
      %v2921 = vsel %vm2918, %v2920, %v2916
      %v2922 = vmul.f32 1.0, %v2921
      %v2923 = vrcp.pop %v2809
      %v2924 = vmul.f32 %v2809, %v2923
      %v2925 = vsub.f32 1.0, %v2924
      %v2926 = vmul.f32 %v2923, %v2925
      %v2927 = vadd.f32 %v2923, %v2926
      %vm2928 = vweird.f32 %v2809
      %vm2929 = vweird.f32 %v2923
      %vm2930 = vmor %vm2928, %vm2929
      %v2931 = vsel %vm2930, %v2923, %v2927
      %v2932 = vand.u32 2147483647, %v2809
      %vm2933 = vcmp.eq.f32.partialorder %v2932, 8.507059e+37
      %v2934 = vand.u32 %v2809, 2147483648
      %v2935 = vor.u32 1.1754944e-38, %v2934
      %v2936 = vsel %vm2933, %v2935, %v2931
      %v2937 = vmul.f32 1.0, %v2936
      %v2938 = vrcp.pop %v2810
      %v2939 = vmul.f32 %v2810, %v2938
      %v2940 = vsub.f32 1.0, %v2939
      %v2941 = vmul.f32 %v2938, %v2940
      %v2942 = vadd.f32 %v2938, %v2941
      %vm2943 = vweird.f32 %v2810
      %vm2944 = vweird.f32 %v2938
      %vm2945 = vmor %vm2943, %vm2944
      %v2946 = vsel %vm2945, %v2938, %v2942
      %v2947 = vand.u32 2147483647, %v2810
      %vm2948 = vcmp.eq.f32.partialorder %v2947, 8.507059e+37
      %v2949 = vand.u32 %v2810, 2147483648
      %v2950 = vor.u32 1.1754944e-38, %v2949
      %v2951 = vsel %vm2948, %v2950, %v2946
      %v2952 = vmul.f32 1.0, %v2951
      %v2953 = vrcp.pop %v2811
      %v2954 = vmul.f32 %v2811, %v2953
      %v2955 = vsub.f32 1.0, %v2954
      %v2956 = vmul.f32 %v2953, %v2955
      %v2957 = vadd.f32 %v2953, %v2956
      %vm2958 = vweird.f32 %v2811
      %vm2959 = vweird.f32 %v2953
      %vm2960 = vmor %vm2958, %vm2959
      %v2961 = vsel %vm2960, %v2953, %v2957
      %v2962 = vand.u32 2147483647, %v2811
      %vm2963 = vcmp.eq.f32.partialorder %v2962, 8.507059e+37
      %v2964 = vand.u32 %v2811, 2147483648
      %v2965 = vor.u32 1.1754944e-38, %v2964
      %v2966 = vsel %vm2963, %v2965, %v2961
      %v2967 = vmul.f32 1.0, %v2966
      %v2968 = vrcp.pop %v2812
      %v2969 = vmul.f32 %v2812, %v2968
      %v2970 = vsub.f32 1.0, %v2969
      %v2971 = vmul.f32 %v2968, %v2970
      %v2972 = vadd.f32 %v2968, %v2971
      %vm2973 = vweird.f32 %v2812
      %vm2974 = vweird.f32 %v2968
      %vm2975 = vmor %vm2973, %vm2974
      %v2976 = vsel %vm2975, %v2968, %v2972
      %v2977 = vand.u32 2147483647, %v2812
      %vm2978 = vcmp.eq.f32.partialorder %v2977, 8.507059e+37
      %v2979 = vand.u32 %v2812, 2147483648
      %v2980 = vor.u32 1.1754944e-38, %v2979
      %v2981 = vsel %vm2978, %v2980, %v2976
      %v2982 = vmul.f32 1.0, %v2981
      %v2983 = vrcp.pop %v2813
      %v2984 = vmul.f32 %v2813, %v2983
      %v2985 = vsub.f32 1.0, %v2984
      %v2986 = vmul.f32 %v2983, %v2985
      %v2987 = vadd.f32 %v2983, %v2986
      %vm2988 = vweird.f32 %v2813
      %vm2989 = vweird.f32 %v2983
      %vm2990 = vmor %vm2988, %vm2989
      %v2991 = vsel %vm2990, %v2983, %v2987
      %v2992 = vand.u32 2147483647, %v2813
      %vm2993 = vcmp.eq.f32.partialorder %v2992, 8.507059e+37
      %v2994 = vand.u32 %v2813, 2147483648
      %v2995 = vor.u32 1.1754944e-38, %v2994
      %v2996 = vsel %vm2993, %v2995, %v2991
      %v2997 = vmul.f32 1.0, %v2996
      %v2998 = vrcp.pop %v2814
      %v2999 = vmul.f32 %v2814, %v2998
      %v3000 = vsub.f32 1.0, %v2999
      %v3001 = vmul.f32 %v2998, %v3000
      %v3002 = vadd.f32 %v2998, %v3001
      %vm3003 = vweird.f32 %v2814
      %vm3004 = vweird.f32 %v2998
      %vm3005 = vmor %vm3003, %vm3004
      %v3006 = vsel %vm3005, %v2998, %v3002
      %v3007 = vand.u32 2147483647, %v2814
      %vm3008 = vcmp.eq.f32.partialorder %v3007, 8.507059e+37
      %v3009 = vand.u32 %v2814, 2147483648
      %v3010 = vor.u32 1.1754944e-38, %v3009
      %v3011 = vsel %vm3008, %v3010, %v3006
      %v3012 = vmul.f32 1.0, %v3011
      %v3013 = vrcp.pop %v2815
      %v3014 = vmul.f32 %v2815, %v3013
      %v3015 = vsub.f32 1.0, %v3014
      %v3016 = vmul.f32 %v3013, %v3015
      %v3017 = vadd.f32 %v3013, %v3016
      %vm3018 = vweird.f32 %v2815
      %vm3019 = vweird.f32 %v3013
      %vm3020 = vmor %vm3018, %vm3019
      %v3021 = vsel %vm3020, %v3013, %v3017
      %v3022 = vand.u32 2147483647, %v2815
      %vm3023 = vcmp.eq.f32.partialorder %v3022, 8.507059e+37
      %v3024 = vand.u32 %v2815, 2147483648
      %v3025 = vor.u32 1.1754944e-38, %v3024
      %v3026 = vsel %vm3023, %v3025, %v3021
      %v3027 = vmul.f32 1.0, %v3026
      %v3028 = vrcp.pop %v2816
      %v3029 = vmul.f32 %v2816, %v3028
      %v3030 = vsub.f32 1.0, %v3029
      %v3031 = vmul.f32 %v3028, %v3030
      %v3032 = vadd.f32 %v3028, %v3031
      %vm3033 = vweird.f32 %v2816
      %vm3034 = vweird.f32 %v3028
      %vm3035 = vmor %vm3033, %vm3034
      %v3036 = vsel %vm3035, %v3028, %v3032
      %v3037 = vand.u32 2147483647, %v2816
      %vm3038 = vcmp.eq.f32.partialorder %v3037, 8.507059e+37
      %v3039 = vand.u32 %v2816, 2147483648
      %v3040 = vor.u32 1.1754944e-38, %v3039
      %v3041 = vsel %vm3038, %v3040, %v3036
      %v3042 = vmul.f32 1.0, %v3041
      %v3043 = vrcp.pop %v2817
      %v3044 = vmul.f32 %v2817, %v3043
      %v3045 = vsub.f32 1.0, %v3044
      %v3046 = vmul.f32 %v3043, %v3045
      %v3047 = vadd.f32 %v3043, %v3046
      %vm3048 = vweird.f32 %v2817
      %vm3049 = vweird.f32 %v3043
      %vm3050 = vmor %vm3048, %vm3049
      %v3051 = vsel %vm3050, %v3043, %v3047
      %v3052 = vand.u32 2147483647, %v2817
      %vm3053 = vcmp.eq.f32.partialorder %v3052, 8.507059e+37
      %v3054 = vand.u32 %v2817, 2147483648
      %v3055 = vor.u32 1.1754944e-38, %v3054
      %v3056 = vsel %vm3053, %v3055, %v3051
      %v3057 = vmul.f32 1.0, %v3056
      %v3058 = vmul.f32 %v2738, %v2832
      %v3059 = vmul.f32 %v2739, %v2847
      %v3060 = vmul.f32 %v2740, %v2862
      %v3061 = vmul.f32 %v2741, %v2877
      %v3062 = vmul.f32 %v2742, %v2892
      %v3063 = vmul.f32 %v2743, %v2907
      %v3064 = vmul.f32 %v2744, %v2922
      %v3065 = vmul.f32 %v2745, %v2937
      %v3066 = vmul.f32 %v2746, %v2952
      %v3067 = vmul.f32 %v2747, %v2967
      %v3068 = vmul.f32 %v2748, %v2982
      %v3069 = vmul.f32 %v2749, %v2997
      %v3070 = vmul.f32 %v2750, %v3012
      %v3071 = vmul.f32 %v2751, %v3027
      %v3072 = vmul.f32 %v2752, %v3042
      %v3073 = vmul.f32 %v2753, %v3057
      %s3074 = scalar_lea.vmem %s360, 128
      %3075 = vst [vmem:[%s3074] sm:$0xff] %v3058
      %3076 = vst [vmem:[%s3074 + $0x8] sm:$0xff] %v3059
      %3077 = vst [vmem:[%s3074 + $0x10] sm:$0xff] %v3060
      %3078 = vst [vmem:[%s3074 + $0x18] sm:$0xff] %v3061
      %3079 = vst [vmem:[%s3074 + $0x20] sm:$0xff] %v3062
      %3080 = vst [vmem:[%s3074 + $0x28] sm:$0xff] %v3063
      %3081 = vst [vmem:[%s3074 + $0x30] sm:$0xff] %v3064
      %3082 = vst [vmem:[%s3074 + $0x38] sm:$0xff] %v3065
      %3083 = vst [vmem:[%s3074 + $0x40] sm:$0xff] %v3066
      %3084 = vst [vmem:[%s3074 + $0x48] sm:$0xff] %v3067
      %3085 = vst [vmem:[%s3074 + $0x50] sm:$0xff] %v3068
      %3086 = vst [vmem:[%s3074 + $0x58] sm:$0xff] %v3069
      %3087 = vst [vmem:[%s3074 + $0x60] sm:$0xff] %v3070
      %3088 = vst [vmem:[%s3074 + $0x68] sm:$0xff] %v3071
      %3089 = vst [vmem:[%s3074 + $0x70] sm:$0xff] %v3072
      %3090 = vst [vmem:[%s3074 + $0x78] sm:$0xff] %v3073
      %3091 = vst [vmem:[#allocation3] sm:$0xff] 0.0
      %3092 = vst [vmem:[#allocation3 + $0x8] sm:$0xff] 0.0
      %3093 = vst [vmem:[#allocation3 + $0x10] sm:$0x3] 0.0
      %s3094 = scalar_lea.vmem [#allocation3], 408
      %3095 = vst [vmem:[%s3094] sm:$0xff] 0.0
      %3096 = vst [vmem:[%s3094 + $0x8] sm:$0xff] 0.0
      %3097 = vst [vmem:[%s3094 + $0x10] sm:$0x3] 0.0
      %s3098 = scalar_lea.vmem [#allocation3], 24
      %3099 = vst [vmem:[%s3098] sm:$0x1] 0.0
      %3100 = vst [vmem:[%s3098 + $0x18] sm:$0x1] 0.0
      %3101 = vst [vmem:[%s3098 + $0x30] sm:$0x1] 0.0
      %3102 = vst [vmem:[%s3098 + $0x48] sm:$0x1] 0.0
      %3103 = vst [vmem:[%s3098 + $0x60] sm:$0x1] 0.0
      %3104 = vst [vmem:[%s3098 + $0x78] sm:$0x1] 0.0
      %3105 = vst [vmem:[%s3098 + $0x90] sm:$0x1] 0.0
      %3106 = vst [vmem:[%s3098 + $0xa8] sm:$0x1] 0.0
      %3107 = vst [vmem:[%s3098 + $0xc0] sm:$0x1] 0.0
      %3108 = vst [vmem:[%s3098 + $0xd8] sm:$0x1] 0.0
      %3109 = vst [vmem:[%s3098 + $0xf0] sm:$0x1] 0.0
      %3110 = vst [vmem:[%s3098 + $0x108] sm:$0x1] 0.0
      %3111 = vst [vmem:[%s3098 + $0x120] sm:$0x1] 0.0
      %3112 = vst [vmem:[%s3098 + $0x138] sm:$0x1] 0.0
      %3113 = vst [vmem:[%s3098 + $0x150] sm:$0x1] 0.0
      %3114 = vst [vmem:[%s3098 + $0x168] sm:$0x1] 0.0
      %3115 = vst [vmem:[%s3098 + $0x11] sm:$0x1] 0.0
      %3116 = vst [vmem:[%s3098 + $0x29] sm:$0x1] 0.0
      %3117 = vst [vmem:[%s3098 + $0x41] sm:$0x1] 0.0
      %3118 = vst [vmem:[%s3098 + $0x59] sm:$0x1] 0.0
      %3119 = vst [vmem:[%s3098 + $0x71] sm:$0x1] 0.0
      %3120 = vst [vmem:[%s3098 + $0x89] sm:$0x1] 0.0
      %3121 = vst [vmem:[%s3098 + $0xa1] sm:$0x1] 0.0
      %3122 = vst [vmem:[%s3098 + $0xb9] sm:$0x1] 0.0
      %3123 = vst [vmem:[%s3098 + $0xd1] sm:$0x1] 0.0
      %3124 = vst [vmem:[%s3098 + $0xe9] sm:$0x1] 0.0
      %3125 = vst [vmem:[%s3098 + $0x101] sm:$0x1] 0.0
      %3126 = vst [vmem:[%s3098 + $0x119] sm:$0x1] 0.0
      %3127 = vst [vmem:[%s3098 + $0x131] sm:$0x1] 0.0
      %3128 = vst [vmem:[%s3098 + $0x149] sm:$0x1] 0.0
      %3129 = vst [vmem:[%s3098 + $0x161] sm:$0x1] 0.0
      %3130 = vst [vmem:[%s3098 + $0x179] sm:$0x1] 0.0
      %v3131 = vld [vmem:[%s355] sm:$0xff]
      %v3132 = vld [vmem:[%s355 + $0x8] sm:$0xff]
      %v3133 = vld [vmem:[%s355 + $0x10] sm:$0xff]
      %v3134 = vld [vmem:[%s355 + $0x18] sm:$0xff]
      %v3135 = vld [vmem:[%s355 + $0x20] sm:$0xff]
      %v3136 = vld [vmem:[%s355 + $0x28] sm:$0xff]
      %v3137 = vld [vmem:[%s355 + $0x30] sm:$0xff]
      %v3138 = vld [vmem:[%s355 + $0x38] sm:$0xff]
      %v3139 = vld [vmem:[%s355 + $0x40] sm:$0xff]
      %v3140 = vld [vmem:[%s355 + $0x48] sm:$0xff]
      %v3141 = vld [vmem:[%s355 + $0x50] sm:$0xff]
      %v3142 = vld [vmem:[%s355 + $0x58] sm:$0xff]
      %v3143 = vld [vmem:[%s355 + $0x60] sm:$0xff]
      %v3144 = vld [vmem:[%s355 + $0x68] sm:$0xff]
      %v3145 = vld [vmem:[%s355 + $0x70] sm:$0xff]
      %v3146 = vld [vmem:[%s355 + $0x78] sm:$0xff]
      %v3147 = vld [vmem:[%s355 + $0x80] sm:$0xff]
      %v3148 = vld [vmem:[%s355 + $0x88] sm:$0xff]
      %v3149 = vld [vmem:[%s355 + $0x90] sm:$0xff]
      %v3150 = vld [vmem:[%s355 + $0x98] sm:$0xff]
      %v3151 = vld [vmem:[%s355 + $0xa0] sm:$0xff]
      %v3152 = vld [vmem:[%s355 + $0xa8] sm:$0xff]
      %v3153 = vld [vmem:[%s355 + $0xb0] sm:$0xff]
      %v3154 = vld [vmem:[%s355 + $0xb8] sm:$0xff]
      %v3155 = vld [vmem:[%s355 + $0xc0] sm:$0xff]
      %v3156 = vld [vmem:[%s355 + $0xc8] sm:$0xff]
      %v3157 = vld [vmem:[%s355 + $0xd0] sm:$0xff]
      %v3158 = vld [vmem:[%s355 + $0xd8] sm:$0xff]
      %v3159 = vld [vmem:[%s355 + $0xe0] sm:$0xff]
      %v3160 = vld [vmem:[%s355 + $0xe8] sm:$0xff]
      %v3161 = vld [vmem:[%s355 + $0xf0] sm:$0xff]
      %v3162 = vld [vmem:[%s355 + $0xf8] sm:$0xff]
      %3163 = vst [vmem:[%s3098 + $0x1] sm:$0xff] %v3131
      %3164 = vst [vmem:[%s3098 + $0x9] sm:$0xff] %v3132
      %3165 = vst [vmem:[%s3098 + $0x19] sm:$0xff] %v3133
      %3166 = vst [vmem:[%s3098 + $0x21] sm:$0xff] %v3134
      %3167 = vst [vmem:[%s3098 + $0x31] sm:$0xff] %v3135
      %3168 = vst [vmem:[%s3098 + $0x39] sm:$0xff] %v3136
      %3169 = vst [vmem:[%s3098 + $0x49] sm:$0xff] %v3137
      %3170 = vst [vmem:[%s3098 + $0x51] sm:$0xff] %v3138
      %3171 = vst [vmem:[%s3098 + $0x61] sm:$0xff] %v3139
      %3172 = vst [vmem:[%s3098 + $0x69] sm:$0xff] %v3140
      %3173 = vst [vmem:[%s3098 + $0x79] sm:$0xff] %v3141
      %3174 = vst [vmem:[%s3098 + $0x81] sm:$0xff] %v3142
      %3175 = vst [vmem:[%s3098 + $0x91] sm:$0xff] %v3143
      %3176 = vst [vmem:[%s3098 + $0x99] sm:$0xff] %v3144
      %3177 = vst [vmem:[%s3098 + $0xa9] sm:$0xff] %v3145
      %3178 = vst [vmem:[%s3098 + $0xb1] sm:$0xff] %v3146
      %3179 = vst [vmem:[%s3098 + $0xc1] sm:$0xff] %v3147
      %3180 = vst [vmem:[%s3098 + $0xc9] sm:$0xff] %v3148
      %3181 = vst [vmem:[%s3098 + $0xd9] sm:$0xff] %v3149
      %3182 = vst [vmem:[%s3098 + $0xe1] sm:$0xff] %v3150
      %3183 = vst [vmem:[%s3098 + $0xf1] sm:$0xff] %v3151
      %3184 = vst [vmem:[%s3098 + $0xf9] sm:$0xff] %v3152
      %3185 = vst [vmem:[%s3098 + $0x109] sm:$0xff] %v3153
      %3186 = vst [vmem:[%s3098 + $0x111] sm:$0xff] %v3154
      %3187 = vst [vmem:[%s3098 + $0x121] sm:$0xff] %v3155
      %3188 = vst [vmem:[%s3098 + $0x129] sm:$0xff] %v3156
      %3189 = vst [vmem:[%s3098 + $0x139] sm:$0xff] %v3157
      %3190 = vst [vmem:[%s3098 + $0x141] sm:$0xff] %v3158
      %3191 = vst [vmem:[%s3098 + $0x151] sm:$0xff] %v3159
      %3192 = vst [vmem:[%s3098 + $0x159] sm:$0xff] %v3160
      %3193 = vst [vmem:[%s3098 + $0x169] sm:$0xff] %v3161
      %3194 = vst [vmem:[%s3098 + $0x171] sm:$0xff] %v3162
      %v3195 = vld [vmem:[%s5] sm:$0xff]
      %v3196 = vld [vmem:[%s5 + $0x8] sm:$0x1]
      %v3197 = vld [vmem:[%s6] sm:$0x1]
      %v3198 = vld [vmem:[%s7] sm:$0x1]
      %v3199 = vld [vmem:[#allocation3] sm:$0xff]
      %v3200 = vld [vmem:[#allocation3 + $0x8] sm:$0xff]
      %v3201 = vld [vmem:[#allocation3 + $0x18] sm:$0xff]
      %v3202 = vld [vmem:[#allocation3 + $0x20] sm:$0xff]
      %v3203 = vld [vmem:[#allocation3 + $0x30] sm:$0xff]
      %v3204 = vld [vmem:[#allocation3 + $0x38] sm:$0xff]
      %v3205 = vld [vmem:[#allocation3 + $0x48] sm:$0xff]
      %v3206 = vld [vmem:[#allocation3 + $0x50] sm:$0xff]
      %v3207 = vld [vmem:[#allocation3 + $0x60] sm:$0xff]
      %v3208 = vld [vmem:[#allocation3 + $0x68] sm:$0xff]
      %v3209 = vld [vmem:[#allocation3 + $0x78] sm:$0xff]
      %v3210 = vld [vmem:[#allocation3 + $0x80] sm:$0xff]
      %v3211 = vld [vmem:[#allocation3 + $0x90] sm:$0xff]
      %v3212 = vld [vmem:[#allocation3 + $0x98] sm:$0xff]
      %v3213 = vld [vmem:[#allocation3 + $0xa8] sm:$0xff]
      %v3214 = vld [vmem:[#allocation3 + $0xb0] sm:$0xff]
      %v3215 = vld [vmem:[#allocation3 + $0xc0] sm:$0xff]
      %v3216 = vld [vmem:[#allocation3 + $0xc8] sm:$0xff]
      %v3217 = vld [vmem:[#allocation3 + $0xd8] sm:$0xff]
      %v3218 = vld [vmem:[#allocation3 + $0xe0] sm:$0xff]
      %v3219 = vperm.slane %v3195, 0
      %v3220 = vmul.f32 %v3199, %v3219
      %v3221 = vmul.f32 %v3200, %v3219
      %v3222 = vmul.f32 %v3201, %v3219
      %v3223 = vmul.f32 %v3202, %v3219
      %v3224 = vmul.f32 %v3203, %v3219
      %v3225 = vmul.f32 %v3204, %v3219
      %v3226 = vmul.f32 %v3205, %v3219
      %v3227 = vmul.f32 %v3206, %v3219
      %v3228 = vmul.f32 %v3207, %v3219
      %v3229 = vmul.f32 %v3208, %v3219
      %v3230 = vmul.f32 %v3209, %v3219
      %v3231 = vmul.f32 %v3210, %v3219
      %v3232 = vmul.f32 %v3211, %v3219
      %v3233 = vmul.f32 %v3212, %v3219
      %v3234 = vmul.f32 %v3213, %v3219
      %v3235 = vmul.f32 %v3214, %v3219
      %v3236 = vadd.f32 %v3220, 0.0
      %v3237 = vadd.f32 %v3221, 0.0
      %v3238 = vadd.f32 %v3222, 0.0
      %v3239 = vadd.f32 %v3223, 0.0
      %v3240 = vadd.f32 %v3224, 0.0
      %v3241 = vadd.f32 %v3225, 0.0
      %v3242 = vadd.f32 %v3226, 0.0
      %v3243 = vadd.f32 %v3227, 0.0
      %v3244 = vadd.f32 %v3228, 0.0
      %v3245 = vadd.f32 %v3229, 0.0
      %v3246 = vadd.f32 %v3230, 0.0
      %v3247 = vadd.f32 %v3231, 0.0
      %v3248 = vadd.f32 %v3232, 0.0
      %v3249 = vadd.f32 %v3233, 0.0
      %v3250 = vadd.f32 %v3234, 0.0
      %v3251 = vadd.f32 %v3235, 0.0
      %v3252 = vperm.slane %v3195, 3
      %v3253 = vmul.f32 %v3201, %v3252
      %v3254 = vmul.f32 %v3202, %v3252
      %v3255 = vmul.f32 %v3203, %v3252
      %v3256 = vmul.f32 %v3204, %v3252
      %v3257 = vmul.f32 %v3205, %v3252
      %v3258 = vmul.f32 %v3206, %v3252
      %v3259 = vmul.f32 %v3207, %v3252
      %v3260 = vmul.f32 %v3208, %v3252
      %v3261 = vmul.f32 %v3209, %v3252
      %v3262 = vmul.f32 %v3210, %v3252
      %v3263 = vmul.f32 %v3211, %v3252
      %v3264 = vmul.f32 %v3212, %v3252
      %v3265 = vmul.f32 %v3213, %v3252
      %v3266 = vmul.f32 %v3214, %v3252
      %v3267 = vmul.f32 %v3215, %v3252
      %v3268 = vmul.f32 %v3216, %v3252
      %v3269 = vadd.f32 %v3236, %v3253
      %v3270 = vadd.f32 %v3237, %v3254
      %v3271 = vadd.f32 %v3238, %v3255
      %v3272 = vadd.f32 %v3239, %v3256
      %v3273 = vadd.f32 %v3240, %v3257
      %v3274 = vadd.f32 %v3241, %v3258
      %v3275 = vadd.f32 %v3242, %v3259
      %v3276 = vadd.f32 %v3243, %v3260
      %v3277 = vadd.f32 %v3244, %v3261
      %v3278 = vadd.f32 %v3245, %v3262
      %v3279 = vadd.f32 %v3246, %v3263
      %v3280 = vadd.f32 %v3247, %v3264
      %v3281 = vadd.f32 %v3248, %v3265
      %v3282 = vadd.f32 %v3249, %v3266
      %v3283 = vadd.f32 %v3250, %v3267
      %v3284 = vadd.f32 %v3251, %v3268
      %v3285 = vperm.slane %v3195, 6
      %v3286 = vmul.f32 %v3203, %v3285
      %v3287 = vmul.f32 %v3204, %v3285
      %v3288 = vmul.f32 %v3205, %v3285
      %v3289 = vmul.f32 %v3206, %v3285
      %v3290 = vmul.f32 %v3207, %v3285
      %v3291 = vmul.f32 %v3208, %v3285
      %v3292 = vmul.f32 %v3209, %v3285
      %v3293 = vmul.f32 %v3210, %v3285
      %v3294 = vmul.f32 %v3211, %v3285
      %v3295 = vmul.f32 %v3212, %v3285
      %v3296 = vmul.f32 %v3213, %v3285
      %v3297 = vmul.f32 %v3214, %v3285
      %v3298 = vmul.f32 %v3215, %v3285
      %v3299 = vmul.f32 %v3216, %v3285
      %v3300 = vmul.f32 %v3217, %v3285
      %v3301 = vmul.f32 %v3218, %v3285
      %v3302 = vadd.f32 %v3269, %v3286
      %v3303 = vadd.f32 %v3270, %v3287
      %v3304 = vadd.f32 %v3271, %v3288
      %v3305 = vadd.f32 %v3272, %v3289
      %v3306 = vadd.f32 %v3273, %v3290
      %v3307 = vadd.f32 %v3274, %v3291
      %v3308 = vadd.f32 %v3275, %v3292
      %v3309 = vadd.f32 %v3276, %v3293
      %v3310 = vadd.f32 %v3277, %v3294
      %v3311 = vadd.f32 %v3278, %v3295
      %v3312 = vadd.f32 %v3279, %v3296
      %v3313 = vadd.f32 %v3280, %v3297
      %v3314 = vadd.f32 %v3281, %v3298
      %v3315 = vadd.f32 %v3282, %v3299
      %v3316 = vadd.f32 %v3283, %v3300
      %v3317 = vadd.f32 %v3284, %v3301
      %v3318 = vld [vmem:[#allocation3 + $0x1] sm:$0xff]
      %v3319 = vld [vmem:[#allocation3 + $0x9] sm:$0xff]
      %v3320 = vld [vmem:[#allocation3 + $0x19] sm:$0xff]
      %v3321 = vld [vmem:[#allocation3 + $0x21] sm:$0xff]
      %v3322 = vld [vmem:[#allocation3 + $0x31] sm:$0xff]
      %v3323 = vld [vmem:[#allocation3 + $0x39] sm:$0xff]
      %v3324 = vld [vmem:[#allocation3 + $0x49] sm:$0xff]
      %v3325 = vld [vmem:[#allocation3 + $0x51] sm:$0xff]
      %v3326 = vld [vmem:[#allocation3 + $0x61] sm:$0xff]
      %v3327 = vld [vmem:[#allocation3 + $0x69] sm:$0xff]
      %v3328 = vld [vmem:[#allocation3 + $0x79] sm:$0xff]
      %v3329 = vld [vmem:[#allocation3 + $0x81] sm:$0xff]
      %v3330 = vld [vmem:[#allocation3 + $0x91] sm:$0xff]
      %v3331 = vld [vmem:[#allocation3 + $0x99] sm:$0xff]
      %v3332 = vld [vmem:[#allocation3 + $0xa9] sm:$0xff]
      %v3333 = vld [vmem:[#allocation3 + $0xb1] sm:$0xff]
      %v3334 = vld [vmem:[#allocation3 + $0xc1] sm:$0xff]
      %v3335 = vld [vmem:[#allocation3 + $0xc9] sm:$0xff]
      %v3336 = vld [vmem:[#allocation3 + $0xd9] sm:$0xff]
      %v3337 = vld [vmem:[#allocation3 + $0xe1] sm:$0xff]
      %v3338 = vperm.slane %v3195, 1
      %v3339 = vmul.f32 %v3318, %v3338
      %v3340 = vmul.f32 %v3319, %v3338
      %v3341 = vmul.f32 %v3320, %v3338
      %v3342 = vmul.f32 %v3321, %v3338
      %v3343 = vmul.f32 %v3322, %v3338
      %v3344 = vmul.f32 %v3323, %v3338
      %v3345 = vmul.f32 %v3324, %v3338
      %v3346 = vmul.f32 %v3325, %v3338
      %v3347 = vmul.f32 %v3326, %v3338
      %v3348 = vmul.f32 %v3327, %v3338
      %v3349 = vmul.f32 %v3328, %v3338
      %v3350 = vmul.f32 %v3329, %v3338
      %v3351 = vmul.f32 %v3330, %v3338
      %v3352 = vmul.f32 %v3331, %v3338
      %v3353 = vmul.f32 %v3332, %v3338
      %v3354 = vmul.f32 %v3333, %v3338
      %v3355 = vadd.f32 %v3302, %v3339
      %v3356 = vadd.f32 %v3303, %v3340
      %v3357 = vadd.f32 %v3304, %v3341
      %v3358 = vadd.f32 %v3305, %v3342
      %v3359 = vadd.f32 %v3306, %v3343
      %v3360 = vadd.f32 %v3307, %v3344
      %v3361 = vadd.f32 %v3308, %v3345
      %v3362 = vadd.f32 %v3309, %v3346
      %v3363 = vadd.f32 %v3310, %v3347
      %v3364 = vadd.f32 %v3311, %v3348
      %v3365 = vadd.f32 %v3312, %v3349
      %v3366 = vadd.f32 %v3313, %v3350
      %v3367 = vadd.f32 %v3314, %v3351
      %v3368 = vadd.f32 %v3315, %v3352
      %v3369 = vadd.f32 %v3316, %v3353
      %v3370 = vadd.f32 %v3317, %v3354
      %v3371 = vperm.slane %v3195, 4
      %v3372 = vmul.f32 %v3320, %v3371
      %v3373 = vmul.f32 %v3321, %v3371
      %v3374 = vmul.f32 %v3322, %v3371
      %v3375 = vmul.f32 %v3323, %v3371
      %v3376 = vmul.f32 %v3324, %v3371
      %v3377 = vmul.f32 %v3325, %v3371
      %v3378 = vmul.f32 %v3326, %v3371
      %v3379 = vmul.f32 %v3327, %v3371
      %v3380 = vmul.f32 %v3328, %v3371
      %v3381 = vmul.f32 %v3329, %v3371
      %v3382 = vmul.f32 %v3330, %v3371
      %v3383 = vmul.f32 %v3331, %v3371
      %v3384 = vmul.f32 %v3332, %v3371
      %v3385 = vmul.f32 %v3333, %v3371
      %v3386 = vmul.f32 %v3334, %v3371
      %v3387 = vmul.f32 %v3335, %v3371
      %v3388 = vadd.f32 %v3355, %v3372
      %v3389 = vadd.f32 %v3356, %v3373
      %v3390 = vadd.f32 %v3357, %v3374
      %v3391 = vadd.f32 %v3358, %v3375
      %v3392 = vadd.f32 %v3359, %v3376
      %v3393 = vadd.f32 %v3360, %v3377
      %v3394 = vadd.f32 %v3361, %v3378
      %v3395 = vadd.f32 %v3362, %v3379
      %v3396 = vadd.f32 %v3363, %v3380
      %v3397 = vadd.f32 %v3364, %v3381
      %v3398 = vadd.f32 %v3365, %v3382
      %v3399 = vadd.f32 %v3366, %v3383
      %v3400 = vadd.f32 %v3367, %v3384
      %v3401 = vadd.f32 %v3368, %v3385
      %v3402 = vadd.f32 %v3369, %v3386
      %v3403 = vadd.f32 %v3370, %v3387
      %v3404 = vperm.slane %v3195, 7
      %v3405 = vmul.f32 %v3322, %v3404
      %v3406 = vmul.f32 %v3323, %v3404
      %v3407 = vmul.f32 %v3324, %v3404
      %v3408 = vmul.f32 %v3325, %v3404
      %v3409 = vmul.f32 %v3326, %v3404
      %v3410 = vmul.f32 %v3327, %v3404
      %v3411 = vmul.f32 %v3328, %v3404
      %v3412 = vmul.f32 %v3329, %v3404
      %v3413 = vmul.f32 %v3330, %v3404
      %v3414 = vmul.f32 %v3331, %v3404
      %v3415 = vmul.f32 %v3332, %v3404
      %v3416 = vmul.f32 %v3333, %v3404
      %v3417 = vmul.f32 %v3334, %v3404
      %v3418 = vmul.f32 %v3335, %v3404
      %v3419 = vmul.f32 %v3336, %v3404
      %v3420 = vmul.f32 %v3337, %v3404
      %v3421 = vadd.f32 %v3388, %v3405
      %v3422 = vadd.f32 %v3389, %v3406
      %v3423 = vadd.f32 %v3390, %v3407
      %v3424 = vadd.f32 %v3391, %v3408
      %v3425 = vadd.f32 %v3392, %v3409
      %v3426 = vadd.f32 %v3393, %v3410
      %v3427 = vadd.f32 %v3394, %v3411
      %v3428 = vadd.f32 %v3395, %v3412
      %v3429 = vadd.f32 %v3396, %v3413
      %v3430 = vadd.f32 %v3397, %v3414
      %v3431 = vadd.f32 %v3398, %v3415
      %v3432 = vadd.f32 %v3399, %v3416
      %v3433 = vadd.f32 %v3400, %v3417
      %v3434 = vadd.f32 %v3401, %v3418
      %v3435 = vadd.f32 %v3402, %v3419
      %v3436 = vadd.f32 %v3403, %v3420
      %v3437 = vld [vmem:[#allocation3 + $0x2] sm:$0xff]
      %v3438 = vld [vmem:[#allocation3 + $0xa] sm:$0xff]
      %v3439 = vld [vmem:[#allocation3 + $0x1a] sm:$0xff]
      %v3440 = vld [vmem:[#allocation3 + $0x22] sm:$0xff]
      %v3441 = vld [vmem:[#allocation3 + $0x32] sm:$0xff]
      %v3442 = vld [vmem:[#allocation3 + $0x3a] sm:$0xff]
      %v3443 = vld [vmem:[#allocation3 + $0x4a] sm:$0xff]
      %v3444 = vld [vmem:[#allocation3 + $0x52] sm:$0xff]
      %v3445 = vld [vmem:[#allocation3 + $0x62] sm:$0xff]
      %v3446 = vld [vmem:[#allocation3 + $0x6a] sm:$0xff]
      %v3447 = vld [vmem:[#allocation3 + $0x7a] sm:$0xff]
      %v3448 = vld [vmem:[#allocation3 + $0x82] sm:$0xff]
      %v3449 = vld [vmem:[#allocation3 + $0x92] sm:$0xff]
      %v3450 = vld [vmem:[#allocation3 + $0x9a] sm:$0xff]
      %v3451 = vld [vmem:[#allocation3 + $0xaa] sm:$0xff]
      %v3452 = vld [vmem:[#allocation3 + $0xb2] sm:$0xff]
      %v3453 = vld [vmem:[#allocation3 + $0xc2] sm:$0xff]
      %v3454 = vld [vmem:[#allocation3 + $0xca] sm:$0xff]
      %v3455 = vld [vmem:[#allocation3 + $0xda] sm:$0xff]
      %v3456 = vld [vmem:[#allocation3 + $0xe2] sm:$0xff]
      %v3457 = vperm.slane %v3195, 2
      %v3458 = vmul.f32 %v3437, %v3457
      %v3459 = vmul.f32 %v3438, %v3457
      %v3460 = vmul.f32 %v3439, %v3457
      %v3461 = vmul.f32 %v3440, %v3457
      %v3462 = vmul.f32 %v3441, %v3457
      %v3463 = vmul.f32 %v3442, %v3457
      %v3464 = vmul.f32 %v3443, %v3457
      %v3465 = vmul.f32 %v3444, %v3457
      %v3466 = vmul.f32 %v3445, %v3457
      %v3467 = vmul.f32 %v3446, %v3457
      %v3468 = vmul.f32 %v3447, %v3457
      %v3469 = vmul.f32 %v3448, %v3457
      %v3470 = vmul.f32 %v3449, %v3457
      %v3471 = vmul.f32 %v3450, %v3457
      %v3472 = vmul.f32 %v3451, %v3457
      %v3473 = vmul.f32 %v3452, %v3457
      %v3474 = vadd.f32 %v3421, %v3458
      %v3475 = vadd.f32 %v3422, %v3459
      %v3476 = vadd.f32 %v3423, %v3460
      %v3477 = vadd.f32 %v3424, %v3461
      %v3478 = vadd.f32 %v3425, %v3462
      %v3479 = vadd.f32 %v3426, %v3463
      %v3480 = vadd.f32 %v3427, %v3464
      %v3481 = vadd.f32 %v3428, %v3465
      %v3482 = vadd.f32 %v3429, %v3466
      %v3483 = vadd.f32 %v3430, %v3467
      %v3484 = vadd.f32 %v3431, %v3468
      %v3485 = vadd.f32 %v3432, %v3469
      %v3486 = vadd.f32 %v3433, %v3470
      %v3487 = vadd.f32 %v3434, %v3471
      %v3488 = vadd.f32 %v3435, %v3472
      %v3489 = vadd.f32 %v3436, %v3473
      %v3490 = vperm.slane %v3195, 5
      %v3491 = vmul.f32 %v3439, %v3490
      %v3492 = vmul.f32 %v3440, %v3490
      %v3493 = vmul.f32 %v3441, %v3490
      %v3494 = vmul.f32 %v3442, %v3490
      %v3495 = vmul.f32 %v3443, %v3490
      %v3496 = vmul.f32 %v3444, %v3490
      %v3497 = vmul.f32 %v3445, %v3490
      %v3498 = vmul.f32 %v3446, %v3490
      %v3499 = vmul.f32 %v3447, %v3490
      %v3500 = vmul.f32 %v3448, %v3490
      %v3501 = vmul.f32 %v3449, %v3490
      %v3502 = vmul.f32 %v3450, %v3490
      %v3503 = vmul.f32 %v3451, %v3490
      %v3504 = vmul.f32 %v3452, %v3490
      %v3505 = vmul.f32 %v3453, %v3490
      %v3506 = vmul.f32 %v3454, %v3490
      %v3507 = vadd.f32 %v3474, %v3491
      %v3508 = vadd.f32 %v3475, %v3492
      %v3509 = vadd.f32 %v3476, %v3493
      %v3510 = vadd.f32 %v3477, %v3494
      %v3511 = vadd.f32 %v3478, %v3495
      %v3512 = vadd.f32 %v3479, %v3496
      %v3513 = vadd.f32 %v3480, %v3497
      %v3514 = vadd.f32 %v3481, %v3498
      %v3515 = vadd.f32 %v3482, %v3499
      %v3516 = vadd.f32 %v3483, %v3500
      %v3517 = vadd.f32 %v3484, %v3501
      %v3518 = vadd.f32 %v3485, %v3502
      %v3519 = vadd.f32 %v3486, %v3503
      %v3520 = vadd.f32 %v3487, %v3504
      %v3521 = vadd.f32 %v3488, %v3505
      %v3522 = vadd.f32 %v3489, %v3506
      %v3523 = vperm.slane %v3196, 0
      %v3524 = vmul.f32 %v3441, %v3523
      %v3525 = vmul.f32 %v3442, %v3523
      %v3526 = vmul.f32 %v3443, %v3523
      %v3527 = vmul.f32 %v3444, %v3523
      %v3528 = vmul.f32 %v3445, %v3523
      %v3529 = vmul.f32 %v3446, %v3523
      %v3530 = vmul.f32 %v3447, %v3523
      %v3531 = vmul.f32 %v3448, %v3523
      %v3532 = vmul.f32 %v3449, %v3523
      %v3533 = vmul.f32 %v3450, %v3523
      %v3534 = vmul.f32 %v3451, %v3523
      %v3535 = vmul.f32 %v3452, %v3523
      %v3536 = vmul.f32 %v3453, %v3523
      %v3537 = vmul.f32 %v3454, %v3523
      %v3538 = vmul.f32 %v3455, %v3523
      %v3539 = vmul.f32 %v3456, %v3523
      %v3540 = vadd.f32 %v3507, %v3524
      %v3541 = vadd.f32 %v3508, %v3525
      %v3542 = vadd.f32 %v3509, %v3526
      %v3543 = vadd.f32 %v3510, %v3527
      %v3544 = vadd.f32 %v3511, %v3528
      %v3545 = vadd.f32 %v3512, %v3529
      %v3546 = vadd.f32 %v3513, %v3530
      %v3547 = vadd.f32 %v3514, %v3531
      %v3548 = vadd.f32 %v3515, %v3532
      %v3549 = vadd.f32 %v3516, %v3533
      %v3550 = vadd.f32 %v3517, %v3534
      %v3551 = vadd.f32 %v3518, %v3535
      %v3552 = vadd.f32 %v3519, %v3536
      %v3553 = vadd.f32 %v3520, %v3537
      %v3554 = vadd.f32 %v3521, %v3538
      %v3555 = vadd.f32 %v3522, %v3539
      %v3557 = vperm.slane %v3197, 0
      %v3559 = vmul.f32 %v3540, %v3557
      %v3560 = vmul.f32 %v3541, %v3557
      %v3561 = vmul.f32 %v3542, %v3557
      %v3562 = vmul.f32 %v3543, %v3557
      %v3563 = vmul.f32 %v3544, %v3557
      %v3564 = vmul.f32 %v3545, %v3557
      %v3565 = vmul.f32 %v3546, %v3557
      %v3566 = vmul.f32 %v3547, %v3557
      %v3567 = vmul.f32 %v3548, %v3557
      %v3568 = vmul.f32 %v3549, %v3557
      %v3569 = vmul.f32 %v3550, %v3557
      %v3570 = vmul.f32 %v3551, %v3557
      %v3571 = vmul.f32 %v3552, %v3557
      %v3572 = vmul.f32 %v3553, %v3557
      %v3573 = vmul.f32 %v3554, %v3557
      %v3574 = vmul.f32 %v3555, %v3557
      %v3576 = vperm.slane %v3198, 0
      %v3578 = vadd.f32 %v3559, %v3576
      %v3579 = vadd.f32 %v3560, %v3576
      %v3580 = vadd.f32 %v3561, %v3576
      %v3581 = vadd.f32 %v3562, %v3576
      %v3582 = vadd.f32 %v3563, %v3576
      %v3583 = vadd.f32 %v3564, %v3576
      %v3584 = vadd.f32 %v3565, %v3576
      %v3585 = vadd.f32 %v3566, %v3576
      %v3586 = vadd.f32 %v3567, %v3576
      %v3587 = vadd.f32 %v3568, %v3576
      %v3588 = vadd.f32 %v3569, %v3576
      %v3589 = vadd.f32 %v3570, %v3576
      %v3590 = vadd.f32 %v3571, %v3576
      %v3591 = vadd.f32 %v3572, %v3576
      %v3592 = vadd.f32 %v3573, %v3576
      %v3593 = vadd.f32 %v3574, %v3576
      %3594 = vst [vmem:[%s365] sm:$0xff] %v3578
      %3595 = vst [vmem:[%s365 + $0x8] sm:$0xff] %v3579
      %3596 = vst [vmem:[%s365 + $0x10] sm:$0xff] %v3580
      %3597 = vst [vmem:[%s365 + $0x18] sm:$0xff] %v3581
      %3598 = vst [vmem:[%s365 + $0x20] sm:$0xff] %v3582
      %3599 = vst [vmem:[%s365 + $0x28] sm:$0xff] %v3583
      %3600 = vst [vmem:[%s365 + $0x30] sm:$0xff] %v3584
      %3601 = vst [vmem:[%s365 + $0x38] sm:$0xff] %v3585
      %3602 = vst [vmem:[%s365 + $0x40] sm:$0xff] %v3586
      %3603 = vst [vmem:[%s365 + $0x48] sm:$0xff] %v3587
      %3604 = vst [vmem:[%s365 + $0x50] sm:$0xff] %v3588
      %3605 = vst [vmem:[%s365 + $0x58] sm:$0xff] %v3589
      %3606 = vst [vmem:[%s365 + $0x60] sm:$0xff] %v3590
      %3607 = vst [vmem:[%s365 + $0x68] sm:$0xff] %v3591
      %3608 = vst [vmem:[%s365 + $0x70] sm:$0xff] %v3592
      %3609 = vst [vmem:[%s365 + $0x78] sm:$0xff] %v3593
      %s3610 = scalar_lea.vmem [#allocation3], 192
      %v3611 = vld [vmem:[%s3610] sm:$0xff]
      %v3612 = vld [vmem:[%s3610 + $0x8] sm:$0xff]
      %v3613 = vld [vmem:[%s3610 + $0x18] sm:$0xff]
      %v3614 = vld [vmem:[%s3610 + $0x20] sm:$0xff]
      %v3615 = vld [vmem:[%s3610 + $0x30] sm:$0xff]
      %v3616 = vld [vmem:[%s3610 + $0x38] sm:$0xff]
      %v3617 = vld [vmem:[%s3610 + $0x48] sm:$0xff]
      %v3618 = vld [vmem:[%s3610 + $0x50] sm:$0xff]
      %v3619 = vld [vmem:[%s3610 + $0x60] sm:$0xff]
      %v3620 = vld [vmem:[%s3610 + $0x68] sm:$0xff]
      %v3621 = vld [vmem:[%s3610 + $0x78] sm:$0xff]
      %v3622 = vld [vmem:[%s3610 + $0x80] sm:$0xff]
      %v3623 = vld [vmem:[%s3610 + $0x90] sm:$0xff]
      %v3624 = vld [vmem:[%s3610 + $0x98] sm:$0xff]
      %v3625 = vld [vmem:[%s3610 + $0xa8] sm:$0xff]
      %v3626 = vld [vmem:[%s3610 + $0xb0] sm:$0xff]
      %v3627 = vld [vmem:[%s3610 + $0xc0] sm:$0xff]
      %v3628 = vld [vmem:[%s3610 + $0xc8] sm:$0xff]
      %v3629 = vld [vmem:[%s3610 + $0xd8] sm:$0xff]
      %v3630 = vld [vmem:[%s3610 + $0xe0] sm:$0xff]
      %v3631 = vmul.f32 %v3611, %v3219
      %v3632 = vmul.f32 %v3612, %v3219
      %v3633 = vmul.f32 %v3613, %v3219
      %v3634 = vmul.f32 %v3614, %v3219
      %v3635 = vmul.f32 %v3615, %v3219
      %v3636 = vmul.f32 %v3616, %v3219
      %v3637 = vmul.f32 %v3617, %v3219
      %v3638 = vmul.f32 %v3618, %v3219
      %v3639 = vmul.f32 %v3619, %v3219
      %v3640 = vmul.f32 %v3620, %v3219
      %v3641 = vmul.f32 %v3621, %v3219
      %v3642 = vmul.f32 %v3622, %v3219
      %v3643 = vmul.f32 %v3623, %v3219
      %v3644 = vmul.f32 %v3624, %v3219
      %v3645 = vmul.f32 %v3625, %v3219
      %v3646 = vmul.f32 %v3626, %v3219
      %v3647 = vadd.f32 %v3631, 0.0
      %v3648 = vadd.f32 %v3632, 0.0
      %v3649 = vadd.f32 %v3633, 0.0
      %v3650 = vadd.f32 %v3634, 0.0
      %v3651 = vadd.f32 %v3635, 0.0
      %v3652 = vadd.f32 %v3636, 0.0
      %v3653 = vadd.f32 %v3637, 0.0
      %v3654 = vadd.f32 %v3638, 0.0
      %v3655 = vadd.f32 %v3639, 0.0
      %v3656 = vadd.f32 %v3640, 0.0
      %v3657 = vadd.f32 %v3641, 0.0
      %v3658 = vadd.f32 %v3642, 0.0
      %v3659 = vadd.f32 %v3643, 0.0
      %v3660 = vadd.f32 %v3644, 0.0
      %v3661 = vadd.f32 %v3645, 0.0
      %v3662 = vadd.f32 %v3646, 0.0
      %v3663 = vmul.f32 %v3613, %v3252
      %v3664 = vmul.f32 %v3614, %v3252
      %v3665 = vmul.f32 %v3615, %v3252
      %v3666 = vmul.f32 %v3616, %v3252
      %v3667 = vmul.f32 %v3617, %v3252
      %v3668 = vmul.f32 %v3618, %v3252
      %v3669 = vmul.f32 %v3619, %v3252
      %v3670 = vmul.f32 %v3620, %v3252
      %v3671 = vmul.f32 %v3621, %v3252
      %v3672 = vmul.f32 %v3622, %v3252
      %v3673 = vmul.f32 %v3623, %v3252
      %v3674 = vmul.f32 %v3624, %v3252
      %v3675 = vmul.f32 %v3625, %v3252
      %v3676 = vmul.f32 %v3626, %v3252
      %v3677 = vmul.f32 %v3627, %v3252
      %v3678 = vmul.f32 %v3628, %v3252
      %v3679 = vadd.f32 %v3647, %v3663
      %v3680 = vadd.f32 %v3648, %v3664
      %v3681 = vadd.f32 %v3649, %v3665
      %v3682 = vadd.f32 %v3650, %v3666
      %v3683 = vadd.f32 %v3651, %v3667
      %v3684 = vadd.f32 %v3652, %v3668
      %v3685 = vadd.f32 %v3653, %v3669
      %v3686 = vadd.f32 %v3654, %v3670
      %v3687 = vadd.f32 %v3655, %v3671
      %v3688 = vadd.f32 %v3656, %v3672
      %v3689 = vadd.f32 %v3657, %v3673
      %v3690 = vadd.f32 %v3658, %v3674
      %v3691 = vadd.f32 %v3659, %v3675
      %v3692 = vadd.f32 %v3660, %v3676
      %v3693 = vadd.f32 %v3661, %v3677
      %v3694 = vadd.f32 %v3662, %v3678
      %v3695 = vmul.f32 %v3615, %v3285
      %v3696 = vmul.f32 %v3616, %v3285
      %v3697 = vmul.f32 %v3617, %v3285
      %v3698 = vmul.f32 %v3618, %v3285
      %v3699 = vmul.f32 %v3619, %v3285
      %v3700 = vmul.f32 %v3620, %v3285
      %v3701 = vmul.f32 %v3621, %v3285
      %v3702 = vmul.f32 %v3622, %v3285
      %v3703 = vmul.f32 %v3623, %v3285
      %v3704 = vmul.f32 %v3624, %v3285
      %v3705 = vmul.f32 %v3625, %v3285
      %v3706 = vmul.f32 %v3626, %v3285
      %v3707 = vmul.f32 %v3627, %v3285
      %v3708 = vmul.f32 %v3628, %v3285
      %v3709 = vmul.f32 %v3629, %v3285
      %v3710 = vmul.f32 %v3630, %v3285
      %v3711 = vadd.f32 %v3679, %v3695
      %v3712 = vadd.f32 %v3680, %v3696
      %v3713 = vadd.f32 %v3681, %v3697
      %v3714 = vadd.f32 %v3682, %v3698
      %v3715 = vadd.f32 %v3683, %v3699
      %v3716 = vadd.f32 %v3684, %v3700
      %v3717 = vadd.f32 %v3685, %v3701
      %v3718 = vadd.f32 %v3686, %v3702
      %v3719 = vadd.f32 %v3687, %v3703
      %v3720 = vadd.f32 %v3688, %v3704
      %v3721 = vadd.f32 %v3689, %v3705
      %v3722 = vadd.f32 %v3690, %v3706
      %v3723 = vadd.f32 %v3691, %v3707
      %v3724 = vadd.f32 %v3692, %v3708
      %v3725 = vadd.f32 %v3693, %v3709
      %v3726 = vadd.f32 %v3694, %v3710
      %v3727 = vld [vmem:[%s3610 + $0x1] sm:$0xff]
      %v3728 = vld [vmem:[%s3610 + $0x9] sm:$0xff]
      %v3729 = vld [vmem:[%s3610 + $0x19] sm:$0xff]
      %v3730 = vld [vmem:[%s3610 + $0x21] sm:$0xff]
      %v3731 = vld [vmem:[%s3610 + $0x31] sm:$0xff]
      %v3732 = vld [vmem:[%s3610 + $0x39] sm:$0xff]
      %v3733 = vld [vmem:[%s3610 + $0x49] sm:$0xff]
      %v3734 = vld [vmem:[%s3610 + $0x51] sm:$0xff]
      %v3735 = vld [vmem:[%s3610 + $0x61] sm:$0xff]
      %v3736 = vld [vmem:[%s3610 + $0x69] sm:$0xff]
      %v3737 = vld [vmem:[%s3610 + $0x79] sm:$0xff]
      %v3738 = vld [vmem:[%s3610 + $0x81] sm:$0xff]
      %v3739 = vld [vmem:[%s3610 + $0x91] sm:$0xff]
      %v3740 = vld [vmem:[%s3610 + $0x99] sm:$0xff]
      %v3741 = vld [vmem:[%s3610 + $0xa9] sm:$0xff]
      %v3742 = vld [vmem:[%s3610 + $0xb1] sm:$0xff]
      %v3743 = vld [vmem:[%s3610 + $0xc1] sm:$0xff]
      %v3744 = vld [vmem:[%s3610 + $0xc9] sm:$0xff]
      %v3745 = vld [vmem:[%s3610 + $0xd9] sm:$0xff]
      %v3746 = vld [vmem:[%s3610 + $0xe1] sm:$0xff]
      %v3747 = vmul.f32 %v3727, %v3338
      %v3748 = vmul.f32 %v3728, %v3338
      %v3749 = vmul.f32 %v3729, %v3338
      %v3750 = vmul.f32 %v3730, %v3338
      %v3751 = vmul.f32 %v3731, %v3338
      %v3752 = vmul.f32 %v3732, %v3338
      %v3753 = vmul.f32 %v3733, %v3338
      %v3754 = vmul.f32 %v3734, %v3338
      %v3755 = vmul.f32 %v3735, %v3338
      %v3756 = vmul.f32 %v3736, %v3338
      %v3757 = vmul.f32 %v3737, %v3338
      %v3758 = vmul.f32 %v3738, %v3338
      %v3759 = vmul.f32 %v3739, %v3338
      %v3760 = vmul.f32 %v3740, %v3338
      %v3761 = vmul.f32 %v3741, %v3338
      %v3762 = vmul.f32 %v3742, %v3338
      %v3763 = vadd.f32 %v3711, %v3747
      %v3764 = vadd.f32 %v3712, %v3748
      %v3765 = vadd.f32 %v3713, %v3749
      %v3766 = vadd.f32 %v3714, %v3750
      %v3767 = vadd.f32 %v3715, %v3751
      %v3768 = vadd.f32 %v3716, %v3752
      %v3769 = vadd.f32 %v3717, %v3753
      %v3770 = vadd.f32 %v3718, %v3754
      %v3771 = vadd.f32 %v3719, %v3755
      %v3772 = vadd.f32 %v3720, %v3756
      %v3773 = vadd.f32 %v3721, %v3757
      %v3774 = vadd.f32 %v3722, %v3758
      %v3775 = vadd.f32 %v3723, %v3759
      %v3776 = vadd.f32 %v3724, %v3760
      %v3777 = vadd.f32 %v3725, %v3761
      %v3778 = vadd.f32 %v3726, %v3762
      %v3779 = vmul.f32 %v3729, %v3371
      %v3780 = vmul.f32 %v3730, %v3371
      %v3781 = vmul.f32 %v3731, %v3371
      %v3782 = vmul.f32 %v3732, %v3371
      %v3783 = vmul.f32 %v3733, %v3371
      %v3784 = vmul.f32 %v3734, %v3371
      %v3785 = vmul.f32 %v3735, %v3371
      %v3786 = vmul.f32 %v3736, %v3371
      %v3787 = vmul.f32 %v3737, %v3371
      %v3788 = vmul.f32 %v3738, %v3371
      %v3789 = vmul.f32 %v3739, %v3371
      %v3790 = vmul.f32 %v3740, %v3371
      %v3791 = vmul.f32 %v3741, %v3371
      %v3792 = vmul.f32 %v3742, %v3371
      %v3793 = vmul.f32 %v3743, %v3371
      %v3794 = vmul.f32 %v3744, %v3371
      %v3795 = vadd.f32 %v3763, %v3779
      %v3796 = vadd.f32 %v3764, %v3780
      %v3797 = vadd.f32 %v3765, %v3781
      %v3798 = vadd.f32 %v3766, %v3782
      %v3799 = vadd.f32 %v3767, %v3783
      %v3800 = vadd.f32 %v3768, %v3784
      %v3801 = vadd.f32 %v3769, %v3785
      %v3802 = vadd.f32 %v3770, %v3786
      %v3803 = vadd.f32 %v3771, %v3787
      %v3804 = vadd.f32 %v3772, %v3788
      %v3805 = vadd.f32 %v3773, %v3789
      %v3806 = vadd.f32 %v3774, %v3790
      %v3807 = vadd.f32 %v3775, %v3791
      %v3808 = vadd.f32 %v3776, %v3792
      %v3809 = vadd.f32 %v3777, %v3793
      %v3810 = vadd.f32 %v3778, %v3794
      %v3811 = vmul.f32 %v3731, %v3404
      %v3812 = vmul.f32 %v3732, %v3404
      %v3813 = vmul.f32 %v3733, %v3404
      %v3814 = vmul.f32 %v3734, %v3404
      %v3815 = vmul.f32 %v3735, %v3404
      %v3816 = vmul.f32 %v3736, %v3404
      %v3817 = vmul.f32 %v3737, %v3404
      %v3818 = vmul.f32 %v3738, %v3404
      %v3819 = vmul.f32 %v3739, %v3404
      %v3820 = vmul.f32 %v3740, %v3404
      %v3821 = vmul.f32 %v3741, %v3404
      %v3822 = vmul.f32 %v3742, %v3404
      %v3823 = vmul.f32 %v3743, %v3404
      %v3824 = vmul.f32 %v3744, %v3404
      %v3825 = vmul.f32 %v3745, %v3404
      %v3826 = vmul.f32 %v3746, %v3404
      %v3827 = vadd.f32 %v3795, %v3811
      %v3828 = vadd.f32 %v3796, %v3812
      %v3829 = vadd.f32 %v3797, %v3813
      %v3830 = vadd.f32 %v3798, %v3814
      %v3831 = vadd.f32 %v3799, %v3815
      %v3832 = vadd.f32 %v3800, %v3816
      %v3833 = vadd.f32 %v3801, %v3817
      %v3834 = vadd.f32 %v3802, %v3818
      %v3835 = vadd.f32 %v3803, %v3819
      %v3836 = vadd.f32 %v3804, %v3820
      %v3837 = vadd.f32 %v3805, %v3821
      %v3838 = vadd.f32 %v3806, %v3822
      %v3839 = vadd.f32 %v3807, %v3823
      %v3840 = vadd.f32 %v3808, %v3824
      %v3841 = vadd.f32 %v3809, %v3825
      %v3842 = vadd.f32 %v3810, %v3826
      %v3843 = vld [vmem:[%s3610 + $0x2] sm:$0xff]
      %v3844 = vld [vmem:[%s3610 + $0xa] sm:$0xff]
      %v3845 = vld [vmem:[%s3610 + $0x1a] sm:$0xff]
      %v3846 = vld [vmem:[%s3610 + $0x22] sm:$0xff]
      %v3847 = vld [vmem:[%s3610 + $0x32] sm:$0xff]
      %v3848 = vld [vmem:[%s3610 + $0x3a] sm:$0xff]
      %v3849 = vld [vmem:[%s3610 + $0x4a] sm:$0xff]
      %v3850 = vld [vmem:[%s3610 + $0x52] sm:$0xff]
      %v3851 = vld [vmem:[%s3610 + $0x62] sm:$0xff]
      %v3852 = vld [vmem:[%s3610 + $0x6a] sm:$0xff]
      %v3853 = vld [vmem:[%s3610 + $0x7a] sm:$0xff]
      %v3854 = vld [vmem:[%s3610 + $0x82] sm:$0xff]
      %v3855 = vld [vmem:[%s3610 + $0x92] sm:$0xff]
      %v3856 = vld [vmem:[%s3610 + $0x9a] sm:$0xff]
      %v3857 = vld [vmem:[%s3610 + $0xaa] sm:$0xff]
      %v3858 = vld [vmem:[%s3610 + $0xb2] sm:$0xff]
      %v3859 = vld [vmem:[%s3610 + $0xc2] sm:$0xff]
      %v3860 = vld [vmem:[%s3610 + $0xca] sm:$0xff]
      %v3861 = vld [vmem:[%s3610 + $0xda] sm:$0xff]
      %v3862 = vld [vmem:[%s3610 + $0xe2] sm:$0xff]
      %v3863 = vmul.f32 %v3843, %v3457
      %v3864 = vmul.f32 %v3844, %v3457
      %v3865 = vmul.f32 %v3845, %v3457
      %v3866 = vmul.f32 %v3846, %v3457
      %v3867 = vmul.f32 %v3847, %v3457
      %v3868 = vmul.f32 %v3848, %v3457
      %v3869 = vmul.f32 %v3849, %v3457
      %v3870 = vmul.f32 %v3850, %v3457
      %v3871 = vmul.f32 %v3851, %v3457
      %v3872 = vmul.f32 %v3852, %v3457
      %v3873 = vmul.f32 %v3853, %v3457
      %v3874 = vmul.f32 %v3854, %v3457
      %v3875 = vmul.f32 %v3855, %v3457
      %v3876 = vmul.f32 %v3856, %v3457
      %v3877 = vmul.f32 %v3857, %v3457
      %v3878 = vmul.f32 %v3858, %v3457
      %v3879 = vadd.f32 %v3827, %v3863
      %v3880 = vadd.f32 %v3828, %v3864
      %v3881 = vadd.f32 %v3829, %v3865
      %v3882 = vadd.f32 %v3830, %v3866
      %v3883 = vadd.f32 %v3831, %v3867
      %v3884 = vadd.f32 %v3832, %v3868
      %v3885 = vadd.f32 %v3833, %v3869
      %v3886 = vadd.f32 %v3834, %v3870
      %v3887 = vadd.f32 %v3835, %v3871
      %v3888 = vadd.f32 %v3836, %v3872
      %v3889 = vadd.f32 %v3837, %v3873
      %v3890 = vadd.f32 %v3838, %v3874
      %v3891 = vadd.f32 %v3839, %v3875
      %v3892 = vadd.f32 %v3840, %v3876
      %v3893 = vadd.f32 %v3841, %v3877
      %v3894 = vadd.f32 %v3842, %v3878
      %v3895 = vmul.f32 %v3845, %v3490
      %v3896 = vmul.f32 %v3846, %v3490
      %v3897 = vmul.f32 %v3847, %v3490
      %v3898 = vmul.f32 %v3848, %v3490
      %v3899 = vmul.f32 %v3849, %v3490
      %v3900 = vmul.f32 %v3850, %v3490
      %v3901 = vmul.f32 %v3851, %v3490
      %v3902 = vmul.f32 %v3852, %v3490
      %v3903 = vmul.f32 %v3853, %v3490
      %v3904 = vmul.f32 %v3854, %v3490
      %v3905 = vmul.f32 %v3855, %v3490
      %v3906 = vmul.f32 %v3856, %v3490
      %v3907 = vmul.f32 %v3857, %v3490
      %v3908 = vmul.f32 %v3858, %v3490
      %v3909 = vmul.f32 %v3859, %v3490
      %v3910 = vmul.f32 %v3860, %v3490
      %v3911 = vadd.f32 %v3879, %v3895
      %v3912 = vadd.f32 %v3880, %v3896
      %v3913 = vadd.f32 %v3881, %v3897
      %v3914 = vadd.f32 %v3882, %v3898
      %v3915 = vadd.f32 %v3883, %v3899
      %v3916 = vadd.f32 %v3884, %v3900
      %v3917 = vadd.f32 %v3885, %v3901
      %v3918 = vadd.f32 %v3886, %v3902
      %v3919 = vadd.f32 %v3887, %v3903
      %v3920 = vadd.f32 %v3888, %v3904
      %v3921 = vadd.f32 %v3889, %v3905
      %v3922 = vadd.f32 %v3890, %v3906
      %v3923 = vadd.f32 %v3891, %v3907
      %v3924 = vadd.f32 %v3892, %v3908
      %v3925 = vadd.f32 %v3893, %v3909
      %v3926 = vadd.f32 %v3894, %v3910
      %v3927 = vmul.f32 %v3847, %v3523
      %v3928 = vmul.f32 %v3848, %v3523
      %v3929 = vmul.f32 %v3849, %v3523
      %v3930 = vmul.f32 %v3850, %v3523
      %v3931 = vmul.f32 %v3851, %v3523
      %v3932 = vmul.f32 %v3852, %v3523
      %v3933 = vmul.f32 %v3853, %v3523
      %v3934 = vmul.f32 %v3854, %v3523
      %v3935 = vmul.f32 %v3855, %v3523
      %v3936 = vmul.f32 %v3856, %v3523
      %v3937 = vmul.f32 %v3857, %v3523
      %v3938 = vmul.f32 %v3858, %v3523
      %v3939 = vmul.f32 %v3859, %v3523
      %v3940 = vmul.f32 %v3860, %v3523
      %v3941 = vmul.f32 %v3861, %v3523
      %v3942 = vmul.f32 %v3862, %v3523
      %v3943 = vadd.f32 %v3911, %v3927
      %v3944 = vadd.f32 %v3912, %v3928
      %v3945 = vadd.f32 %v3913, %v3929
      %v3946 = vadd.f32 %v3914, %v3930
      %v3947 = vadd.f32 %v3915, %v3931
      %v3948 = vadd.f32 %v3916, %v3932
      %v3949 = vadd.f32 %v3917, %v3933
      %v3950 = vadd.f32 %v3918, %v3934
      %v3951 = vadd.f32 %v3919, %v3935
      %v3952 = vadd.f32 %v3920, %v3936
      %v3953 = vadd.f32 %v3921, %v3937
      %v3954 = vadd.f32 %v3922, %v3938
      %v3955 = vadd.f32 %v3923, %v3939
      %v3956 = vadd.f32 %v3924, %v3940
      %v3957 = vadd.f32 %v3925, %v3941
      %v3958 = vadd.f32 %v3926, %v3942
      %v3959 = vmul.f32 %v3943, %v3557
      %v3960 = vmul.f32 %v3944, %v3557
      %v3961 = vmul.f32 %v3945, %v3557
      %v3962 = vmul.f32 %v3946, %v3557
      %v3963 = vmul.f32 %v3947, %v3557
      %v3964 = vmul.f32 %v3948, %v3557
      %v3965 = vmul.f32 %v3949, %v3557
      %v3966 = vmul.f32 %v3950, %v3557
      %v3967 = vmul.f32 %v3951, %v3557
      %v3968 = vmul.f32 %v3952, %v3557
      %v3969 = vmul.f32 %v3953, %v3557
      %v3970 = vmul.f32 %v3954, %v3557
      %v3971 = vmul.f32 %v3955, %v3557
      %v3972 = vmul.f32 %v3956, %v3557
      %v3973 = vmul.f32 %v3957, %v3557
      %v3974 = vmul.f32 %v3958, %v3557
      %v3975 = vadd.f32 %v3959, %v3576
      %v3976 = vadd.f32 %v3960, %v3576
      %v3977 = vadd.f32 %v3961, %v3576
      %v3978 = vadd.f32 %v3962, %v3576
      %v3979 = vadd.f32 %v3963, %v3576
      %v3980 = vadd.f32 %v3964, %v3576
      %v3981 = vadd.f32 %v3965, %v3576
      %v3982 = vadd.f32 %v3966, %v3576
      %v3983 = vadd.f32 %v3967, %v3576
      %v3984 = vadd.f32 %v3968, %v3576
      %v3985 = vadd.f32 %v3969, %v3576
      %v3986 = vadd.f32 %v3970, %v3576
      %v3987 = vadd.f32 %v3971, %v3576
      %v3988 = vadd.f32 %v3972, %v3576
      %v3989 = vadd.f32 %v3973, %v3576
      %v3990 = vadd.f32 %v3974, %v3576
      %s3991 = scalar_lea.vmem %s365, 128
      %3992 = vst [vmem:[%s3991] sm:$0xff] %v3975
      %3993 = vst [vmem:[%s3991 + $0x8] sm:$0xff] %v3976
      %3994 = vst [vmem:[%s3991 + $0x10] sm:$0xff] %v3977
      %3995 = vst [vmem:[%s3991 + $0x18] sm:$0xff] %v3978
      %3996 = vst [vmem:[%s3991 + $0x20] sm:$0xff] %v3979
      %3997 = vst [vmem:[%s3991 + $0x28] sm:$0xff] %v3980
      %3998 = vst [vmem:[%s3991 + $0x30] sm:$0xff] %v3981
      %3999 = vst [vmem:[%s3991 + $0x38] sm:$0xff] %v3982
      %4000 = vst [vmem:[%s3991 + $0x40] sm:$0xff] %v3983
      %4001 = vst [vmem:[%s3991 + $0x48] sm:$0xff] %v3984
      %4002 = vst [vmem:[%s3991 + $0x50] sm:$0xff] %v3985
      %4003 = vst [vmem:[%s3991 + $0x58] sm:$0xff] %v3986
      %4004 = vst [vmem:[%s3991 + $0x60] sm:$0xff] %v3987
      %4005 = vst [vmem:[%s3991 + $0x68] sm:$0xff] %v3988
      %4006 = vst [vmem:[%s3991 + $0x70] sm:$0xff] %v3989
      %4007 = vst [vmem:[%s3991 + $0x78] sm:$0xff] %v3990
      %p4008 = scmp.lt.s32.totalorder %s21, 1
      %s4009 = scalar_select %p4008, %s21, 1
      %s4010 = smul.addr %s4009, 32
      %s4011 = smul.addr %s4010, 8
      %s4012 = scalar_lea.vmem %s8, %s4011
      %p4013 = scmp.lt.s32.totalorder %s21, 1
      %s4014 = scalar_select %p4013, %s21, 1
      %s4015 = smul.addr %s4014, 32
      %s4016 = smul.addr %s4015, 8
      %s4017 = scalar_lea.vmem %s9, %s4016
      // Predicated region
      $region53: #{_lambda_.4} parent=51 // pred_check
        %p4018 = pneg %p217
      $region54: #{_lambda_.4} parent=51 // pred_check_branch
        %4020 = sbr.rel (%p4018) target = $region56
      $region55: #{_lambda_.4} parent=51 // pred_region
        _
      $region56: #{_lambda_.4} parent=51 // pred_fallthru
        _
      // Predicated region
      $region57: #{_lambda_.4} parent=51 // pred_check
        %p4021 = pneg %p243
      $region58: #{_lambda_.4} parent=51 // pred_check_branch
        %4023 = sbr.rel (%p4021) target = $region60
      $region59: #{_lambda_.4} parent=51 // pred_region
        _
      $region60: #{_lambda_.4} parent=51 // pred_fallthru
        _
    $region52: #{_lambda_.4} parent=5 // pred_fallthru
      _
    %p4024 = scmp.le.s32.totalorder 2, %s16
    // Predicated region
    $region61: #{_lambda_.4} parent=5 // pred_check
      %p4025 = pneg %p4024
    $region62: #{_lambda_.4} parent=5 // pred_check_branch
      %4027 = sbr.rel (%p4025) target = $region64
    $region63: #{_lambda_.4} parent=5 // pred_region
      %s4028 = ssub.s32 %s16, 2
      // Predicated region
      $region65: #{_lambda_.4} parent=63 // pred_check
        %p4029 = pneg %p223
      $region66: #{_lambda_.4} parent=63 // pred_check_branch
        %4031 = sbr.rel (%p4029) target = $region68
      $region67: #{_lambda_.4} parent=63 // pred_region
        %p4032 = scmp.lt.s32.totalorder %s22, 1
        %s4033 = scalar_select %p4032, %s22, 1
        %s4034 = smul.addr %s4033, 32
        %s4035 = smul.addr %s4034, 8
        %s4036 = scalar_lea.vmem %s8, %s4035
      $region68: #{_lambda_.4} parent=63 // pred_fallthru
        _
      // Predicated region
      $region69: #{_lambda_.4} parent=63 // pred_check
        %p4037 = pneg %p249
      $region70: #{_lambda_.4} parent=63 // pred_check_branch
        %4039 = sbr.rel (%p4037) target = $region72
      $region71: #{_lambda_.4} parent=63 // pred_region
        %p4040 = scmp.lt.s32.totalorder %s22, 1
        %s4041 = scalar_select %p4040, %s22, 1
        %s4042 = smul.addr %s4041, 32
        %s4043 = smul.addr %s4042, 8
        %s4044 = scalar_lea.vmem %s9, %s4043
      $region72: #{_lambda_.4} parent=63 // pred_fallthru
        _
    $region64: #{_lambda_.4} parent=5 // pred_fallthru
      _
  $region6: #{_lambda_.4} parent=0 // loop_footer
    %s20 = sadd.s32 1, %s16
  $region7: #{_lambda_.4} parent=0 // loop_footer_branch
    %15 = sbr.rel target = $region3
  $region8: #{_lambda_.4} parent=0 // loop_exit
    _

</llo_original>
